<compile_context>
chip_gen: v5e
topology: v5e:2x2
jax: 0.10.0
libtpu: 0.0.40
codegen_flags: <defaults>
</compile_context>

<pallas_src>
import functools
import numpy as np

import jax
import jax.numpy as jnp
from jax import lax
from jax.experimental import pallas as pl
from jax.experimental.pallas import tpu as pltpu

EPS = 1e-5
# Use bf16 for the col2im scatter matmul once S gets big (0/1 values are exact
# in bf16; f32 accumulation on the MXU).
_BF16_S_BYTES = 1 << 20


# ----------------------------- Pallas kernels ------------------------------ #

def _dense_bn_relu_kernel(x_ref, w_ref, g_ref, be_ref, p_ref, pt_ref, o_ref, *,
                          inv_cnt, eps):
    """Layer 1 (Hin=Win=1): ConvTranspose == plain GEMM, fused with BN + ReLU.

    x:(N,Cin)  w:(Cin,Cout*KHW)  g,be:(1,Cout)
    p:(Cout*KHW,Cout) 0/1 lane-pooling matrix, pt = p^T.
    Output: (N, Cout*KHW), channel-major along lanes.
    """
    col = jnp.dot(x_ref[...], w_ref[...], preferred_element_type=jnp.float32)
    p = p_ref[...]
    pt = pt_ref[...]
    # ConvTranspose bias is absorbed by the BatchNorm mean subtraction -> skip.
    ch_sum = jnp.sum(jnp.dot(col, p, preferred_element_type=jnp.float32),
                     axis=0, keepdims=True)                      # (1, Cout)
    mean_b = jnp.dot(ch_sum * inv_cnt, pt,
                     preferred_element_type=jnp.float32)         # (1, Cout*KHW)
    d = col - mean_b
    var = jnp.sum(jnp.dot(d * d, p, preferred_element_type=jnp.float32),
                  axis=0, keepdims=True) * inv_cnt               # (1, Cout)
    scale = g_ref[...] * lax.rsqrt(var + eps)                    # (1, Cout)
    y = (d * jnp.dot(scale, pt, preferred_element_type=jnp.float32)
         + jnp.dot(be_ref[...], pt, preferred_element_type=jnp.float32))
    o_ref[...] = jnp.maximum(y, 0.0)


def _gemm_kernel(x_ref, w_ref, o_ref):
    # Column GEMM of the transposed conv: (N*Hin*Win, Cin) @ (Cin, Cout*kH*kW)
    o_ref[...] = jnp.dot(x_ref[...], w_ref[...],
                         preferred_element_type=jnp.float32)


def _col2im_bn_relu_kernel(a_ref, s_ref, pool_ref, g_ref, be_ref, y_ref, *,
                           inv_cnt, eps):
    """col2im overlap-add + BatchNorm(train stats) + ReLU for one channel block.

    a:(Cb*N, K)  rows ordered (channel, batch)
    s:(K, HWout) 0/1 scatter matrix
    pool:(Cb*N, Cb*N) = kron(I_Cb, ones(N,N))  -> per-channel row pooling
    g,be:(Cb*N, 1) per-channel gamma/beta repeated over the batch rows.
    """
    a = a_ref[...].astype(s_ref.dtype)
    y = jnp.dot(a, s_ref[...], preferred_element_type=jnp.float32)  # (Cb*N, HWout)
    # ConvTranspose bias is absorbed by the BatchNorm mean subtraction -> skip.
    rs = jnp.sum(y, axis=1, keepdims=True)                           # (Cb*N, 1)
    mean = jnp.dot(pool_ref[...], rs,
                   preferred_element_type=jnp.float32) * inv_cnt     # per-channel
    d = y - mean
    vs = jnp.sum(d * d, axis=1, keepdims=True)
    var = jnp.dot(pool_ref[...], vs,
                  preferred_element_type=jnp.float32) * inv_cnt
    yn = d * lax.rsqrt(var + eps) * g_ref[...] + be_ref[...]
    y_ref[...] = jnp.maximum(yn, 0.0)


def _col2im_tanh_kernel(a_ref, s_ref, b_ref, y_ref):
    a = a_ref[...].astype(s_ref.dtype)
    y = jnp.dot(a, s_ref[...], preferred_element_type=jnp.float32)
    y_ref[...] = jnp.tanh(y + b_ref[...])


# ------------------------------- glue / setup ------------------------------ #

def _scatter_matrix(Hin, Win, kH, kW, stride, dtype):
    """0/1 overlap-add (col2im) matrix for ConvTranspose2d, built host-side."""
    Hout = (Hin - 1) * stride + kH
    Wout = (Win - 1) * stride + kW
    K = Hin * Win * kH * kW
    S = np.zeros((K, Hout * Wout), dtype=np.float32)
    for i in range(Hin):
        for j in range(Win):
            for p in range(kH):
                for q in range(kW):
                    k_idx = ((i * Win + j) * kH + p) * kW + q
                    o_idx = (i * stride + p) * Wout + (j * stride + q)
                    S[k_idx, o_idx] = 1.0
    return jnp.asarray(S, dtype=dtype), Hout, Wout


def _num_channel_blocks(Cout, N, K):
    """Split output channels across grid steps only if the per-step A block is
    large; any split must keep Cb*N a multiple of 8 (sublane tiling)."""
    nblk = 1
    while (Cout * N * K * 4) // nblk > (4 << 20):
        nxt = nblk * 2
        if Cout % nxt != 0 or ((Cout // nxt) * N) % 8 != 0:
            break
        nblk = nxt
    return nblk


def dense_layer1(noise, weight, gamma, beta):
    """Layer 1: Hin=Win=1 -> col2im is the identity -> one fused kernel."""
    N, Cin = noise.shape
    Cin_w, Cout, kH, kW = weight.shape
    assert Cin == Cin_w
    KHW = kH * kW
    w2 = weight.reshape(Cin, Cout * KHW)
    P = jnp.asarray(np.kron(np.eye(Cout, dtype=np.float32),
                            np.ones((KHW, 1), dtype=np.float32)))
    out = pl.pallas_call(
        functools.partial(_dense_bn_relu_kernel,
                          inv_cnt=1.0 / (N * KHW), eps=EPS),
        out_shape=jax.ShapeDtypeStruct((N, Cout * KHW), jnp.float32),
    )(noise, w2, gamma.reshape(1, Cout), beta.reshape(1, Cout), P, P.T)
    return out.reshape(N, Cout, kH, kW)          # NCHW (H=kH, W=kW here)


def conv_transpose_bn_act(x_nchw, weight, bias, gamma, beta, *, stride, use_bn):
    """ConvTranspose2d (+ BatchNorm train-mode + ReLU, else + Tanh)."""
    N, Cin, Hin, Win = x_nchw.shape
    Cin_w, Cout, kH, kW = weight.shape
    assert Cin == Cin_w
    KHW = kH * kW
    K = Hin * Win * KHW

    s_dtype = (jnp.bfloat16 if K * ((Hin - 1) * stride + kH) *
               ((Win - 1) * stride + kW) * 4 > _BF16_S_BYTES else jnp.float32)
    S, Hout, Wout = _scatter_matrix(Hin, Win, kH, kW, stride, s_dtype)
    HWout = Hout * Wout

    # --- Kernel A: column GEMM (whole arrays, single step) -------------------
    x2 = jnp.transpose(x_nchw, (0, 2, 3, 1)).reshape(N * Hin * Win, Cin)
    w2 = weight.reshape(Cin, Cout * KHW)
    col = pl.pallas_call(
        _gemm_kernel,
        out_shape=jax.ShapeDtypeStruct((N * Hin * Win, Cout * KHW), jnp.float32),
    )(x2, w2)

    # XLA glue: (N*HinWin, Cout*KHW) -> rows (Cout, N), cols (HinWin, KHW).
    # (A mixed 4-D transpose that a single GEMM cannot absorb.)
    a2 = (col.reshape(N, Hin * Win, Cout, KHW)
             .transpose(2, 0, 1, 3)
             .reshape(Cout * N, K))

    nblk = _num_channel_blocks(Cout, N, K)
    cb = Cout // nblk
    cbn = cb * N
    inv_cnt = 1.0 / (N * HWout)

    a_spec = pl.BlockSpec((cbn, K), lambda c: (c, 0))
    s_spec = pl.BlockSpec((K, HWout), lambda c: (0, 0))
    row_spec = pl.BlockSpec((cbn, 1), lambda c: (c, 0))
    out_spec = pl.BlockSpec((cbn, HWout), lambda c: (c, 0))
    cparams = pltpu.CompilerParams(dimension_semantics=("parallel",),
                                   vmem_limit_bytes=32 * 1024 * 1024)

    if use_bn:
        pool = jnp.asarray(np.kron(np.eye(cb, dtype=np.float32),
                                   np.ones((N, N), dtype=np.float32)))
        g_rows = jnp.repeat(gamma, N).reshape(Cout * N, 1)
        b_rows = jnp.repeat(beta, N).reshape(Cout * N, 1)
        y2 = pl.pallas_call(
            functools.partial(_col2im_bn_relu_kernel, inv_cnt=inv_cnt, eps=EPS),
            grid=(nblk,),
            in_specs=[a_spec, s_spec,
                      pl.BlockSpec((cbn, cbn), lambda c: (0, 0)),
                      row_spec, row_spec],
            out_specs=out_spec,
            out_shape=jax.ShapeDtypeStruct((Cout * N, HWout), jnp.float32),
            compiler_params=cparams,
        )(a2, S, pool, g_rows, b_rows)
    else:
        bias_rows = jnp.repeat(bias, N).reshape(Cout * N, 1)
        y2 = pl.pallas_call(
            _col2im_tanh_kernel,
            grid=(nblk,),
            in_specs=[a_spec, s_spec, row_spec],
            out_specs=out_spec,
            out_shape=jax.ShapeDtypeStruct((Cout * N, HWout), jnp.float32),
            compiler_params=cparams,
        )(a2, S, bias_rows)

    # glue back to NCHW
    return y2.reshape(Cout, N, Hout, Wout).transpose(1, 0, 2, 3)


# ------------------------------- Generator --------------------------------- #

def init_generator_params(key, input_dim=10, im_chan=3, hidden_dim=16,
                          kernel_size=3):
    layer_defs = [
        (input_dim,      hidden_dim * 4, kernel_size),
        (hidden_dim * 4, hidden_dim * 2, 4),
        (hidden_dim * 2, hidden_dim,     kernel_size),
        (hidden_dim,     im_chan,        4),
    ]
    params = []
    for cin, cout, k in layer_defs:
        key, k1, k2, k3, k4 = jax.random.split(key, 5)
        params.append(dict(
            w=jax.random.normal(k1, (cin, cout, k, k), jnp.float32) * 0.1,
            b=jax.random.normal(k2, (cout,), jnp.float32) * 0.1,
            gamma=1.0 + 0.1 * jax.random.normal(k3, (cout,), jnp.float32),
            beta=0.1 * jax.random.normal(k4, (cout,), jnp.float32),
        ))
    return params


def generator_forward(noise, params, *, input_dim, stride=2):
    del input_dim  # noise already (N, z); the x.view(N, z, 1, 1) is implicit
    # Layer 1: Hin=Win=1 -> fully fused single kernel.
    x = dense_layer1(noise, params[0]["w"], params[0]["gamma"],
                     params[0]["beta"])
    layer_strides = (1, stride, stride)
    for li, (p, s) in enumerate(zip(params[1:], layer_strides), start=1):
        x = conv_transpose_bn_act(x, p["w"], p["b"], p["gamma"], p["beta"],
                                  stride=s, use_bn=(li < 3))
    return x


# --------------------------- pure-JAX reference ----------------------------- #

def _conv_transpose_ref(x, w, b, stride):
    N, Cin, Hin, Win = x.shape
    _, Cout, kH, kW = w.shape
    Hout = (Hin - 1) * stride + kH
    Wout = (Win - 1) * stride + kW
    col = jnp.einsum('ncij,cdpq->ndijpq', x, w)
    y = jnp.zeros((N, Cout, Hout, Wout), jnp.float32)
    for i in range(Hin):
        for j in range(Win):
            y = y.at[:, :, i * stride:i * stride + kH,
                            j * stride:j * stride + kW].add(col[:, :, i, j])
    return y + b.reshape(1, Cout, 1, 1)


def generator_ref(noise, params, *, input_dim, stride=2):
    N = noise.shape[0]
    x = noise.reshape(N, input_dim, 1, 1)
    layer_strides = (stride, 1, stride, stride)
    for li, (p, s) in enumerate(zip(params, layer_strides)):
        x = _conv_transpose_ref(x, p["w"], p["b"], s)
        if li < 3:
            mean = x.mean(axis=(0, 2, 3), keepdims=True)
            var = ((x - mean) ** 2).mean(axis=(0, 2, 3), keepdims=True)
            x = (x - mean) / jnp.sqrt(var + EPS)
            x = p["gamma"].reshape(1, -1, 1, 1) * x + p["beta"].reshape(1, -1, 1, 1)
            x = jnp.maximum(x, 0.0)
        else:
            x = jnp.tanh(x)
    return x


# ----------------------------------- main ----------------------------------- #

if __name__ == "__main__":
    input_dim, im_chan, hidden_dim, N = 10, 3, 16, 2

    key = jax.random.PRNGKey(0)
    key, nk = jax.random.split(key)
    noise = jax.random.normal(nk, (N, input_dim), jnp.float32)
    params = init_generator_params(key, input_dim, im_chan, hidden_dim)

    fwd = jax.jit(functools.partial(generator_forward, input_dim=input_dim))
    out = jax.block_until_ready(fwd(noise, params))
    assert out.shape == (N, im_chan, 28, 28), out.shape

    ref = jax.block_until_ready(generator_ref(noise, params, input_dim=input_dim))
    max_err = float(jnp.max(jnp.abs(out - ref)))
    assert max_err < 5e-2, f"max abs error {max_err}"

    print("KERNEL_OK")
</pallas_src>

<mosaic_0001>
module attributes {stable_mosaic.version = 11 : i64} {
  func.func @_dense_bn_relu_kernel(%arg0: memref<2x10xf32, #tpu.memory_space<vmem>>, %arg1: memref<10x576xf32, #tpu.memory_space<vmem>>, %arg2: memref<1x64xf32, #tpu.memory_space<vmem>>, %arg3: memref<1x64xf32, #tpu.memory_space<vmem>>, %arg4: memref<576x64xf32, #tpu.memory_space<vmem>>, %arg5: memref<64x576xf32, #tpu.memory_space<vmem>>, %arg6: memref<2x576xf32, #tpu.memory_space<vmem>>) attributes {dimension_semantics = [], scalar_prefetch = 0 : i64, scratch_operands = 0 : i64, tpu.core_type = #tpu.core_type<tc>} {
    %c0 = arith.constant 0 : index
    %c0_0 = arith.constant 0 : index
    %0 = vector.load %arg0[%c0, %c0_0] : memref<2x10xf32, #tpu.memory_space<vmem>>, vector<2x10xf32>
    %c0_1 = arith.constant 0 : index
    %c0_2 = arith.constant 0 : index
    %1 = vector.load %arg1[%c0_1, %c0_2] : memref<10x576xf32, #tpu.memory_space<vmem>>, vector<10x576xf32>
    %cst = arith.constant dense<0.000000e+00> : vector<2x576xf32>
    %2 = tpu.matmul %0, %1, %cst {dimension_numbers = #tpu.dot_dimension_numbers<[1], [0], [0], [1], [0, 0, 1, 1], [], []>} : vector<2x10xf32>, vector<10x576xf32>, vector<2x576xf32> -> vector<2x576xf32>
    %c0_3 = arith.constant 0 : index
    %c0_4 = arith.constant 0 : index
    %3 = vector.load %arg4[%c0_3, %c0_4] : memref<576x64xf32, #tpu.memory_space<vmem>>, vector<576x64xf32>
    %c0_5 = arith.constant 0 : index
    %c0_6 = arith.constant 0 : index
    %4 = vector.load %arg5[%c0_5, %c0_6] : memref<64x576xf32, #tpu.memory_space<vmem>>, vector<64x576xf32>
    %cst_7 = arith.constant dense<0.000000e+00> : vector<2x64xf32>
    %5 = tpu.matmul %2, %3, %cst_7 {dimension_numbers = #tpu.dot_dimension_numbers<[1], [0], [0], [1], [0, 0, 1, 1], [], []>} : vector<2x576xf32>, vector<576x64xf32>, vector<2x64xf32> -> vector<2x64xf32>
    %cst_8 = arith.constant dense<0.000000e+00> : vector<64xf32>
    %6 = vector.multi_reduction <add>, %5, %cst_8 [0] : vector<2x64xf32> to vector<64xf32>
    %7 = vector.shape_cast %6 : vector<64xf32> to vector<1x64xf32>
    %cst_9 = arith.constant 0.055555556 : f32
    %8 = vector.broadcast %cst_9 : f32 to vector<1x64xf32>
    %9 = arith.mulf %7, %8 : vector<1x64xf32>
    %cst_10 = arith.constant dense<0.000000e+00> : vector<1x576xf32>
    %10 = tpu.matmul %9, %4, %cst_10 {dimension_numbers = #tpu.dot_dimension_numbers<[1], [0], [0], [1], [0, 0, 1, 1], [], []>} : vector<1x64xf32>, vector<64x576xf32>, vector<1x576xf32> -> vector<1x576xf32>
    %11 = vector.broadcast %10 : vector<1x576xf32> to vector<2x576xf32>
    %12 = arith.subf %2, %11 : vector<2x576xf32>
    %13 = arith.mulf %12, %12 : vector<2x576xf32>
    %cst_11 = arith.constant dense<0.000000e+00> : vector<2x64xf32>
    %14 = tpu.matmul %13, %3, %cst_11 {dimension_numbers = #tpu.dot_dimension_numbers<[1], [0], [0], [1], [0, 0, 1, 1], [], []>} : vector<2x576xf32>, vector<576x64xf32>, vector<2x64xf32> -> vector<2x64xf32>
    %cst_12 = arith.constant dense<0.000000e+00> : vector<64xf32>
    %15 = vector.multi_reduction <add>, %14, %cst_12 [0] : vector<2x64xf32> to vector<64xf32>
    %16 = vector.shape_cast %15 : vector<64xf32> to vector<1x64xf32>
    %cst_13 = arith.constant 0.055555556 : f32
    %17 = vector.broadcast %cst_13 : f32 to vector<1x64xf32>
    %18 = arith.mulf %16, %17 : vector<1x64xf32>
    %c0_14 = arith.constant 0 : index
    %c0_15 = arith.constant 0 : index
    %19 = vector.load %arg2[%c0_14, %c0_15] : memref<1x64xf32, #tpu.memory_space<vmem>>, vector<1x64xf32>
    %cst_16 = arith.constant 9.99999974E-6 : f32
    %20 = vector.broadcast %cst_16 : f32 to vector<1x64xf32>
    %21 = arith.addf %18, %20 : vector<1x64xf32>
    %22 = math.rsqrt %21 : vector<1x64xf32>
    %23 = arith.mulf %19, %22 : vector<1x64xf32>
    %cst_17 = arith.constant dense<0.000000e+00> : vector<1x576xf32>
    %24 = tpu.matmul %23, %4, %cst_17 {dimension_numbers = #tpu.dot_dimension_numbers<[1], [0], [0], [1], [0, 0, 1, 1], [], []>} : vector<1x64xf32>, vector<64x576xf32>, vector<1x576xf32> -> vector<1x576xf32>
    %25 = vector.broadcast %24 : vector<1x576xf32> to vector<2x576xf32>
    %26 = arith.mulf %12, %25 : vector<2x576xf32>
    %c0_18 = arith.constant 0 : index
    %c0_19 = arith.constant 0 : index
    %27 = vector.load %arg3[%c0_18, %c0_19] : memref<1x64xf32, #tpu.memory_space<vmem>>, vector<1x64xf32>
    %cst_20 = arith.constant dense<0.000000e+00> : vector<1x576xf32>
    %28 = tpu.matmul %27, %4, %cst_20 {dimension_numbers = #tpu.dot_dimension_numbers<[1], [0], [0], [1], [0, 0, 1, 1], [], []>} : vector<1x64xf32>, vector<64x576xf32>, vector<1x576xf32> -> vector<1x576xf32>
    %29 = vector.broadcast %28 : vector<1x576xf32> to vector<2x576xf32>
    %30 = arith.addf %26, %29 : vector<2x576xf32>
    %cst_21 = arith.constant 0.000000e+00 : f32
    %31 = vector.broadcast %cst_21 : f32 to vector<2x576xf32>
    %32 = arith.maximumf %30, %31 : vector<2x576xf32>
    %c0_22 = arith.constant 0 : index
    %c0_23 = arith.constant 0 : index
    %33 = vector.load %arg6[%c0_22, %c0_23] : memref<2x576xf32, #tpu.memory_space<vmem>>, vector<2x576xf32>
    tpu.vector_store %arg6[%c0_22, %c0_23], %32 {strides = array<i32>} : memref<2x576xf32, #tpu.memory_space<vmem>>, vector<2x576xf32>,
    return
  }
}

module attributes {stable_mosaic.version = 11 : i64} {
  func.func @_gemm_kernel(%arg0: memref<18x64xf32, #tpu.memory_space<vmem>>, %arg1: memref<64x512xf32, #tpu.memory_space<vmem>>, %arg2: memref<18x512xf32, #tpu.memory_space<vmem>>) attributes {dimension_semantics = [], scalar_prefetch = 0 : i64, scratch_operands = 0 : i64, tpu.core_type = #tpu.core_type<tc>} {
    %c0 = arith.constant 0 : index
    %c0_0 = arith.constant 0 : index
    %0 = vector.load %arg0[%c0, %c0_0] : memref<18x64xf32, #tpu.memory_space<vmem>>, vector<18x64xf32>
    %c0_1 = arith.constant 0 : index
    %c0_2 = arith.constant 0 : index
    %1 = vector.load %arg1[%c0_1, %c0_2] : memref<64x512xf32, #tpu.memory_space<vmem>>, vector<64x512xf32>
    %cst = arith.constant dense<0.000000e+00> : vector<18x512xf32>
    %2 = tpu.matmul %0, %1, %cst {dimension_numbers = #tpu.dot_dimension_numbers<[1], [0], [0], [1], [0, 0, 1, 1], [], []>} : vector<18x64xf32>, vector<64x512xf32>, vector<18x512xf32> -> vector<18x512xf32>
    %c0_3 = arith.constant 0 : index
    %c0_4 = arith.constant 0 : index
    %3 = vector.load %arg2[%c0_3, %c0_4] : memref<18x512xf32, #tpu.memory_space<vmem>>, vector<18x512xf32>
    tpu.vector_store %arg2[%c0_3, %c0_4], %2 {strides = array<i32>} : memref<18x512xf32, #tpu.memory_space<vmem>>, vector<18x512xf32>,
    return
  }
}

module attributes {stable_mosaic.version = 11 : i64} {
  func.func @_col2im_bn_relu_kernel(%arg0: i32, %arg1: memref<64x144xf32, #tpu.memory_space<vmem>>, %arg2: memref<144x36xf32, #tpu.memory_space<vmem>>, %arg3: memref<64x64xf32, #tpu.memory_space<vmem>>, %arg4: memref<64x1xf32, #tpu.memory_space<vmem>>, %arg5: memref<64x1xf32, #tpu.memory_space<vmem>>, %arg6: memref<64x36xf32, #tpu.memory_space<vmem>>) attributes {dimension_semantics = [#tpu.dimension_semantics<parallel>], iteration_bounds = array<i64: 1>, scalar_prefetch = 0 : i64, scratch_operands = 0 : i64, tpu.core_type = #tpu.core_type<tc>, window_params = [{transform_indices = @transform_0, window_bounds = array<i64: 64, 144>}, {pipeline_mode = #tpu.pipeline_mode<synchronous>, transform_indices = @transform_1, window_bounds = array<i64: 144, 36>}, {pipeline_mode = #tpu.pipeline_mode<synchronous>, transform_indices = @transform_2, window_bounds = array<i64: 64, 64>}, {transform_indices = @transform_3, window_bounds = array<i64: 64, 1>}, {transform_indices = @transform_4, window_bounds = array<i64: 64, 1>}, {transform_indices = @transform_5, window_bounds = array<i64: 64, 36>}]} {
    %c0 = arith.constant 0 : index
    %c0_0 = arith.constant 0 : index
    %0 = vector.load %arg1[%c0, %c0_0] : memref<64x144xf32, #tpu.memory_space<vmem>>, vector<64x144xf32>
    %c0_1 = arith.constant 0 : index
    %c0_2 = arith.constant 0 : index
    %1 = vector.load %arg2[%c0_1, %c0_2] : memref<144x36xf32, #tpu.memory_space<vmem>>, vector<144x36xf32>
    %cst = arith.constant dense<0.000000e+00> : vector<64x36xf32>
    %2 = tpu.matmul %0, %1, %cst {dimension_numbers = #tpu.dot_dimension_numbers<[1], [0], [0], [1], [0, 0, 1, 1], [], []>} : vector<64x144xf32>, vector<144x36xf32>, vector<64x36xf32> -> vector<64x36xf32>
    %cst_3 = arith.constant dense<0.000000e+00> : vector<64xf32>
    %3 = vector.multi_reduction <add>, %2, %cst_3 [1] : vector<64x36xf32> to vector<64xf32>
    %4 = vector.shape_cast %3 : vector<64xf32> to vector<64x1xf32>
    %c0_4 = arith.constant 0 : index
    %c0_5 = arith.constant 0 : index
    %5 = vector.load %arg3[%c0_4, %c0_5] : memref<64x64xf32, #tpu.memory_space<vmem>>, vector<64x64xf32>
    %cst_6 = arith.constant dense<0.000000e+00> : vector<64x1xf32>
    %6 = tpu.matmul %5, %4, %cst_6 {dimension_numbers = #tpu.dot_dimension_numbers<[1], [0], [0], [1], [0, 0, 1, 1], [], []>} : vector<64x64xf32>, vector<64x1xf32>, vector<64x1xf32> -> vector<64x1xf32>
    %cst_7 = arith.constant 0.013888889 : f32
    %7 = vector.broadcast %cst_7 : f32 to vector<64x1xf32>
    %8 = arith.mulf %6, %7 : vector<64x1xf32>
    %9 = vector.broadcast %8 : vector<64x1xf32> to vector<64x36xf32>
    %10 = arith.subf %2, %9 : vector<64x36xf32>
    %11 = arith.mulf %10, %10 : vector<64x36xf32>
    %cst_8 = arith.constant dense<0.000000e+00> : vector<64xf32>
    %12 = vector.multi_reduction <add>, %11, %cst_8 [1] : vector<64x36xf32> to vector<64xf32>
    %13 = vector.shape_cast %12 : vector<64xf32> to vector<64x1xf32>
    %c0_9 = arith.constant 0 : index
    %c0_10 = arith.constant 0 : index
    %14 = vector.load %arg3[%c0_9, %c0_10] : memref<64x64xf32, #tpu.memory_space<vmem>>, vector<64x64xf32>
    %cst_11 = arith.constant dense<0.000000e+00> : vector<64x1xf32>
    %15 = tpu.matmul %14, %13, %cst_11 {dimension_numbers = #tpu.dot_dimension_numbers<[1], [0], [0], [1], [0, 0, 1, 1], [], []>} : vector<64x64xf32>, vector<64x1xf32>, vector<64x1xf32> -> vector<64x1xf32>
    %cst_12 = arith.constant 0.013888889 : f32
    %16 = vector.broadcast %cst_12 : f32 to vector<64x1xf32>
    %17 = arith.mulf %15, %16 : vector<64x1xf32>
    %cst_13 = arith.constant 9.99999974E-6 : f32
    %18 = vector.broadcast %cst_13 : f32 to vector<64x1xf32>
    %19 = arith.addf %17, %18 : vector<64x1xf32>
    %20 = math.rsqrt %19 : vector<64x1xf32>
    %21 = vector.broadcast %20 : vector<64x1xf32> to vector<64x36xf32>
    %22 = arith.mulf %10, %21 : vector<64x36xf32>
    %c0_14 = arith.constant 0 : index
    %c0_15 = arith.constant 0 : index
    %23 = vector.load %arg4[%c0_14, %c0_15] : memref<64x1xf32, #tpu.memory_space<vmem>>, vector<64x1xf32>
    %24 = vector.broadcast %23 : vector<64x1xf32> to vector<64x36xf32>
    %25 = arith.mulf %22, %24 : vector<64x36xf32>
    %c0_16 = arith.constant 0 : index
    %c0_17 = arith.constant 0 : index
    %26 = vector.load %arg5[%c0_16, %c0_17] : memref<64x1xf32, #tpu.memory_space<vmem>>, vector<64x1xf32>
    %27 = vector.broadcast %26 : vector<64x1xf32> to vector<64x36xf32>
    %28 = arith.addf %25, %27 : vector<64x36xf32>
    %cst_18 = arith.constant 0.000000e+00 : f32
    %29 = vector.broadcast %cst_18 : f32 to vector<64x36xf32>
    %30 = arith.maximumf %28, %29 : vector<64x36xf32>
    %c0_19 = arith.constant 0 : index
    %c0_20 = arith.constant 0 : index
    %31 = vector.load %arg6[%c0_19, %c0_20] : memref<64x36xf32, #tpu.memory_space<vmem>>, vector<64x36xf32>
    tpu.vector_store %arg6[%c0_19, %c0_20], %30 {strides = array<i32>} : memref<64x36xf32, #tpu.memory_space<vmem>>, vector<64x36xf32>,
    return
  }
  func.func @transform_0(%arg0: i32) -> (i32, i32) {
    %c0_i32 = arith.constant 0 : i32
    %c0_i32_0 = arith.constant 0 : i32
    return %arg0, %c0_i32 : i32, i32
  }
  func.func @transform_1(%arg0: i32) -> (i32, i32) {
    %c0_i32 = arith.constant 0 : i32
    %c0_i32_0 = arith.constant 0 : i32
    %c0_i32_1 = arith.constant 0 : i32
    return %c0_i32, %c0_i32_0 : i32, i32
  }
  func.func @transform_2(%arg0: i32) -> (i32, i32) {
    %c0_i32 = arith.constant 0 : i32
    %c0_i32_0 = arith.constant 0 : i32
    %c0_i32_1 = arith.constant 0 : i32
    return %c0_i32, %c0_i32_0 : i32, i32
  }
  func.func @transform_3(%arg0: i32) -> (i32, i32) {
    %c0_i32 = arith.constant 0 : i32
    %c0_i32_0 = arith.constant 0 : i32
    return %arg0, %c0_i32 : i32, i32
  }
  func.func @transform_4(%arg0: i32) -> (i32, i32) {
    %c0_i32 = arith.constant 0 : i32
    %c0_i32_0 = arith.constant 0 : i32
    return %arg0, %c0_i32 : i32, i32
  }
  func.func @transform_5(%arg0: i32) -> (i32, i32) {
    %c0_i32 = arith.constant 0 : i32
    %c0_i32_0 = arith.constant 0 : i32
    return %arg0, %c0_i32 : i32, i32
  }
}

module attributes {stable_mosaic.version = 11 : i64} {
  func.func @_gemm_kernel(%arg0: memref<72x32xf32, #tpu.memory_space<vmem>>, %arg1: memref<32x144xf32, #tpu.memory_space<vmem>>, %arg2: memref<72x144xf32, #tpu.memory_space<vmem>>) attributes {dimension_semantics = [], scalar_prefetch = 0 : i64, scratch_operands = 0 : i64, tpu.core_type = #tpu.core_type<tc>} {
    %c0 = arith.constant 0 : index
    %c0_0 = arith.constant 0 : index
    %0 = vector.load %arg0[%c0, %c0_0] : memref<72x32xf32, #tpu.memory_space<vmem>>, vector<72x32xf32>
    %c0_1 = arith.constant 0 : index
    %c0_2 = arith.constant 0 : index
    %1 = vector.load %arg1[%c0_1, %c0_2] : memref<32x144xf32, #tpu.memory_space<vmem>>, vector<32x144xf32>
    %cst = arith.constant dense<0.000000e+00> : vector<72x144xf32>
    %2 = tpu.matmul %0, %1, %cst {dimension_numbers = #tpu.dot_dimension_numbers<[1], [0], [0], [1], [0, 0, 1, 1], [], []>} : vector<72x32xf32>, vector<32x144xf32>, vector<72x144xf32> -> vector<72x144xf32>
    %c0_3 = arith.constant 0 : index
    %c0_4 = arith.constant 0 : index
    %3 = vector.load %arg2[%c0_3, %c0_4] : memref<72x144xf32, #tpu.memory_space<vmem>>, vector<72x144xf32>
    tpu.vector_store %arg2[%c0_3, %c0_4], %2 {strides = array<i32>} : memref<72x144xf32, #tpu.memory_space<vmem>>, vector<72x144xf32>,
    return
  }
}

module attributes {stable_mosaic.version = 11 : i64} {
  func.func @_col2im_bn_relu_kernel(%arg0: i32, %arg1: memref<32x324xf32, #tpu.memory_space<vmem>>, %arg2: memref<324x169xf32, #tpu.memory_space<vmem>>, %arg3: memref<32x32xf32, #tpu.memory_space<vmem>>, %arg4: memref<32x1xf32, #tpu.memory_space<vmem>>, %arg5: memref<32x1xf32, #tpu.memory_space<vmem>>, %arg6: memref<32x169xf32, #tpu.memory_space<vmem>>) attributes {dimension_semantics = [#tpu.dimension_semantics<parallel>], iteration_bounds = array<i64: 1>, scalar_prefetch = 0 : i64, scratch_operands = 0 : i64, tpu.core_type = #tpu.core_type<tc>, window_params = [{transform_indices = @transform_0, window_bounds = array<i64: 32, 324>}, {pipeline_mode = #tpu.pipeline_mode<synchronous>, transform_indices = @transform_1, window_bounds = array<i64: 324, 169>}, {pipeline_mode = #tpu.pipeline_mode<synchronous>, transform_indices = @transform_2, window_bounds = array<i64: 32, 32>}, {transform_indices = @transform_3, window_bounds = array<i64: 32, 1>}, {transform_indices = @transform_4, window_bounds = array<i64: 32, 1>}, {transform_indices = @transform_5, window_bounds = array<i64: 32, 169>}]} {
    %c0 = arith.constant 0 : index
    %c0_0 = arith.constant 0 : index
    %0 = vector.load %arg1[%c0, %c0_0] : memref<32x324xf32, #tpu.memory_space<vmem>>, vector<32x324xf32>
    %c0_1 = arith.constant 0 : index
    %c0_2 = arith.constant 0 : index
    %1 = vector.load %arg2[%c0_1, %c0_2] : memref<324x169xf32, #tpu.memory_space<vmem>>, vector<324x169xf32>
    %cst = arith.constant dense<0.000000e+00> : vector<32x169xf32>
    %2 = tpu.matmul %0, %1, %cst {dimension_numbers = #tpu.dot_dimension_numbers<[1], [0], [0], [1], [0, 0, 1, 1], [], []>} : vector<32x324xf32>, vector<324x169xf32>, vector<32x169xf32> -> vector<32x169xf32>
    %cst_3 = arith.constant dense<0.000000e+00> : vector<32xf32>
    %3 = vector.multi_reduction <add>, %2, %cst_3 [1] : vector<32x169xf32> to vector<32xf32>
    %4 = vector.shape_cast %3 : vector<32xf32> to vector<32x1xf32>
    %c0_4 = arith.constant 0 : index
    %c0_5 = arith.constant 0 : index
    %5 = vector.load %arg3[%c0_4, %c0_5] : memref<32x32xf32, #tpu.memory_space<vmem>>, vector<32x32xf32>
    %cst_6 = arith.constant dense<0.000000e+00> : vector<32x1xf32>
    %6 = tpu.matmul %5, %4, %cst_6 {dimension_numbers = #tpu.dot_dimension_numbers<[1], [0], [0], [1], [0, 0, 1, 1], [], []>} : vector<32x32xf32>, vector<32x1xf32>, vector<32x1xf32> -> vector<32x1xf32>
    %cst_7 = arith.constant 2.958580e-03 : f32
    %7 = vector.broadcast %cst_7 : f32 to vector<32x1xf32>
    %8 = arith.mulf %6, %7 : vector<32x1xf32>
    %9 = vector.broadcast %8 : vector<32x1xf32> to vector<32x169xf32>
    %10 = arith.subf %2, %9 : vector<32x169xf32>
    %11 = arith.mulf %10, %10 : vector<32x169xf32>
    %cst_8 = arith.constant dense<0.000000e+00> : vector<32xf32>
    %12 = vector.multi_reduction <add>, %11, %cst_8 [1] : vector<32x169xf32> to vector<32xf32>
    %13 = vector.shape_cast %12 : vector<32xf32> to vector<32x1xf32>
    %c0_9 = arith.constant 0 : index
    %c0_10 = arith.constant 0 : index
    %14 = vector.load %arg3[%c0_9, %c0_10] : memref<32x32xf32, #tpu.memory_space<vmem>>, vector<32x32xf32>
    %cst_11 = arith.constant dense<0.000000e+00> : vector<32x1xf32>
    %15 = tpu.matmul %14, %13, %cst_11 {dimension_numbers = #tpu.dot_dimension_numbers<[1], [0], [0], [1], [0, 0, 1, 1], [], []>} : vector<32x32xf32>, vector<32x1xf32>, vector<32x1xf32> -> vector<32x1xf32>
    %cst_12 = arith.constant 2.958580e-03 : f32
    %16 = vector.broadcast %cst_12 : f32 to vector<32x1xf32>
    %17 = arith.mulf %15, %16 : vector<32x1xf32>
    %cst_13 = arith.constant 9.99999974E-6 : f32
    %18 = vector.broadcast %cst_13 : f32 to vector<32x1xf32>
    %19 = arith.addf %17, %18 : vector<32x1xf32>
    %20 = math.rsqrt %19 : vector<32x1xf32>
    %21 = vector.broadcast %20 : vector<32x1xf32> to vector<32x169xf32>
    %22 = arith.mulf %10, %21 : vector<32x169xf32>
    %c0_14 = arith.constant 0 : index
    %c0_15 = arith.constant 0 : index
    %23 = vector.load %arg4[%c0_14, %c0_15] : memref<32x1xf32, #tpu.memory_space<vmem>>, vector<32x1xf32>
    %24 = vector.broadcast %23 : vector<32x1xf32> to vector<32x169xf32>
    %25 = arith.mulf %22, %24 : vector<32x169xf32>
    %c0_16 = arith.constant 0 : index
    %c0_17 = arith.constant 0 : index
    %26 = vector.load %arg5[%c0_16, %c0_17] : memref<32x1xf32, #tpu.memory_space<vmem>>, vector<32x1xf32>
    %27 = vector.broadcast %26 : vector<32x1xf32> to vector<32x169xf32>
    %28 = arith.addf %25, %27 : vector<32x169xf32>
    %cst_18 = arith.constant 0.000000e+00 : f32
    %29 = vector.broadcast %cst_18 : f32 to vector<32x169xf32>
    %30 = arith.maximumf %28, %29 : vector<32x169xf32>
    %c0_19 = arith.constant 0 : index
    %c0_20 = arith.constant 0 : index
    %31 = vector.load %arg6[%c0_19, %c0_20] : memref<32x169xf32, #tpu.memory_space<vmem>>, vector<32x169xf32>
    tpu.vector_store %arg6[%c0_19, %c0_20], %30 {strides = array<i32>} : memref<32x169xf32, #tpu.memory_space<vmem>>, vector<32x169xf32>,
    return
  }
  func.func @transform_0(%arg0: i32) -> (i32, i32) {
    %c0_i32 = arith.constant 0 : i32
    %c0_i32_0 = arith.constant 0 : i32
    return %arg0, %c0_i32 : i32, i32
  }
  func.func @transform_1(%arg0: i32) -> (i32, i32) {
    %c0_i32 = arith.constant 0 : i32
    %c0_i32_0 = arith.constant 0 : i32
    %c0_i32_1 = arith.constant 0 : i32
    return %c0_i32, %c0_i32_0 : i32, i32
  }
  func.func @transform_2(%arg0: i32) -> (i32, i32) {
    %c0_i32 = arith.constant 0 : i32
    %c0_i32_0 = arith.constant 0 : i32
    %c0_i32_1 = arith.constant 0 : i32
    return %c0_i32, %c0_i32_0 : i32, i32
  }
  func.func @transform_3(%arg0: i32) -> (i32, i32) {
    %c0_i32 = arith.constant 0 : i32
    %c0_i32_0 = arith.constant 0 : i32
    return %arg0, %c0_i32 : i32, i32
  }
  func.func @transform_4(%arg0: i32) -> (i32, i32) {
    %c0_i32 = arith.constant 0 : i32
    %c0_i32_0 = arith.constant 0 : i32
    return %arg0, %c0_i32 : i32, i32
  }
  func.func @transform_5(%arg0: i32) -> (i32, i32) {
    %c0_i32 = arith.constant 0 : i32
    %c0_i32_0 = arith.constant 0 : i32
    return %arg0, %c0_i32 : i32, i32
  }
}

module attributes {stable_mosaic.version = 11 : i64} {
  func.func @_gemm_kernel(%arg0: memref<338x16xf32, #tpu.memory_space<vmem>>, %arg1: memref<16x48xf32, #tpu.memory_space<vmem>>, %arg2: memref<338x48xf32, #tpu.memory_space<vmem>>) attributes {dimension_semantics = [], scalar_prefetch = 0 : i64, scratch_operands = 0 : i64, tpu.core_type = #tpu.core_type<tc>} {
    %c0 = arith.constant 0 : index
    %c0_0 = arith.constant 0 : index
    %0 = vector.load %arg0[%c0, %c0_0] : memref<338x16xf32, #tpu.memory_space<vmem>>, vector<338x16xf32>
    %c0_1 = arith.constant 0 : index
    %c0_2 = arith.constant 0 : index
    %1 = vector.load %arg1[%c0_1, %c0_2] : memref<16x48xf32, #tpu.memory_space<vmem>>, vector<16x48xf32>
    %cst = arith.constant dense<0.000000e+00> : vector<338x48xf32>
    %2 = tpu.matmul %0, %1, %cst {dimension_numbers = #tpu.dot_dimension_numbers<[1], [0], [0], [1], [0, 0, 1, 1], [], []>} : vector<338x16xf32>, vector<16x48xf32>, vector<338x48xf32> -> vector<338x48xf32>
    %c0_3 = arith.constant 0 : index
    %c0_4 = arith.constant 0 : index
    %3 = vector.load %arg2[%c0_3, %c0_4] : memref<338x48xf32, #tpu.memory_space<vmem>>, vector<338x48xf32>
    tpu.vector_store %arg2[%c0_3, %c0_4], %2 {strides = array<i32>} : memref<338x48xf32, #tpu.memory_space<vmem>>, vector<338x48xf32>,
    return
  }
}

module attributes {stable_mosaic.version = 11 : i64} {
  func.func @_col2im_tanh_kernel(%arg0: i32, %arg1: memref<6x2704xf32, #tpu.memory_space<vmem>>, %arg2: memref<2704x784xbf16, #tpu.memory_space<vmem>>, %arg3: memref<6x1xf32, #tpu.memory_space<vmem>>, %arg4: memref<6x784xf32, #tpu.memory_space<vmem>>) attributes {dimension_semantics = [#tpu.dimension_semantics<parallel>], iteration_bounds = array<i64: 1>, scalar_prefetch = 0 : i64, scratch_operands = 0 : i64, tpu.core_type = #tpu.core_type<tc>, window_params = [{transform_indices = @transform_0, window_bounds = array<i64: 6, 2704>}, {pipeline_mode = #tpu.pipeline_mode<synchronous>, transform_indices = @transform_1, window_bounds = array<i64: 2704, 784>}, {transform_indices = @transform_2, window_bounds = array<i64: 6, 1>}, {transform_indices = @transform_3, window_bounds = array<i64: 6, 784>}]} {
    %c0 = arith.constant 0 : index
    %c0_0 = arith.constant 0 : index
    %0 = vector.load %arg1[%c0, %c0_0] : memref<6x2704xf32, #tpu.memory_space<vmem>>, vector<6x2704xf32>
    %1 = arith.truncf %0 : vector<6x2704xf32> to vector<6x2704xbf16>
    %c0_1 = arith.constant 0 : index
    %c0_2 = arith.constant 0 : index
    %2 = vector.load %arg2[%c0_1, %c0_2] : memref<2704x784xbf16, #tpu.memory_space<vmem>>, vector<2704x784xbf16>
    %cst = arith.constant dense<0.000000e+00> : vector<6x784xf32>
    %3 = tpu.matmul %1, %2, %cst {dimension_numbers = #tpu.dot_dimension_numbers<[1], [0], [0], [1], [0, 0, 1, 1], [], []>} : vector<6x2704xbf16>, vector<2704x784xbf16>, vector<6x784xf32> -> vector<6x784xf32>
    %c0_3 = arith.constant 0 : index
    %c0_4 = arith.constant 0 : index
    %4 = vector.load %arg3[%c0_3, %c0_4] : memref<6x1xf32, #tpu.memory_space<vmem>>, vector<6x1xf32>
    %5 = vector.broadcast %4 : vector<6x1xf32> to vector<6x784xf32>
    %6 = arith.addf %3, %5 : vector<6x784xf32>
    %7 = math.tanh %6 : vector<6x784xf32>
    %c0_5 = arith.constant 0 : index
    %c0_6 = arith.constant 0 : index
    %8 = vector.load %arg4[%c0_5, %c0_6] : memref<6x784xf32, #tpu.memory_space<vmem>>, vector<6x784xf32>
    tpu.vector_store %arg4[%c0_5, %c0_6], %7 {strides = array<i32>} : memref<6x784xf32, #tpu.memory_space<vmem>>, vector<6x784xf32>,
    return
  }
  func.func @transform_0(%arg0: i32) -> (i32, i32) {
    %c0_i32 = arith.constant 0 : i32
    %c0_i32_0 = arith.constant 0 : i32
    return %arg0, %c0_i32 : i32, i32
  }
  func.func @transform_1(%arg0: i32) -> (i32, i32) {
    %c0_i32 = arith.constant 0 : i32
    %c0_i32_0 = arith.constant 0 : i32
    %c0_i32_1 = arith.constant 0 : i32
    return %c0_i32, %c0_i32_0 : i32, i32
  }
  func.func @transform_2(%arg0: i32) -> (i32, i32) {
    %c0_i32 = arith.constant 0 : i32
    %c0_i32_0 = arith.constant 0 : i32
    return %arg0, %c0_i32 : i32, i32
  }
  func.func @transform_3(%arg0: i32) -> (i32, i32) {
    %c0_i32 = arith.constant 0 : i32
    %c0_i32_0 = arith.constant 0 : i32
    return %arg0, %c0_i32 : i32, i32
  }
}

</mosaic_0001>

<llo_original>
// kernel: generator_forward.7
$region0: #{generator_forward.7}
  #allocation0 [shape = 'u32[]', space=smem, size = 0x4, offset = 0x4, fixed_abs, tag = 'smem constant byte address 0x4 - core index']
  #allocation1 [shape = 'u32[72,128]{1,0:T(1,128)}', space=vmem, size = 0x9000, scoped, tag = 'internal scratch']
  %s0 = inlined_call_operand.hbm [shape: f32[2,10], index: 0, kind: input, shape index: {}]
  %s1 = inlined_call_operand.vmem [shape: f32[10,576], index: 1, kind: input, shape index: {}]
  %s2 = inlined_call_operand.hbm [shape: f32[1,64], index: 2, kind: input, shape index: {}]
  %s3 = inlined_call_operand.hbm [shape: f32[1,64], index: 3, kind: input, shape index: {}]
  %s4 = inlined_call_operand.hbm [shape: f32[576,64], index: 4, kind: input, shape index: {}]
  %s5 = inlined_call_operand.hbm [shape: f32[64,576], index: 5, kind: input, shape index: {}]
  %s6 = inlined_call_operand.vmem [shape: f32[2,576], index: 6, kind: output, shape index: {}]
  %s7 = sld [smem:[#allocation0]]
  $region54: #{generator_forward.7} parent=0
    _
  %s9 = ssub.s32 1, %s7
  %s10 = scalar_select 0, %s9, %s7
  $region1: #{generator_forward.7} parent=0
    #allocation2 [shape = 'u8[1024]{0}', space=vmem, size = 0x400, scoped, tag = 'input window, operand 0, single buffered']
    #allocation3 [shape = 's32[1]{0}', space=sflag, size = 0x4, scoped, tag = 'scoped memory for generator_forward.7']
    #allocation4 [shape = 'u8[512]{0}', space=vmem, size = 0x400, scoped, tag = 'input window, operand 2, single buffered']
    #allocation5 [shape = 's32[1]{0}', space=sflag, size = 0x4, scoped, tag = 'scoped memory for generator_forward.7']
    #allocation6 [shape = 'u8[512]{0}', space=vmem, size = 0x400, scoped, tag = 'input window, operand 3, single buffered']
    #allocation7 [shape = 'u8[294912]{0}', space=vmem, size = 0x48000, scoped, tag = 'input window, operand 4, single buffered']
    #allocation8 [shape = 's32[1]{0}', space=sflag, size = 0x4, scoped, tag = 'scoped memory for generator_forward.7']
    #allocation9 [shape = 'u8[163840]{0}', space=vmem, size = 0x28000, scoped, tag = 'input window, operand 5, single buffered']
    %11 = vsyncpa [#allocation3], 0
    %12 = vsyncpa [#allocation5], 0
    %13 = vsyncpa [#allocation8], 0
    // Predicated region
    $region2: #{generator_forward.7} parent=1 // pred_check
      _
    $region3: #{generator_forward.7} parent=1 // pred_check_branch
      %15 = sbr.rel (0) target = $region5
    $region4: #{generator_forward.7} parent=1 // pred_region
      %17 = vsyncadd [#allocation3], 0
      %s19 = sshll.u32 %s0, 4
      %s20 = int_to_ptr.hbm [resolvable:$true] %s19
      %s21 = sshll.u32 [#allocation2], 4
      %s22 = int_to_ptr.vmem [resolvable:$true] %s21
      %24 = dma.hbm_to_vmem [thread:$0]  %s20, 32, %s22, [#allocation3]
    $region5: #{generator_forward.7} parent=1 // pred_fallthru
      _
    // Predicated region
    $region6: #{generator_forward.7} parent=1 // pred_check
      _
    $region7: #{generator_forward.7} parent=1 // pred_check_branch
      %26 = sbr.rel (0) target = $region9
    $region8: #{generator_forward.7} parent=1 // pred_region
      _
    $region9: #{generator_forward.7} parent=1 // pred_fallthru
      _
    // Predicated region
    $region10: #{generator_forward.7} parent=1 // pred_check
      _
    $region11: #{generator_forward.7} parent=1 // pred_check_branch
      %28 = sbr.rel (0) target = $region13
    $region12: #{generator_forward.7} parent=1 // pred_region
      %30 = vsyncadd [#allocation5], 0
      %s32 = sshll.u32 %s2, 4
      %s33 = int_to_ptr.hbm [resolvable:$true] %s32
      %s34 = sshll.u32 [#allocation4], 4
      %s35 = int_to_ptr.vmem [resolvable:$true] %s34
      %37 = dma.hbm_to_vmem [thread:$0]  %s33, 16, %s35, [#allocation5]
    $region13: #{generator_forward.7} parent=1 // pred_fallthru
      _
    // Predicated region
    $region14: #{generator_forward.7} parent=1 // pred_check
      _
    $region15: #{generator_forward.7} parent=1 // pred_check_branch
      %39 = sbr.rel (0) target = $region17
    $region16: #{generator_forward.7} parent=1 // pred_region
      %41 = vsyncadd [#allocation5], 0
      %s43 = sshll.u32 %s3, 4
      %s44 = int_to_ptr.hbm [resolvable:$true] %s43
      %s45 = sshll.u32 [#allocation6], 4
      %s46 = int_to_ptr.vmem [resolvable:$true] %s45
      %48 = dma.hbm_to_vmem [thread:$0]  %s44, 16, %s46, [#allocation5]
    $region17: #{generator_forward.7} parent=1 // pred_fallthru
      _
    // Predicated region
    $region18: #{generator_forward.7} parent=1 // pred_check
      _
    $region19: #{generator_forward.7} parent=1 // pred_check_branch
      %50 = sbr.rel (0) target = $region21
    $region20: #{generator_forward.7} parent=1 // pred_region
      %52 = vsyncadd [#allocation8], 0
      %s53 = sshll.u32 %s4, 4
      %s54 = int_to_ptr.hbm [resolvable:$true] %s53
      %s55 = sshll.u32 [#allocation7], 4
      %s56 = int_to_ptr.vmem [resolvable:$true] %s55
      %61 = dma.hbm_to_vmem [thread:$0]  %s54, 9216, %s56, [#allocation8], 128, 128, 8
    $region21: #{generator_forward.7} parent=1 // pred_fallthru
      _
    // Predicated region
    $region22: #{generator_forward.7} parent=1 // pred_check
      _
    $region23: #{generator_forward.7} parent=1 // pred_check_branch
      %63 = sbr.rel (0) target = $region25
    $region24: #{generator_forward.7} parent=1 // pred_region
      %65 = vsyncadd [#allocation8], 0
      %s66 = sshll.u32 %s5, 4
      %s67 = int_to_ptr.hbm [resolvable:$true] %s66
      %s68 = sshll.u32 [#allocation9], 4
      %s69 = int_to_ptr.vmem [resolvable:$true] %s68
      %74 = dma.hbm_to_vmem [thread:$0]  %s67, 5120, %s69, [#allocation8], 640, 640, 40
    $region25: #{generator_forward.7} parent=1 // pred_fallthru
      _
    // Predicated region
    $region26: #{generator_forward.7} parent=1 // pred_check
      _
    $region27: #{generator_forward.7} parent=1 // pred_check_branch
      %76 = sbr.rel (0) target = $region29
    $region28: #{generator_forward.7} parent=1 // pred_region
      %78 = dma.done [#allocation3], 32
    $region29: #{generator_forward.7} parent=1 // pred_fallthru
      _
    // Predicated region
    $region30: #{generator_forward.7} parent=1 // pred_check
      _
    $region31: #{generator_forward.7} parent=1 // pred_check_branch
      %80 = sbr.rel (0) target = $region33
    $region32: #{generator_forward.7} parent=1 // pred_region
      %82 = dma.done [#allocation5], 16
    $region33: #{generator_forward.7} parent=1 // pred_fallthru
      _
    // Predicated region
    $region34: #{generator_forward.7} parent=1 // pred_check
      _
    $region35: #{generator_forward.7} parent=1 // pred_check_branch
      %84 = sbr.rel (0) target = $region37
    $region36: #{generator_forward.7} parent=1 // pred_region
      %86 = dma.done [#allocation5], 16
    $region37: #{generator_forward.7} parent=1 // pred_fallthru
      _
    // Predicated region
    $region38: #{generator_forward.7} parent=1 // pred_check
      _
    $region39: #{generator_forward.7} parent=1 // pred_check_branch
      %88 = sbr.rel (0) target = $region41
    $region40: #{generator_forward.7} parent=1 // pred_region
      %90 = dma.done [#allocation8], 9216
    $region41: #{generator_forward.7} parent=1 // pred_fallthru
      _
    // Predicated region
    $region42: #{generator_forward.7} parent=1 // pred_check
      _
    $region43: #{generator_forward.7} parent=1 // pred_check_branch
      %92 = sbr.rel (0) target = $region45
    $region44: #{generator_forward.7} parent=1 // pred_region
      %94 = dma.done [#allocation8], 5120
    $region45: #{generator_forward.7} parent=1 // pred_fallthru
      _
    %v95 = vld [vmem:[#allocation2] sm:$0x3]
    %v96 = vld [vmem:[%s1] sm:$0xff]
    %v97 = vld [vmem:[%s1 + $0x8] sm:$0xff]
    %v98 = vld [vmem:[%s1 + $0x10] sm:$0xff]
    %v99 = vld [vmem:[%s1 + $0x18] sm:$0xff]
    %v100 = vld [vmem:[%s1 + $0x20] sm:$0xff]
    %v101 = vld [vmem:[%s1 + $0x28] sm:$0x3]
    %v102 = vld [vmem:[%s1 + $0x30] sm:$0x3]
    %v103 = vld [vmem:[%s1 + $0x38] sm:$0x3]
    %v104 = vld [vmem:[%s1 + $0x40] sm:$0x3]
    %v105 = vld [vmem:[%s1 + $0x48] sm:$0x3]
    %vm106 = vcmask 80896
    %v108 = vsel %vm106, %v95, 0
    %vm110 = vcmask 1041408
    %v112 = vsel %vm110, %v101, 0
    %v115 = vsel %vm110, %v102, 0
    %v118 = vsel %vm110, %v103, 0
    %v121 = vsel %vm110, %v104, 0
    %v124 = vsel %vm110, %v105, 0
    %126 = vmatpush.msra.mxu0 0.0
    %127 = vmatpush.msra.mxu0 0.0
    %128 = vmatpush.msra.mxu0 0.0
    %129 = vmatpush.msra.mxu0 0.0
    %130 = vmatpush.msra.mxu0 0.0
    %131 = vmatpush.msra.mxu0 0.0
    %132 = vmatpush.msra.mxu0 0.0
    %133 = vmatpush.msra.mxu0 0.0
    %134 = vmatpush.msra.mxu0 0.0
    %135 = vmatpush.msra.mxu0 0.0
    %136 = vmatpush.msra.mxu0 0.0
    %137 = vmatpush.msra.mxu0 0.0
    %138 = vmatpush.msra.mxu0 0.0
    %139 = vmatpush.msra.mxu0 0.0
    %140 = vmatpush.msra.mxu0 %v112
    %141 = vmatpush.msra.mxu0 %v96
    %142 = vmatmul.f32.gmra.mxu0 %v108
    %v143 = vpop.f32.mrf.mxu0
    %v144 = vadd.f32 0.0, %v143
    %145 = vdwg.mxu0
    %146 = vmatpush.msra.mxu0 0.0
    %147 = vmatpush.msra.mxu0 0.0
    %148 = vmatpush.msra.mxu0 0.0
    %149 = vmatpush.msra.mxu0 0.0
    %150 = vmatpush.msra.mxu0 0.0
    %151 = vmatpush.msra.mxu0 0.0
    %152 = vmatpush.msra.mxu0 0.0
    %153 = vmatpush.msra.mxu0 0.0
    %154 = vmatpush.msra.mxu0 0.0
    %155 = vmatpush.msra.mxu0 0.0
    %156 = vmatpush.msra.mxu0 0.0
    %157 = vmatpush.msra.mxu0 0.0
    %158 = vmatpush.msra.mxu0 0.0
    %159 = vmatpush.msra.mxu0 0.0
    %160 = vmatpush.msra.mxu0 %v115
    %161 = vmatpush.msra.mxu0 %v97
    %162 = vmatmul.f32.gmra.mxu0 %v108
    %v163 = vpop.f32.mrf.mxu0
    %v164 = vadd.f32 0.0, %v163
    %165 = vdwg.mxu0
    %166 = vmatpush.msra.mxu0 0.0
    %167 = vmatpush.msra.mxu0 0.0
    %168 = vmatpush.msra.mxu0 0.0
    %169 = vmatpush.msra.mxu0 0.0
    %170 = vmatpush.msra.mxu0 0.0
    %171 = vmatpush.msra.mxu0 0.0
    %172 = vmatpush.msra.mxu0 0.0
    %173 = vmatpush.msra.mxu0 0.0
    %174 = vmatpush.msra.mxu0 0.0
    %175 = vmatpush.msra.mxu0 0.0
    %176 = vmatpush.msra.mxu0 0.0
    %177 = vmatpush.msra.mxu0 0.0
    %178 = vmatpush.msra.mxu0 0.0
    %179 = vmatpush.msra.mxu0 0.0
    %180 = vmatpush.msra.mxu0 %v118
    %181 = vmatpush.msra.mxu0 %v98
    %182 = vmatmul.f32.gmra.mxu0 %v108
    %v183 = vpop.f32.mrf.mxu0
    %v184 = vadd.f32 0.0, %v183
    %185 = vdwg.mxu0
    %186 = vmatpush.msra.mxu0 0.0
    %187 = vmatpush.msra.mxu0 0.0
    %188 = vmatpush.msra.mxu0 0.0
    %189 = vmatpush.msra.mxu0 0.0
    %190 = vmatpush.msra.mxu0 0.0
    %191 = vmatpush.msra.mxu0 0.0
    %192 = vmatpush.msra.mxu0 0.0
    %193 = vmatpush.msra.mxu0 0.0
    %194 = vmatpush.msra.mxu0 0.0
    %195 = vmatpush.msra.mxu0 0.0
    %196 = vmatpush.msra.mxu0 0.0
    %197 = vmatpush.msra.mxu0 0.0
    %198 = vmatpush.msra.mxu0 0.0
    %199 = vmatpush.msra.mxu0 0.0
    %200 = vmatpush.msra.mxu0 %v121
    %201 = vmatpush.msra.mxu0 %v99
    %202 = vmatmul.f32.gmra.mxu0 %v108
    %v203 = vpop.f32.mrf.mxu0
    %v204 = vadd.f32 0.0, %v203
    %205 = vdwg.mxu0
    %206 = vmatpush.msra.mxu0 0.0
    %207 = vmatpush.msra.mxu0 0.0
    %208 = vmatpush.msra.mxu0 0.0
    %209 = vmatpush.msra.mxu0 0.0
    %210 = vmatpush.msra.mxu0 0.0
    %211 = vmatpush.msra.mxu0 0.0
    %212 = vmatpush.msra.mxu0 0.0
    %213 = vmatpush.msra.mxu0 0.0
    %214 = vmatpush.msra.mxu0 0.0
    %215 = vmatpush.msra.mxu0 0.0
    %216 = vmatpush.msra.mxu0 0.0
    %217 = vmatpush.msra.mxu0 0.0
    %218 = vmatpush.msra.mxu0 0.0
    %219 = vmatpush.msra.mxu0 0.0
    %220 = vmatpush.msra.mxu0 %v124
    %221 = vmatpush.msra.mxu0 %v100
    %222 = vmatmul.f32.gmra.mxu0 %v108
    %v223 = vpop.f32.mrf.mxu0
    %v224 = vadd.f32 0.0, %v223
    %225 = vdwg.mxu0
    %v226 = vld [vmem:[#allocation7] sm:$0xff]
    %v227 = vld [vmem:[#allocation7 + $0x8] sm:$0xff]
    %v228 = vld [vmem:[#allocation7 + $0x10] sm:$0xff]
    %v229 = vld [vmem:[#allocation7 + $0x18] sm:$0xff]
    %v230 = vld [vmem:[#allocation7 + $0x20] sm:$0xff]
    %v231 = vld [vmem:[#allocation7 + $0x28] sm:$0xff]
    %v232 = vld [vmem:[#allocation7 + $0x30] sm:$0xff]
    %v233 = vld [vmem:[#allocation7 + $0x38] sm:$0xff]
    %v234 = vld [vmem:[#allocation7 + $0x40] sm:$0xff]
    %v235 = vld [vmem:[#allocation7 + $0x48] sm:$0xff]
    %v236 = vld [vmem:[#allocation7 + $0x50] sm:$0xff]
    %v237 = vld [vmem:[#allocation7 + $0x58] sm:$0xff]
    %v238 = vld [vmem:[#allocation7 + $0x60] sm:$0xff]
    %v239 = vld [vmem:[#allocation7 + $0x68] sm:$0xff]
    %v240 = vld [vmem:[#allocation7 + $0x70] sm:$0xff]
    %v241 = vld [vmem:[#allocation7 + $0x78] sm:$0xff]
    %v242 = vld [vmem:[#allocation7 + $0x80] sm:$0xff]
    %v243 = vld [vmem:[#allocation7 + $0x88] sm:$0xff]
    %v244 = vld [vmem:[#allocation7 + $0x90] sm:$0xff]
    %v245 = vld [vmem:[#allocation7 + $0x98] sm:$0xff]
    %v246 = vld [vmem:[#allocation7 + $0xa0] sm:$0xff]
    %v247 = vld [vmem:[#allocation7 + $0xa8] sm:$0xff]
    %v248 = vld [vmem:[#allocation7 + $0xb0] sm:$0xff]
    %v249 = vld [vmem:[#allocation7 + $0xb8] sm:$0xff]
    %v250 = vld [vmem:[#allocation7 + $0xc0] sm:$0xff]
    %v251 = vld [vmem:[#allocation7 + $0xc8] sm:$0xff]
    %v252 = vld [vmem:[#allocation7 + $0xd0] sm:$0xff]
    %v253 = vld [vmem:[#allocation7 + $0xd8] sm:$0xff]
    %v254 = vld [vmem:[#allocation7 + $0xe0] sm:$0xff]
    %v255 = vld [vmem:[#allocation7 + $0xe8] sm:$0xff]
    %v256 = vld [vmem:[#allocation7 + $0xf0] sm:$0xff]
    %v257 = vld [vmem:[#allocation7 + $0xf8] sm:$0xff]
    %v258 = vld [vmem:[#allocation7 + $0x100] sm:$0xff]
    %v259 = vld [vmem:[#allocation7 + $0x108] sm:$0xff]
    %v260 = vld [vmem:[#allocation7 + $0x110] sm:$0xff]
    %v261 = vld [vmem:[#allocation7 + $0x118] sm:$0xff]
    %v262 = vld [vmem:[#allocation7 + $0x120] sm:$0xff]
    %v263 = vld [vmem:[#allocation7 + $0x128] sm:$0xff]
    %v264 = vld [vmem:[#allocation7 + $0x130] sm:$0xff]
    %v265 = vld [vmem:[#allocation7 + $0x138] sm:$0xff]
    %v266 = vld [vmem:[#allocation7 + $0x140] sm:$0xff]
    %v267 = vld [vmem:[#allocation7 + $0x148] sm:$0xff]
    %v268 = vld [vmem:[#allocation7 + $0x150] sm:$0xff]
    %v269 = vld [vmem:[#allocation7 + $0x158] sm:$0xff]
    %v270 = vld [vmem:[#allocation7 + $0x160] sm:$0xff]
    %v271 = vld [vmem:[#allocation7 + $0x168] sm:$0xff]
    %v272 = vld [vmem:[#allocation7 + $0x170] sm:$0xff]
    %v273 = vld [vmem:[#allocation7 + $0x178] sm:$0xff]
    %v274 = vld [vmem:[#allocation7 + $0x180] sm:$0xff]
    %v275 = vld [vmem:[#allocation7 + $0x188] sm:$0xff]
    %v276 = vld [vmem:[#allocation7 + $0x190] sm:$0xff]
    %v277 = vld [vmem:[#allocation7 + $0x198] sm:$0xff]
    %v278 = vld [vmem:[#allocation7 + $0x1a0] sm:$0xff]
    %v279 = vld [vmem:[#allocation7 + $0x1a8] sm:$0xff]
    %v280 = vld [vmem:[#allocation7 + $0x1b0] sm:$0xff]
    %v281 = vld [vmem:[#allocation7 + $0x1b8] sm:$0xff]
    %v282 = vld [vmem:[#allocation7 + $0x1c0] sm:$0xff]
    %v283 = vld [vmem:[#allocation7 + $0x1c8] sm:$0xff]
    %v284 = vld [vmem:[#allocation7 + $0x1d0] sm:$0xff]
    %v285 = vld [vmem:[#allocation7 + $0x1d8] sm:$0xff]
    %v286 = vld [vmem:[#allocation7 + $0x1e0] sm:$0xff]
    %v287 = vld [vmem:[#allocation7 + $0x1e8] sm:$0xff]
    %v288 = vld [vmem:[#allocation7 + $0x1f0] sm:$0xff]
    %v289 = vld [vmem:[#allocation7 + $0x1f8] sm:$0xff]
    %v290 = vld [vmem:[#allocation7 + $0x200] sm:$0xff]
    %v291 = vld [vmem:[#allocation7 + $0x208] sm:$0xff]
    %v292 = vld [vmem:[#allocation7 + $0x210] sm:$0xff]
    %v293 = vld [vmem:[#allocation7 + $0x218] sm:$0xff]
    %v294 = vld [vmem:[#allocation7 + $0x220] sm:$0xff]
    %v295 = vld [vmem:[#allocation7 + $0x228] sm:$0xff]
    %v296 = vld [vmem:[#allocation7 + $0x230] sm:$0xff]
    %v297 = vld [vmem:[#allocation7 + $0x238] sm:$0xff]
    %v298 = vld [vmem:[#allocation9] sm:$0xff]
    %v299 = vld [vmem:[#allocation9 + $0x8] sm:$0xff]
    %v300 = vld [vmem:[#allocation9 + $0x10] sm:$0xff]
    %v301 = vld [vmem:[#allocation9 + $0x18] sm:$0xff]
    %v302 = vld [vmem:[#allocation9 + $0x20] sm:$0xff]
    %v303 = vld [vmem:[#allocation9 + $0x28] sm:$0xff]
    %v304 = vld [vmem:[#allocation9 + $0x30] sm:$0xff]
    %v305 = vld [vmem:[#allocation9 + $0x38] sm:$0xff]
    %v306 = vld [vmem:[#allocation9 + $0x40] sm:$0xff]
    %v307 = vld [vmem:[#allocation9 + $0x48] sm:$0xff]
    %v308 = vld [vmem:[#allocation9 + $0x50] sm:$0xff]
    %v309 = vld [vmem:[#allocation9 + $0x58] sm:$0xff]
    %v310 = vld [vmem:[#allocation9 + $0x60] sm:$0xff]
    %v311 = vld [vmem:[#allocation9 + $0x68] sm:$0xff]
    %v312 = vld [vmem:[#allocation9 + $0x70] sm:$0xff]
    %v313 = vld [vmem:[#allocation9 + $0x78] sm:$0xff]
    %v314 = vld [vmem:[#allocation9 + $0x80] sm:$0xff]
    %v315 = vld [vmem:[#allocation9 + $0x88] sm:$0xff]
    %v316 = vld [vmem:[#allocation9 + $0x90] sm:$0xff]
    %v317 = vld [vmem:[#allocation9 + $0x98] sm:$0xff]
    %v318 = vld [vmem:[#allocation9 + $0xa0] sm:$0xff]
    %v319 = vld [vmem:[#allocation9 + $0xa8] sm:$0xff]
    %v320 = vld [vmem:[#allocation9 + $0xb0] sm:$0xff]
    %v321 = vld [vmem:[#allocation9 + $0xb8] sm:$0xff]
    %v322 = vld [vmem:[#allocation9 + $0xc0] sm:$0xff]
    %v323 = vld [vmem:[#allocation9 + $0xc8] sm:$0xff]
    %v324 = vld [vmem:[#allocation9 + $0xd0] sm:$0xff]
    %v325 = vld [vmem:[#allocation9 + $0xd8] sm:$0xff]
    %v326 = vld [vmem:[#allocation9 + $0xe0] sm:$0xff]
    %v327 = vld [vmem:[#allocation9 + $0xe8] sm:$0xff]
    %v328 = vld [vmem:[#allocation9 + $0xf0] sm:$0xff]
    %v329 = vld [vmem:[#allocation9 + $0xf8] sm:$0xff]
    %v330 = vld [vmem:[#allocation9 + $0x100] sm:$0xff]
    %v331 = vld [vmem:[#allocation9 + $0x108] sm:$0xff]
    %v332 = vld [vmem:[#allocation9 + $0x110] sm:$0xff]
    %v333 = vld [vmem:[#allocation9 + $0x118] sm:$0xff]
    %v334 = vld [vmem:[#allocation9 + $0x120] sm:$0xff]
    %v335 = vld [vmem:[#allocation9 + $0x128] sm:$0xff]
    %v336 = vld [vmem:[#allocation9 + $0x130] sm:$0xff]
    %v337 = vld [vmem:[#allocation9 + $0x138] sm:$0xff]
    %vm338 = vcmask 523264
    %v340 = vsel %vm338, %v224, 0
    %342 = vmatpush.msra.mxu0 %v241
    %343 = vmatpush.msra.mxu0 %v240
    %344 = vmatpush.msra.mxu0 %v239
    %345 = vmatpush.msra.mxu0 %v238
    %346 = vmatpush.msra.mxu0 %v237
    %347 = vmatpush.msra.mxu0 %v236
    %348 = vmatpush.msra.mxu0 %v235
    %349 = vmatpush.msra.mxu0 %v234
    %350 = vmatpush.msra.mxu0 %v233
    %351 = vmatpush.msra.mxu0 %v232
    %352 = vmatpush.msra.mxu0 %v231
    %353 = vmatpush.msra.mxu0 %v230
    %354 = vmatpush.msra.mxu0 %v229
    %355 = vmatpush.msra.mxu0 %v228
    %356 = vmatpush.msra.mxu0 %v227
    %357 = vmatpush.msra.mxu0 %v226
    %358 = vmatmul.f32.gmra.mxu0 %v144
    %v359 = vpop.f32.mrf.mxu0
    %v360 = vadd.f32 0.0, %v359
    %361 = vdwg.mxu0
    %362 = vmatpush.msra.mxu0 %v257
    %363 = vmatpush.msra.mxu0 %v256
    %364 = vmatpush.msra.mxu0 %v255
    %365 = vmatpush.msra.mxu0 %v254
    %366 = vmatpush.msra.mxu0 %v253
    %367 = vmatpush.msra.mxu0 %v252
    %368 = vmatpush.msra.mxu0 %v251
    %369 = vmatpush.msra.mxu0 %v250
    %370 = vmatpush.msra.mxu0 %v249
    %371 = vmatpush.msra.mxu0 %v248
    %372 = vmatpush.msra.mxu0 %v247
    %373 = vmatpush.msra.mxu0 %v246
    %374 = vmatpush.msra.mxu0 %v245
    %375 = vmatpush.msra.mxu0 %v244
    %376 = vmatpush.msra.mxu0 %v243
    %377 = vmatpush.msra.mxu0 %v242
    %378 = vmatmul.f32.gmra.mxu0 %v164
    %v379 = vpop.f32.mrf.mxu0
    %v380 = vadd.f32 %v360, %v379
    %381 = vdwg.mxu0
    %382 = vmatpush.msra.mxu0 %v273
    %383 = vmatpush.msra.mxu0 %v272
    %384 = vmatpush.msra.mxu0 %v271
    %385 = vmatpush.msra.mxu0 %v270
    %386 = vmatpush.msra.mxu0 %v269
    %387 = vmatpush.msra.mxu0 %v268
    %388 = vmatpush.msra.mxu0 %v267
    %389 = vmatpush.msra.mxu0 %v266
    %390 = vmatpush.msra.mxu0 %v265
    %391 = vmatpush.msra.mxu0 %v264
    %392 = vmatpush.msra.mxu0 %v263
    %393 = vmatpush.msra.mxu0 %v262
    %394 = vmatpush.msra.mxu0 %v261
    %395 = vmatpush.msra.mxu0 %v260
    %396 = vmatpush.msra.mxu0 %v259
    %397 = vmatpush.msra.mxu0 %v258
    %398 = vmatmul.f32.gmra.mxu0 %v184
    %v399 = vpop.f32.mrf.mxu0
    %v400 = vadd.f32 %v380, %v399
    %401 = vdwg.mxu0
    %402 = vmatpush.msra.mxu0 %v289
    %403 = vmatpush.msra.mxu0 %v288
    %404 = vmatpush.msra.mxu0 %v287
    %405 = vmatpush.msra.mxu0 %v286
    %406 = vmatpush.msra.mxu0 %v285
    %407 = vmatpush.msra.mxu0 %v284
    %408 = vmatpush.msra.mxu0 %v283
    %409 = vmatpush.msra.mxu0 %v282
    %410 = vmatpush.msra.mxu0 %v281
    %411 = vmatpush.msra.mxu0 %v280
    %412 = vmatpush.msra.mxu0 %v279
    %413 = vmatpush.msra.mxu0 %v278
    %414 = vmatpush.msra.mxu0 %v277
    %415 = vmatpush.msra.mxu0 %v276
    %416 = vmatpush.msra.mxu0 %v275
    %417 = vmatpush.msra.mxu0 %v274
    %418 = vmatmul.f32.gmra.mxu0 %v204
    %v419 = vpop.f32.mrf.mxu0
    %v420 = vadd.f32 %v400, %v419
    %421 = vdwg.mxu0
    %422 = vmatpush.msra.mxu0 0.0
    %423 = vmatpush.msra.mxu0 0.0
    %424 = vmatpush.msra.mxu0 0.0
    %425 = vmatpush.msra.mxu0 0.0
    %426 = vmatpush.msra.mxu0 0.0
    %427 = vmatpush.msra.mxu0 0.0
    %428 = vmatpush.msra.mxu0 0.0
    %429 = vmatpush.msra.mxu0 0.0
    %430 = vmatpush.msra.mxu0 %v297
    %431 = vmatpush.msra.mxu0 %v296
    %432 = vmatpush.msra.mxu0 %v295
    %433 = vmatpush.msra.mxu0 %v294
    %434 = vmatpush.msra.mxu0 %v293
    %435 = vmatpush.msra.mxu0 %v292
    %436 = vmatpush.msra.mxu0 %v291
    %437 = vmatpush.msra.mxu0 %v290
    %438 = vmatmul.f32.gmra.mxu0 %v340
    %v439 = vpop.f32.mrf.mxu0
    %v440 = vadd.f32 %v420, %v439
    %441 = vdwg.mxu0
    %vm442 = vcmask 517120
    %v443 = vsel %vm442, %v440, 0.0
    %v444 = vrot.slane %v443, 4
    %v445 = vadd.f32 %v443, %v444
    %v446 = vrot.slane %v445, 2
    %v447 = vadd.f32 %v445, %v446
    %v448 = vrot.slane %v447, 1
    %v449 = vadd.f32 %v447, %v448
    %v450 = vmul.f32 %v449, 0.055555556
    %v452 = vsel %vm338, %v450, 0
    %454 = vmatpush.msra.mxu0 0.0
    %455 = vmatpush.msra.mxu0 0.0
    %456 = vmatpush.msra.mxu0 0.0
    %457 = vmatpush.msra.mxu0 0.0
    %458 = vmatpush.msra.mxu0 0.0
    %459 = vmatpush.msra.mxu0 0.0
    %460 = vmatpush.msra.mxu0 0.0
    %461 = vmatpush.msra.mxu0 0.0
    %462 = vmatpush.msra.mxu0 %v333
    %463 = vmatpush.msra.mxu0 %v328
    %464 = vmatpush.msra.mxu0 %v323
    %465 = vmatpush.msra.mxu0 %v318
    %466 = vmatpush.msra.mxu0 %v313
    %467 = vmatpush.msra.mxu0 %v308
    %468 = vmatpush.msra.mxu0 %v303
    %469 = vmatpush.msra.mxu0 %v298
    %470 = vmatmul.f32.gmra.mxu0 %v452
    %v471 = vpop.f32.mrf.mxu0
    %v472 = vadd.f32 0.0, %v471
    %473 = vdwg.mxu0
    %474 = vmatpush.msra.mxu0 0.0
    %475 = vmatpush.msra.mxu0 0.0
    %476 = vmatpush.msra.mxu0 0.0
    %477 = vmatpush.msra.mxu0 0.0
    %478 = vmatpush.msra.mxu0 0.0
    %479 = vmatpush.msra.mxu0 0.0
    %480 = vmatpush.msra.mxu0 0.0
    %481 = vmatpush.msra.mxu0 0.0
    %482 = vmatpush.msra.mxu0 %v334
    %483 = vmatpush.msra.mxu0 %v329
    %484 = vmatpush.msra.mxu0 %v324
    %485 = vmatpush.msra.mxu0 %v319
    %486 = vmatpush.msra.mxu0 %v314
    %487 = vmatpush.msra.mxu0 %v309
    %488 = vmatpush.msra.mxu0 %v304
    %489 = vmatpush.msra.mxu0 %v299
    %490 = vmatmul.f32.gmra.mxu0 %v452
    %v491 = vpop.f32.mrf.mxu0
    %v492 = vadd.f32 0.0, %v491
    %493 = vdwg.mxu0
    %494 = vmatpush.msra.mxu0 0.0
    %495 = vmatpush.msra.mxu0 0.0
    %496 = vmatpush.msra.mxu0 0.0
    %497 = vmatpush.msra.mxu0 0.0
    %498 = vmatpush.msra.mxu0 0.0
    %499 = vmatpush.msra.mxu0 0.0
    %500 = vmatpush.msra.mxu0 0.0
    %501 = vmatpush.msra.mxu0 0.0
    %502 = vmatpush.msra.mxu0 %v335
    %503 = vmatpush.msra.mxu0 %v330
    %504 = vmatpush.msra.mxu0 %v325
    %505 = vmatpush.msra.mxu0 %v320
    %506 = vmatpush.msra.mxu0 %v315
    %507 = vmatpush.msra.mxu0 %v310
    %508 = vmatpush.msra.mxu0 %v305
    %509 = vmatpush.msra.mxu0 %v300
    %510 = vmatmul.f32.gmra.mxu0 %v452
    %v511 = vpop.f32.mrf.mxu0
    %v512 = vadd.f32 0.0, %v511
    %513 = vdwg.mxu0
    %514 = vmatpush.msra.mxu0 0.0
    %515 = vmatpush.msra.mxu0 0.0
    %516 = vmatpush.msra.mxu0 0.0
    %517 = vmatpush.msra.mxu0 0.0
    %518 = vmatpush.msra.mxu0 0.0
    %519 = vmatpush.msra.mxu0 0.0
    %520 = vmatpush.msra.mxu0 0.0
    %521 = vmatpush.msra.mxu0 0.0
    %522 = vmatpush.msra.mxu0 %v336
    %523 = vmatpush.msra.mxu0 %v331
    %524 = vmatpush.msra.mxu0 %v326
    %525 = vmatpush.msra.mxu0 %v321
    %526 = vmatpush.msra.mxu0 %v316
    %527 = vmatpush.msra.mxu0 %v311
    %528 = vmatpush.msra.mxu0 %v306
    %529 = vmatpush.msra.mxu0 %v301
    %530 = vmatmul.f32.gmra.mxu0 %v452
    %v531 = vpop.f32.mrf.mxu0
    %v532 = vadd.f32 0.0, %v531
    %533 = vdwg.mxu0
    %534 = vmatpush.msra.mxu0 0.0
    %535 = vmatpush.msra.mxu0 0.0
    %536 = vmatpush.msra.mxu0 0.0
    %537 = vmatpush.msra.mxu0 0.0
    %538 = vmatpush.msra.mxu0 0.0
    %539 = vmatpush.msra.mxu0 0.0
    %540 = vmatpush.msra.mxu0 0.0
    %541 = vmatpush.msra.mxu0 0.0
    %542 = vmatpush.msra.mxu0 %v337
    %543 = vmatpush.msra.mxu0 %v332
    %544 = vmatpush.msra.mxu0 %v327
    %545 = vmatpush.msra.mxu0 %v322
    %546 = vmatpush.msra.mxu0 %v317
    %547 = vmatpush.msra.mxu0 %v312
    %548 = vmatpush.msra.mxu0 %v307
    %549 = vmatpush.msra.mxu0 %v302
    %550 = vmatmul.f32.gmra.mxu0 %v452
    %v551 = vpop.f32.mrf.mxu0
    %v552 = vadd.f32 0.0, %v551
    %553 = vdwg.mxu0
    %v554 = vperm.slane %v472, 0
    %v555 = vperm.slane %v492, 0
    %v556 = vperm.slane %v512, 0
    %v557 = vperm.slane %v532, 0
    %v558 = vperm.slane %v552, 0
    %v559 = vsub.f32 %v144, %v554
    %v560 = vsub.f32 %v164, %v555
    %v561 = vsub.f32 %v184, %v556
    %v562 = vsub.f32 %v204, %v557
    %v563 = vsub.f32 %v224, %v558
    %v564 = vmul.f32 %v559, %v559
    %v565 = vmul.f32 %v560, %v560
    %v566 = vmul.f32 %v561, %v561
    %v567 = vmul.f32 %v562, %v562
    %v568 = vmul.f32 %v563, %v563
    %v570 = vsel %vm338, %v568, 0
    %572 = vmatpush.msra.mxu0 %v241
    %573 = vmatpush.msra.mxu0 %v240
    %574 = vmatpush.msra.mxu0 %v239
    %575 = vmatpush.msra.mxu0 %v238
    %576 = vmatpush.msra.mxu0 %v237
    %577 = vmatpush.msra.mxu0 %v236
    %578 = vmatpush.msra.mxu0 %v235
    %579 = vmatpush.msra.mxu0 %v234
    %580 = vmatpush.msra.mxu0 %v233
    %581 = vmatpush.msra.mxu0 %v232
    %582 = vmatpush.msra.mxu0 %v231
    %583 = vmatpush.msra.mxu0 %v230
    %584 = vmatpush.msra.mxu0 %v229
    %585 = vmatpush.msra.mxu0 %v228
    %586 = vmatpush.msra.mxu0 %v227
    %587 = vmatpush.msra.mxu0 %v226
    %588 = vmatmul.f32.gmra.mxu0 %v564
    %v589 = vpop.f32.mrf.mxu0
    %v590 = vadd.f32 0.0, %v589
    %591 = vdwg.mxu0
    %592 = vmatpush.msra.mxu0 %v257
    %593 = vmatpush.msra.mxu0 %v256
    %594 = vmatpush.msra.mxu0 %v255
    %595 = vmatpush.msra.mxu0 %v254
    %596 = vmatpush.msra.mxu0 %v253
    %597 = vmatpush.msra.mxu0 %v252
    %598 = vmatpush.msra.mxu0 %v251
    %599 = vmatpush.msra.mxu0 %v250
    %600 = vmatpush.msra.mxu0 %v249
    %601 = vmatpush.msra.mxu0 %v248
    %602 = vmatpush.msra.mxu0 %v247
    %603 = vmatpush.msra.mxu0 %v246
    %604 = vmatpush.msra.mxu0 %v245
    %605 = vmatpush.msra.mxu0 %v244
    %606 = vmatpush.msra.mxu0 %v243
    %607 = vmatpush.msra.mxu0 %v242
    %608 = vmatmul.f32.gmra.mxu0 %v565
    %v609 = vpop.f32.mrf.mxu0
    %v610 = vadd.f32 %v590, %v609
    %611 = vdwg.mxu0
    %612 = vmatpush.msra.mxu0 %v273
    %613 = vmatpush.msra.mxu0 %v272
    %614 = vmatpush.msra.mxu0 %v271
    %615 = vmatpush.msra.mxu0 %v270
    %616 = vmatpush.msra.mxu0 %v269
    %617 = vmatpush.msra.mxu0 %v268
    %618 = vmatpush.msra.mxu0 %v267
    %619 = vmatpush.msra.mxu0 %v266
    %620 = vmatpush.msra.mxu0 %v265
    %621 = vmatpush.msra.mxu0 %v264
    %622 = vmatpush.msra.mxu0 %v263
    %623 = vmatpush.msra.mxu0 %v262
    %624 = vmatpush.msra.mxu0 %v261
    %625 = vmatpush.msra.mxu0 %v260
    %626 = vmatpush.msra.mxu0 %v259
    %627 = vmatpush.msra.mxu0 %v258
    %628 = vmatmul.f32.gmra.mxu0 %v566
    %v629 = vpop.f32.mrf.mxu0
    %v630 = vadd.f32 %v610, %v629
    %631 = vdwg.mxu0
    %632 = vmatpush.msra.mxu0 %v289
    %633 = vmatpush.msra.mxu0 %v288
    %634 = vmatpush.msra.mxu0 %v287
    %635 = vmatpush.msra.mxu0 %v286
    %636 = vmatpush.msra.mxu0 %v285
    %637 = vmatpush.msra.mxu0 %v284
    %638 = vmatpush.msra.mxu0 %v283
    %639 = vmatpush.msra.mxu0 %v282
    %640 = vmatpush.msra.mxu0 %v281
    %641 = vmatpush.msra.mxu0 %v280
    %642 = vmatpush.msra.mxu0 %v279
    %643 = vmatpush.msra.mxu0 %v278
    %644 = vmatpush.msra.mxu0 %v277
    %645 = vmatpush.msra.mxu0 %v276
    %646 = vmatpush.msra.mxu0 %v275
    %647 = vmatpush.msra.mxu0 %v274
    %648 = vmatmul.f32.gmra.mxu0 %v567
    %v649 = vpop.f32.mrf.mxu0
    %v650 = vadd.f32 %v630, %v649
    %651 = vdwg.mxu0
    %652 = vmatpush.msra.mxu0 0.0
    %653 = vmatpush.msra.mxu0 0.0
    %654 = vmatpush.msra.mxu0 0.0
    %655 = vmatpush.msra.mxu0 0.0
    %656 = vmatpush.msra.mxu0 0.0
    %657 = vmatpush.msra.mxu0 0.0
    %658 = vmatpush.msra.mxu0 0.0
    %659 = vmatpush.msra.mxu0 0.0
    %660 = vmatpush.msra.mxu0 %v297
    %661 = vmatpush.msra.mxu0 %v296
    %662 = vmatpush.msra.mxu0 %v295
    %663 = vmatpush.msra.mxu0 %v294
    %664 = vmatpush.msra.mxu0 %v293
    %665 = vmatpush.msra.mxu0 %v292
    %666 = vmatpush.msra.mxu0 %v291
    %667 = vmatpush.msra.mxu0 %v290
    %668 = vmatmul.f32.gmra.mxu0 %v570
    %v669 = vpop.f32.mrf.mxu0
    %v670 = vadd.f32 %v650, %v669
    %671 = vdwg.mxu0
    %v672 = vsel %vm442, %v670, 0.0
    %v673 = vrot.slane %v672, 4
    %v674 = vadd.f32 %v672, %v673
    %v675 = vrot.slane %v674, 2
    %v676 = vadd.f32 %v674, %v675
    %v677 = vrot.slane %v676, 1
    %v678 = vadd.f32 %v676, %v677
    %v679 = vmul.f32 %v678, 0.055555556
    %v680 = vld [vmem:[#allocation4] sm:$0x1]
    %v681 = vadd.f32 %v679, 1e-05
    %v682 = vrsqrt.pop %v681
    %v683 = vmul.f32 %v682, %v681
    %v684 = vmul.f32 %v683, %v682
    %v685 = vmul.f32 0.5, %v684
    %v686 = vsub.f32 1.5, %v685
    %v687 = vmul.f32 %v682, %v686
    %vm688 = vweird.f32 %v681
    %vm689 = vweird.f32 %v682
    %vm690 = vmor %vm688, %vm689
    %v691 = vsel %vm690, %v682, %v687
    %v692 = vmul.f32 %v680, %v691
    %v694 = vsel %vm338, %v692, 0
    %696 = vmatpush.msra.mxu0 0.0
    %697 = vmatpush.msra.mxu0 0.0
    %698 = vmatpush.msra.mxu0 0.0
    %699 = vmatpush.msra.mxu0 0.0
    %700 = vmatpush.msra.mxu0 0.0
    %701 = vmatpush.msra.mxu0 0.0
    %702 = vmatpush.msra.mxu0 0.0
    %703 = vmatpush.msra.mxu0 0.0
    %704 = vmatpush.msra.mxu0 %v333
    %705 = vmatpush.msra.mxu0 %v328
    %706 = vmatpush.msra.mxu0 %v323
    %707 = vmatpush.msra.mxu0 %v318
    %708 = vmatpush.msra.mxu0 %v313
    %709 = vmatpush.msra.mxu0 %v308
    %710 = vmatpush.msra.mxu0 %v303
    %711 = vmatpush.msra.mxu0 %v298
    %712 = vmatmul.f32.gmra.mxu0 %v694
    %v713 = vpop.f32.mrf.mxu0
    %v714 = vadd.f32 0.0, %v713
    %715 = vdwg.mxu0
    %716 = vmatpush.msra.mxu0 0.0
    %717 = vmatpush.msra.mxu0 0.0
    %718 = vmatpush.msra.mxu0 0.0
    %719 = vmatpush.msra.mxu0 0.0
    %720 = vmatpush.msra.mxu0 0.0
    %721 = vmatpush.msra.mxu0 0.0
    %722 = vmatpush.msra.mxu0 0.0
    %723 = vmatpush.msra.mxu0 0.0
    %724 = vmatpush.msra.mxu0 %v334
    %725 = vmatpush.msra.mxu0 %v329
    %726 = vmatpush.msra.mxu0 %v324
    %727 = vmatpush.msra.mxu0 %v319
    %728 = vmatpush.msra.mxu0 %v314
    %729 = vmatpush.msra.mxu0 %v309
    %730 = vmatpush.msra.mxu0 %v304
    %731 = vmatpush.msra.mxu0 %v299
    %732 = vmatmul.f32.gmra.mxu0 %v694
    %v733 = vpop.f32.mrf.mxu0
    %v734 = vadd.f32 0.0, %v733
    %735 = vdwg.mxu0
    %736 = vmatpush.msra.mxu0 0.0
    %737 = vmatpush.msra.mxu0 0.0
    %738 = vmatpush.msra.mxu0 0.0
    %739 = vmatpush.msra.mxu0 0.0
    %740 = vmatpush.msra.mxu0 0.0
    %741 = vmatpush.msra.mxu0 0.0
    %742 = vmatpush.msra.mxu0 0.0
    %743 = vmatpush.msra.mxu0 0.0
    %744 = vmatpush.msra.mxu0 %v335
    %745 = vmatpush.msra.mxu0 %v330
    %746 = vmatpush.msra.mxu0 %v325
    %747 = vmatpush.msra.mxu0 %v320
    %748 = vmatpush.msra.mxu0 %v315
    %749 = vmatpush.msra.mxu0 %v310
    %750 = vmatpush.msra.mxu0 %v305
    %751 = vmatpush.msra.mxu0 %v300
    %752 = vmatmul.f32.gmra.mxu0 %v694
    %v753 = vpop.f32.mrf.mxu0
    %v754 = vadd.f32 0.0, %v753
    %755 = vdwg.mxu0
    %756 = vmatpush.msra.mxu0 0.0
    %757 = vmatpush.msra.mxu0 0.0
    %758 = vmatpush.msra.mxu0 0.0
    %759 = vmatpush.msra.mxu0 0.0
    %760 = vmatpush.msra.mxu0 0.0
    %761 = vmatpush.msra.mxu0 0.0
    %762 = vmatpush.msra.mxu0 0.0
    %763 = vmatpush.msra.mxu0 0.0
    %764 = vmatpush.msra.mxu0 %v336
    %765 = vmatpush.msra.mxu0 %v331
    %766 = vmatpush.msra.mxu0 %v326
    %767 = vmatpush.msra.mxu0 %v321
    %768 = vmatpush.msra.mxu0 %v316
    %769 = vmatpush.msra.mxu0 %v311
    %770 = vmatpush.msra.mxu0 %v306
    %771 = vmatpush.msra.mxu0 %v301
    %772 = vmatmul.f32.gmra.mxu0 %v694
    %v773 = vpop.f32.mrf.mxu0
    %v774 = vadd.f32 0.0, %v773
    %775 = vdwg.mxu0
    %776 = vmatpush.msra.mxu0 0.0
    %777 = vmatpush.msra.mxu0 0.0
    %778 = vmatpush.msra.mxu0 0.0
    %779 = vmatpush.msra.mxu0 0.0
    %780 = vmatpush.msra.mxu0 0.0
    %781 = vmatpush.msra.mxu0 0.0
    %782 = vmatpush.msra.mxu0 0.0
    %783 = vmatpush.msra.mxu0 0.0
    %784 = vmatpush.msra.mxu0 %v337
    %785 = vmatpush.msra.mxu0 %v332
    %786 = vmatpush.msra.mxu0 %v327
    %787 = vmatpush.msra.mxu0 %v322
    %788 = vmatpush.msra.mxu0 %v317
    %789 = vmatpush.msra.mxu0 %v312
    %790 = vmatpush.msra.mxu0 %v307
    %791 = vmatpush.msra.mxu0 %v302
    %792 = vmatmul.f32.gmra.mxu0 %v694
    %v793 = vpop.f32.mrf.mxu0
    %v794 = vadd.f32 0.0, %v793
    %795 = vdwg.mxu0
    %v796 = vperm.slane %v714, 0
    %v797 = vperm.slane %v734, 0
    %v798 = vperm.slane %v754, 0
    %v799 = vperm.slane %v774, 0
    %v800 = vperm.slane %v794, 0
    %v801 = vmul.f32 %v559, %v796
    %v802 = vmul.f32 %v560, %v797
    %v803 = vmul.f32 %v561, %v798
    %v804 = vmul.f32 %v562, %v799
    %v805 = vmul.f32 %v563, %v800
    %v806 = vld [vmem:[#allocation6] sm:$0x1]
    %v808 = vsel %vm338, %v806, 0
    %810 = vmatpush.msra.mxu0 0.0
    %811 = vmatpush.msra.mxu0 0.0
    %812 = vmatpush.msra.mxu0 0.0
    %813 = vmatpush.msra.mxu0 0.0
    %814 = vmatpush.msra.mxu0 0.0
    %815 = vmatpush.msra.mxu0 0.0
    %816 = vmatpush.msra.mxu0 0.0
    %817 = vmatpush.msra.mxu0 0.0
    %818 = vmatpush.msra.mxu0 %v333
    %819 = vmatpush.msra.mxu0 %v328
    %820 = vmatpush.msra.mxu0 %v323
    %821 = vmatpush.msra.mxu0 %v318
    %822 = vmatpush.msra.mxu0 %v313
    %823 = vmatpush.msra.mxu0 %v308
    %824 = vmatpush.msra.mxu0 %v303
    %825 = vmatpush.msra.mxu0 %v298
    %826 = vmatmul.f32.gmra.mxu0 %v808
    %v827 = vpop.f32.mrf.mxu0
    %v828 = vadd.f32 0.0, %v827
    %829 = vdwg.mxu0
    %830 = vmatpush.msra.mxu0 0.0
    %831 = vmatpush.msra.mxu0 0.0
    %832 = vmatpush.msra.mxu0 0.0
    %833 = vmatpush.msra.mxu0 0.0
    %834 = vmatpush.msra.mxu0 0.0
    %835 = vmatpush.msra.mxu0 0.0
    %836 = vmatpush.msra.mxu0 0.0
    %837 = vmatpush.msra.mxu0 0.0
    %838 = vmatpush.msra.mxu0 %v334
    %839 = vmatpush.msra.mxu0 %v329
    %840 = vmatpush.msra.mxu0 %v324
    %841 = vmatpush.msra.mxu0 %v319
    %842 = vmatpush.msra.mxu0 %v314
    %843 = vmatpush.msra.mxu0 %v309
    %844 = vmatpush.msra.mxu0 %v304
    %845 = vmatpush.msra.mxu0 %v299
    %846 = vmatmul.f32.gmra.mxu0 %v808
    %v847 = vpop.f32.mrf.mxu0
    %v848 = vadd.f32 0.0, %v847
    %849 = vdwg.mxu0
    %850 = vmatpush.msra.mxu0 0.0
    %851 = vmatpush.msra.mxu0 0.0
    %852 = vmatpush.msra.mxu0 0.0
    %853 = vmatpush.msra.mxu0 0.0
    %854 = vmatpush.msra.mxu0 0.0
    %855 = vmatpush.msra.mxu0 0.0
    %856 = vmatpush.msra.mxu0 0.0
    %857 = vmatpush.msra.mxu0 0.0
    %858 = vmatpush.msra.mxu0 %v335
    %859 = vmatpush.msra.mxu0 %v330
    %860 = vmatpush.msra.mxu0 %v325
    %861 = vmatpush.msra.mxu0 %v320
    %862 = vmatpush.msra.mxu0 %v315
    %863 = vmatpush.msra.mxu0 %v310
    %864 = vmatpush.msra.mxu0 %v305
    %865 = vmatpush.msra.mxu0 %v300
    %866 = vmatmul.f32.gmra.mxu0 %v808
    %v867 = vpop.f32.mrf.mxu0
    %v868 = vadd.f32 0.0, %v867
    %869 = vdwg.mxu0
    %870 = vmatpush.msra.mxu0 0.0
    %871 = vmatpush.msra.mxu0 0.0
    %872 = vmatpush.msra.mxu0 0.0
    %873 = vmatpush.msra.mxu0 0.0
    %874 = vmatpush.msra.mxu0 0.0
    %875 = vmatpush.msra.mxu0 0.0
    %876 = vmatpush.msra.mxu0 0.0
    %877 = vmatpush.msra.mxu0 0.0
    %878 = vmatpush.msra.mxu0 %v336
    %879 = vmatpush.msra.mxu0 %v331
    %880 = vmatpush.msra.mxu0 %v326
    %881 = vmatpush.msra.mxu0 %v321
    %882 = vmatpush.msra.mxu0 %v316
    %883 = vmatpush.msra.mxu0 %v311
    %884 = vmatpush.msra.mxu0 %v306
    %885 = vmatpush.msra.mxu0 %v301
    %886 = vmatmul.f32.gmra.mxu0 %v808
    %v887 = vpop.f32.mrf.mxu0
    %v888 = vadd.f32 0.0, %v887
    %889 = vdwg.mxu0
    %890 = vmatpush.msra.mxu0 0.0
    %891 = vmatpush.msra.mxu0 0.0
    %892 = vmatpush.msra.mxu0 0.0
    %893 = vmatpush.msra.mxu0 0.0
    %894 = vmatpush.msra.mxu0 0.0
    %895 = vmatpush.msra.mxu0 0.0
    %896 = vmatpush.msra.mxu0 0.0
    %897 = vmatpush.msra.mxu0 0.0
    %898 = vmatpush.msra.mxu0 %v337
    %899 = vmatpush.msra.mxu0 %v332
    %900 = vmatpush.msra.mxu0 %v327
    %901 = vmatpush.msra.mxu0 %v322
    %902 = vmatpush.msra.mxu0 %v317
    %903 = vmatpush.msra.mxu0 %v312
    %904 = vmatpush.msra.mxu0 %v307
    %905 = vmatpush.msra.mxu0 %v302
    %906 = vmatmul.f32.gmra.mxu0 %v808
    %v907 = vpop.f32.mrf.mxu0
    %v908 = vadd.f32 0.0, %v907
    %909 = vdwg.mxu0
    %v910 = vperm.slane %v828, 0
    %v911 = vperm.slane %v848, 0
    %v912 = vperm.slane %v868, 0
    %v913 = vperm.slane %v888, 0
    %v914 = vperm.slane %v908, 0
    %v915 = vadd.f32 %v801, %v910
    %v916 = vadd.f32 %v802, %v911
    %v917 = vadd.f32 %v803, %v912
    %v918 = vadd.f32 %v804, %v913
    %v919 = vadd.f32 %v805, %v914
    %v920 = vmax.f32 %v915, 0.0
    %v921 = vmax.f32 %v916, 0.0
    %v922 = vmax.f32 %v917, 0.0
    %v923 = vmax.f32 %v918, 0.0
    %v924 = vmax.f32 %v919, 0.0
    %v929 = vrot.slane %v921, 6
    %v930 = vrot.slane %v922, 4
    %v931 = vrot.slane %v923, 2
    %v932 = vsel %vm110, %v920, %v929
    %vm933 = vcmask 1045508
    %v934 = vsel %vm933, %v930, %v931
    %vm935 = vcmask 1043456
    %v936 = vsel %vm935, %v932, %v934
    %938 = vst [vmem:[%s6] sm:$0xff] %v936
    %939 = vst.msk [vmem:[%s6 + $0x8] sm:$0x3] %vm442, %v924
    // Predicated region
    $region46: #{generator_forward.7} parent=1 // pred_check
      _
    $region47: #{generator_forward.7} parent=1 // pred_check_branch
      %941 = sbr.rel (0) target = $region49
    $region48: #{generator_forward.7} parent=1 // pred_region
      _
    $region49: #{generator_forward.7} parent=1 // pred_fallthru
      _
    // Predicated region
    $region50: #{generator_forward.7} parent=1 // pred_check
      _
    $region51: #{generator_forward.7} parent=1 // pred_check_branch
      %943 = sbr.rel (0) target = $region53
    $region52: #{generator_forward.7} parent=1 // pred_region
      _
    $region53: #{generator_forward.7} parent=1 // pred_fallthru
      _
    %944 = vsyncpa [#allocation3], 1
    %945 = vsyncpa [#allocation5], 1
    %946 = vsyncpa [#allocation8], 1

// kernel: generator_forward.8
$region0: #{generator_forward.8}
  #allocation0 [shape = 'u32[]', space=smem, size = 0x4, offset = 0x4, fixed_abs, tag = 'smem constant byte address 0x4 - core index']
  #allocation1 [shape = 'u32[72,128]{1,0:T(1,128)}', space=vmem, size = 0x9000, scoped, tag = 'internal scratch']
  %s0 = inlined_call_operand.vmem [shape: f32[18,64], index: 0, kind: input, shape index: {}]
  %s1 = inlined_call_operand.vmem [shape: f32[64,512], index: 1, kind: input, shape index: {}]
  %s2 = inlined_call_operand.vmem [shape: f32[18,512], index: 2, kind: output, shape index: {}]
  %s3 = sld [smem:[#allocation0]]
  $region18: #{generator_forward.8} parent=0
    _
  %s5 = ssub.s32 1, %s3
  %s6 = scalar_select 0, %s5, %s3
  // Predicated region
  $region2: #{generator_forward.8} parent=0 // pred_check
    _
  $region3: #{generator_forward.8} parent=0 // pred_check_branch
    %8 = sbr.rel (0) target = $region5
  $region4: #{generator_forward.8} parent=0 // pred_region
    _
  $region5: #{generator_forward.8} parent=0 // pred_fallthru
    _
  // Predicated region
  $region6: #{generator_forward.8} parent=0 // pred_check
    _
  $region7: #{generator_forward.8} parent=0 // pred_check_branch
    %10 = sbr.rel (0) target = $region9
  $region8: #{generator_forward.8} parent=0 // pred_region
    _
  $region9: #{generator_forward.8} parent=0 // pred_fallthru
    _
  %v11 = vld [vmem:[%s0] sm:$0xff]
  %v12 = vld [vmem:[%s0 + $0x8] sm:$0xff]
  %v13 = vld [vmem:[%s0 + $0x10] sm:$0x3]
  %v14 = vld [vmem:[%s1] sm:$0xff]
  %v15 = vld [vmem:[%s1 + $0x8] sm:$0xff]
  %v16 = vld [vmem:[%s1 + $0x10] sm:$0xff]
  %v17 = vld [vmem:[%s1 + $0x18] sm:$0xff]
  %v18 = vld [vmem:[%s1 + $0x20] sm:$0xff]
  %v19 = vld [vmem:[%s1 + $0x28] sm:$0xff]
  %v20 = vld [vmem:[%s1 + $0x30] sm:$0xff]
  %v21 = vld [vmem:[%s1 + $0x38] sm:$0xff]
  %v22 = vld [vmem:[%s1 + $0x40] sm:$0xff]
  %v23 = vld [vmem:[%s1 + $0x48] sm:$0xff]
  %v24 = vld [vmem:[%s1 + $0x50] sm:$0xff]
  %v25 = vld [vmem:[%s1 + $0x58] sm:$0xff]
  %v26 = vld [vmem:[%s1 + $0x60] sm:$0xff]
  %v27 = vld [vmem:[%s1 + $0x68] sm:$0xff]
  %v28 = vld [vmem:[%s1 + $0x70] sm:$0xff]
  %v29 = vld [vmem:[%s1 + $0x78] sm:$0xff]
  %v30 = vld [vmem:[%s1 + $0x80] sm:$0xff]
  %v31 = vld [vmem:[%s1 + $0x88] sm:$0xff]
  %v32 = vld [vmem:[%s1 + $0x90] sm:$0xff]
  %v33 = vld [vmem:[%s1 + $0x98] sm:$0xff]
  %v34 = vld [vmem:[%s1 + $0xa0] sm:$0xff]
  %v35 = vld [vmem:[%s1 + $0xa8] sm:$0xff]
  %v36 = vld [vmem:[%s1 + $0xb0] sm:$0xff]
  %v37 = vld [vmem:[%s1 + $0xb8] sm:$0xff]
  %v38 = vld [vmem:[%s1 + $0xc0] sm:$0xff]
  %v39 = vld [vmem:[%s1 + $0xc8] sm:$0xff]
  %v40 = vld [vmem:[%s1 + $0xd0] sm:$0xff]
  %v41 = vld [vmem:[%s1 + $0xd8] sm:$0xff]
  %v42 = vld [vmem:[%s1 + $0xe0] sm:$0xff]
  %v43 = vld [vmem:[%s1 + $0xe8] sm:$0xff]
  %v44 = vld [vmem:[%s1 + $0xf0] sm:$0xff]
  %v45 = vld [vmem:[%s1 + $0xf8] sm:$0xff]
  %vm46 = vcmask 523264
  %v48 = vsel %vm46, %v11, 0
  %v51 = vsel %vm46, %v12, 0
  %v54 = vsel %vm46, %v13, 0
  %56 = vmatpush.msra.mxu0 0.0
  %57 = vmatpush.msra.mxu0 0.0
  %58 = vmatpush.msra.mxu0 0.0
  %59 = vmatpush.msra.mxu0 0.0
  %60 = vmatpush.msra.mxu0 0.0
  %61 = vmatpush.msra.mxu0 0.0
  %62 = vmatpush.msra.mxu0 0.0
  %63 = vmatpush.msra.mxu0 0.0
  %64 = vmatpush.msra.mxu0 %v42
  %65 = vmatpush.msra.mxu0 %v38
  %66 = vmatpush.msra.mxu0 %v34
  %67 = vmatpush.msra.mxu0 %v30
  %68 = vmatpush.msra.mxu0 %v26
  %69 = vmatpush.msra.mxu0 %v22
  %70 = vmatpush.msra.mxu0 %v18
  %71 = vmatpush.msra.mxu0 %v14
  %72 = vmatmul.f32.gmra.mxu0 %v48
  %v73 = vpop.f32.mrf.mxu0
  %v74 = vadd.f32 0.0, %v73
  %75 = vmatmul.f32.gmra.mxu0 %v51
  %v76 = vpop.f32.mrf.mxu0
  %v77 = vadd.f32 0.0, %v76
  %78 = vmatmul.f32.gmra.mxu0 %v54
  %v79 = vpop.f32.mrf.mxu0
  %v80 = vadd.f32 0.0, %v79
  %81 = vdwg.mxu0
  %82 = vmatpush.msra.mxu0 0.0
  %83 = vmatpush.msra.mxu0 0.0
  %84 = vmatpush.msra.mxu0 0.0
  %85 = vmatpush.msra.mxu0 0.0
  %86 = vmatpush.msra.mxu0 0.0
  %87 = vmatpush.msra.mxu0 0.0
  %88 = vmatpush.msra.mxu0 0.0
  %89 = vmatpush.msra.mxu0 0.0
  %90 = vmatpush.msra.mxu0 %v43
  %91 = vmatpush.msra.mxu0 %v39
  %92 = vmatpush.msra.mxu0 %v35
  %93 = vmatpush.msra.mxu0 %v31
  %94 = vmatpush.msra.mxu0 %v27
  %95 = vmatpush.msra.mxu0 %v23
  %96 = vmatpush.msra.mxu0 %v19
  %97 = vmatpush.msra.mxu0 %v15
  %98 = vmatmul.f32.gmra.mxu0 %v48
  %v99 = vpop.f32.mrf.mxu0
  %v100 = vadd.f32 0.0, %v99
  %101 = vmatmul.f32.gmra.mxu0 %v51
  %v102 = vpop.f32.mrf.mxu0
  %v103 = vadd.f32 0.0, %v102
  %104 = vmatmul.f32.gmra.mxu0 %v54
  %v105 = vpop.f32.mrf.mxu0
  %v106 = vadd.f32 0.0, %v105
  %107 = vdwg.mxu0
  %108 = vmatpush.msra.mxu0 0.0
  %109 = vmatpush.msra.mxu0 0.0
  %110 = vmatpush.msra.mxu0 0.0
  %111 = vmatpush.msra.mxu0 0.0
  %112 = vmatpush.msra.mxu0 0.0
  %113 = vmatpush.msra.mxu0 0.0
  %114 = vmatpush.msra.mxu0 0.0
  %115 = vmatpush.msra.mxu0 0.0
  %116 = vmatpush.msra.mxu0 %v44
  %117 = vmatpush.msra.mxu0 %v40
  %118 = vmatpush.msra.mxu0 %v36
  %119 = vmatpush.msra.mxu0 %v32
  %120 = vmatpush.msra.mxu0 %v28
  %121 = vmatpush.msra.mxu0 %v24
  %122 = vmatpush.msra.mxu0 %v20
  %123 = vmatpush.msra.mxu0 %v16
  %124 = vmatmul.f32.gmra.mxu0 %v48
  %v125 = vpop.f32.mrf.mxu0
  %v126 = vadd.f32 0.0, %v125
  %127 = vmatmul.f32.gmra.mxu0 %v51
  %v128 = vpop.f32.mrf.mxu0
  %v129 = vadd.f32 0.0, %v128
  %130 = vmatmul.f32.gmra.mxu0 %v54
  %v131 = vpop.f32.mrf.mxu0
  %v132 = vadd.f32 0.0, %v131
  %133 = vdwg.mxu0
  %134 = vmatpush.msra.mxu0 0.0
  %135 = vmatpush.msra.mxu0 0.0
  %136 = vmatpush.msra.mxu0 0.0
  %137 = vmatpush.msra.mxu0 0.0
  %138 = vmatpush.msra.mxu0 0.0
  %139 = vmatpush.msra.mxu0 0.0
  %140 = vmatpush.msra.mxu0 0.0
  %141 = vmatpush.msra.mxu0 0.0
  %142 = vmatpush.msra.mxu0 %v45
  %143 = vmatpush.msra.mxu0 %v41
  %144 = vmatpush.msra.mxu0 %v37
  %145 = vmatpush.msra.mxu0 %v33
  %146 = vmatpush.msra.mxu0 %v29
  %147 = vmatpush.msra.mxu0 %v25
  %148 = vmatpush.msra.mxu0 %v21
  %149 = vmatpush.msra.mxu0 %v17
  %150 = vmatmul.f32.gmra.mxu0 %v48
  %v151 = vpop.f32.mrf.mxu0
  %v152 = vadd.f32 0.0, %v151
  %153 = vmatmul.f32.gmra.mxu0 %v51
  %v154 = vpop.f32.mrf.mxu0
  %v155 = vadd.f32 0.0, %v154
  %156 = vmatmul.f32.gmra.mxu0 %v54
  %v157 = vpop.f32.mrf.mxu0
  %v158 = vadd.f32 0.0, %v157
  %159 = vdwg.mxu0
  %160 = vst [vmem:[%s2] sm:$0xff] %v74
  %161 = vst [vmem:[%s2 + $0x8] sm:$0xff] %v100
  %162 = vst [vmem:[%s2 + $0x10] sm:$0xff] %v126
  %163 = vst [vmem:[%s2 + $0x18] sm:$0xff] %v152
  %164 = vst [vmem:[%s2 + $0x20] sm:$0xff] %v77
  %165 = vst [vmem:[%s2 + $0x28] sm:$0xff] %v103
  %166 = vst [vmem:[%s2 + $0x30] sm:$0xff] %v129
  %167 = vst [vmem:[%s2 + $0x38] sm:$0xff] %v155
  %168 = vst [vmem:[%s2 + $0x40] sm:$0x3] %v80
  %169 = vst [vmem:[%s2 + $0x48] sm:$0x3] %v106
  %170 = vst [vmem:[%s2 + $0x50] sm:$0x3] %v132
  %171 = vst [vmem:[%s2 + $0x58] sm:$0x3] %v158
  // Predicated region
  $region10: #{generator_forward.8} parent=0 // pred_check
    _
  $region11: #{generator_forward.8} parent=0 // pred_check_branch
    %173 = sbr.rel (0) target = $region13
  $region12: #{generator_forward.8} parent=0 // pred_region
    _
  $region13: #{generator_forward.8} parent=0 // pred_fallthru
    _
  // Predicated region
  $region14: #{generator_forward.8} parent=0 // pred_check
    _
  $region15: #{generator_forward.8} parent=0 // pred_check_branch
    %175 = sbr.rel (0) target = $region17
  $region16: #{generator_forward.8} parent=0 // pred_region
    _
  $region17: #{generator_forward.8} parent=0 // pred_fallthru
    _

// kernel: generator_forward.9
$region0: #{generator_forward.9}
  #allocation0 [shape = 'u32[]', space=smem, size = 0x4, offset = 0x4, fixed_abs, tag = 'smem constant byte address 0x4 - core index']
  #allocation1 [shape = 'u32[72,128]{1,0:T(1,128)}', space=vmem, size = 0x9000, scoped, tag = 'internal scratch']
  %s0 = inlined_call_operand.vmem [shape: f32[64,144], index: 0, kind: input, shape index: {}]
  %s1 = inlined_call_operand.hbm [shape: f32[144,36], index: 1, kind: input, shape index: {}]
  %s2 = inlined_call_operand.hbm [shape: f32[64,64], index: 2, kind: input, shape index: {}]
  %s3 = inlined_call_operand.vmem [shape: f32[64,1], index: 3, kind: input, shape index: {}]
  %s4 = inlined_call_operand.vmem [shape: f32[64,1], index: 4, kind: input, shape index: {}]
  %s5 = inlined_call_operand.vmem [shape: f32[64,36], index: 5, kind: output, shape index: {}]
  %s6 = sld [smem:[#allocation0]]
  $region38: #{generator_forward.9} parent=0
    _
  %s8 = ssub.s32 1, %s6
  %s9 = scalar_select 0, %s8, %s6
  $region1: #{generator_forward.9} parent=0
    #allocation2 [shape = 'u8[73728]{0}', space=vmem, size = 0x12000, scoped, tag = 'input window, operand 1, single buffered']
    #allocation3 [shape = 's32[1]{0}', space=sflag, size = 0x4, scoped, tag = 'scoped memory for generator_forward.9']
    #allocation4 [shape = 'u8[32768]{0}', space=vmem, size = 0x8000, scoped, tag = 'input window, operand 2, single buffered']
    #allocation5 [shape = 's32[1]{0}', space=sflag, size = 0x4, scoped, tag = 'scoped memory for generator_forward.9']
    %10 = vsyncpa [#allocation3], 0
    %11 = vsyncpa [#allocation5], 0
    // Predicated region
    $region2: #{generator_forward.9} parent=1 // pred_check
      _
    $region3: #{generator_forward.9} parent=1 // pred_check_branch
      %13 = sbr.rel (0) target = $region5
    $region4: #{generator_forward.9} parent=1 // pred_region
      _
    $region5: #{generator_forward.9} parent=1 // pred_fallthru
      _
    // Predicated region
    $region6: #{generator_forward.9} parent=1 // pred_check
      _
    $region7: #{generator_forward.9} parent=1 // pred_check_branch
      %15 = sbr.rel (0) target = $region9
    $region8: #{generator_forward.9} parent=1 // pred_region
      %17 = vsyncadd [#allocation3], 0
      %s18 = sshll.u32 %s1, 4
      %s19 = int_to_ptr.hbm [resolvable:$true] %s18
      %s20 = sshll.u32 [#allocation2], 4
      %s21 = int_to_ptr.vmem [resolvable:$true] %s20
      %26 = dma.hbm_to_vmem [thread:$0]  %s19, 2304, %s21, [#allocation3], 128, 128, 8
    $region9: #{generator_forward.9} parent=1 // pred_fallthru
      _
    // Predicated region
    $region10: #{generator_forward.9} parent=1 // pred_check
      _
    $region11: #{generator_forward.9} parent=1 // pred_check_branch
      %28 = sbr.rel (0) target = $region13
    $region12: #{generator_forward.9} parent=1 // pred_region
      %30 = vsyncadd [#allocation5], 0
      %s31 = sshll.u32 %s2, 4
      %s32 = int_to_ptr.hbm [resolvable:$true] %s31
      %s33 = sshll.u32 [#allocation4], 4
      %s34 = int_to_ptr.vmem [resolvable:$true] %s33
      %39 = dma.hbm_to_vmem [thread:$0]  %s32, 1024, %s34, [#allocation5], 128, 128, 8
    $region13: #{generator_forward.9} parent=1 // pred_fallthru
      _
    // Predicated region
    $region14: #{generator_forward.9} parent=1 // pred_check
      _
    $region15: #{generator_forward.9} parent=1 // pred_check_branch
      %41 = sbr.rel (0) target = $region17
    $region16: #{generator_forward.9} parent=1 // pred_region
      _
    $region17: #{generator_forward.9} parent=1 // pred_fallthru
      _
    // Predicated region
    $region18: #{generator_forward.9} parent=1 // pred_check
      _
    $region19: #{generator_forward.9} parent=1 // pred_check_branch
      %43 = sbr.rel (0) target = $region21
    $region20: #{generator_forward.9} parent=1 // pred_region
      _
    $region21: #{generator_forward.9} parent=1 // pred_fallthru
      _
    // Predicated region
    $region22: #{generator_forward.9} parent=1 // pred_check
      _
    $region23: #{generator_forward.9} parent=1 // pred_check_branch
      %45 = sbr.rel (0) target = $region25
    $region24: #{generator_forward.9} parent=1 // pred_region
      %47 = dma.done [#allocation3], 2304
    $region25: #{generator_forward.9} parent=1 // pred_fallthru
      _
    // Predicated region
    $region26: #{generator_forward.9} parent=1 // pred_check
      _
    $region27: #{generator_forward.9} parent=1 // pred_check_branch
      %49 = sbr.rel (0) target = $region29
    $region28: #{generator_forward.9} parent=1 // pred_region
      %51 = dma.done [#allocation5], 1024
    $region29: #{generator_forward.9} parent=1 // pred_fallthru
      _
    %v52 = vld [vmem:[%s0] sm:$0xff]
    %v53 = vld [vmem:[%s0 + $0x8] sm:$0xff]
    %v54 = vld [vmem:[%s0 + $0x10] sm:$0xff]
    %v55 = vld [vmem:[%s0 + $0x18] sm:$0xff]
    %v56 = vld [vmem:[%s0 + $0x20] sm:$0xff]
    %v57 = vld [vmem:[%s0 + $0x28] sm:$0xff]
    %v58 = vld [vmem:[%s0 + $0x30] sm:$0xff]
    %v59 = vld [vmem:[%s0 + $0x38] sm:$0xff]
    %v60 = vld [vmem:[%s0 + $0x40] sm:$0xff]
    %v61 = vld [vmem:[%s0 + $0x48] sm:$0xff]
    %v62 = vld [vmem:[%s0 + $0x50] sm:$0xff]
    %v63 = vld [vmem:[%s0 + $0x58] sm:$0xff]
    %v64 = vld [vmem:[%s0 + $0x60] sm:$0xff]
    %v65 = vld [vmem:[%s0 + $0x68] sm:$0xff]
    %v66 = vld [vmem:[%s0 + $0x70] sm:$0xff]
    %v67 = vld [vmem:[%s0 + $0x78] sm:$0xff]
    %v68 = vld [vmem:[#allocation2] sm:$0xff]
    %v69 = vld [vmem:[#allocation2 + $0x8] sm:$0xff]
    %v70 = vld [vmem:[#allocation2 + $0x10] sm:$0xff]
    %v71 = vld [vmem:[#allocation2 + $0x18] sm:$0xff]
    %v72 = vld [vmem:[#allocation2 + $0x20] sm:$0xff]
    %v73 = vld [vmem:[#allocation2 + $0x28] sm:$0xff]
    %v74 = vld [vmem:[#allocation2 + $0x30] sm:$0xff]
    %v75 = vld [vmem:[#allocation2 + $0x38] sm:$0xff]
    %v76 = vld [vmem:[#allocation2 + $0x40] sm:$0xff]
    %v77 = vld [vmem:[#allocation2 + $0x48] sm:$0xff]
    %v78 = vld [vmem:[#allocation2 + $0x50] sm:$0xff]
    %v79 = vld [vmem:[#allocation2 + $0x58] sm:$0xff]
    %v80 = vld [vmem:[#allocation2 + $0x60] sm:$0xff]
    %v81 = vld [vmem:[#allocation2 + $0x68] sm:$0xff]
    %v82 = vld [vmem:[#allocation2 + $0x70] sm:$0xff]
    %v83 = vld [vmem:[#allocation2 + $0x78] sm:$0xff]
    %v84 = vld [vmem:[#allocation2 + $0x80] sm:$0xff]
    %v85 = vld [vmem:[#allocation2 + $0x88] sm:$0xff]
    %vm86 = vcmask 130048
    %v88 = vsel %vm86, %v53, 0
    %v91 = vsel %vm86, %v55, 0
    %v94 = vsel %vm86, %v57, 0
    %v97 = vsel %vm86, %v59, 0
    %v100 = vsel %vm86, %v61, 0
    %v103 = vsel %vm86, %v63, 0
    %v106 = vsel %vm86, %v65, 0
    %v109 = vsel %vm86, %v67, 0
    %111 = vmatpush.msra.mxu0 %v83
    %112 = vmatpush.msra.mxu0 %v82
    %113 = vmatpush.msra.mxu0 %v81
    %114 = vmatpush.msra.mxu0 %v80
    %115 = vmatpush.msra.mxu0 %v79
    %116 = vmatpush.msra.mxu0 %v78
    %117 = vmatpush.msra.mxu0 %v77
    %118 = vmatpush.msra.mxu0 %v76
    %119 = vmatpush.msra.mxu0 %v75
    %120 = vmatpush.msra.mxu0 %v74
    %121 = vmatpush.msra.mxu0 %v73
    %122 = vmatpush.msra.mxu0 %v72
    %123 = vmatpush.msra.mxu0 %v71
    %124 = vmatpush.msra.mxu0 %v70
    %125 = vmatpush.msra.mxu0 %v69
    %126 = vmatpush.msra.mxu0 %v68
    %127 = vmatmul.f32.gmra.mxu0 %v52
    %v128 = vpop.f32.mrf.mxu0
    %v129 = vadd.f32 0.0, %v128
    %130 = vmatmul.f32.gmra.mxu0 %v54
    %v131 = vpop.f32.mrf.mxu0
    %v132 = vadd.f32 0.0, %v131
    %133 = vmatmul.f32.gmra.mxu0 %v56
    %v134 = vpop.f32.mrf.mxu0
    %v135 = vadd.f32 0.0, %v134
    %136 = vmatmul.f32.gmra.mxu0 %v58
    %v137 = vpop.f32.mrf.mxu0
    %v138 = vadd.f32 0.0, %v137
    %139 = vmatmul.f32.gmra.mxu0 %v60
    %v140 = vpop.f32.mrf.mxu0
    %v141 = vadd.f32 0.0, %v140
    %142 = vmatmul.f32.gmra.mxu0 %v62
    %v143 = vpop.f32.mrf.mxu0
    %v144 = vadd.f32 0.0, %v143
    %145 = vmatmul.f32.gmra.mxu0 %v64
    %v146 = vpop.f32.mrf.mxu0
    %v147 = vadd.f32 0.0, %v146
    %148 = vmatmul.f32.gmra.mxu0 %v66
    %v149 = vpop.f32.mrf.mxu0
    %v150 = vadd.f32 0.0, %v149
    %151 = vdwg.mxu0
    %152 = vmatpush.msra.mxu0 0.0
    %153 = vmatpush.msra.mxu0 0.0
    %154 = vmatpush.msra.mxu0 0.0
    %155 = vmatpush.msra.mxu0 0.0
    %156 = vmatpush.msra.mxu0 0.0
    %157 = vmatpush.msra.mxu0 0.0
    %158 = vmatpush.msra.mxu0 0.0
    %159 = vmatpush.msra.mxu0 0.0
    %160 = vmatpush.msra.mxu0 0.0
    %161 = vmatpush.msra.mxu0 0.0
    %162 = vmatpush.msra.mxu0 0.0
    %163 = vmatpush.msra.mxu0 0.0
    %164 = vmatpush.msra.mxu0 0.0
    %165 = vmatpush.msra.mxu0 0.0
    %166 = vmatpush.msra.mxu0 %v85
    %167 = vmatpush.msra.mxu0 %v84
    %168 = vmatmul.f32.gmra.mxu0 %v88
    %v169 = vpop.f32.mrf.mxu0
    %v170 = vadd.f32 %v129, %v169
    %171 = vmatmul.f32.gmra.mxu0 %v91
    %v172 = vpop.f32.mrf.mxu0
    %v173 = vadd.f32 %v132, %v172
    %174 = vmatmul.f32.gmra.mxu0 %v94
    %v175 = vpop.f32.mrf.mxu0
    %v176 = vadd.f32 %v135, %v175
    %177 = vmatmul.f32.gmra.mxu0 %v97
    %v178 = vpop.f32.mrf.mxu0
    %v179 = vadd.f32 %v138, %v178
    %180 = vmatmul.f32.gmra.mxu0 %v100
    %v181 = vpop.f32.mrf.mxu0
    %v182 = vadd.f32 %v141, %v181
    %183 = vmatmul.f32.gmra.mxu0 %v103
    %v184 = vpop.f32.mrf.mxu0
    %v185 = vadd.f32 %v144, %v184
    %186 = vmatmul.f32.gmra.mxu0 %v106
    %v187 = vpop.f32.mrf.mxu0
    %v188 = vadd.f32 %v147, %v187
    %189 = vmatmul.f32.gmra.mxu0 %v109
    %v190 = vpop.f32.mrf.mxu0
    %v191 = vadd.f32 %v150, %v190
    %192 = vdwg.mxu0
    %vm193 = vcmask 293888
    %v194 = vsel %vm193, %v170, 0.0
    %195 = vadd.xlane.f32.xlu0 %v194
    %v196 = vpop.xlane.xlu0 %195
    %v197 = vsel %vm193, %v173, 0.0
    %198 = vadd.xlane.f32.xlu0 %v197
    %v199 = vpop.xlane.xlu0 %198
    %v200 = vsel %vm193, %v176, 0.0
    %201 = vadd.xlane.f32.xlu0 %v200
    %v202 = vpop.xlane.xlu0 %201
    %v203 = vsel %vm193, %v179, 0.0
    %204 = vadd.xlane.f32.xlu0 %v203
    %v205 = vpop.xlane.xlu0 %204
    %v206 = vsel %vm193, %v182, 0.0
    %207 = vadd.xlane.f32.xlu0 %v206
    %v208 = vpop.xlane.xlu0 %207
    %v209 = vsel %vm193, %v185, 0.0
    %210 = vadd.xlane.f32.xlu0 %v209
    %v211 = vpop.xlane.xlu0 %210
    %v212 = vsel %vm193, %v188, 0.0
    %213 = vadd.xlane.f32.xlu0 %v212
    %v214 = vpop.xlane.xlu0 %213
    %v215 = vsel %vm193, %v191, 0.0
    %216 = vadd.xlane.f32.xlu0 %v215
    %v217 = vpop.xlane.xlu0 %216
    %v218 = vld [vmem:[#allocation4] sm:$0xff]
    %v219 = vld [vmem:[#allocation4 + $0x8] sm:$0xff]
    %v220 = vld [vmem:[#allocation4 + $0x10] sm:$0xff]
    %v221 = vld [vmem:[#allocation4 + $0x18] sm:$0xff]
    %v222 = vld [vmem:[#allocation4 + $0x20] sm:$0xff]
    %v223 = vld [vmem:[#allocation4 + $0x28] sm:$0xff]
    %v224 = vld [vmem:[#allocation4 + $0x30] sm:$0xff]
    %v225 = vld [vmem:[#allocation4 + $0x38] sm:$0xff]
    %vm226 = vcmask 523264
    %v228 = vsel %vm226, %v218, 0
    %v231 = vsel %vm226, %v219, 0
    %v234 = vsel %vm226, %v220, 0
    %v237 = vsel %vm226, %v221, 0
    %v240 = vsel %vm226, %v222, 0
    %v243 = vsel %vm226, %v223, 0
    %v246 = vsel %vm226, %v224, 0
    %v249 = vsel %vm226, %v225, 0
    %251 = vmatpush.msra.mxu0 0.0
    %252 = vmatpush.msra.mxu0 0.0
    %253 = vmatpush.msra.mxu0 0.0
    %254 = vmatpush.msra.mxu0 0.0
    %255 = vmatpush.msra.mxu0 0.0
    %256 = vmatpush.msra.mxu0 0.0
    %257 = vmatpush.msra.mxu0 0.0
    %258 = vmatpush.msra.mxu0 0.0
    %259 = vmatpush.msra.mxu0 %v217
    %260 = vmatpush.msra.mxu0 %v214
    %261 = vmatpush.msra.mxu0 %v211
    %262 = vmatpush.msra.mxu0 %v208
    %263 = vmatpush.msra.mxu0 %v205
    %264 = vmatpush.msra.mxu0 %v202
    %265 = vmatpush.msra.mxu0 %v199
    %266 = vmatpush.msra.mxu0 %v196
    %267 = vmatmul.f32.gmra.mxu0 %v228
    %v268 = vpop.f32.mrf.mxu0
    %v269 = vadd.f32 0.0, %v268
    %270 = vmatmul.f32.gmra.mxu0 %v231
    %v271 = vpop.f32.mrf.mxu0
    %v272 = vadd.f32 0.0, %v271
    %273 = vmatmul.f32.gmra.mxu0 %v234
    %v274 = vpop.f32.mrf.mxu0
    %v275 = vadd.f32 0.0, %v274
    %276 = vmatmul.f32.gmra.mxu0 %v237
    %v277 = vpop.f32.mrf.mxu0
    %v278 = vadd.f32 0.0, %v277
    %279 = vmatmul.f32.gmra.mxu0 %v240
    %v280 = vpop.f32.mrf.mxu0
    %v281 = vadd.f32 0.0, %v280
    %282 = vmatmul.f32.gmra.mxu0 %v243
    %v283 = vpop.f32.mrf.mxu0
    %v284 = vadd.f32 0.0, %v283
    %285 = vmatmul.f32.gmra.mxu0 %v246
    %v286 = vpop.f32.mrf.mxu0
    %v287 = vadd.f32 0.0, %v286
    %288 = vmatmul.f32.gmra.mxu0 %v249
    %v289 = vpop.f32.mrf.mxu0
    %v290 = vadd.f32 0.0, %v289
    %291 = vdwg.mxu0
    %v292 = vmul.f32 %v269, 0.013888889
    %v293 = vmul.f32 %v272, 0.013888889
    %v294 = vmul.f32 %v275, 0.013888889
    %v295 = vmul.f32 %v278, 0.013888889
    %v296 = vmul.f32 %v281, 0.013888889
    %v297 = vmul.f32 %v284, 0.013888889
    %v298 = vmul.f32 %v287, 0.013888889
    %v299 = vmul.f32 %v290, 0.013888889
    %301 = vset.pattern.permute.xlu0 0
    %302 = vperm.xlu0 %301, %v292
    %v303 = vpop.permute.xlu0 %302
    %306 = vset.pattern.permute.xlu0 0
    %307 = vperm.xlu0 %306, %v293
    %v308 = vpop.permute.xlu0 %307
    %311 = vset.pattern.permute.xlu0 0
    %312 = vperm.xlu0 %311, %v294
    %v313 = vpop.permute.xlu0 %312
    %316 = vset.pattern.permute.xlu0 0
    %317 = vperm.xlu0 %316, %v295
    %v318 = vpop.permute.xlu0 %317
    %321 = vset.pattern.permute.xlu0 0
    %322 = vperm.xlu0 %321, %v296
    %v323 = vpop.permute.xlu0 %322
    %326 = vset.pattern.permute.xlu0 0
    %327 = vperm.xlu0 %326, %v297
    %v328 = vpop.permute.xlu0 %327
    %331 = vset.pattern.permute.xlu0 0
    %332 = vperm.xlu0 %331, %v298
    %v333 = vpop.permute.xlu0 %332
    %336 = vset.pattern.permute.xlu0 0
    %337 = vperm.xlu0 %336, %v299
    %v338 = vpop.permute.xlu0 %337
    %v340 = vsub.f32 %v170, %v303
    %v341 = vsub.f32 %v173, %v308
    %v342 = vsub.f32 %v176, %v313
    %v343 = vsub.f32 %v179, %v318
    %v344 = vsub.f32 %v182, %v323
    %v345 = vsub.f32 %v185, %v328
    %v346 = vsub.f32 %v188, %v333
    %v347 = vsub.f32 %v191, %v338
    %v348 = vmul.f32 %v340, %v340
    %v349 = vmul.f32 %v341, %v341
    %v350 = vmul.f32 %v342, %v342
    %v351 = vmul.f32 %v343, %v343
    %v352 = vmul.f32 %v344, %v344
    %v353 = vmul.f32 %v345, %v345
    %v354 = vmul.f32 %v346, %v346
    %v355 = vmul.f32 %v347, %v347
    %v356 = vsel %vm193, %v348, 0.0
    %357 = vadd.xlane.f32.xlu0 %v356
    %v358 = vpop.xlane.xlu0 %357
    %v359 = vsel %vm193, %v349, 0.0
    %360 = vadd.xlane.f32.xlu0 %v359
    %v361 = vpop.xlane.xlu0 %360
    %v362 = vsel %vm193, %v350, 0.0
    %363 = vadd.xlane.f32.xlu0 %v362
    %v364 = vpop.xlane.xlu0 %363
    %v365 = vsel %vm193, %v351, 0.0
    %366 = vadd.xlane.f32.xlu0 %v365
    %v367 = vpop.xlane.xlu0 %366
    %v368 = vsel %vm193, %v352, 0.0
    %369 = vadd.xlane.f32.xlu0 %v368
    %v370 = vpop.xlane.xlu0 %369
    %v371 = vsel %vm193, %v353, 0.0
    %372 = vadd.xlane.f32.xlu0 %v371
    %v373 = vpop.xlane.xlu0 %372
    %v374 = vsel %vm193, %v354, 0.0
    %375 = vadd.xlane.f32.xlu0 %v374
    %v376 = vpop.xlane.xlu0 %375
    %v377 = vsel %vm193, %v355, 0.0
    %378 = vadd.xlane.f32.xlu0 %v377
    %v379 = vpop.xlane.xlu0 %378
    %380 = vmatpush.msra.mxu0 0.0
    %381 = vmatpush.msra.mxu0 0.0
    %382 = vmatpush.msra.mxu0 0.0
    %383 = vmatpush.msra.mxu0 0.0
    %384 = vmatpush.msra.mxu0 0.0
    %385 = vmatpush.msra.mxu0 0.0
    %386 = vmatpush.msra.mxu0 0.0
    %387 = vmatpush.msra.mxu0 0.0
    %388 = vmatpush.msra.mxu0 %v379
    %389 = vmatpush.msra.mxu0 %v376
    %390 = vmatpush.msra.mxu0 %v373
    %391 = vmatpush.msra.mxu0 %v370
    %392 = vmatpush.msra.mxu0 %v367
    %393 = vmatpush.msra.mxu0 %v364
    %394 = vmatpush.msra.mxu0 %v361
    %395 = vmatpush.msra.mxu0 %v358
    %396 = vmatmul.f32.gmra.mxu0 %v228
    %v397 = vpop.f32.mrf.mxu0
    %v398 = vadd.f32 0.0, %v397
    %399 = vmatmul.f32.gmra.mxu0 %v231
    %v400 = vpop.f32.mrf.mxu0
    %v401 = vadd.f32 0.0, %v400
    %402 = vmatmul.f32.gmra.mxu0 %v234
    %v403 = vpop.f32.mrf.mxu0
    %v404 = vadd.f32 0.0, %v403
    %405 = vmatmul.f32.gmra.mxu0 %v237
    %v406 = vpop.f32.mrf.mxu0
    %v407 = vadd.f32 0.0, %v406
    %408 = vmatmul.f32.gmra.mxu0 %v240
    %v409 = vpop.f32.mrf.mxu0
    %v410 = vadd.f32 0.0, %v409
    %411 = vmatmul.f32.gmra.mxu0 %v243
    %v412 = vpop.f32.mrf.mxu0
    %v413 = vadd.f32 0.0, %v412
    %414 = vmatmul.f32.gmra.mxu0 %v246
    %v415 = vpop.f32.mrf.mxu0
    %v416 = vadd.f32 0.0, %v415
    %417 = vmatmul.f32.gmra.mxu0 %v249
    %v418 = vpop.f32.mrf.mxu0
    %v419 = vadd.f32 0.0, %v418
    %420 = vdwg.mxu0
    %v421 = vmul.f32 %v398, 0.013888889
    %v422 = vmul.f32 %v401, 0.013888889
    %v423 = vmul.f32 %v404, 0.013888889
    %v424 = vmul.f32 %v407, 0.013888889
    %v425 = vmul.f32 %v410, 0.013888889
    %v426 = vmul.f32 %v413, 0.013888889
    %v427 = vmul.f32 %v416, 0.013888889
    %v428 = vmul.f32 %v419, 0.013888889
    %v429 = vadd.f32 %v421, 1e-05
    %v430 = vadd.f32 %v422, 1e-05
    %v431 = vadd.f32 %v423, 1e-05
    %v432 = vadd.f32 %v424, 1e-05
    %v433 = vadd.f32 %v425, 1e-05
    %v434 = vadd.f32 %v426, 1e-05
    %v435 = vadd.f32 %v427, 1e-05
    %v436 = vadd.f32 %v428, 1e-05
    %v437 = vrsqrt.pop %v429
    %v438 = vmul.f32 %v437, %v429
    %v439 = vmul.f32 %v438, %v437
    %v440 = vmul.f32 0.5, %v439
    %v441 = vsub.f32 1.5, %v440
    %v442 = vmul.f32 %v437, %v441
    %vm443 = vweird.f32 %v429
    %vm444 = vweird.f32 %v437
    %vm445 = vmor %vm443, %vm444
    %v446 = vsel %vm445, %v437, %v442
    %v447 = vrsqrt.pop %v430
    %v448 = vmul.f32 %v447, %v430
    %v449 = vmul.f32 %v448, %v447
    %v450 = vmul.f32 0.5, %v449
    %v451 = vsub.f32 1.5, %v450
    %v452 = vmul.f32 %v447, %v451
    %vm453 = vweird.f32 %v430
    %vm454 = vweird.f32 %v447
    %vm455 = vmor %vm453, %vm454
    %v456 = vsel %vm455, %v447, %v452
    %v457 = vrsqrt.pop %v431
    %v458 = vmul.f32 %v457, %v431
    %v459 = vmul.f32 %v458, %v457
    %v460 = vmul.f32 0.5, %v459
    %v461 = vsub.f32 1.5, %v460
    %v462 = vmul.f32 %v457, %v461
    %vm463 = vweird.f32 %v431
    %vm464 = vweird.f32 %v457
    %vm465 = vmor %vm463, %vm464
    %v466 = vsel %vm465, %v457, %v462
    %v467 = vrsqrt.pop %v432
    %v468 = vmul.f32 %v467, %v432
    %v469 = vmul.f32 %v468, %v467
    %v470 = vmul.f32 0.5, %v469
    %v471 = vsub.f32 1.5, %v470
    %v472 = vmul.f32 %v467, %v471
    %vm473 = vweird.f32 %v432
    %vm474 = vweird.f32 %v467
    %vm475 = vmor %vm473, %vm474
    %v476 = vsel %vm475, %v467, %v472
    %v477 = vrsqrt.pop %v433
    %v478 = vmul.f32 %v477, %v433
    %v479 = vmul.f32 %v478, %v477
    %v480 = vmul.f32 0.5, %v479
    %v481 = vsub.f32 1.5, %v480
    %v482 = vmul.f32 %v477, %v481
    %vm483 = vweird.f32 %v433
    %vm484 = vweird.f32 %v477
    %vm485 = vmor %vm483, %vm484
    %v486 = vsel %vm485, %v477, %v482
    %v487 = vrsqrt.pop %v434
    %v488 = vmul.f32 %v487, %v434
    %v489 = vmul.f32 %v488, %v487
    %v490 = vmul.f32 0.5, %v489
    %v491 = vsub.f32 1.5, %v490
    %v492 = vmul.f32 %v487, %v491
    %vm493 = vweird.f32 %v434
    %vm494 = vweird.f32 %v487
    %vm495 = vmor %vm493, %vm494
    %v496 = vsel %vm495, %v487, %v492
    %v497 = vrsqrt.pop %v435
    %v498 = vmul.f32 %v497, %v435
    %v499 = vmul.f32 %v498, %v497
    %v500 = vmul.f32 0.5, %v499
    %v501 = vsub.f32 1.5, %v500
    %v502 = vmul.f32 %v497, %v501
    %vm503 = vweird.f32 %v435
    %vm504 = vweird.f32 %v497
    %vm505 = vmor %vm503, %vm504
    %v506 = vsel %vm505, %v497, %v502
    %v507 = vrsqrt.pop %v436
    %v508 = vmul.f32 %v507, %v436
    %v509 = vmul.f32 %v508, %v507
    %v510 = vmul.f32 0.5, %v509
    %v511 = vsub.f32 1.5, %v510
    %v512 = vmul.f32 %v507, %v511
    %vm513 = vweird.f32 %v436
    %vm514 = vweird.f32 %v507
    %vm515 = vmor %vm513, %vm514
    %v516 = vsel %vm515, %v507, %v512
    %518 = vset.pattern.permute.xlu0 0
    %519 = vperm.xlu0 %518, %v446
    %v520 = vpop.permute.xlu0 %519
    %523 = vset.pattern.permute.xlu0 0
    %524 = vperm.xlu0 %523, %v456
    %v525 = vpop.permute.xlu0 %524
    %528 = vset.pattern.permute.xlu0 0
    %529 = vperm.xlu0 %528, %v466
    %v530 = vpop.permute.xlu0 %529
    %533 = vset.pattern.permute.xlu0 0
    %534 = vperm.xlu0 %533, %v476
    %v535 = vpop.permute.xlu0 %534
    %538 = vset.pattern.permute.xlu0 0
    %539 = vperm.xlu0 %538, %v486
    %v540 = vpop.permute.xlu0 %539
    %543 = vset.pattern.permute.xlu0 0
    %544 = vperm.xlu0 %543, %v496
    %v545 = vpop.permute.xlu0 %544
    %548 = vset.pattern.permute.xlu0 0
    %549 = vperm.xlu0 %548, %v506
    %v550 = vpop.permute.xlu0 %549
    %553 = vset.pattern.permute.xlu0 0
    %554 = vperm.xlu0 %553, %v516
    %v555 = vpop.permute.xlu0 %554
    %v557 = vmul.f32 %v340, %v520
    %v558 = vmul.f32 %v341, %v525
    %v559 = vmul.f32 %v342, %v530
    %v560 = vmul.f32 %v343, %v535
    %v561 = vmul.f32 %v344, %v540
    %v562 = vmul.f32 %v345, %v545
    %v563 = vmul.f32 %v346, %v550
    %v564 = vmul.f32 %v347, %v555
    %v565 = vld [vmem:[%s3] sm:$0xff]
    %v566 = vld [vmem:[%s3 + $0x8] sm:$0xff]
    %v567 = vld [vmem:[%s3 + $0x10] sm:$0xff]
    %v568 = vld [vmem:[%s3 + $0x18] sm:$0xff]
    %v569 = vld [vmem:[%s3 + $0x20] sm:$0xff]
    %v570 = vld [vmem:[%s3 + $0x28] sm:$0xff]
    %v571 = vld [vmem:[%s3 + $0x30] sm:$0xff]
    %v572 = vld [vmem:[%s3 + $0x38] sm:$0xff]
    %574 = vset.pattern.permute.xlu0 0
    %575 = vperm.xlu0 %574, %v565
    %v576 = vpop.permute.xlu0 %575
    %579 = vset.pattern.permute.xlu0 0
    %580 = vperm.xlu0 %579, %v566
    %v581 = vpop.permute.xlu0 %580
    %584 = vset.pattern.permute.xlu0 0
    %585 = vperm.xlu0 %584, %v567
    %v586 = vpop.permute.xlu0 %585
    %589 = vset.pattern.permute.xlu0 0
    %590 = vperm.xlu0 %589, %v568
    %v591 = vpop.permute.xlu0 %590
    %594 = vset.pattern.permute.xlu0 0
    %595 = vperm.xlu0 %594, %v569
    %v596 = vpop.permute.xlu0 %595
    %599 = vset.pattern.permute.xlu0 0
    %600 = vperm.xlu0 %599, %v570
    %v601 = vpop.permute.xlu0 %600
    %604 = vset.pattern.permute.xlu0 0
    %605 = vperm.xlu0 %604, %v571
    %v606 = vpop.permute.xlu0 %605
    %609 = vset.pattern.permute.xlu0 0
    %610 = vperm.xlu0 %609, %v572
    %v611 = vpop.permute.xlu0 %610
    %v613 = vmul.f32 %v557, %v576
    %v614 = vmul.f32 %v558, %v581
    %v615 = vmul.f32 %v559, %v586
    %v616 = vmul.f32 %v560, %v591
    %v617 = vmul.f32 %v561, %v596
    %v618 = vmul.f32 %v562, %v601
    %v619 = vmul.f32 %v563, %v606
    %v620 = vmul.f32 %v564, %v611
    %v621 = vld [vmem:[%s4] sm:$0xff]
    %v622 = vld [vmem:[%s4 + $0x8] sm:$0xff]
    %v623 = vld [vmem:[%s4 + $0x10] sm:$0xff]
    %v624 = vld [vmem:[%s4 + $0x18] sm:$0xff]
    %v625 = vld [vmem:[%s4 + $0x20] sm:$0xff]
    %v626 = vld [vmem:[%s4 + $0x28] sm:$0xff]
    %v627 = vld [vmem:[%s4 + $0x30] sm:$0xff]
    %v628 = vld [vmem:[%s4 + $0x38] sm:$0xff]
    %630 = vset.pattern.permute.xlu0 0
    %631 = vperm.xlu0 %630, %v621
    %v632 = vpop.permute.xlu0 %631
    %635 = vset.pattern.permute.xlu0 0
    %636 = vperm.xlu0 %635, %v622
    %v637 = vpop.permute.xlu0 %636
    %640 = vset.pattern.permute.xlu0 0
    %641 = vperm.xlu0 %640, %v623
    %v642 = vpop.permute.xlu0 %641
    %645 = vset.pattern.permute.xlu0 0
    %646 = vperm.xlu0 %645, %v624
    %v647 = vpop.permute.xlu0 %646
    %650 = vset.pattern.permute.xlu0 0
    %651 = vperm.xlu0 %650, %v625
    %v652 = vpop.permute.xlu0 %651
    %655 = vset.pattern.permute.xlu0 0
    %656 = vperm.xlu0 %655, %v626
    %v657 = vpop.permute.xlu0 %656
    %660 = vset.pattern.permute.xlu0 0
    %661 = vperm.xlu0 %660, %v627
    %v662 = vpop.permute.xlu0 %661
    %665 = vset.pattern.permute.xlu0 0
    %666 = vperm.xlu0 %665, %v628
    %v667 = vpop.permute.xlu0 %666
    %v669 = vadd.f32 %v613, %v632
    %v670 = vadd.f32 %v614, %v637
    %v671 = vadd.f32 %v615, %v642
    %v672 = vadd.f32 %v616, %v647
    %v673 = vadd.f32 %v617, %v652
    %v674 = vadd.f32 %v618, %v657
    %v675 = vadd.f32 %v619, %v662
    %v676 = vadd.f32 %v620, %v667
    %v677 = vmax.f32 %v669, 0.0
    %v678 = vmax.f32 %v670, 0.0
    %v679 = vmax.f32 %v671, 0.0
    %v680 = vmax.f32 %v672, 0.0
    %v681 = vmax.f32 %v673, 0.0
    %v682 = vmax.f32 %v674, 0.0
    %v683 = vmax.f32 %v675, 0.0
    %v684 = vmax.f32 %v676, 0.0
    %685 = vst.msk [vmem:[%s5] sm:$0xff] %vm193, %v677
    %686 = vst.msk [vmem:[%s5 + $0x8] sm:$0xff] %vm193, %v678
    %687 = vst.msk [vmem:[%s5 + $0x10] sm:$0xff] %vm193, %v679
    %688 = vst.msk [vmem:[%s5 + $0x18] sm:$0xff] %vm193, %v680
    %689 = vst.msk [vmem:[%s5 + $0x20] sm:$0xff] %vm193, %v681
    %690 = vst.msk [vmem:[%s5 + $0x28] sm:$0xff] %vm193, %v682
    %691 = vst.msk [vmem:[%s5 + $0x30] sm:$0xff] %vm193, %v683
    %692 = vst.msk [vmem:[%s5 + $0x38] sm:$0xff] %vm193, %v684
    // Predicated region
    $region30: #{generator_forward.9} parent=1 // pred_check
      _
    $region31: #{generator_forward.9} parent=1 // pred_check_branch
      %694 = sbr.rel (0) target = $region33
    $region32: #{generator_forward.9} parent=1 // pred_region
      _
    $region33: #{generator_forward.9} parent=1 // pred_fallthru
      _
    // Predicated region
    $region34: #{generator_forward.9} parent=1 // pred_check
      _
    $region35: #{generator_forward.9} parent=1 // pred_check_branch
      %696 = sbr.rel (0) target = $region37
    $region36: #{generator_forward.9} parent=1 // pred_region
      _
    $region37: #{generator_forward.9} parent=1 // pred_fallthru
      _
    %697 = vsyncpa [#allocation3], 1
    %698 = vsyncpa [#allocation5], 1

// kernel: generator_forward.10
$region0: #{generator_forward.10}
  #allocation0 [shape = 'u32[]', space=smem, size = 0x4, offset = 0x4, fixed_abs, tag = 'smem constant byte address 0x4 - core index']
  #allocation1 [shape = 'u32[72,128]{1,0:T(1,128)}', space=vmem, size = 0x9000, scoped, tag = 'internal scratch']
  %s0 = inlined_call_operand.vmem [shape: f32[72,32], index: 0, kind: input, shape index: {}]
  %s1 = inlined_call_operand.vmem [shape: f32[32,144], index: 1, kind: input, shape index: {}]
  %s2 = inlined_call_operand.vmem [shape: f32[72,144], index: 2, kind: output, shape index: {}]
  %s3 = sld [smem:[#allocation0]]
  $region18: #{generator_forward.10} parent=0
    _
  %s5 = ssub.s32 1, %s3
  %s6 = scalar_select 0, %s5, %s3
  // Predicated region
  $region2: #{generator_forward.10} parent=0 // pred_check
    _
  $region3: #{generator_forward.10} parent=0 // pred_check_branch
    %8 = sbr.rel (0) target = $region5
  $region4: #{generator_forward.10} parent=0 // pred_region
    _
  $region5: #{generator_forward.10} parent=0 // pred_fallthru
    _
  // Predicated region
  $region6: #{generator_forward.10} parent=0 // pred_check
    _
  $region7: #{generator_forward.10} parent=0 // pred_check_branch
    %10 = sbr.rel (0) target = $region9
  $region8: #{generator_forward.10} parent=0 // pred_region
    _
  $region9: #{generator_forward.10} parent=0 // pred_fallthru
    _
  %v11 = vld [vmem:[%s0] sm:$0xff]
  %v12 = vld [vmem:[%s0 + $0x8] sm:$0xff]
  %v13 = vld [vmem:[%s0 + $0x10] sm:$0xff]
  %v14 = vld [vmem:[%s0 + $0x18] sm:$0xff]
  %v15 = vld [vmem:[%s0 + $0x20] sm:$0xff]
  %v16 = vld [vmem:[%s0 + $0x28] sm:$0xff]
  %v17 = vld [vmem:[%s0 + $0x30] sm:$0xff]
  %v18 = vld [vmem:[%s0 + $0x38] sm:$0xff]
  %v19 = vld [vmem:[%s0 + $0x40] sm:$0xff]
  %v20 = vld [vmem:[%s1] sm:$0xff]
  %v21 = vld [vmem:[%s1 + $0x8] sm:$0xff]
  %v22 = vld [vmem:[%s1 + $0x10] sm:$0xff]
  %v23 = vld [vmem:[%s1 + $0x18] sm:$0xff]
  %v24 = vld [vmem:[%s1 + $0x20] sm:$0xff]
  %v25 = vld [vmem:[%s1 + $0x28] sm:$0xff]
  %v26 = vld [vmem:[%s1 + $0x30] sm:$0xff]
  %v27 = vld [vmem:[%s1 + $0x38] sm:$0xff]
  %vm28 = vcmask 261120
  %v30 = vsel %vm28, %v11, 0
  %v33 = vsel %vm28, %v12, 0
  %v36 = vsel %vm28, %v13, 0
  %v39 = vsel %vm28, %v14, 0
  %v42 = vsel %vm28, %v15, 0
  %v45 = vsel %vm28, %v16, 0
  %v48 = vsel %vm28, %v17, 0
  %v51 = vsel %vm28, %v18, 0
  %v54 = vsel %vm28, %v19, 0
  %56 = vmatpush.msra.mxu0 0.0
  %57 = vmatpush.msra.mxu0 0.0
  %58 = vmatpush.msra.mxu0 0.0
  %59 = vmatpush.msra.mxu0 0.0
  %60 = vmatpush.msra.mxu0 0.0
  %61 = vmatpush.msra.mxu0 0.0
  %62 = vmatpush.msra.mxu0 0.0
  %63 = vmatpush.msra.mxu0 0.0
  %64 = vmatpush.msra.mxu0 0.0
  %65 = vmatpush.msra.mxu0 0.0
  %66 = vmatpush.msra.mxu0 0.0
  %67 = vmatpush.msra.mxu0 0.0
  %68 = vmatpush.msra.mxu0 %v26
  %69 = vmatpush.msra.mxu0 %v24
  %70 = vmatpush.msra.mxu0 %v22
  %71 = vmatpush.msra.mxu0 %v20
  %72 = vmatmul.f32.gmra.mxu0 %v30
  %v73 = vpop.f32.mrf.mxu0
  %v74 = vadd.f32 0.0, %v73
  %75 = vmatmul.f32.gmra.mxu0 %v33
  %v76 = vpop.f32.mrf.mxu0
  %v77 = vadd.f32 0.0, %v76
  %78 = vmatmul.f32.gmra.mxu0 %v36
  %v79 = vpop.f32.mrf.mxu0
  %v80 = vadd.f32 0.0, %v79
  %81 = vmatmul.f32.gmra.mxu0 %v39
  %v82 = vpop.f32.mrf.mxu0
  %v83 = vadd.f32 0.0, %v82
  %84 = vmatmul.f32.gmra.mxu0 %v42
  %v85 = vpop.f32.mrf.mxu0
  %v86 = vadd.f32 0.0, %v85
  %87 = vmatmul.f32.gmra.mxu0 %v45
  %v88 = vpop.f32.mrf.mxu0
  %v89 = vadd.f32 0.0, %v88
  %90 = vmatmul.f32.gmra.mxu0 %v48
  %v91 = vpop.f32.mrf.mxu0
  %v92 = vadd.f32 0.0, %v91
  %93 = vmatmul.f32.gmra.mxu0 %v51
  %v94 = vpop.f32.mrf.mxu0
  %v95 = vadd.f32 0.0, %v94
  %96 = vmatmul.f32.gmra.mxu0 %v54
  %v97 = vpop.f32.mrf.mxu0
  %v98 = vadd.f32 0.0, %v97
  %99 = vdwg.mxu0
  %100 = vmatpush.msra.mxu0 0.0
  %101 = vmatpush.msra.mxu0 0.0
  %102 = vmatpush.msra.mxu0 0.0
  %103 = vmatpush.msra.mxu0 0.0
  %104 = vmatpush.msra.mxu0 0.0
  %105 = vmatpush.msra.mxu0 0.0
  %106 = vmatpush.msra.mxu0 0.0
  %107 = vmatpush.msra.mxu0 0.0
  %108 = vmatpush.msra.mxu0 0.0
  %109 = vmatpush.msra.mxu0 0.0
  %110 = vmatpush.msra.mxu0 0.0
  %111 = vmatpush.msra.mxu0 0.0
  %112 = vmatpush.msra.mxu0 %v27
  %113 = vmatpush.msra.mxu0 %v25
  %114 = vmatpush.msra.mxu0 %v23
  %115 = vmatpush.msra.mxu0 %v21
  %116 = vmatmul.f32.gmra.mxu0 %v30
  %v117 = vpop.f32.mrf.mxu0
  %v118 = vadd.f32 0.0, %v117
  %119 = vmatmul.f32.gmra.mxu0 %v33
  %v120 = vpop.f32.mrf.mxu0
  %v121 = vadd.f32 0.0, %v120
  %122 = vmatmul.f32.gmra.mxu0 %v36
  %v123 = vpop.f32.mrf.mxu0
  %v124 = vadd.f32 0.0, %v123
  %125 = vmatmul.f32.gmra.mxu0 %v39
  %v126 = vpop.f32.mrf.mxu0
  %v127 = vadd.f32 0.0, %v126
  %128 = vmatmul.f32.gmra.mxu0 %v42
  %v129 = vpop.f32.mrf.mxu0
  %v130 = vadd.f32 0.0, %v129
  %131 = vmatmul.f32.gmra.mxu0 %v45
  %v132 = vpop.f32.mrf.mxu0
  %v133 = vadd.f32 0.0, %v132
  %134 = vmatmul.f32.gmra.mxu0 %v48
  %v135 = vpop.f32.mrf.mxu0
  %v136 = vadd.f32 0.0, %v135
  %137 = vmatmul.f32.gmra.mxu0 %v51
  %v138 = vpop.f32.mrf.mxu0
  %v139 = vadd.f32 0.0, %v138
  %140 = vmatmul.f32.gmra.mxu0 %v54
  %v141 = vpop.f32.mrf.mxu0
  %v142 = vadd.f32 0.0, %v141
  %143 = vdwg.mxu0
  %144 = vst [vmem:[%s2] sm:$0xff] %v74
  %vm145 = vcmask 130048
  %146 = vst.msk [vmem:[%s2 + $0x8] sm:$0xff] %vm145, %v118
  %147 = vst [vmem:[%s2 + $0x10] sm:$0xff] %v77
  %148 = vst.msk [vmem:[%s2 + $0x18] sm:$0xff] %vm145, %v121
  %149 = vst [vmem:[%s2 + $0x20] sm:$0xff] %v80
  %150 = vst.msk [vmem:[%s2 + $0x28] sm:$0xff] %vm145, %v124
  %151 = vst [vmem:[%s2 + $0x30] sm:$0xff] %v83
  %152 = vst.msk [vmem:[%s2 + $0x38] sm:$0xff] %vm145, %v127
  %153 = vst [vmem:[%s2 + $0x40] sm:$0xff] %v86
  %154 = vst.msk [vmem:[%s2 + $0x48] sm:$0xff] %vm145, %v130
  %155 = vst [vmem:[%s2 + $0x50] sm:$0xff] %v89
  %156 = vst.msk [vmem:[%s2 + $0x58] sm:$0xff] %vm145, %v133
  %157 = vst [vmem:[%s2 + $0x60] sm:$0xff] %v92
  %158 = vst.msk [vmem:[%s2 + $0x68] sm:$0xff] %vm145, %v136
  %159 = vst [vmem:[%s2 + $0x70] sm:$0xff] %v95
  %160 = vst.msk [vmem:[%s2 + $0x78] sm:$0xff] %vm145, %v139
  %161 = vst [vmem:[%s2 + $0x80] sm:$0xff] %v98
  %162 = vst.msk [vmem:[%s2 + $0x88] sm:$0xff] %vm145, %v142
  // Predicated region
  $region10: #{generator_forward.10} parent=0 // pred_check
    _
  $region11: #{generator_forward.10} parent=0 // pred_check_branch
    %164 = sbr.rel (0) target = $region13
  $region12: #{generator_forward.10} parent=0 // pred_region
    _
  $region13: #{generator_forward.10} parent=0 // pred_fallthru
    _
  // Predicated region
  $region14: #{generator_forward.10} parent=0 // pred_check
    _
  $region15: #{generator_forward.10} parent=0 // pred_check_branch
    %166 = sbr.rel (0) target = $region17
  $region16: #{generator_forward.10} parent=0 // pred_region
    _
  $region17: #{generator_forward.10} parent=0 // pred_fallthru
    _

// kernel: generator_forward.11
$region0: #{generator_forward.11}
  #allocation0 [shape = 'u32[]', space=smem, size = 0x4, offset = 0x4, fixed_abs, tag = 'smem constant byte address 0x4 - core index']
  #allocation1 [shape = 'u32[72,128]{1,0:T(1,128)}', space=vmem, size = 0x9000, scoped, tag = 'internal scratch']
  %s0 = inlined_call_operand.vmem [shape: f32[32,324], index: 0, kind: input, shape index: {}]
  %s1 = inlined_call_operand.vmem [shape: f32[324,169], index: 1, kind: input, shape index: {}]
  %s2 = inlined_call_operand.vmem [shape: f32[32,32], index: 2, kind: input, shape index: {}]
  %s3 = inlined_call_operand.vmem [shape: f32[32,1], index: 3, kind: input, shape index: {}]
  %s4 = inlined_call_operand.vmem [shape: f32[32,1], index: 4, kind: input, shape index: {}]
  %s5 = inlined_call_operand.vmem [shape: f32[32,169], index: 5, kind: output, shape index: {}]
  %s6 = sld [smem:[#allocation0]]
  $region30: #{generator_forward.11} parent=0
    _
  %s8 = ssub.s32 1, %s6
  %s9 = scalar_select 0, %s8, %s6
  // Predicated region
  $region2: #{generator_forward.11} parent=0 // pred_check
    _
  $region3: #{generator_forward.11} parent=0 // pred_check_branch
    %11 = sbr.rel (0) target = $region5
  $region4: #{generator_forward.11} parent=0 // pred_region
    _
  $region5: #{generator_forward.11} parent=0 // pred_fallthru
    _
  // Predicated region
  $region6: #{generator_forward.11} parent=0 // pred_check
    _
  $region7: #{generator_forward.11} parent=0 // pred_check_branch
    %13 = sbr.rel (0) target = $region9
  $region8: #{generator_forward.11} parent=0 // pred_region
    _
  $region9: #{generator_forward.11} parent=0 // pred_fallthru
    _
  // Predicated region
  $region10: #{generator_forward.11} parent=0 // pred_check
    _
  $region11: #{generator_forward.11} parent=0 // pred_check_branch
    %15 = sbr.rel (0) target = $region13
  $region12: #{generator_forward.11} parent=0 // pred_region
    _
  $region13: #{generator_forward.11} parent=0 // pred_fallthru
    _
  // Predicated region
  $region14: #{generator_forward.11} parent=0 // pred_check
    _
  $region15: #{generator_forward.11} parent=0 // pred_check_branch
    %17 = sbr.rel (0) target = $region17
  $region16: #{generator_forward.11} parent=0 // pred_region
    _
  $region17: #{generator_forward.11} parent=0 // pred_fallthru
    _
  // Predicated region
  $region18: #{generator_forward.11} parent=0 // pred_check
    _
  $region19: #{generator_forward.11} parent=0 // pred_check_branch
    %19 = sbr.rel (0) target = $region21
  $region20: #{generator_forward.11} parent=0 // pred_region
    _
  $region21: #{generator_forward.11} parent=0 // pred_fallthru
    _
  %v20 = vld [vmem:[%s0] sm:$0xff]
  %v21 = vld [vmem:[%s0 + $0x8] sm:$0xff]
  %v22 = vld [vmem:[%s0 + $0x10] sm:$0xff]
  %v23 = vld [vmem:[%s0 + $0x18] sm:$0xff]
  %v24 = vld [vmem:[%s0 + $0x20] sm:$0xff]
  %v25 = vld [vmem:[%s0 + $0x28] sm:$0xff]
  %v26 = vld [vmem:[%s0 + $0x30] sm:$0xff]
  %v27 = vld [vmem:[%s0 + $0x38] sm:$0xff]
  %v28 = vld [vmem:[%s0 + $0x40] sm:$0xff]
  %v29 = vld [vmem:[%s0 + $0x48] sm:$0xff]
  %v30 = vld [vmem:[%s0 + $0x50] sm:$0xff]
  %v31 = vld [vmem:[%s0 + $0x58] sm:$0xff]
  %v32 = vld [vmem:[%s1] sm:$0xff]
  %v33 = vld [vmem:[%s1 + $0x8] sm:$0xff]
  %v34 = vld [vmem:[%s1 + $0x10] sm:$0xff]
  %v35 = vld [vmem:[%s1 + $0x18] sm:$0xff]
  %v36 = vld [vmem:[%s1 + $0x20] sm:$0xff]
  %v37 = vld [vmem:[%s1 + $0x28] sm:$0xff]
  %v38 = vld [vmem:[%s1 + $0x30] sm:$0xff]
  %v39 = vld [vmem:[%s1 + $0x38] sm:$0xff]
  %v40 = vld [vmem:[%s1 + $0x40] sm:$0xff]
  %v41 = vld [vmem:[%s1 + $0x48] sm:$0xff]
  %v42 = vld [vmem:[%s1 + $0x50] sm:$0xff]
  %v43 = vld [vmem:[%s1 + $0x58] sm:$0xff]
  %v44 = vld [vmem:[%s1 + $0x60] sm:$0xff]
  %v45 = vld [vmem:[%s1 + $0x68] sm:$0xff]
  %v46 = vld [vmem:[%s1 + $0x70] sm:$0xff]
  %v47 = vld [vmem:[%s1 + $0x78] sm:$0xff]
  %v48 = vld [vmem:[%s1 + $0x80] sm:$0xff]
  %v49 = vld [vmem:[%s1 + $0x88] sm:$0xff]
  %v50 = vld [vmem:[%s1 + $0x90] sm:$0xff]
  %v51 = vld [vmem:[%s1 + $0x98] sm:$0xff]
  %v52 = vld [vmem:[%s1 + $0xa0] sm:$0xff]
  %v53 = vld [vmem:[%s1 + $0xa8] sm:$0xff]
  %v54 = vld [vmem:[%s1 + $0xb0] sm:$0xff]
  %v55 = vld [vmem:[%s1 + $0xb8] sm:$0xff]
  %v56 = vld [vmem:[%s1 + $0xc0] sm:$0xff]
  %v57 = vld [vmem:[%s1 + $0xc8] sm:$0xff]
  %v58 = vld [vmem:[%s1 + $0xd0] sm:$0xff]
  %v59 = vld [vmem:[%s1 + $0xd8] sm:$0xff]
  %v60 = vld [vmem:[%s1 + $0xe0] sm:$0xff]
  %v61 = vld [vmem:[%s1 + $0xe8] sm:$0xff]
  %v62 = vld [vmem:[%s1 + $0xf0] sm:$0xff]
  %v63 = vld [vmem:[%s1 + $0xf8] sm:$0xff]
  %v64 = vld [vmem:[%s1 + $0x100] sm:$0xff]
  %v65 = vld [vmem:[%s1 + $0x108] sm:$0xff]
  %v66 = vld [vmem:[%s1 + $0x110] sm:$0xff]
  %v67 = vld [vmem:[%s1 + $0x118] sm:$0xff]
  %v68 = vld [vmem:[%s1 + $0x120] sm:$0xff]
  %v69 = vld [vmem:[%s1 + $0x128] sm:$0xff]
  %v70 = vld [vmem:[%s1 + $0x130] sm:$0xff]
  %v71 = vld [vmem:[%s1 + $0x138] sm:$0xff]
  %v72 = vld [vmem:[%s1 + $0x140] sm:$0xff]
  %v73 = vld [vmem:[%s1 + $0x148] sm:$0xff]
  %v74 = vld [vmem:[%s1 + $0x150] sm:$0xff]
  %v75 = vld [vmem:[%s1 + $0x158] sm:$0xff]
  %v76 = vld [vmem:[%s1 + $0x160] sm:$0xff]
  %v77 = vld [vmem:[%s1 + $0x168] sm:$0xff]
  %v78 = vld [vmem:[%s1 + $0x170] sm:$0xff]
  %v79 = vld [vmem:[%s1 + $0x178] sm:$0xff]
  %v80 = vld [vmem:[%s1 + $0x180] sm:$0xff]
  %v81 = vld [vmem:[%s1 + $0x188] sm:$0xff]
  %v82 = vld [vmem:[%s1 + $0x190] sm:$0xff]
  %v83 = vld [vmem:[%s1 + $0x198] sm:$0xff]
  %v84 = vld [vmem:[%s1 + $0x1a0] sm:$0xff]
  %v85 = vld [vmem:[%s1 + $0x1a8] sm:$0xff]
  %v86 = vld [vmem:[%s1 + $0x1b0] sm:$0xff]
  %v87 = vld [vmem:[%s1 + $0x1b8] sm:$0xff]
  %v88 = vld [vmem:[%s1 + $0x1c0] sm:$0xff]
  %v89 = vld [vmem:[%s1 + $0x1c8] sm:$0xff]
  %v90 = vld [vmem:[%s1 + $0x1d0] sm:$0xff]
  %v91 = vld [vmem:[%s1 + $0x1d8] sm:$0xff]
  %v92 = vld [vmem:[%s1 + $0x1e0] sm:$0xff]
  %v93 = vld [vmem:[%s1 + $0x1e8] sm:$0xff]
  %v94 = vld [vmem:[%s1 + $0x1f0] sm:$0xff]
  %v95 = vld [vmem:[%s1 + $0x1f8] sm:$0xff]
  %v96 = vld [vmem:[%s1 + $0x200] sm:$0xff]
  %v97 = vld [vmem:[%s1 + $0x208] sm:$0xff]
  %v98 = vld [vmem:[%s1 + $0x210] sm:$0xff]
  %v99 = vld [vmem:[%s1 + $0x218] sm:$0xff]
  %v100 = vld [vmem:[%s1 + $0x220] sm:$0xff]
  %v101 = vld [vmem:[%s1 + $0x228] sm:$0xff]
  %v102 = vld [vmem:[%s1 + $0x230] sm:$0xff]
  %v103 = vld [vmem:[%s1 + $0x238] sm:$0xff]
  %v104 = vld [vmem:[%s1 + $0x240] sm:$0xff]
  %v105 = vld [vmem:[%s1 + $0x248] sm:$0xff]
  %v106 = vld [vmem:[%s1 + $0x250] sm:$0xff]
  %v107 = vld [vmem:[%s1 + $0x258] sm:$0xff]
  %v108 = vld [vmem:[%s1 + $0x260] sm:$0xff]
  %v109 = vld [vmem:[%s1 + $0x268] sm:$0xff]
  %v110 = vld [vmem:[%s1 + $0x270] sm:$0xff]
  %v111 = vld [vmem:[%s1 + $0x278] sm:$0xff]
  %v112 = vld [vmem:[%s1 + $0x280] sm:$0xf]
  %v113 = vld [vmem:[%s1 + $0x288] sm:$0xf]
  %vm114 = vcmask 556032
  %v116 = vsel %vm114, %v22, 0
  %v119 = vsel %vm114, %v25, 0
  %v122 = vsel %vm114, %v28, 0
  %v125 = vsel %vm114, %v31, 0
  %vm127 = vcmask 1043456
  %v129 = vsel %vm127, %v112, 0
  %v132 = vsel %vm127, %v113, 0
  %134 = vmatpush.msra.mxu0 %v62
  %135 = vmatpush.msra.mxu0 %v60
  %136 = vmatpush.msra.mxu0 %v58
  %137 = vmatpush.msra.mxu0 %v56
  %138 = vmatpush.msra.mxu0 %v54
  %139 = vmatpush.msra.mxu0 %v52
  %140 = vmatpush.msra.mxu0 %v50
  %141 = vmatpush.msra.mxu0 %v48
  %142 = vmatpush.msra.mxu0 %v46
  %143 = vmatpush.msra.mxu0 %v44
  %144 = vmatpush.msra.mxu0 %v42
  %145 = vmatpush.msra.mxu0 %v40
  %146 = vmatpush.msra.mxu0 %v38
  %147 = vmatpush.msra.mxu0 %v36
  %148 = vmatpush.msra.mxu0 %v34
  %149 = vmatpush.msra.mxu0 %v32
  %150 = vmatmul.f32.gmra.mxu0 %v20
  %v151 = vpop.f32.mrf.mxu0
  %v152 = vadd.f32 0.0, %v151
  %153 = vmatmul.f32.gmra.mxu0 %v23
  %v154 = vpop.f32.mrf.mxu0
  %v155 = vadd.f32 0.0, %v154
  %156 = vmatmul.f32.gmra.mxu0 %v26
  %v157 = vpop.f32.mrf.mxu0
  %v158 = vadd.f32 0.0, %v157
  %159 = vmatmul.f32.gmra.mxu0 %v29
  %v160 = vpop.f32.mrf.mxu0
  %v161 = vadd.f32 0.0, %v160
  %162 = vdwg.mxu0
  %163 = vmatpush.msra.mxu0 %v94
  %164 = vmatpush.msra.mxu0 %v92
  %165 = vmatpush.msra.mxu0 %v90
  %166 = vmatpush.msra.mxu0 %v88
  %167 = vmatpush.msra.mxu0 %v86
  %168 = vmatpush.msra.mxu0 %v84
  %169 = vmatpush.msra.mxu0 %v82
  %170 = vmatpush.msra.mxu0 %v80
  %171 = vmatpush.msra.mxu0 %v78
  %172 = vmatpush.msra.mxu0 %v76
  %173 = vmatpush.msra.mxu0 %v74
  %174 = vmatpush.msra.mxu0 %v72
  %175 = vmatpush.msra.mxu0 %v70
  %176 = vmatpush.msra.mxu0 %v68
  %177 = vmatpush.msra.mxu0 %v66
  %178 = vmatpush.msra.mxu0 %v64
  %179 = vmatmul.f32.gmra.mxu0 %v21
  %v180 = vpop.f32.mrf.mxu0
  %v181 = vadd.f32 %v152, %v180
  %182 = vmatmul.f32.gmra.mxu0 %v24
  %v183 = vpop.f32.mrf.mxu0
  %v184 = vadd.f32 %v155, %v183
  %185 = vmatmul.f32.gmra.mxu0 %v27
  %v186 = vpop.f32.mrf.mxu0
  %v187 = vadd.f32 %v158, %v186
  %188 = vmatmul.f32.gmra.mxu0 %v30
  %v189 = vpop.f32.mrf.mxu0
  %v190 = vadd.f32 %v161, %v189
  %191 = vdwg.mxu0
  %192 = vmatpush.msra.mxu0 0.0
  %193 = vmatpush.msra.mxu0 0.0
  %194 = vmatpush.msra.mxu0 0.0
  %195 = vmatpush.msra.mxu0 0.0
  %196 = vmatpush.msra.mxu0 0.0
  %197 = vmatpush.msra.mxu0 0.0
  %198 = vmatpush.msra.mxu0 0.0
  %199 = vmatpush.msra.mxu0 %v129
  %200 = vmatpush.msra.mxu0 %v110
  %201 = vmatpush.msra.mxu0 %v108
  %202 = vmatpush.msra.mxu0 %v106
  %203 = vmatpush.msra.mxu0 %v104
  %204 = vmatpush.msra.mxu0 %v102
  %205 = vmatpush.msra.mxu0 %v100
  %206 = vmatpush.msra.mxu0 %v98
  %207 = vmatpush.msra.mxu0 %v96
  %208 = vmatmul.f32.gmra.mxu0 %v116
  %v209 = vpop.f32.mrf.mxu0
  %v210 = vadd.f32 %v181, %v209
  %211 = vmatmul.f32.gmra.mxu0 %v119
  %v212 = vpop.f32.mrf.mxu0
  %v213 = vadd.f32 %v184, %v212
  %214 = vmatmul.f32.gmra.mxu0 %v122
  %v215 = vpop.f32.mrf.mxu0
  %v216 = vadd.f32 %v187, %v215
  %217 = vmatmul.f32.gmra.mxu0 %v125
  %v218 = vpop.f32.mrf.mxu0
  %v219 = vadd.f32 %v190, %v218
  %220 = vdwg.mxu0
  %221 = vmatpush.msra.mxu0 %v63
  %222 = vmatpush.msra.mxu0 %v61
  %223 = vmatpush.msra.mxu0 %v59
  %224 = vmatpush.msra.mxu0 %v57
  %225 = vmatpush.msra.mxu0 %v55
  %226 = vmatpush.msra.mxu0 %v53
  %227 = vmatpush.msra.mxu0 %v51
  %228 = vmatpush.msra.mxu0 %v49
  %229 = vmatpush.msra.mxu0 %v47
  %230 = vmatpush.msra.mxu0 %v45
  %231 = vmatpush.msra.mxu0 %v43
  %232 = vmatpush.msra.mxu0 %v41
  %233 = vmatpush.msra.mxu0 %v39
  %234 = vmatpush.msra.mxu0 %v37
  %235 = vmatpush.msra.mxu0 %v35
  %236 = vmatpush.msra.mxu0 %v33
  %237 = vmatmul.f32.gmra.mxu0 %v20
  %v238 = vpop.f32.mrf.mxu0
  %v239 = vadd.f32 0.0, %v238
  %240 = vmatmul.f32.gmra.mxu0 %v23
  %v241 = vpop.f32.mrf.mxu0
  %v242 = vadd.f32 0.0, %v241
  %243 = vmatmul.f32.gmra.mxu0 %v26
  %v244 = vpop.f32.mrf.mxu0
  %v245 = vadd.f32 0.0, %v244
  %246 = vmatmul.f32.gmra.mxu0 %v29
  %v247 = vpop.f32.mrf.mxu0
  %v248 = vadd.f32 0.0, %v247
  %249 = vdwg.mxu0
  %250 = vmatpush.msra.mxu0 %v95
  %251 = vmatpush.msra.mxu0 %v93
  %252 = vmatpush.msra.mxu0 %v91
  %253 = vmatpush.msra.mxu0 %v89
  %254 = vmatpush.msra.mxu0 %v87
  %255 = vmatpush.msra.mxu0 %v85
  %256 = vmatpush.msra.mxu0 %v83
  %257 = vmatpush.msra.mxu0 %v81
  %258 = vmatpush.msra.mxu0 %v79
  %259 = vmatpush.msra.mxu0 %v77
  %260 = vmatpush.msra.mxu0 %v75
  %261 = vmatpush.msra.mxu0 %v73
  %262 = vmatpush.msra.mxu0 %v71
  %263 = vmatpush.msra.mxu0 %v69
  %264 = vmatpush.msra.mxu0 %v67
  %265 = vmatpush.msra.mxu0 %v65
  %266 = vmatmul.f32.gmra.mxu0 %v21
  %v267 = vpop.f32.mrf.mxu0
  %v268 = vadd.f32 %v239, %v267
  %269 = vmatmul.f32.gmra.mxu0 %v24
  %v270 = vpop.f32.mrf.mxu0
  %v271 = vadd.f32 %v242, %v270
  %272 = vmatmul.f32.gmra.mxu0 %v27
  %v273 = vpop.f32.mrf.mxu0
  %v274 = vadd.f32 %v245, %v273
  %275 = vmatmul.f32.gmra.mxu0 %v30
  %v276 = vpop.f32.mrf.mxu0
  %v277 = vadd.f32 %v248, %v276
  %278 = vdwg.mxu0
  %279 = vmatpush.msra.mxu0 0.0
  %280 = vmatpush.msra.mxu0 0.0
  %281 = vmatpush.msra.mxu0 0.0
  %282 = vmatpush.msra.mxu0 0.0
  %283 = vmatpush.msra.mxu0 0.0
  %284 = vmatpush.msra.mxu0 0.0
  %285 = vmatpush.msra.mxu0 0.0
  %286 = vmatpush.msra.mxu0 %v132
  %287 = vmatpush.msra.mxu0 %v111
  %288 = vmatpush.msra.mxu0 %v109
  %289 = vmatpush.msra.mxu0 %v107
  %290 = vmatpush.msra.mxu0 %v105
  %291 = vmatpush.msra.mxu0 %v103
  %292 = vmatpush.msra.mxu0 %v101
  %293 = vmatpush.msra.mxu0 %v99
  %294 = vmatpush.msra.mxu0 %v97
  %295 = vmatmul.f32.gmra.mxu0 %v116
  %v296 = vpop.f32.mrf.mxu0
  %v297 = vadd.f32 %v268, %v296
  %298 = vmatmul.f32.gmra.mxu0 %v119
  %v299 = vpop.f32.mrf.mxu0
  %v300 = vadd.f32 %v271, %v299
  %301 = vmatmul.f32.gmra.mxu0 %v122
  %v302 = vpop.f32.mrf.mxu0
  %v303 = vadd.f32 %v274, %v302
  %304 = vmatmul.f32.gmra.mxu0 %v125
  %v305 = vpop.f32.mrf.mxu0
  %v306 = vadd.f32 %v277, %v305
  %307 = vdwg.mxu0
  %vm308 = vcmask 334848
  %v309 = vsel %vm308, %v297, 0.0
  %v310 = vadd.f32 %v210, %v309
  %311 = vadd.xlane.f32.xlu0 %v310
  %v312 = vpop.xlane.xlu0 %311
  %v313 = vsel %vm308, %v300, 0.0
  %v314 = vadd.f32 %v213, %v313
  %315 = vadd.xlane.f32.xlu0 %v314
  %v316 = vpop.xlane.xlu0 %315
  %v317 = vsel %vm308, %v303, 0.0
  %v318 = vadd.f32 %v216, %v317
  %319 = vadd.xlane.f32.xlu0 %v318
  %v320 = vpop.xlane.xlu0 %319
  %v321 = vsel %vm308, %v306, 0.0
  %v322 = vadd.f32 %v219, %v321
  %323 = vadd.xlane.f32.xlu0 %v322
  %v324 = vpop.xlane.xlu0 %323
  %v325 = vld [vmem:[%s2] sm:$0xff]
  %v326 = vld [vmem:[%s2 + $0x8] sm:$0xff]
  %v327 = vld [vmem:[%s2 + $0x10] sm:$0xff]
  %v328 = vld [vmem:[%s2 + $0x18] sm:$0xff]
  %vm329 = vcmask 261120
  %v331 = vsel %vm329, %v325, 0
  %v334 = vsel %vm329, %v326, 0
  %v337 = vsel %vm329, %v327, 0
  %v340 = vsel %vm329, %v328, 0
  %342 = vmatpush.msra.mxu0 0.0
  %343 = vmatpush.msra.mxu0 0.0
  %344 = vmatpush.msra.mxu0 0.0
  %345 = vmatpush.msra.mxu0 0.0
  %346 = vmatpush.msra.mxu0 0.0
  %347 = vmatpush.msra.mxu0 0.0
  %348 = vmatpush.msra.mxu0 0.0
  %349 = vmatpush.msra.mxu0 0.0
  %350 = vmatpush.msra.mxu0 0.0
  %351 = vmatpush.msra.mxu0 0.0
  %352 = vmatpush.msra.mxu0 0.0
  %353 = vmatpush.msra.mxu0 0.0
  %354 = vmatpush.msra.mxu0 %v324
  %355 = vmatpush.msra.mxu0 %v320
  %356 = vmatpush.msra.mxu0 %v316
  %357 = vmatpush.msra.mxu0 %v312
  %358 = vmatmul.f32.gmra.mxu0 %v331
  %v359 = vpop.f32.mrf.mxu0
  %v360 = vadd.f32 0.0, %v359
  %361 = vmatmul.f32.gmra.mxu0 %v334
  %v362 = vpop.f32.mrf.mxu0
  %v363 = vadd.f32 0.0, %v362
  %364 = vmatmul.f32.gmra.mxu0 %v337
  %v365 = vpop.f32.mrf.mxu0
  %v366 = vadd.f32 0.0, %v365
  %367 = vmatmul.f32.gmra.mxu0 %v340
  %v368 = vpop.f32.mrf.mxu0
  %v369 = vadd.f32 0.0, %v368
  %370 = vdwg.mxu0
  %v371 = vmul.f32 %v360, 0.00295858
  %v372 = vmul.f32 %v363, 0.00295858
  %v373 = vmul.f32 %v366, 0.00295858
  %v374 = vmul.f32 %v369, 0.00295858
  %376 = vset.pattern.permute.xlu0 0
  %377 = vperm.xlu0 %376, %v371
  %v378 = vpop.permute.xlu0 %377
  %381 = vset.pattern.permute.xlu0 0
  %382 = vperm.xlu0 %381, %v372
  %v383 = vpop.permute.xlu0 %382
  %386 = vset.pattern.permute.xlu0 0
  %387 = vperm.xlu0 %386, %v373
  %v388 = vpop.permute.xlu0 %387
  %391 = vset.pattern.permute.xlu0 0
  %392 = vperm.xlu0 %391, %v374
  %v393 = vpop.permute.xlu0 %392
  %v395 = vsub.f32 %v210, %v378
  %v396 = vsub.f32 %v297, %v378
  %v397 = vsub.f32 %v213, %v383
  %v398 = vsub.f32 %v300, %v383
  %v399 = vsub.f32 %v216, %v388
  %v400 = vsub.f32 %v303, %v388
  %v401 = vsub.f32 %v219, %v393
  %v402 = vsub.f32 %v306, %v393
  %v403 = vmul.f32 %v395, %v395
  %v404 = vmul.f32 %v396, %v396
  %v405 = vmul.f32 %v397, %v397
  %v406 = vmul.f32 %v398, %v398
  %v407 = vmul.f32 %v399, %v399
  %v408 = vmul.f32 %v400, %v400
  %v409 = vmul.f32 %v401, %v401
  %v410 = vmul.f32 %v402, %v402
  %v411 = vsel %vm308, %v404, 0.0
  %v412 = vadd.f32 %v403, %v411
  %413 = vadd.xlane.f32.xlu0 %v412
  %v414 = vpop.xlane.xlu0 %413
  %v415 = vsel %vm308, %v406, 0.0
  %v416 = vadd.f32 %v405, %v415
  %417 = vadd.xlane.f32.xlu0 %v416
  %v418 = vpop.xlane.xlu0 %417
  %v419 = vsel %vm308, %v408, 0.0
  %v420 = vadd.f32 %v407, %v419
  %421 = vadd.xlane.f32.xlu0 %v420
  %v422 = vpop.xlane.xlu0 %421
  %v423 = vsel %vm308, %v410, 0.0
  %v424 = vadd.f32 %v409, %v423
  %425 = vadd.xlane.f32.xlu0 %v424
  %v426 = vpop.xlane.xlu0 %425
  %427 = vmatpush.msra.mxu0 0.0
  %428 = vmatpush.msra.mxu0 0.0
  %429 = vmatpush.msra.mxu0 0.0
  %430 = vmatpush.msra.mxu0 0.0
  %431 = vmatpush.msra.mxu0 0.0
  %432 = vmatpush.msra.mxu0 0.0
  %433 = vmatpush.msra.mxu0 0.0
  %434 = vmatpush.msra.mxu0 0.0
  %435 = vmatpush.msra.mxu0 0.0
  %436 = vmatpush.msra.mxu0 0.0
  %437 = vmatpush.msra.mxu0 0.0
  %438 = vmatpush.msra.mxu0 0.0
  %439 = vmatpush.msra.mxu0 %v426
  %440 = vmatpush.msra.mxu0 %v422
  %441 = vmatpush.msra.mxu0 %v418
  %442 = vmatpush.msra.mxu0 %v414
  %443 = vmatmul.f32.gmra.mxu0 %v331
  %v444 = vpop.f32.mrf.mxu0
  %v445 = vadd.f32 0.0, %v444
  %446 = vmatmul.f32.gmra.mxu0 %v334
  %v447 = vpop.f32.mrf.mxu0
  %v448 = vadd.f32 0.0, %v447
  %449 = vmatmul.f32.gmra.mxu0 %v337
  %v450 = vpop.f32.mrf.mxu0
  %v451 = vadd.f32 0.0, %v450
  %452 = vmatmul.f32.gmra.mxu0 %v340
  %v453 = vpop.f32.mrf.mxu0
  %v454 = vadd.f32 0.0, %v453
  %455 = vdwg.mxu0
  %v456 = vmul.f32 %v445, 0.00295858
  %v457 = vmul.f32 %v448, 0.00295858
  %v458 = vmul.f32 %v451, 0.00295858
  %v459 = vmul.f32 %v454, 0.00295858
  %v460 = vadd.f32 %v456, 1e-05
  %v461 = vadd.f32 %v457, 1e-05
  %v462 = vadd.f32 %v458, 1e-05
  %v463 = vadd.f32 %v459, 1e-05
  %v464 = vrsqrt.pop %v460
  %v465 = vmul.f32 %v464, %v460
  %v466 = vmul.f32 %v465, %v464
  %v467 = vmul.f32 0.5, %v466
  %v468 = vsub.f32 1.5, %v467
  %v469 = vmul.f32 %v464, %v468
  %vm470 = vweird.f32 %v460
  %vm471 = vweird.f32 %v464
  %vm472 = vmor %vm470, %vm471
  %v473 = vsel %vm472, %v464, %v469
  %v474 = vrsqrt.pop %v461
  %v475 = vmul.f32 %v474, %v461
  %v476 = vmul.f32 %v475, %v474
  %v477 = vmul.f32 0.5, %v476
  %v478 = vsub.f32 1.5, %v477
  %v479 = vmul.f32 %v474, %v478
  %vm480 = vweird.f32 %v461
  %vm481 = vweird.f32 %v474
  %vm482 = vmor %vm480, %vm481
  %v483 = vsel %vm482, %v474, %v479
  %v484 = vrsqrt.pop %v462
  %v485 = vmul.f32 %v484, %v462
  %v486 = vmul.f32 %v485, %v484
  %v487 = vmul.f32 0.5, %v486
  %v488 = vsub.f32 1.5, %v487
  %v489 = vmul.f32 %v484, %v488
  %vm490 = vweird.f32 %v462
  %vm491 = vweird.f32 %v484
  %vm492 = vmor %vm490, %vm491
  %v493 = vsel %vm492, %v484, %v489
  %v494 = vrsqrt.pop %v463
  %v495 = vmul.f32 %v494, %v463
  %v496 = vmul.f32 %v495, %v494
  %v497 = vmul.f32 0.5, %v496
  %v498 = vsub.f32 1.5, %v497
  %v499 = vmul.f32 %v494, %v498
  %vm500 = vweird.f32 %v463
  %vm501 = vweird.f32 %v494
  %vm502 = vmor %vm500, %vm501
  %v503 = vsel %vm502, %v494, %v499
  %505 = vset.pattern.permute.xlu0 0
  %506 = vperm.xlu0 %505, %v473
  %v507 = vpop.permute.xlu0 %506
  %510 = vset.pattern.permute.xlu0 0
  %511 = vperm.xlu0 %510, %v483
  %v512 = vpop.permute.xlu0 %511
  %515 = vset.pattern.permute.xlu0 0
  %516 = vperm.xlu0 %515, %v493
  %v517 = vpop.permute.xlu0 %516
  %520 = vset.pattern.permute.xlu0 0
  %521 = vperm.xlu0 %520, %v503
  %v522 = vpop.permute.xlu0 %521
  %v524 = vmul.f32 %v395, %v507
  %v525 = vmul.f32 %v396, %v507
  %v526 = vmul.f32 %v397, %v512
  %v527 = vmul.f32 %v398, %v512
  %v528 = vmul.f32 %v399, %v517
  %v529 = vmul.f32 %v400, %v517
  %v530 = vmul.f32 %v401, %v522
  %v531 = vmul.f32 %v402, %v522
  %v532 = vld [vmem:[%s3] sm:$0xff]
  %v533 = vld [vmem:[%s3 + $0x8] sm:$0xff]
  %v534 = vld [vmem:[%s3 + $0x10] sm:$0xff]
  %v535 = vld [vmem:[%s3 + $0x18] sm:$0xff]
  %537 = vset.pattern.permute.xlu0 0
  %538 = vperm.xlu0 %537, %v532
  %v539 = vpop.permute.xlu0 %538
  %542 = vset.pattern.permute.xlu0 0
  %543 = vperm.xlu0 %542, %v533
  %v544 = vpop.permute.xlu0 %543
  %547 = vset.pattern.permute.xlu0 0
  %548 = vperm.xlu0 %547, %v534
  %v549 = vpop.permute.xlu0 %548
  %552 = vset.pattern.permute.xlu0 0
  %553 = vperm.xlu0 %552, %v535
  %v554 = vpop.permute.xlu0 %553
  %v556 = vmul.f32 %v524, %v539
  %v557 = vmul.f32 %v525, %v539
  %v558 = vmul.f32 %v526, %v544
  %v559 = vmul.f32 %v527, %v544
  %v560 = vmul.f32 %v528, %v549
  %v561 = vmul.f32 %v529, %v549
  %v562 = vmul.f32 %v530, %v554
  %v563 = vmul.f32 %v531, %v554
  %v564 = vld [vmem:[%s4] sm:$0xff]
  %v565 = vld [vmem:[%s4 + $0x8] sm:$0xff]
  %v566 = vld [vmem:[%s4 + $0x10] sm:$0xff]
  %v567 = vld [vmem:[%s4 + $0x18] sm:$0xff]
  %569 = vset.pattern.permute.xlu0 0
  %570 = vperm.xlu0 %569, %v564
  %v571 = vpop.permute.xlu0 %570
  %574 = vset.pattern.permute.xlu0 0
  %575 = vperm.xlu0 %574, %v565
  %v576 = vpop.permute.xlu0 %575
  %579 = vset.pattern.permute.xlu0 0
  %580 = vperm.xlu0 %579, %v566
  %v581 = vpop.permute.xlu0 %580
  %584 = vset.pattern.permute.xlu0 0
  %585 = vperm.xlu0 %584, %v567
  %v586 = vpop.permute.xlu0 %585
  %v588 = vadd.f32 %v556, %v571
  %v589 = vadd.f32 %v557, %v571
  %v590 = vadd.f32 %v558, %v576
  %v591 = vadd.f32 %v559, %v576
  %v592 = vadd.f32 %v560, %v581
  %v593 = vadd.f32 %v561, %v581
  %v594 = vadd.f32 %v562, %v586
  %v595 = vadd.f32 %v563, %v586
  %v596 = vmax.f32 %v588, 0.0
  %v597 = vmax.f32 %v589, 0.0
  %v598 = vmax.f32 %v590, 0.0
  %v599 = vmax.f32 %v591, 0.0
  %v600 = vmax.f32 %v592, 0.0
  %v601 = vmax.f32 %v593, 0.0
  %v602 = vmax.f32 %v594, 0.0
  %v603 = vmax.f32 %v595, 0.0
  %604 = vst [vmem:[%s5] sm:$0xff] %v596
  %605 = vst.msk [vmem:[%s5 + $0x8] sm:$0xff] %vm308, %v597
  %606 = vst [vmem:[%s5 + $0x10] sm:$0xff] %v598
  %607 = vst.msk [vmem:[%s5 + $0x18] sm:$0xff] %vm308, %v599
  %608 = vst [vmem:[%s5 + $0x20] sm:$0xff] %v600
  %609 = vst.msk [vmem:[%s5 + $0x28] sm:$0xff] %vm308, %v601
  %610 = vst [vmem:[%s5 + $0x30] sm:$0xff] %v602
  %611 = vst.msk [vmem:[%s5 + $0x38] sm:$0xff] %vm308, %v603
  // Predicated region
  $region22: #{generator_forward.11} parent=0 // pred_check
    _
  $region23: #{generator_forward.11} parent=0 // pred_check_branch
    %613 = sbr.rel (0) target = $region25
  $region24: #{generator_forward.11} parent=0 // pred_region
    _
  $region25: #{generator_forward.11} parent=0 // pred_fallthru
    _
  // Predicated region
  $region26: #{generator_forward.11} parent=0 // pred_check
    _
  $region27: #{generator_forward.11} parent=0 // pred_check_branch
    %615 = sbr.rel (0) target = $region29
  $region28: #{generator_forward.11} parent=0 // pred_region
    _
  $region29: #{generator_forward.11} parent=0 // pred_fallthru
    _

// kernel: generator_forward.12
$region0: #{generator_forward.12}
  #allocation0 [shape = 'u32[]', space=smem, size = 0x4, offset = 0x4, fixed_abs, tag = 'smem constant byte address 0x4 - core index']
  #allocation1 [shape = 'u32[72,128]{1,0:T(1,128)}', space=vmem, size = 0x9000, scoped, tag = 'internal scratch']
  %s0 = inlined_call_operand.vmem [shape: f32[338,16], index: 0, kind: input, shape index: {}]
  %s1 = inlined_call_operand.vmem [shape: f32[16,48], index: 1, kind: input, shape index: {}]
  %s2 = inlined_call_operand.vmem [shape: f32[338,48], index: 2, kind: output, shape index: {}]
  %s3 = sld [smem:[#allocation0]]
  $region18: #{generator_forward.12} parent=0
    _
  %s5 = ssub.s32 1, %s3
  %s6 = scalar_select 0, %s5, %s3
  // Predicated region
  $region2: #{generator_forward.12} parent=0 // pred_check
    _
  $region3: #{generator_forward.12} parent=0 // pred_check_branch
    %8 = sbr.rel (0) target = $region5
  $region4: #{generator_forward.12} parent=0 // pred_region
    _
  $region5: #{generator_forward.12} parent=0 // pred_fallthru
    _
  // Predicated region
  $region6: #{generator_forward.12} parent=0 // pred_check
    _
  $region7: #{generator_forward.12} parent=0 // pred_check_branch
    %10 = sbr.rel (0) target = $region9
  $region8: #{generator_forward.12} parent=0 // pred_region
    _
  $region9: #{generator_forward.12} parent=0 // pred_fallthru
    _
  %v11 = vld [vmem:[%s0] sm:$0xff]
  %v12 = vld [vmem:[%s0 + $0x8] sm:$0xff]
  %v13 = vld [vmem:[%s0 + $0x10] sm:$0xff]
  %v14 = vld [vmem:[%s0 + $0x18] sm:$0xff]
  %v15 = vld [vmem:[%s0 + $0x20] sm:$0xff]
  %v16 = vld [vmem:[%s0 + $0x28] sm:$0xff]
  %v17 = vld [vmem:[%s0 + $0x30] sm:$0xff]
  %v18 = vld [vmem:[%s0 + $0x38] sm:$0xff]
  %v19 = vld [vmem:[%s0 + $0x40] sm:$0xff]
  %v20 = vld [vmem:[%s0 + $0x48] sm:$0xff]
  %v21 = vld [vmem:[%s0 + $0x50] sm:$0xff]
  %v22 = vld [vmem:[%s0 + $0x58] sm:$0xff]
  %v23 = vld [vmem:[%s0 + $0x60] sm:$0xff]
  %v24 = vld [vmem:[%s0 + $0x68] sm:$0xff]
  %v25 = vld [vmem:[%s0 + $0x70] sm:$0xff]
  %v26 = vld [vmem:[%s0 + $0x78] sm:$0xff]
  %v27 = vld [vmem:[%s0 + $0x80] sm:$0xff]
  %v28 = vld [vmem:[%s0 + $0x88] sm:$0xff]
  %v29 = vld [vmem:[%s0 + $0x90] sm:$0xff]
  %v30 = vld [vmem:[%s0 + $0x98] sm:$0xff]
  %v31 = vld [vmem:[%s0 + $0xa0] sm:$0xff]
  %v32 = vld [vmem:[%s0 + $0xa8] sm:$0xff]
  %v33 = vld [vmem:[%s0 + $0xb0] sm:$0xff]
  %v34 = vld [vmem:[%s0 + $0xb8] sm:$0xff]
  %v35 = vld [vmem:[%s0 + $0xc0] sm:$0xff]
  %v36 = vld [vmem:[%s0 + $0xc8] sm:$0xff]
  %v37 = vld [vmem:[%s0 + $0xd0] sm:$0xff]
  %v38 = vld [vmem:[%s0 + $0xd8] sm:$0xff]
  %v39 = vld [vmem:[%s0 + $0xe0] sm:$0xff]
  %v40 = vld [vmem:[%s0 + $0xe8] sm:$0xff]
  %v41 = vld [vmem:[%s0 + $0xf0] sm:$0xff]
  %v42 = vld [vmem:[%s0 + $0xf8] sm:$0xff]
  %v43 = vld [vmem:[%s0 + $0x100] sm:$0xff]
  %v44 = vld [vmem:[%s0 + $0x108] sm:$0xff]
  %v45 = vld [vmem:[%s0 + $0x110] sm:$0xff]
  %v46 = vld [vmem:[%s0 + $0x118] sm:$0xff]
  %v47 = vld [vmem:[%s0 + $0x120] sm:$0xff]
  %v48 = vld [vmem:[%s0 + $0x128] sm:$0xff]
  %v49 = vld [vmem:[%s0 + $0x130] sm:$0xff]
  %v50 = vld [vmem:[%s0 + $0x138] sm:$0xff]
  %v51 = vld [vmem:[%s0 + $0x140] sm:$0xff]
  %v52 = vld [vmem:[%s0 + $0x148] sm:$0xff]
  %v53 = vld [vmem:[%s0 + $0x150] sm:$0x3]
  %v54 = vld [vmem:[%s1] sm:$0xff]
  %v55 = vld [vmem:[%s1 + $0x8] sm:$0xff]
  %vm56 = vcmask 130048
  %v58 = vsel %vm56, %v11, 0
  %v61 = vsel %vm56, %v12, 0
  %v64 = vsel %vm56, %v13, 0
  %v67 = vsel %vm56, %v14, 0
  %v70 = vsel %vm56, %v15, 0
  %v73 = vsel %vm56, %v16, 0
  %v76 = vsel %vm56, %v17, 0
  %v79 = vsel %vm56, %v18, 0
  %v82 = vsel %vm56, %v19, 0
  %v85 = vsel %vm56, %v20, 0
  %v88 = vsel %vm56, %v21, 0
  %v91 = vsel %vm56, %v22, 0
  %v94 = vsel %vm56, %v23, 0
  %v97 = vsel %vm56, %v24, 0
  %v100 = vsel %vm56, %v25, 0
  %v103 = vsel %vm56, %v26, 0
  %v106 = vsel %vm56, %v27, 0
  %v109 = vsel %vm56, %v28, 0
  %v112 = vsel %vm56, %v29, 0
  %v115 = vsel %vm56, %v30, 0
  %v118 = vsel %vm56, %v31, 0
  %v121 = vsel %vm56, %v32, 0
  %v124 = vsel %vm56, %v33, 0
  %v127 = vsel %vm56, %v34, 0
  %v130 = vsel %vm56, %v35, 0
  %v133 = vsel %vm56, %v36, 0
  %v136 = vsel %vm56, %v37, 0
  %v139 = vsel %vm56, %v38, 0
  %v142 = vsel %vm56, %v39, 0
  %v145 = vsel %vm56, %v40, 0
  %v148 = vsel %vm56, %v41, 0
  %v151 = vsel %vm56, %v42, 0
  %v154 = vsel %vm56, %v43, 0
  %v157 = vsel %vm56, %v44, 0
  %v160 = vsel %vm56, %v45, 0
  %v163 = vsel %vm56, %v46, 0
  %v166 = vsel %vm56, %v47, 0
  %v169 = vsel %vm56, %v48, 0
  %v172 = vsel %vm56, %v49, 0
  %v175 = vsel %vm56, %v50, 0
  %v178 = vsel %vm56, %v51, 0
  %v181 = vsel %vm56, %v52, 0
  %v184 = vsel %vm56, %v53, 0
  %186 = vmatpush.msra.mxu0 0.0
  %187 = vmatpush.msra.mxu0 0.0
  %188 = vmatpush.msra.mxu0 0.0
  %189 = vmatpush.msra.mxu0 0.0
  %190 = vmatpush.msra.mxu0 0.0
  %191 = vmatpush.msra.mxu0 0.0
  %192 = vmatpush.msra.mxu0 0.0
  %193 = vmatpush.msra.mxu0 0.0
  %194 = vmatpush.msra.mxu0 0.0
  %195 = vmatpush.msra.mxu0 0.0
  %196 = vmatpush.msra.mxu0 0.0
  %197 = vmatpush.msra.mxu0 0.0
  %198 = vmatpush.msra.mxu0 0.0
  %199 = vmatpush.msra.mxu0 0.0
  %200 = vmatpush.msra.mxu0 %v55
  %201 = vmatpush.msra.mxu0 %v54
  %202 = vmatmul.f32.gmra.mxu0 %v58
  %v203 = vpop.f32.mrf.mxu0
  %v204 = vadd.f32 0.0, %v203
  %205 = vmatmul.f32.gmra.mxu0 %v61
  %v206 = vpop.f32.mrf.mxu0
  %v207 = vadd.f32 0.0, %v206
  %208 = vmatmul.f32.gmra.mxu0 %v64
  %v209 = vpop.f32.mrf.mxu0
  %v210 = vadd.f32 0.0, %v209
  %211 = vmatmul.f32.gmra.mxu0 %v67
  %v212 = vpop.f32.mrf.mxu0
  %v213 = vadd.f32 0.0, %v212
  %214 = vmatmul.f32.gmra.mxu0 %v70
  %v215 = vpop.f32.mrf.mxu0
  %v216 = vadd.f32 0.0, %v215
  %217 = vmatmul.f32.gmra.mxu0 %v73
  %v218 = vpop.f32.mrf.mxu0
  %v219 = vadd.f32 0.0, %v218
  %220 = vmatmul.f32.gmra.mxu0 %v76
  %v221 = vpop.f32.mrf.mxu0
  %v222 = vadd.f32 0.0, %v221
  %223 = vmatmul.f32.gmra.mxu0 %v79
  %v224 = vpop.f32.mrf.mxu0
  %v225 = vadd.f32 0.0, %v224
  %226 = vmatmul.f32.gmra.mxu0 %v82
  %v227 = vpop.f32.mrf.mxu0
  %v228 = vadd.f32 0.0, %v227
  %229 = vmatmul.f32.gmra.mxu0 %v85
  %v230 = vpop.f32.mrf.mxu0
  %v231 = vadd.f32 0.0, %v230
  %232 = vmatmul.f32.gmra.mxu0 %v88
  %v233 = vpop.f32.mrf.mxu0
  %v234 = vadd.f32 0.0, %v233
  %235 = vmatmul.f32.gmra.mxu0 %v91
  %v236 = vpop.f32.mrf.mxu0
  %v237 = vadd.f32 0.0, %v236
  %238 = vmatmul.f32.gmra.mxu0 %v94
  %v239 = vpop.f32.mrf.mxu0
  %v240 = vadd.f32 0.0, %v239
  %241 = vmatmul.f32.gmra.mxu0 %v97
  %v242 = vpop.f32.mrf.mxu0
  %v243 = vadd.f32 0.0, %v242
  %244 = vmatmul.f32.gmra.mxu0 %v100
  %v245 = vpop.f32.mrf.mxu0
  %v246 = vadd.f32 0.0, %v245
  %247 = vmatmul.f32.gmra.mxu0 %v103
  %v248 = vpop.f32.mrf.mxu0
  %v249 = vadd.f32 0.0, %v248
  %250 = vmatmul.f32.gmra.mxu0 %v106
  %v251 = vpop.f32.mrf.mxu0
  %v252 = vadd.f32 0.0, %v251
  %253 = vmatmul.f32.gmra.mxu0 %v109
  %v254 = vpop.f32.mrf.mxu0
  %v255 = vadd.f32 0.0, %v254
  %256 = vmatmul.f32.gmra.mxu0 %v112
  %v257 = vpop.f32.mrf.mxu0
  %v258 = vadd.f32 0.0, %v257
  %259 = vmatmul.f32.gmra.mxu0 %v115
  %v260 = vpop.f32.mrf.mxu0
  %v261 = vadd.f32 0.0, %v260
  %262 = vmatmul.f32.gmra.mxu0 %v118
  %v263 = vpop.f32.mrf.mxu0
  %v264 = vadd.f32 0.0, %v263
  %265 = vmatmul.f32.gmra.mxu0 %v121
  %v266 = vpop.f32.mrf.mxu0
  %v267 = vadd.f32 0.0, %v266
  %268 = vmatmul.f32.gmra.mxu0 %v124
  %v269 = vpop.f32.mrf.mxu0
  %v270 = vadd.f32 0.0, %v269
  %271 = vmatmul.f32.gmra.mxu0 %v127
  %v272 = vpop.f32.mrf.mxu0
  %v273 = vadd.f32 0.0, %v272
  %274 = vmatmul.f32.gmra.mxu0 %v130
  %v275 = vpop.f32.mrf.mxu0
  %v276 = vadd.f32 0.0, %v275
  %277 = vmatmul.f32.gmra.mxu0 %v133
  %v278 = vpop.f32.mrf.mxu0
  %v279 = vadd.f32 0.0, %v278
  %280 = vmatmul.f32.gmra.mxu0 %v136
  %v281 = vpop.f32.mrf.mxu0
  %v282 = vadd.f32 0.0, %v281
  %283 = vmatmul.f32.gmra.mxu0 %v139
  %v284 = vpop.f32.mrf.mxu0
  %v285 = vadd.f32 0.0, %v284
  %286 = vmatmul.f32.gmra.mxu0 %v142
  %v287 = vpop.f32.mrf.mxu0
  %v288 = vadd.f32 0.0, %v287
  %289 = vmatmul.f32.gmra.mxu0 %v145
  %v290 = vpop.f32.mrf.mxu0
  %v291 = vadd.f32 0.0, %v290
  %292 = vmatmul.f32.gmra.mxu0 %v148
  %v293 = vpop.f32.mrf.mxu0
  %v294 = vadd.f32 0.0, %v293
  %295 = vmatmul.f32.gmra.mxu0 %v151
  %v296 = vpop.f32.mrf.mxu0
  %v297 = vadd.f32 0.0, %v296
  %298 = vmatmul.f32.gmra.mxu0 %v154
  %v299 = vpop.f32.mrf.mxu0
  %v300 = vadd.f32 0.0, %v299
  %301 = vmatmul.f32.gmra.mxu0 %v157
  %v302 = vpop.f32.mrf.mxu0
  %v303 = vadd.f32 0.0, %v302
  %304 = vmatmul.f32.gmra.mxu0 %v160
  %v305 = vpop.f32.mrf.mxu0
  %v306 = vadd.f32 0.0, %v305
  %307 = vmatmul.f32.gmra.mxu0 %v163
  %v308 = vpop.f32.mrf.mxu0
  %v309 = vadd.f32 0.0, %v308
  %310 = vmatmul.f32.gmra.mxu0 %v166
  %v311 = vpop.f32.mrf.mxu0
  %v312 = vadd.f32 0.0, %v311
  %313 = vmatmul.f32.gmra.mxu0 %v169
  %v314 = vpop.f32.mrf.mxu0
  %v315 = vadd.f32 0.0, %v314
  %316 = vmatmul.f32.gmra.mxu0 %v172
  %v317 = vpop.f32.mrf.mxu0
  %v318 = vadd.f32 0.0, %v317
  %319 = vmatmul.f32.gmra.mxu0 %v175
  %v320 = vpop.f32.mrf.mxu0
  %v321 = vadd.f32 0.0, %v320
  %322 = vmatmul.f32.gmra.mxu0 %v178
  %v323 = vpop.f32.mrf.mxu0
  %v324 = vadd.f32 0.0, %v323
  %325 = vmatmul.f32.gmra.mxu0 %v181
  %v326 = vpop.f32.mrf.mxu0
  %v327 = vadd.f32 0.0, %v326
  %328 = vmatmul.f32.gmra.mxu0 %v184
  %v329 = vpop.f32.mrf.mxu0
  %v330 = vadd.f32 0.0, %v329
  %331 = vdwg.mxu0
  %vm332 = vcmask 392192
  %333 = vst.msk [vmem:[%s2] sm:$0xff] %vm332, %v204
  %334 = vst.msk [vmem:[%s2 + $0x8] sm:$0xff] %vm332, %v207
  %335 = vst.msk [vmem:[%s2 + $0x10] sm:$0xff] %vm332, %v210
  %336 = vst.msk [vmem:[%s2 + $0x18] sm:$0xff] %vm332, %v213
  %337 = vst.msk [vmem:[%s2 + $0x20] sm:$0xff] %vm332, %v216
  %338 = vst.msk [vmem:[%s2 + $0x28] sm:$0xff] %vm332, %v219
  %339 = vst.msk [vmem:[%s2 + $0x30] sm:$0xff] %vm332, %v222
  %340 = vst.msk [vmem:[%s2 + $0x38] sm:$0xff] %vm332, %v225
  %341 = vst.msk [vmem:[%s2 + $0x40] sm:$0xff] %vm332, %v228
  %342 = vst.msk [vmem:[%s2 + $0x48] sm:$0xff] %vm332, %v231
  %343 = vst.msk [vmem:[%s2 + $0x50] sm:$0xff] %vm332, %v234
  %344 = vst.msk [vmem:[%s2 + $0x58] sm:$0xff] %vm332, %v237
  %345 = vst.msk [vmem:[%s2 + $0x60] sm:$0xff] %vm332, %v240
  %346 = vst.msk [vmem:[%s2 + $0x68] sm:$0xff] %vm332, %v243
  %347 = vst.msk [vmem:[%s2 + $0x70] sm:$0xff] %vm332, %v246
  %348 = vst.msk [vmem:[%s2 + $0x78] sm:$0xff] %vm332, %v249
  %349 = vst.msk [vmem:[%s2 + $0x80] sm:$0xff] %vm332, %v252
  %350 = vst.msk [vmem:[%s2 + $0x88] sm:$0xff] %vm332, %v255
  %351 = vst.msk [vmem:[%s2 + $0x90] sm:$0xff] %vm332, %v258
  %352 = vst.msk [vmem:[%s2 + $0x98] sm:$0xff] %vm332, %v261
  %353 = vst.msk [vmem:[%s2 + $0xa0] sm:$0xff] %vm332, %v264
  %354 = vst.msk [vmem:[%s2 + $0xa8] sm:$0xff] %vm332, %v267
  %355 = vst.msk [vmem:[%s2 + $0xb0] sm:$0xff] %vm332, %v270
  %356 = vst.msk [vmem:[%s2 + $0xb8] sm:$0xff] %vm332, %v273
  %357 = vst.msk [vmem:[%s2 + $0xc0] sm:$0xff] %vm332, %v276
  %358 = vst.msk [vmem:[%s2 + $0xc8] sm:$0xff] %vm332, %v279
  %359 = vst.msk [vmem:[%s2 + $0xd0] sm:$0xff] %vm332, %v282
  %360 = vst.msk [vmem:[%s2 + $0xd8] sm:$0xff] %vm332, %v285
  %361 = vst.msk [vmem:[%s2 + $0xe0] sm:$0xff] %vm332, %v288
  %362 = vst.msk [vmem:[%s2 + $0xe8] sm:$0xff] %vm332, %v291
  %363 = vst.msk [vmem:[%s2 + $0xf0] sm:$0xff] %vm332, %v294
  %364 = vst.msk [vmem:[%s2 + $0xf8] sm:$0xff] %vm332, %v297
  %365 = vst.msk [vmem:[%s2 + $0x100] sm:$0xff] %vm332, %v300
  %366 = vst.msk [vmem:[%s2 + $0x108] sm:$0xff] %vm332, %v303
  %367 = vst.msk [vmem:[%s2 + $0x110] sm:$0xff] %vm332, %v306
  %368 = vst.msk [vmem:[%s2 + $0x118] sm:$0xff] %vm332, %v309
  %369 = vst.msk [vmem:[%s2 + $0x120] sm:$0xff] %vm332, %v312
  %370 = vst.msk [vmem:[%s2 + $0x128] sm:$0xff] %vm332, %v315
  %371 = vst.msk [vmem:[%s2 + $0x130] sm:$0xff] %vm332, %v318
  %372 = vst.msk [vmem:[%s2 + $0x138] sm:$0xff] %vm332, %v321
  %373 = vst.msk [vmem:[%s2 + $0x140] sm:$0xff] %vm332, %v324
  %374 = vst.msk [vmem:[%s2 + $0x148] sm:$0xff] %vm332, %v327
  %vm375 = vcmask 386048
  %376 = vst.msk [vmem:[%s2 + $0x150] sm:$0x3] %vm375, %v330
  // Predicated region
  $region10: #{generator_forward.12} parent=0 // pred_check
    _
  $region11: #{generator_forward.12} parent=0 // pred_check_branch
    %378 = sbr.rel (0) target = $region13
  $region12: #{generator_forward.12} parent=0 // pred_region
    _
  $region13: #{generator_forward.12} parent=0 // pred_fallthru
    _
  // Predicated region
  $region14: #{generator_forward.12} parent=0 // pred_check
    _
  $region15: #{generator_forward.12} parent=0 // pred_check_branch
    %380 = sbr.rel (0) target = $region17
  $region16: #{generator_forward.12} parent=0 // pred_region
    _
  $region17: #{generator_forward.12} parent=0 // pred_fallthru
    _

// kernel: generator_forward.13
$region0: #{generator_forward.13}
  #allocation0 [shape = 'u32[]', space=smem, size = 0x4, offset = 0x4, fixed_abs, tag = 'smem constant byte address 0x4 - core index']
  #allocation1 [shape = 'u32[72,128]{1,0:T(1,128)}', space=vmem, size = 0x9000, scoped, tag = 'internal scratch']
  %s0 = inlined_call_operand.vmem [shape: f32[6,2704], index: 0, kind: input, shape index: {}]
  %s1 = inlined_call_operand.vmem [shape: bf16[2704,784], index: 1, kind: input, shape index: {}]
  %s2 = inlined_call_operand.vmem [shape: f32[6,1], index: 2, kind: input, shape index: {}]
  %s3 = inlined_call_operand.vmem [shape: f32[6,784], index: 3, kind: output, shape index: {}]
  %s4 = sld [smem:[#allocation0]]
  $region22: #{generator_forward.13} parent=0
    _
  %s6 = ssub.s32 1, %s4
  %s7 = scalar_select 0, %s6, %s4
  // Predicated region
  $region2: #{generator_forward.13} parent=0 // pred_check
    _
  $region3: #{generator_forward.13} parent=0 // pred_check_branch
    %9 = sbr.rel (0) target = $region5
  $region4: #{generator_forward.13} parent=0 // pred_region
    _
  $region5: #{generator_forward.13} parent=0 // pred_fallthru
    _
  // Predicated region
  $region6: #{generator_forward.13} parent=0 // pred_check
    _
  $region7: #{generator_forward.13} parent=0 // pred_check_branch
    %11 = sbr.rel (0) target = $region9
  $region8: #{generator_forward.13} parent=0 // pred_region
    _
  $region9: #{generator_forward.13} parent=0 // pred_fallthru
    _
  // Predicated region
  $region10: #{generator_forward.13} parent=0 // pred_check
    _
  $region11: #{generator_forward.13} parent=0 // pred_check_branch
    %13 = sbr.rel (0) target = $region13
  $region12: #{generator_forward.13} parent=0 // pred_region
    _
  $region13: #{generator_forward.13} parent=0 // pred_fallthru
    _
  %v15 = vld [vmem:[%s0] sm:$0x3f]
  %v16 = vld [vmem:[%s0 + $0x8] sm:$0x3f]
  %v17 = vld [vmem:[%s0 + $0x10] sm:$0x3f]
  %v18 = vld [vmem:[%s0 + $0x18] sm:$0x3f]
  %v19 = vld [vmem:[%s0 + $0x20] sm:$0x3f]
  %v20 = vld [vmem:[%s0 + $0x28] sm:$0x3f]
  %v21 = vld [vmem:[%s0 + $0x30] sm:$0x3f]
  %v22 = vld [vmem:[%s0 + $0x38] sm:$0x3f]
  %v23 = vld [vmem:[%s0 + $0x40] sm:$0x3f]
  %v24 = vld [vmem:[%s0 + $0x48] sm:$0x3f]
  %v25 = vld [vmem:[%s0 + $0x50] sm:$0x3f]
  %v26 = vld [vmem:[%s0 + $0x58] sm:$0x3f]
  %v27 = vld [vmem:[%s0 + $0x60] sm:$0x3f]
  %v28 = vld [vmem:[%s0 + $0x68] sm:$0x3f]
  %v29 = vld [vmem:[%s0 + $0x70] sm:$0x3f]
  %v30 = vld [vmem:[%s0 + $0x78] sm:$0x3f]
  %v31 = vld [vmem:[%s0 + $0x80] sm:$0x3f]
  %v32 = vld [vmem:[%s0 + $0x88] sm:$0x3f]
  %v33 = vld [vmem:[%s0 + $0x90] sm:$0x3f]
  %v34 = vld [vmem:[%s0 + $0x98] sm:$0x3f]
  %v35 = vld [vmem:[%s0 + $0xa0] sm:$0x3f]
  %v36 = vld [vmem:[%s0 + $0xa8] sm:$0x3f]
  %v37 = vpack.c.bf16 %v15, %v15
  %v38 = vpack.c.bf16 %v16, %v16
  %v39 = vpack.c.bf16 %v17, %v17
  %v40 = vpack.c.bf16 %v18, %v18
  %v41 = vpack.c.bf16 %v19, %v19
  %v42 = vpack.c.bf16 %v20, %v20
  %v43 = vpack.c.bf16 %v21, %v21
  %v44 = vpack.c.bf16 %v22, %v22
  %v45 = vpack.c.bf16 %v23, %v23
  %v46 = vpack.c.bf16 %v24, %v24
  %v47 = vpack.c.bf16 %v25, %v25
  %v48 = vpack.c.bf16 %v26, %v26
  %v49 = vpack.c.bf16 %v27, %v27
  %v50 = vpack.c.bf16 %v28, %v28
  %v51 = vpack.c.bf16 %v29, %v29
  %v52 = vpack.c.bf16 %v30, %v30
  %v53 = vpack.c.bf16 %v31, %v31
  %v54 = vpack.c.bf16 %v32, %v32
  %v55 = vpack.c.bf16 %v33, %v33
  %v56 = vpack.c.bf16 %v34, %v34
  %v57 = vpack.c.bf16 %v35, %v35
  %v58 = vpack.c.bf16 %v36, %v36
  %v59 = vld [vmem:[%s1] sm:$0xff]
  %v60 = vld [vmem:[%s1 + $0x8] sm:$0xff]
  %v61 = vld [vmem:[%s1 + $0x10] sm:$0xff]
  %v62 = vld [vmem:[%s1 + $0x18] sm:$0xf]
  %v63 = vld [vmem:[%s1 + $0x1c] sm:$0xff]
  %v64 = vld [vmem:[%s1 + $0x24] sm:$0xff]
  %v65 = vld [vmem:[%s1 + $0x2c] sm:$0xff]
  %v66 = vld [vmem:[%s1 + $0x34] sm:$0xf]
  %v67 = vld [vmem:[%s1 + $0x38] sm:$0xff]
  %v68 = vld [vmem:[%s1 + $0x40] sm:$0xff]
  %v69 = vld [vmem:[%s1 + $0x48] sm:$0xff]
  %v70 = vld [vmem:[%s1 + $0x50] sm:$0xf]
  %v71 = vld [vmem:[%s1 + $0x54] sm:$0xff]
  %v72 = vld [vmem:[%s1 + $0x5c] sm:$0xff]
  %v73 = vld [vmem:[%s1 + $0x64] sm:$0xff]
  %v74 = vld [vmem:[%s1 + $0x6c] sm:$0xf]
  %v75 = vld [vmem:[%s1 + $0x70] sm:$0xff]
  %v76 = vld [vmem:[%s1 + $0x78] sm:$0xff]
  %v77 = vld [vmem:[%s1 + $0x80] sm:$0xff]
  %v78 = vld [vmem:[%s1 + $0x88] sm:$0xf]
  %v79 = vld [vmem:[%s1 + $0x8c] sm:$0xff]
  %v80 = vld [vmem:[%s1 + $0x94] sm:$0xff]
  %v81 = vld [vmem:[%s1 + $0x9c] sm:$0xff]
  %v82 = vld [vmem:[%s1 + $0xa4] sm:$0xf]
  %v83 = vld [vmem:[%s1 + $0xa8] sm:$0xff]
  %v84 = vld [vmem:[%s1 + $0xb0] sm:$0xff]
  %v85 = vld [vmem:[%s1 + $0xb8] sm:$0xff]
  %v86 = vld [vmem:[%s1 + $0xc0] sm:$0xf]
  %v87 = vld [vmem:[%s1 + $0xc4] sm:$0xff]
  %v88 = vld [vmem:[%s1 + $0xcc] sm:$0xff]
  %v89 = vld [vmem:[%s1 + $0xd4] sm:$0xff]
  %v90 = vld [vmem:[%s1 + $0xdc] sm:$0xf]
  %v91 = vld [vmem:[%s1 + $0xe0] sm:$0xff]
  %v92 = vld [vmem:[%s1 + $0xe8] sm:$0xff]
  %v93 = vld [vmem:[%s1 + $0xf0] sm:$0xff]
  %v94 = vld [vmem:[%s1 + $0xf8] sm:$0xf]
  %v95 = vld [vmem:[%s1 + $0xfc] sm:$0xff]
  %v96 = vld [vmem:[%s1 + $0x104] sm:$0xff]
  %v97 = vld [vmem:[%s1 + $0x10c] sm:$0xff]
  %v98 = vld [vmem:[%s1 + $0x114] sm:$0xf]
  %v99 = vld [vmem:[%s1 + $0x118] sm:$0xff]
  %v100 = vld [vmem:[%s1 + $0x120] sm:$0xff]
  %v101 = vld [vmem:[%s1 + $0x128] sm:$0xff]
  %v102 = vld [vmem:[%s1 + $0x130] sm:$0xf]
  %v103 = vld [vmem:[%s1 + $0x134] sm:$0xff]
  %v104 = vld [vmem:[%s1 + $0x13c] sm:$0xff]
  %v105 = vld [vmem:[%s1 + $0x144] sm:$0xff]
  %v106 = vld [vmem:[%s1 + $0x14c] sm:$0xf]
  %v107 = vld [vmem:[%s1 + $0x150] sm:$0xff]
  %v108 = vld [vmem:[%s1 + $0x158] sm:$0xff]
  %v109 = vld [vmem:[%s1 + $0x160] sm:$0xff]
  %v110 = vld [vmem:[%s1 + $0x168] sm:$0xf]
  %v111 = vld [vmem:[%s1 + $0x16c] sm:$0xff]
  %v112 = vld [vmem:[%s1 + $0x174] sm:$0xff]
  %v113 = vld [vmem:[%s1 + $0x17c] sm:$0xff]
  %v114 = vld [vmem:[%s1 + $0x184] sm:$0xf]
  %v115 = vld [vmem:[%s1 + $0x188] sm:$0xff]
  %v116 = vld [vmem:[%s1 + $0x190] sm:$0xff]
  %v117 = vld [vmem:[%s1 + $0x198] sm:$0xff]
  %v118 = vld [vmem:[%s1 + $0x1a0] sm:$0xf]
  %v119 = vld [vmem:[%s1 + $0x1a4] sm:$0xff]
  %v120 = vld [vmem:[%s1 + $0x1ac] sm:$0xff]
  %v121 = vld [vmem:[%s1 + $0x1b4] sm:$0xff]
  %v122 = vld [vmem:[%s1 + $0x1bc] sm:$0xf]
  %v123 = vld [vmem:[%s1 + $0x1c0] sm:$0xff]
  %v124 = vld [vmem:[%s1 + $0x1c8] sm:$0xff]
  %v125 = vld [vmem:[%s1 + $0x1d0] sm:$0xff]
  %v126 = vld [vmem:[%s1 + $0x1d8] sm:$0xf]
  %v127 = vld [vmem:[%s1 + $0x1dc] sm:$0xff]
  %v128 = vld [vmem:[%s1 + $0x1e4] sm:$0xff]
  %v129 = vld [vmem:[%s1 + $0x1ec] sm:$0xff]
  %v130 = vld [vmem:[%s1 + $0x1f4] sm:$0xf]
  %v131 = vld [vmem:[%s1 + $0x1f8] sm:$0xff]
  %v132 = vld [vmem:[%s1 + $0x200] sm:$0xff]
  %v133 = vld [vmem:[%s1 + $0x208] sm:$0xff]
  %v134 = vld [vmem:[%s1 + $0x210] sm:$0xf]
  %v135 = vld [vmem:[%s1 + $0x214] sm:$0xff]
  %v136 = vld [vmem:[%s1 + $0x21c] sm:$0xff]
  %v137 = vld [vmem:[%s1 + $0x224] sm:$0xff]
  %v138 = vld [vmem:[%s1 + $0x22c] sm:$0xf]
  %v139 = vld [vmem:[%s1 + $0x230] sm:$0xff]
  %v140 = vld [vmem:[%s1 + $0x238] sm:$0xff]
  %v141 = vld [vmem:[%s1 + $0x240] sm:$0xff]
  %v142 = vld [vmem:[%s1 + $0x248] sm:$0xf]
  %v143 = vld [vmem:[%s1 + $0x24c] sm:$0xff]
  %v144 = vld [vmem:[%s1 + $0x254] sm:$0xff]
  %v145 = vld [vmem:[%s1 + $0x25c] sm:$0xff]
  %v146 = vld [vmem:[%s1 + $0x264] sm:$0xf]
  %v147 = vld [vmem:[%s1 + $0x268] sm:$0xff]
  %v148 = vld [vmem:[%s1 + $0x270] sm:$0xff]
  %v149 = vld [vmem:[%s1 + $0x278] sm:$0xff]
  %v150 = vld [vmem:[%s1 + $0x280] sm:$0xf]
  %v151 = vld [vmem:[%s1 + $0x284] sm:$0xff]
  %v152 = vld [vmem:[%s1 + $0x28c] sm:$0xff]
  %v153 = vld [vmem:[%s1 + $0x294] sm:$0xff]
  %v154 = vld [vmem:[%s1 + $0x29c] sm:$0xf]
  %v155 = vld [vmem:[%s1 + $0x2a0] sm:$0xff]
  %v156 = vld [vmem:[%s1 + $0x2a8] sm:$0xff]
  %v157 = vld [vmem:[%s1 + $0x2b0] sm:$0xff]
  %v158 = vld [vmem:[%s1 + $0x2b8] sm:$0xf]
  %v159 = vld [vmem:[%s1 + $0x2bc] sm:$0xff]
  %v160 = vld [vmem:[%s1 + $0x2c4] sm:$0xff]
  %v161 = vld [vmem:[%s1 + $0x2cc] sm:$0xff]
  %v162 = vld [vmem:[%s1 + $0x2d4] sm:$0xf]
  %v163 = vld [vmem:[%s1 + $0x2d8] sm:$0xff]
  %v164 = vld [vmem:[%s1 + $0x2e0] sm:$0xff]
  %v165 = vld [vmem:[%s1 + $0x2e8] sm:$0xff]
  %v166 = vld [vmem:[%s1 + $0x2f0] sm:$0xf]
  %v167 = vld [vmem:[%s1 + $0x2f4] sm:$0xff]
  %v168 = vld [vmem:[%s1 + $0x2fc] sm:$0xff]
  %v169 = vld [vmem:[%s1 + $0x304] sm:$0xff]
  %v170 = vld [vmem:[%s1 + $0x30c] sm:$0xf]
  %v171 = vld [vmem:[%s1 + $0x310] sm:$0xff]
  %v172 = vld [vmem:[%s1 + $0x318] sm:$0xff]
  %v173 = vld [vmem:[%s1 + $0x320] sm:$0xff]
  %v174 = vld [vmem:[%s1 + $0x328] sm:$0xf]
  %v175 = vld [vmem:[%s1 + $0x32c] sm:$0xff]
  %v176 = vld [vmem:[%s1 + $0x334] sm:$0xff]
  %v177 = vld [vmem:[%s1 + $0x33c] sm:$0xff]
  %v178 = vld [vmem:[%s1 + $0x344] sm:$0xf]
  %v179 = vld [vmem:[%s1 + $0x348] sm:$0xff]
  %v180 = vld [vmem:[%s1 + $0x350] sm:$0xff]
  %v181 = vld [vmem:[%s1 + $0x358] sm:$0xff]
  %v182 = vld [vmem:[%s1 + $0x360] sm:$0xf]
  %v183 = vld [vmem:[%s1 + $0x364] sm:$0xff]
  %v184 = vld [vmem:[%s1 + $0x36c] sm:$0xff]
  %v185 = vld [vmem:[%s1 + $0x374] sm:$0xff]
  %v186 = vld [vmem:[%s1 + $0x37c] sm:$0xf]
  %v187 = vld [vmem:[%s1 + $0x380] sm:$0xff]
  %v188 = vld [vmem:[%s1 + $0x388] sm:$0xff]
  %v189 = vld [vmem:[%s1 + $0x390] sm:$0xff]
  %v190 = vld [vmem:[%s1 + $0x398] sm:$0xf]
  %v191 = vld [vmem:[%s1 + $0x39c] sm:$0xff]
  %v192 = vld [vmem:[%s1 + $0x3a4] sm:$0xff]
  %v193 = vld [vmem:[%s1 + $0x3ac] sm:$0xff]
  %v194 = vld [vmem:[%s1 + $0x3b4] sm:$0xf]
  %v195 = vld [vmem:[%s1 + $0x3b8] sm:$0xff]
  %v196 = vld [vmem:[%s1 + $0x3c0] sm:$0xff]
  %v197 = vld [vmem:[%s1 + $0x3c8] sm:$0xff]
  %v198 = vld [vmem:[%s1 + $0x3d0] sm:$0xf]
  %v199 = vld [vmem:[%s1 + $0x3d4] sm:$0xff]
  %v200 = vld [vmem:[%s1 + $0x3dc] sm:$0xff]
  %v201 = vld [vmem:[%s1 + $0x3e4] sm:$0xff]
  %v202 = vld [vmem:[%s1 + $0x3ec] sm:$0xf]
  %v203 = vld [vmem:[%s1 + $0x3f0] sm:$0xff]
  %v204 = vld [vmem:[%s1 + $0x3f8] sm:$0xff]
  %v205 = vld [vmem:[%s1 + $0x400] sm:$0xff]
  %v206 = vld [vmem:[%s1 + $0x408] sm:$0xf]
  %v207 = vld [vmem:[%s1 + $0x40c] sm:$0xff]
  %v208 = vld [vmem:[%s1 + $0x414] sm:$0xff]
  %v209 = vld [vmem:[%s1 + $0x41c] sm:$0xff]
  %v210 = vld [vmem:[%s1 + $0x424] sm:$0xf]
  %v211 = vld [vmem:[%s1 + $0x428] sm:$0xff]
  %v212 = vld [vmem:[%s1 + $0x430] sm:$0xff]
  %v213 = vld [vmem:[%s1 + $0x438] sm:$0xff]
  %v214 = vld [vmem:[%s1 + $0x440] sm:$0xf]
  %v215 = vld [vmem:[%s1 + $0x444] sm:$0xff]
  %v216 = vld [vmem:[%s1 + $0x44c] sm:$0xff]
  %v217 = vld [vmem:[%s1 + $0x454] sm:$0xff]
  %v218 = vld [vmem:[%s1 + $0x45c] sm:$0xf]
  %v219 = vld [vmem:[%s1 + $0x460] sm:$0xff]
  %v220 = vld [vmem:[%s1 + $0x468] sm:$0xff]
  %v221 = vld [vmem:[%s1 + $0x470] sm:$0xff]
  %v222 = vld [vmem:[%s1 + $0x478] sm:$0xf]
  %v223 = vld [vmem:[%s1 + $0x47c] sm:$0xff]
  %v224 = vld [vmem:[%s1 + $0x484] sm:$0xff]
  %v225 = vld [vmem:[%s1 + $0x48c] sm:$0xff]
  %v226 = vld [vmem:[%s1 + $0x494] sm:$0xf]
  %v227 = vld [vmem:[%s1 + $0x498] sm:$0xff]
  %v228 = vld [vmem:[%s1 + $0x4a0] sm:$0xff]
  %v229 = vld [vmem:[%s1 + $0x4a8] sm:$0xff]
  %v230 = vld [vmem:[%s1 + $0x4b0] sm:$0xf]
  %v231 = vld [vmem:[%s1 + $0x4b4] sm:$0xff]
  %v232 = vld [vmem:[%s1 + $0x4bc] sm:$0xff]
  %v233 = vld [vmem:[%s1 + $0x4c4] sm:$0xff]
  %v234 = vld [vmem:[%s1 + $0x4cc] sm:$0xf]
  %v235 = vld [vmem:[%s1 + $0x4d0] sm:$0xff]
  %v236 = vld [vmem:[%s1 + $0x4d8] sm:$0xff]
  %v237 = vld [vmem:[%s1 + $0x4e0] sm:$0xff]
  %v238 = vld [vmem:[%s1 + $0x4e8] sm:$0xf]
  %v239 = vld [vmem:[%s1 + $0x4ec] sm:$0xff]
  %v240 = vld [vmem:[%s1 + $0x4f4] sm:$0xff]
  %v241 = vld [vmem:[%s1 + $0x4fc] sm:$0xff]
  %v242 = vld [vmem:[%s1 + $0x504] sm:$0xf]
  %v243 = vld [vmem:[%s1 + $0x508] sm:$0xff]
  %v244 = vld [vmem:[%s1 + $0x510] sm:$0xff]
  %v245 = vld [vmem:[%s1 + $0x518] sm:$0xff]
  %v246 = vld [vmem:[%s1 + $0x520] sm:$0xf]
  %v247 = vld [vmem:[%s1 + $0x524] sm:$0xff]
  %v248 = vld [vmem:[%s1 + $0x52c] sm:$0xff]
  %v249 = vld [vmem:[%s1 + $0x534] sm:$0xff]
  %v250 = vld [vmem:[%s1 + $0x53c] sm:$0xf]
  %v251 = vld [vmem:[%s1 + $0x540] sm:$0xff]
  %v252 = vld [vmem:[%s1 + $0x548] sm:$0xff]
  %v253 = vld [vmem:[%s1 + $0x550] sm:$0xff]
  %v254 = vld [vmem:[%s1 + $0x558] sm:$0xf]
  %v255 = vld [vmem:[%s1 + $0x55c] sm:$0xff]
  %v256 = vld [vmem:[%s1 + $0x564] sm:$0xff]
  %v257 = vld [vmem:[%s1 + $0x56c] sm:$0xff]
  %v258 = vld [vmem:[%s1 + $0x574] sm:$0xf]
  %v259 = vld [vmem:[%s1 + $0x578] sm:$0xff]
  %v260 = vld [vmem:[%s1 + $0x580] sm:$0xff]
  %v261 = vld [vmem:[%s1 + $0x588] sm:$0xff]
  %v262 = vld [vmem:[%s1 + $0x590] sm:$0xf]
  %v263 = vld [vmem:[%s1 + $0x594] sm:$0xff]
  %v264 = vld [vmem:[%s1 + $0x59c] sm:$0xff]
  %v265 = vld [vmem:[%s1 + $0x5a4] sm:$0xff]
  %v266 = vld [vmem:[%s1 + $0x5ac] sm:$0xf]
  %v267 = vld [vmem:[%s1 + $0x5b0] sm:$0xff]
  %v268 = vld [vmem:[%s1 + $0x5b8] sm:$0xff]
  %v269 = vld [vmem:[%s1 + $0x5c0] sm:$0xff]
  %v270 = vld [vmem:[%s1 + $0x5c8] sm:$0xf]
  %v271 = vld [vmem:[%s1 + $0x5cc] sm:$0xff]
  %v272 = vld [vmem:[%s1 + $0x5d4] sm:$0xff]
  %v273 = vld [vmem:[%s1 + $0x5dc] sm:$0xff]
  %v274 = vld [vmem:[%s1 + $0x5e4] sm:$0xf]
  %v275 = vld [vmem:[%s1 + $0x5e8] sm:$0xff]
  %v276 = vld [vmem:[%s1 + $0x5f0] sm:$0xff]
  %v277 = vld [vmem:[%s1 + $0x5f8] sm:$0xff]
  %v278 = vld [vmem:[%s1 + $0x600] sm:$0xf]
  %v279 = vld [vmem:[%s1 + $0x604] sm:$0xff]
  %v280 = vld [vmem:[%s1 + $0x60c] sm:$0xff]
  %v281 = vld [vmem:[%s1 + $0x614] sm:$0xff]
  %v282 = vld [vmem:[%s1 + $0x61c] sm:$0xf]
  %v283 = vld [vmem:[%s1 + $0x620] sm:$0xff]
  %v284 = vld [vmem:[%s1 + $0x628] sm:$0xff]
  %v285 = vld [vmem:[%s1 + $0x630] sm:$0xff]
  %v286 = vld [vmem:[%s1 + $0x638] sm:$0xf]
  %v287 = vld [vmem:[%s1 + $0x63c] sm:$0xff]
  %v288 = vld [vmem:[%s1 + $0x644] sm:$0xff]
  %v289 = vld [vmem:[%s1 + $0x64c] sm:$0xff]
  %v290 = vld [vmem:[%s1 + $0x654] sm:$0xf]
  %v291 = vld [vmem:[%s1 + $0x658] sm:$0xff]
  %v292 = vld [vmem:[%s1 + $0x660] sm:$0xff]
  %v293 = vld [vmem:[%s1 + $0x668] sm:$0xff]
  %v294 = vld [vmem:[%s1 + $0x670] sm:$0xf]
  %v295 = vld [vmem:[%s1 + $0x674] sm:$0xff]
  %v296 = vld [vmem:[%s1 + $0x67c] sm:$0xff]
  %v297 = vld [vmem:[%s1 + $0x684] sm:$0xff]
  %v298 = vld [vmem:[%s1 + $0x68c] sm:$0xf]
  %v299 = vld [vmem:[%s1 + $0x690] sm:$0xff]
  %v300 = vld [vmem:[%s1 + $0x698] sm:$0xff]
  %v301 = vld [vmem:[%s1 + $0x6a0] sm:$0xff]
  %v302 = vld [vmem:[%s1 + $0x6a8] sm:$0xf]
  %v303 = vld [vmem:[%s1 + $0x6ac] sm:$0xff]
  %v304 = vld [vmem:[%s1 + $0x6b4] sm:$0xff]
  %v305 = vld [vmem:[%s1 + $0x6bc] sm:$0xff]
  %v306 = vld [vmem:[%s1 + $0x6c4] sm:$0xf]
  %v307 = vld [vmem:[%s1 + $0x6c8] sm:$0xff]
  %v308 = vld [vmem:[%s1 + $0x6d0] sm:$0xff]
  %v309 = vld [vmem:[%s1 + $0x6d8] sm:$0xff]
  %v310 = vld [vmem:[%s1 + $0x6e0] sm:$0xf]
  %v311 = vld [vmem:[%s1 + $0x6e4] sm:$0xff]
  %v312 = vld [vmem:[%s1 + $0x6ec] sm:$0xff]
  %v313 = vld [vmem:[%s1 + $0x6f4] sm:$0xff]
  %v314 = vld [vmem:[%s1 + $0x6fc] sm:$0xf]
  %v315 = vld [vmem:[%s1 + $0x700] sm:$0xff]
  %v316 = vld [vmem:[%s1 + $0x708] sm:$0xff]
  %v317 = vld [vmem:[%s1 + $0x710] sm:$0xff]
  %v318 = vld [vmem:[%s1 + $0x718] sm:$0xf]
  %v319 = vld [vmem:[%s1 + $0x71c] sm:$0xff]
  %v320 = vld [vmem:[%s1 + $0x724] sm:$0xff]
  %v321 = vld [vmem:[%s1 + $0x72c] sm:$0xff]
  %v322 = vld [vmem:[%s1 + $0x734] sm:$0xf]
  %v323 = vld [vmem:[%s1 + $0x738] sm:$0xff]
  %v324 = vld [vmem:[%s1 + $0x740] sm:$0xff]
  %v325 = vld [vmem:[%s1 + $0x748] sm:$0xff]
  %v326 = vld [vmem:[%s1 + $0x750] sm:$0xf]
  %v327 = vld [vmem:[%s1 + $0x754] sm:$0xff]
  %v328 = vld [vmem:[%s1 + $0x75c] sm:$0xff]
  %v329 = vld [vmem:[%s1 + $0x764] sm:$0xff]
  %v330 = vld [vmem:[%s1 + $0x76c] sm:$0xf]
  %v331 = vld [vmem:[%s1 + $0x770] sm:$0xff]
  %v332 = vld [vmem:[%s1 + $0x778] sm:$0xff]
  %v333 = vld [vmem:[%s1 + $0x780] sm:$0xff]
  %v334 = vld [vmem:[%s1 + $0x788] sm:$0xf]
  %v335 = vld [vmem:[%s1 + $0x78c] sm:$0xff]
  %v336 = vld [vmem:[%s1 + $0x794] sm:$0xff]
  %v337 = vld [vmem:[%s1 + $0x79c] sm:$0xff]
  %v338 = vld [vmem:[%s1 + $0x7a4] sm:$0xf]
  %v339 = vld [vmem:[%s1 + $0x7a8] sm:$0xff]
  %v340 = vld [vmem:[%s1 + $0x7b0] sm:$0xff]
  %v341 = vld [vmem:[%s1 + $0x7b8] sm:$0xff]
  %v342 = vld [vmem:[%s1 + $0x7c0] sm:$0xf]
  %v343 = vld [vmem:[%s1 + $0x7c4] sm:$0xff]
  %v344 = vld [vmem:[%s1 + $0x7cc] sm:$0xff]
  %v345 = vld [vmem:[%s1 + $0x7d4] sm:$0xff]
  %v346 = vld [vmem:[%s1 + $0x7dc] sm:$0xf]
  %v347 = vld [vmem:[%s1 + $0x7e0] sm:$0xff]
  %v348 = vld [vmem:[%s1 + $0x7e8] sm:$0xff]
  %v349 = vld [vmem:[%s1 + $0x7f0] sm:$0xff]
  %v350 = vld [vmem:[%s1 + $0x7f8] sm:$0xf]
  %v351 = vld [vmem:[%s1 + $0x7fc] sm:$0xff]
  %v352 = vld [vmem:[%s1 + $0x804] sm:$0xff]
  %v353 = vld [vmem:[%s1 + $0x80c] sm:$0xff]
  %v354 = vld [vmem:[%s1 + $0x814] sm:$0xf]
  %v355 = vld [vmem:[%s1 + $0x818] sm:$0xff]
  %v356 = vld [vmem:[%s1 + $0x820] sm:$0xff]
  %v357 = vld [vmem:[%s1 + $0x828] sm:$0xff]
  %v358 = vld [vmem:[%s1 + $0x830] sm:$0xf]
  %v359 = vld [vmem:[%s1 + $0x834] sm:$0xff]
  %v360 = vld [vmem:[%s1 + $0x83c] sm:$0xff]
  %v361 = vld [vmem:[%s1 + $0x844] sm:$0xff]
  %v362 = vld [vmem:[%s1 + $0x84c] sm:$0xf]
  %v363 = vld [vmem:[%s1 + $0x850] sm:$0xff]
  %v364 = vld [vmem:[%s1 + $0x858] sm:$0xff]
  %v365 = vld [vmem:[%s1 + $0x860] sm:$0xff]
  %v366 = vld [vmem:[%s1 + $0x868] sm:$0xf]
  %v367 = vld [vmem:[%s1 + $0x86c] sm:$0xff]
  %v368 = vld [vmem:[%s1 + $0x874] sm:$0xff]
  %v369 = vld [vmem:[%s1 + $0x87c] sm:$0xff]
  %v370 = vld [vmem:[%s1 + $0x884] sm:$0xf]
  %v371 = vld [vmem:[%s1 + $0x888] sm:$0xff]
  %v372 = vld [vmem:[%s1 + $0x890] sm:$0xff]
  %v373 = vld [vmem:[%s1 + $0x898] sm:$0xff]
  %v374 = vld [vmem:[%s1 + $0x8a0] sm:$0xf]
  %v375 = vld [vmem:[%s1 + $0x8a4] sm:$0xff]
  %v376 = vld [vmem:[%s1 + $0x8ac] sm:$0xff]
  %v377 = vld [vmem:[%s1 + $0x8b4] sm:$0xff]
  %v378 = vld [vmem:[%s1 + $0x8bc] sm:$0xf]
  %v379 = vld [vmem:[%s1 + $0x8c0] sm:$0xff]
  %v380 = vld [vmem:[%s1 + $0x8c8] sm:$0xff]
  %v381 = vld [vmem:[%s1 + $0x8d0] sm:$0xff]
  %v382 = vld [vmem:[%s1 + $0x8d8] sm:$0xf]
  %v383 = vld [vmem:[%s1 + $0x8dc] sm:$0xff]
  %v384 = vld [vmem:[%s1 + $0x8e4] sm:$0xff]
  %v385 = vld [vmem:[%s1 + $0x8ec] sm:$0xff]
  %v386 = vld [vmem:[%s1 + $0x8f4] sm:$0xf]
  %v387 = vld [vmem:[%s1 + $0x8f8] sm:$0xff]
  %v388 = vld [vmem:[%s1 + $0x900] sm:$0xff]
  %v389 = vld [vmem:[%s1 + $0x908] sm:$0xff]
  %v390 = vld [vmem:[%s1 + $0x910] sm:$0xf]
  %v391 = vld [vmem:[%s1 + $0x914] sm:$0xff]
  %v392 = vld [vmem:[%s1 + $0x91c] sm:$0xff]
  %v393 = vld [vmem:[%s1 + $0x924] sm:$0xff]
  %v394 = vld [vmem:[%s1 + $0x92c] sm:$0xf]
  %v395 = vld [vmem:[%s1 + $0x930] sm:$0xff]
  %v396 = vld [vmem:[%s1 + $0x938] sm:$0xff]
  %v397 = vld [vmem:[%s1 + $0x940] sm:$0xff]
  %v398 = vld [vmem:[%s1 + $0x948] sm:$0xf]
  %v399 = vld [vmem:[%s1 + $0x94c] sm:$0xff]
  %v400 = vld [vmem:[%s1 + $0x954] sm:$0xff]
  %v401 = vld [vmem:[%s1 + $0x95c] sm:$0xff]
  %v402 = vld [vmem:[%s1 + $0x964] sm:$0xf]
  %v403 = vld [vmem:[%s1 + $0x968] sm:$0xff]
  %v404 = vld [vmem:[%s1 + $0x970] sm:$0xff]
  %v405 = vld [vmem:[%s1 + $0x978] sm:$0xff]
  %v406 = vld [vmem:[%s1 + $0x980] sm:$0xf]
  %v407 = vld [vmem:[%s1 + $0x984] sm:$0xff]
  %v408 = vld [vmem:[%s1 + $0x98c] sm:$0xff]
  %v409 = vld [vmem:[%s1 + $0x994] sm:$0xff]
  %v410 = vld [vmem:[%s1 + $0x99c] sm:$0xf]
  %v411 = vld [vmem:[%s1 + $0x9a0] sm:$0xff]
  %v412 = vld [vmem:[%s1 + $0x9a8] sm:$0xff]
  %v413 = vld [vmem:[%s1 + $0x9b0] sm:$0xff]
  %v414 = vld [vmem:[%s1 + $0x9b8] sm:$0xf]
  %v415 = vld [vmem:[%s1 + $0x9bc] sm:$0xff]
  %v416 = vld [vmem:[%s1 + $0x9c4] sm:$0xff]
  %v417 = vld [vmem:[%s1 + $0x9cc] sm:$0xff]
  %v418 = vld [vmem:[%s1 + $0x9d4] sm:$0xf]
  %v419 = vld [vmem:[%s1 + $0x9d8] sm:$0xff]
  %v420 = vld [vmem:[%s1 + $0x9e0] sm:$0xff]
  %v421 = vld [vmem:[%s1 + $0x9e8] sm:$0xff]
  %v422 = vld [vmem:[%s1 + $0x9f0] sm:$0xf]
  %v423 = vld [vmem:[%s1 + $0x9f4] sm:$0xff]
  %v424 = vld [vmem:[%s1 + $0x9fc] sm:$0xff]
  %v425 = vld [vmem:[%s1 + $0xa04] sm:$0xff]
  %v426 = vld [vmem:[%s1 + $0xa0c] sm:$0xf]
  %v427 = vld [vmem:[%s1 + $0xa10] sm:$0xff]
  %v428 = vld [vmem:[%s1 + $0xa18] sm:$0xff]
  %v429 = vld [vmem:[%s1 + $0xa20] sm:$0xff]
  %v430 = vld [vmem:[%s1 + $0xa28] sm:$0xf]
  %v431 = vld [vmem:[%s1 + $0xa2c] sm:$0xff]
  %v432 = vld [vmem:[%s1 + $0xa34] sm:$0xff]
  %v433 = vld [vmem:[%s1 + $0xa3c] sm:$0xff]
  %v434 = vld [vmem:[%s1 + $0xa44] sm:$0xf]
  %v435 = vld [vmem:[%s1 + $0xa48] sm:$0xff]
  %v436 = vld [vmem:[%s1 + $0xa50] sm:$0xff]
  %v437 = vld [vmem:[%s1 + $0xa58] sm:$0xff]
  %v438 = vld [vmem:[%s1 + $0xa60] sm:$0xf]
  %v439 = vld [vmem:[%s1 + $0xa64] sm:$0xff]
  %v440 = vld [vmem:[%s1 + $0xa6c] sm:$0xff]
  %v441 = vld [vmem:[%s1 + $0xa74] sm:$0xff]
  %v442 = vld [vmem:[%s1 + $0xa7c] sm:$0xf]
  %v443 = vld [vmem:[%s1 + $0xa80] sm:$0xff]
  %v444 = vld [vmem:[%s1 + $0xa88] sm:$0xff]
  %v445 = vld [vmem:[%s1 + $0xa90] sm:$0xff]
  %v446 = vld [vmem:[%s1 + $0xa98] sm:$0xf]
  %v447 = vld [vmem:[%s1 + $0xa9c] sm:$0xff]
  %v448 = vld [vmem:[%s1 + $0xaa4] sm:$0xff]
  %v449 = vld [vmem:[%s1 + $0xaac] sm:$0xff]
  %v450 = vld [vmem:[%s1 + $0xab4] sm:$0xf]
  %v451 = vld [vmem:[%s1 + $0xab8] sm:$0xff]
  %v452 = vld [vmem:[%s1 + $0xac0] sm:$0xff]
  %v453 = vld [vmem:[%s1 + $0xac8] sm:$0xff]
  %v454 = vld [vmem:[%s1 + $0xad0] sm:$0xf]
  %v455 = vld [vmem:[%s1 + $0xad4] sm:$0xff]
  %v456 = vld [vmem:[%s1 + $0xadc] sm:$0xff]
  %v457 = vld [vmem:[%s1 + $0xae4] sm:$0xff]
  %v458 = vld [vmem:[%s1 + $0xaec] sm:$0xf]
  %v459 = vld [vmem:[%s1 + $0xaf0] sm:$0xff]
  %v460 = vld [vmem:[%s1 + $0xaf8] sm:$0xff]
  %v461 = vld [vmem:[%s1 + $0xb00] sm:$0xff]
  %v462 = vld [vmem:[%s1 + $0xb08] sm:$0xf]
  %v463 = vld [vmem:[%s1 + $0xb0c] sm:$0xff]
  %v464 = vld [vmem:[%s1 + $0xb14] sm:$0xff]
  %v465 = vld [vmem:[%s1 + $0xb1c] sm:$0xff]
  %v466 = vld [vmem:[%s1 + $0xb24] sm:$0xf]
  %v467 = vld [vmem:[%s1 + $0xb28] sm:$0xff]
  %v468 = vld [vmem:[%s1 + $0xb30] sm:$0xff]
  %v469 = vld [vmem:[%s1 + $0xb38] sm:$0xff]
  %v470 = vld [vmem:[%s1 + $0xb40] sm:$0xf]
  %v471 = vld [vmem:[%s1 + $0xb44] sm:$0xff]
  %v472 = vld [vmem:[%s1 + $0xb4c] sm:$0xff]
  %v473 = vld [vmem:[%s1 + $0xb54] sm:$0xff]
  %v474 = vld [vmem:[%s1 + $0xb5c] sm:$0xf]
  %v475 = vld [vmem:[%s1 + $0xb60] sm:$0xff]
  %v476 = vld [vmem:[%s1 + $0xb68] sm:$0xff]
  %v477 = vld [vmem:[%s1 + $0xb70] sm:$0xff]
  %v478 = vld [vmem:[%s1 + $0xb78] sm:$0xf]
  %v479 = vld [vmem:[%s1 + $0xb7c] sm:$0xff]
  %v480 = vld [vmem:[%s1 + $0xb84] sm:$0xff]
  %v481 = vld [vmem:[%s1 + $0xb8c] sm:$0xff]
  %v482 = vld [vmem:[%s1 + $0xb94] sm:$0xf]
  %v483 = vld [vmem:[%s1 + $0xb98] sm:$0xff]
  %v484 = vld [vmem:[%s1 + $0xba0] sm:$0xff]
  %v485 = vld [vmem:[%s1 + $0xba8] sm:$0xff]
  %v486 = vld [vmem:[%s1 + $0xbb0] sm:$0xf]
  %v487 = vld [vmem:[%s1 + $0xbb4] sm:$0xff]
  %v488 = vld [vmem:[%s1 + $0xbbc] sm:$0xff]
  %v489 = vld [vmem:[%s1 + $0xbc4] sm:$0xff]
  %v490 = vld [vmem:[%s1 + $0xbcc] sm:$0xf]
  %v491 = vld [vmem:[%s1 + $0xbd0] sm:$0xff]
  %v492 = vld [vmem:[%s1 + $0xbd8] sm:$0xff]
  %v493 = vld [vmem:[%s1 + $0xbe0] sm:$0xff]
  %v494 = vld [vmem:[%s1 + $0xbe8] sm:$0xf]
  %v495 = vld [vmem:[%s1 + $0xbec] sm:$0xff]
  %v496 = vld [vmem:[%s1 + $0xbf4] sm:$0xff]
  %v497 = vld [vmem:[%s1 + $0xbfc] sm:$0xff]
  %v498 = vld [vmem:[%s1 + $0xc04] sm:$0xf]
  %v499 = vld [vmem:[%s1 + $0xc08] sm:$0xff]
  %v500 = vld [vmem:[%s1 + $0xc10] sm:$0xff]
  %v501 = vld [vmem:[%s1 + $0xc18] sm:$0xff]
  %v502 = vld [vmem:[%s1 + $0xc20] sm:$0xf]
  %v503 = vld [vmem:[%s1 + $0xc24] sm:$0xff]
  %v504 = vld [vmem:[%s1 + $0xc2c] sm:$0xff]
  %v505 = vld [vmem:[%s1 + $0xc34] sm:$0xff]
  %v506 = vld [vmem:[%s1 + $0xc3c] sm:$0xf]
  %v507 = vld [vmem:[%s1 + $0xc40] sm:$0xff]
  %v508 = vld [vmem:[%s1 + $0xc48] sm:$0xff]
  %v509 = vld [vmem:[%s1 + $0xc50] sm:$0xff]
  %v510 = vld [vmem:[%s1 + $0xc58] sm:$0xf]
  %v511 = vld [vmem:[%s1 + $0xc5c] sm:$0xff]
  %v512 = vld [vmem:[%s1 + $0xc64] sm:$0xff]
  %v513 = vld [vmem:[%s1 + $0xc6c] sm:$0xff]
  %v514 = vld [vmem:[%s1 + $0xc74] sm:$0xf]
  %v515 = vld [vmem:[%s1 + $0xc78] sm:$0xff]
  %v516 = vld [vmem:[%s1 + $0xc80] sm:$0xff]
  %v517 = vld [vmem:[%s1 + $0xc88] sm:$0xff]
  %v518 = vld [vmem:[%s1 + $0xc90] sm:$0xf]
  %v519 = vld [vmem:[%s1 + $0xc94] sm:$0xff]
  %v520 = vld [vmem:[%s1 + $0xc9c] sm:$0xff]
  %v521 = vld [vmem:[%s1 + $0xca4] sm:$0xff]
  %v522 = vld [vmem:[%s1 + $0xcac] sm:$0xf]
  %v523 = vld [vmem:[%s1 + $0xcb0] sm:$0xff]
  %v524 = vld [vmem:[%s1 + $0xcb8] sm:$0xff]
  %v525 = vld [vmem:[%s1 + $0xcc0] sm:$0xff]
  %v526 = vld [vmem:[%s1 + $0xcc8] sm:$0xf]
  %v527 = vld [vmem:[%s1 + $0xccc] sm:$0xff]
  %v528 = vld [vmem:[%s1 + $0xcd4] sm:$0xff]
  %v529 = vld [vmem:[%s1 + $0xcdc] sm:$0xff]
  %v530 = vld [vmem:[%s1 + $0xce4] sm:$0xf]
  %v531 = vld [vmem:[%s1 + $0xce8] sm:$0xff]
  %v532 = vld [vmem:[%s1 + $0xcf0] sm:$0xff]
  %v533 = vld [vmem:[%s1 + $0xcf8] sm:$0xff]
  %v534 = vld [vmem:[%s1 + $0xd00] sm:$0xf]
  %v535 = vld [vmem:[%s1 + $0xd04] sm:$0xff]
  %v536 = vld [vmem:[%s1 + $0xd0c] sm:$0xff]
  %v537 = vld [vmem:[%s1 + $0xd14] sm:$0xff]
  %v538 = vld [vmem:[%s1 + $0xd1c] sm:$0xf]
  %v539 = vld [vmem:[%s1 + $0xd20] sm:$0xff]
  %v540 = vld [vmem:[%s1 + $0xd28] sm:$0xff]
  %v541 = vld [vmem:[%s1 + $0xd30] sm:$0xff]
  %v542 = vld [vmem:[%s1 + $0xd38] sm:$0xf]
  %v543 = vld [vmem:[%s1 + $0xd3c] sm:$0xff]
  %v544 = vld [vmem:[%s1 + $0xd44] sm:$0xff]
  %v545 = vld [vmem:[%s1 + $0xd4c] sm:$0xff]
  %v546 = vld [vmem:[%s1 + $0xd54] sm:$0xf]
  %v547 = vld [vmem:[%s1 + $0xd58] sm:$0xff]
  %v548 = vld [vmem:[%s1 + $0xd60] sm:$0xff]
  %v549 = vld [vmem:[%s1 + $0xd68] sm:$0xff]
  %v550 = vld [vmem:[%s1 + $0xd70] sm:$0xf]
  %v551 = vld [vmem:[%s1 + $0xd74] sm:$0xff]
  %v552 = vld [vmem:[%s1 + $0xd7c] sm:$0xff]
  %v553 = vld [vmem:[%s1 + $0xd84] sm:$0xff]
  %v554 = vld [vmem:[%s1 + $0xd8c] sm:$0xf]
  %v555 = vld [vmem:[%s1 + $0xd90] sm:$0xff]
  %v556 = vld [vmem:[%s1 + $0xd98] sm:$0xff]
  %v557 = vld [vmem:[%s1 + $0xda0] sm:$0xff]
  %v558 = vld [vmem:[%s1 + $0xda8] sm:$0xf]
  %v559 = vld [vmem:[%s1 + $0xdac] sm:$0xff]
  %v560 = vld [vmem:[%s1 + $0xdb4] sm:$0xff]
  %v561 = vld [vmem:[%s1 + $0xdbc] sm:$0xff]
  %v562 = vld [vmem:[%s1 + $0xdc4] sm:$0xf]
  %v563 = vld [vmem:[%s1 + $0xdc8] sm:$0xff]
  %v564 = vld [vmem:[%s1 + $0xdd0] sm:$0xff]
  %v565 = vld [vmem:[%s1 + $0xdd8] sm:$0xff]
  %v566 = vld [vmem:[%s1 + $0xde0] sm:$0xf]
  %v567 = vld [vmem:[%s1 + $0xde4] sm:$0xff]
  %v568 = vld [vmem:[%s1 + $0xdec] sm:$0xff]
  %v569 = vld [vmem:[%s1 + $0xdf4] sm:$0xff]
  %v570 = vld [vmem:[%s1 + $0xdfc] sm:$0xf]
  %v571 = vld [vmem:[%s1 + $0xe00] sm:$0xff]
  %v572 = vld [vmem:[%s1 + $0xe08] sm:$0xff]
  %v573 = vld [vmem:[%s1 + $0xe10] sm:$0xff]
  %v574 = vld [vmem:[%s1 + $0xe18] sm:$0xf]
  %v575 = vld [vmem:[%s1 + $0xe1c] sm:$0xff]
  %v576 = vld [vmem:[%s1 + $0xe24] sm:$0xff]
  %v577 = vld [vmem:[%s1 + $0xe2c] sm:$0xff]
  %v578 = vld [vmem:[%s1 + $0xe34] sm:$0xf]
  %v579 = vld [vmem:[%s1 + $0xe38] sm:$0xff]
  %v580 = vld [vmem:[%s1 + $0xe40] sm:$0xff]
  %v581 = vld [vmem:[%s1 + $0xe48] sm:$0xff]
  %v582 = vld [vmem:[%s1 + $0xe50] sm:$0xf]
  %v583 = vld [vmem:[%s1 + $0xe54] sm:$0xff]
  %v584 = vld [vmem:[%s1 + $0xe5c] sm:$0xff]
  %v585 = vld [vmem:[%s1 + $0xe64] sm:$0xff]
  %v586 = vld [vmem:[%s1 + $0xe6c] sm:$0xf]
  %v587 = vld [vmem:[%s1 + $0xe70] sm:$0xff]
  %v588 = vld [vmem:[%s1 + $0xe78] sm:$0xff]
  %v589 = vld [vmem:[%s1 + $0xe80] sm:$0xff]
  %v590 = vld [vmem:[%s1 + $0xe88] sm:$0xf]
  %v591 = vld [vmem:[%s1 + $0xe8c] sm:$0xff]
  %v592 = vld [vmem:[%s1 + $0xe94] sm:$0xff]
  %v593 = vld [vmem:[%s1 + $0xe9c] sm:$0xff]
  %v594 = vld [vmem:[%s1 + $0xea4] sm:$0xf]
  %v595 = vld [vmem:[%s1 + $0xea8] sm:$0xff]
  %v596 = vld [vmem:[%s1 + $0xeb0] sm:$0xff]
  %v597 = vld [vmem:[%s1 + $0xeb8] sm:$0xff]
  %v598 = vld [vmem:[%s1 + $0xec0] sm:$0xf]
  %v599 = vld [vmem:[%s1 + $0xec4] sm:$0xff]
  %v600 = vld [vmem:[%s1 + $0xecc] sm:$0xff]
  %v601 = vld [vmem:[%s1 + $0xed4] sm:$0xff]
  %v602 = vld [vmem:[%s1 + $0xedc] sm:$0xf]
  %v603 = vld [vmem:[%s1 + $0xee0] sm:$0xff]
  %v604 = vld [vmem:[%s1 + $0xee8] sm:$0xff]
  %v605 = vld [vmem:[%s1 + $0xef0] sm:$0xff]
  %v606 = vld [vmem:[%s1 + $0xef8] sm:$0xf]
  %v607 = vld [vmem:[%s1 + $0xefc] sm:$0xff]
  %v608 = vld [vmem:[%s1 + $0xf04] sm:$0xff]
  %v609 = vld [vmem:[%s1 + $0xf0c] sm:$0xff]
  %v610 = vld [vmem:[%s1 + $0xf14] sm:$0xf]
  %v611 = vld [vmem:[%s1 + $0xf18] sm:$0xff]
  %v612 = vld [vmem:[%s1 + $0xf20] sm:$0xff]
  %v613 = vld [vmem:[%s1 + $0xf28] sm:$0xff]
  %v614 = vld [vmem:[%s1 + $0xf30] sm:$0xf]
  %v615 = vld [vmem:[%s1 + $0xf34] sm:$0xff]
  %v616 = vld [vmem:[%s1 + $0xf3c] sm:$0xff]
  %v617 = vld [vmem:[%s1 + $0xf44] sm:$0xff]
  %v618 = vld [vmem:[%s1 + $0xf4c] sm:$0xf]
  %v619 = vld [vmem:[%s1 + $0xf50] sm:$0xff]
  %v620 = vld [vmem:[%s1 + $0xf58] sm:$0xff]
  %v621 = vld [vmem:[%s1 + $0xf60] sm:$0xff]
  %v622 = vld [vmem:[%s1 + $0xf68] sm:$0xf]
  %v623 = vld [vmem:[%s1 + $0xf6c] sm:$0xff]
  %v624 = vld [vmem:[%s1 + $0xf74] sm:$0xff]
  %v625 = vld [vmem:[%s1 + $0xf7c] sm:$0xff]
  %v626 = vld [vmem:[%s1 + $0xf84] sm:$0xf]
  %v627 = vld [vmem:[%s1 + $0xf88] sm:$0xff]
  %v628 = vld [vmem:[%s1 + $0xf90] sm:$0xff]
  %v629 = vld [vmem:[%s1 + $0xf98] sm:$0xff]
  %v630 = vld [vmem:[%s1 + $0xfa0] sm:$0xf]
  %v631 = vld [vmem:[%s1 + $0xfa4] sm:$0xff]
  %v632 = vld [vmem:[%s1 + $0xfac] sm:$0xff]
  %v633 = vld [vmem:[%s1 + $0xfb4] sm:$0xff]
  %v634 = vld [vmem:[%s1 + $0xfbc] sm:$0xf]
  %v635 = vld [vmem:[%s1 + $0xfc0] sm:$0xff]
  %v636 = vld [vmem:[%s1 + $0xfc8] sm:$0xff]
  %v637 = vld [vmem:[%s1 + $0xfd0] sm:$0xff]
  %v638 = vld [vmem:[%s1 + $0xfd8] sm:$0xf]
  %v639 = vld [vmem:[%s1 + $0xfdc] sm:$0xff]
  %v640 = vld [vmem:[%s1 + $0xfe4] sm:$0xff]
  %v641 = vld [vmem:[%s1 + $0xfec] sm:$0xff]
  %v642 = vld [vmem:[%s1 + $0xff4] sm:$0xf]
  %v643 = vld [vmem:[%s1 + $0xff8] sm:$0xff]
  %v644 = vld [vmem:[%s1 + $0x1000] sm:$0xff]
  %v645 = vld [vmem:[%s1 + $0x1008] sm:$0xff]
  %v646 = vld [vmem:[%s1 + $0x1010] sm:$0xf]
  %v647 = vld [vmem:[%s1 + $0x1014] sm:$0xff]
  %v648 = vld [vmem:[%s1 + $0x101c] sm:$0xff]
  %v649 = vld [vmem:[%s1 + $0x1024] sm:$0xff]
  %v650 = vld [vmem:[%s1 + $0x102c] sm:$0xf]
  %v651 = vld [vmem:[%s1 + $0x1030] sm:$0xff]
  %v652 = vld [vmem:[%s1 + $0x1038] sm:$0xff]
  %v653 = vld [vmem:[%s1 + $0x1040] sm:$0xff]
  %v654 = vld [vmem:[%s1 + $0x1048] sm:$0xf]
  %v655 = vld [vmem:[%s1 + $0x104c] sm:$0xff]
  %v656 = vld [vmem:[%s1 + $0x1054] sm:$0xff]
  %v657 = vld [vmem:[%s1 + $0x105c] sm:$0xff]
  %v658 = vld [vmem:[%s1 + $0x1064] sm:$0xf]
  %v659 = vld [vmem:[%s1 + $0x1068] sm:$0xff]
  %v660 = vld [vmem:[%s1 + $0x1070] sm:$0xff]
  %v661 = vld [vmem:[%s1 + $0x1078] sm:$0xff]
  %v662 = vld [vmem:[%s1 + $0x1080] sm:$0xf]
  %v663 = vld [vmem:[%s1 + $0x1084] sm:$0xff]
  %v664 = vld [vmem:[%s1 + $0x108c] sm:$0xff]
  %v665 = vld [vmem:[%s1 + $0x1094] sm:$0xff]
  %v666 = vld [vmem:[%s1 + $0x109c] sm:$0xf]
  %v667 = vld [vmem:[%s1 + $0x10a0] sm:$0xff]
  %v668 = vld [vmem:[%s1 + $0x10a8] sm:$0xff]
  %v669 = vld [vmem:[%s1 + $0x10b0] sm:$0xff]
  %v670 = vld [vmem:[%s1 + $0x10b8] sm:$0xf]
  %v671 = vld [vmem:[%s1 + $0x10bc] sm:$0xff]
  %v672 = vld [vmem:[%s1 + $0x10c4] sm:$0xff]
  %v673 = vld [vmem:[%s1 + $0x10cc] sm:$0xff]
  %v674 = vld [vmem:[%s1 + $0x10d4] sm:$0xf]
  %v675 = vld [vmem:[%s1 + $0x10d8] sm:$0xff]
  %v676 = vld [vmem:[%s1 + $0x10e0] sm:$0xff]
  %v677 = vld [vmem:[%s1 + $0x10e8] sm:$0xff]
  %v678 = vld [vmem:[%s1 + $0x10f0] sm:$0xf]
  %v679 = vld [vmem:[%s1 + $0x10f4] sm:$0xff]
  %v680 = vld [vmem:[%s1 + $0x10fc] sm:$0xff]
  %v681 = vld [vmem:[%s1 + $0x1104] sm:$0xff]
  %v682 = vld [vmem:[%s1 + $0x110c] sm:$0xf]
  %v683 = vld [vmem:[%s1 + $0x1110] sm:$0xff]
  %v684 = vld [vmem:[%s1 + $0x1118] sm:$0xff]
  %v685 = vld [vmem:[%s1 + $0x1120] sm:$0xff]
  %v686 = vld [vmem:[%s1 + $0x1128] sm:$0xf]
  %v687 = vld [vmem:[%s1 + $0x112c] sm:$0xff]
  %v688 = vld [vmem:[%s1 + $0x1134] sm:$0xff]
  %v689 = vld [vmem:[%s1 + $0x113c] sm:$0xff]
  %v690 = vld [vmem:[%s1 + $0x1144] sm:$0xf]
  %v691 = vld [vmem:[%s1 + $0x1148] sm:$0xff]
  %v692 = vld [vmem:[%s1 + $0x1150] sm:$0xff]
  %v693 = vld [vmem:[%s1 + $0x1158] sm:$0xff]
  %v694 = vld [vmem:[%s1 + $0x1160] sm:$0xf]
  %v695 = vld [vmem:[%s1 + $0x1164] sm:$0xff]
  %v696 = vld [vmem:[%s1 + $0x116c] sm:$0xff]
  %v697 = vld [vmem:[%s1 + $0x1174] sm:$0xff]
  %v698 = vld [vmem:[%s1 + $0x117c] sm:$0xf]
  %v699 = vld [vmem:[%s1 + $0x1180] sm:$0xff]
  %v700 = vld [vmem:[%s1 + $0x1188] sm:$0xff]
  %v701 = vld [vmem:[%s1 + $0x1190] sm:$0xff]
  %v702 = vld [vmem:[%s1 + $0x1198] sm:$0xf]
  %v703 = vld [vmem:[%s1 + $0x119c] sm:$0xff]
  %v704 = vld [vmem:[%s1 + $0x11a4] sm:$0xff]
  %v705 = vld [vmem:[%s1 + $0x11ac] sm:$0xff]
  %v706 = vld [vmem:[%s1 + $0x11b4] sm:$0xf]
  %v707 = vld [vmem:[%s1 + $0x11b8] sm:$0xff]
  %v708 = vld [vmem:[%s1 + $0x11c0] sm:$0xff]
  %v709 = vld [vmem:[%s1 + $0x11c8] sm:$0xff]
  %v710 = vld [vmem:[%s1 + $0x11d0] sm:$0xf]
  %v711 = vld [vmem:[%s1 + $0x11d4] sm:$0xff]
  %v712 = vld [vmem:[%s1 + $0x11dc] sm:$0xff]
  %v713 = vld [vmem:[%s1 + $0x11e4] sm:$0xff]
  %v714 = vld [vmem:[%s1 + $0x11ec] sm:$0xf]
  %v715 = vld [vmem:[%s1 + $0x11f0] sm:$0xff]
  %v716 = vld [vmem:[%s1 + $0x11f8] sm:$0xff]
  %v717 = vld [vmem:[%s1 + $0x1200] sm:$0xff]
  %v718 = vld [vmem:[%s1 + $0x1208] sm:$0xf]
  %v719 = vld [vmem:[%s1 + $0x120c] sm:$0xff]
  %v720 = vld [vmem:[%s1 + $0x1214] sm:$0xff]
  %v721 = vld [vmem:[%s1 + $0x121c] sm:$0xff]
  %v722 = vld [vmem:[%s1 + $0x1224] sm:$0xf]
  %v723 = vld [vmem:[%s1 + $0x1228] sm:$0xff]
  %v724 = vld [vmem:[%s1 + $0x1230] sm:$0xff]
  %v725 = vld [vmem:[%s1 + $0x1238] sm:$0xff]
  %v726 = vld [vmem:[%s1 + $0x1240] sm:$0xf]
  %v727 = vld [vmem:[%s1 + $0x1244] sm:$0xff]
  %v728 = vld [vmem:[%s1 + $0x124c] sm:$0xff]
  %v729 = vld [vmem:[%s1 + $0x1254] sm:$0xff]
  %v730 = vld [vmem:[%s1 + $0x125c] sm:$0xf]
  %v731 = vld [vmem:[%s1 + $0x1260] sm:$0xff]
  %v732 = vld [vmem:[%s1 + $0x1268] sm:$0xff]
  %v733 = vld [vmem:[%s1 + $0x1270] sm:$0xff]
  %v734 = vld [vmem:[%s1 + $0x1278] sm:$0xf]
  %v735 = vld [vmem:[%s1 + $0x127c] sm:$0xff]
  %v736 = vld [vmem:[%s1 + $0x1284] sm:$0xff]
  %v737 = vld [vmem:[%s1 + $0x128c] sm:$0xff]
  %v738 = vld [vmem:[%s1 + $0x1294] sm:$0xf]
  %v739 = vld [vmem:[%s1 + $0x1298] sm:$0xff]
  %v740 = vld [vmem:[%s1 + $0x12a0] sm:$0xff]
  %v741 = vld [vmem:[%s1 + $0x12a8] sm:$0xff]
  %v742 = vld [vmem:[%s1 + $0x12b0] sm:$0xf]
  %v743 = vld [vmem:[%s1 + $0x12b4] sm:$0xff]
  %v744 = vld [vmem:[%s1 + $0x12bc] sm:$0xff]
  %v745 = vld [vmem:[%s1 + $0x12c4] sm:$0xff]
  %v746 = vld [vmem:[%s1 + $0x12cc] sm:$0xf]
  %v747 = vld [vmem:[%s1 + $0x12d0] sm:$0xff]
  %v748 = vld [vmem:[%s1 + $0x12d8] sm:$0xff]
  %v749 = vld [vmem:[%s1 + $0x12e0] sm:$0xff]
  %v750 = vld [vmem:[%s1 + $0x12e8] sm:$0xf]
  %v751 = vld [vmem:[%s1 + $0x12ec] sm:$0xff]
  %v752 = vld [vmem:[%s1 + $0x12f4] sm:$0xff]
  %v753 = vld [vmem:[%s1 + $0x12fc] sm:$0xff]
  %v754 = vld [vmem:[%s1 + $0x1304] sm:$0xf]
  %v755 = vld [vmem:[%s1 + $0x1308] sm:$0xff]
  %v756 = vld [vmem:[%s1 + $0x1310] sm:$0xff]
  %v757 = vld [vmem:[%s1 + $0x1318] sm:$0xff]
  %v758 = vld [vmem:[%s1 + $0x1320] sm:$0xf]
  %v759 = vld [vmem:[%s1 + $0x1324] sm:$0xff]
  %v760 = vld [vmem:[%s1 + $0x132c] sm:$0xff]
  %v761 = vld [vmem:[%s1 + $0x1334] sm:$0xff]
  %v762 = vld [vmem:[%s1 + $0x133c] sm:$0xf]
  %v763 = vld [vmem:[%s1 + $0x1340] sm:$0xff]
  %v764 = vld [vmem:[%s1 + $0x1348] sm:$0xff]
  %v765 = vld [vmem:[%s1 + $0x1350] sm:$0xff]
  %v766 = vld [vmem:[%s1 + $0x1358] sm:$0xf]
  %v767 = vld [vmem:[%s1 + $0x135c] sm:$0xff]
  %v768 = vld [vmem:[%s1 + $0x1364] sm:$0xff]
  %v769 = vld [vmem:[%s1 + $0x136c] sm:$0xff]
  %v770 = vld [vmem:[%s1 + $0x1374] sm:$0xf]
  %v771 = vld [vmem:[%s1 + $0x1378] sm:$0xff]
  %v772 = vld [vmem:[%s1 + $0x1380] sm:$0xff]
  %v773 = vld [vmem:[%s1 + $0x1388] sm:$0xff]
  %v774 = vld [vmem:[%s1 + $0x1390] sm:$0xf]
  %v775 = vld [vmem:[%s1 + $0x1394] sm:$0xff]
  %v776 = vld [vmem:[%s1 + $0x139c] sm:$0xff]
  %v777 = vld [vmem:[%s1 + $0x13a4] sm:$0xff]
  %v778 = vld [vmem:[%s1 + $0x13ac] sm:$0xf]
  %v779 = vld [vmem:[%s1 + $0x13b0] sm:$0xff]
  %v780 = vld [vmem:[%s1 + $0x13b8] sm:$0xff]
  %v781 = vld [vmem:[%s1 + $0x13c0] sm:$0xff]
  %v782 = vld [vmem:[%s1 + $0x13c8] sm:$0xf]
  %v783 = vld [vmem:[%s1 + $0x13cc] sm:$0xff]
  %v784 = vld [vmem:[%s1 + $0x13d4] sm:$0xff]
  %v785 = vld [vmem:[%s1 + $0x13dc] sm:$0xff]
  %v786 = vld [vmem:[%s1 + $0x13e4] sm:$0xf]
  %v787 = vld [vmem:[%s1 + $0x13e8] sm:$0xff]
  %v788 = vld [vmem:[%s1 + $0x13f0] sm:$0xff]
  %v789 = vld [vmem:[%s1 + $0x13f8] sm:$0xff]
  %v790 = vld [vmem:[%s1 + $0x1400] sm:$0xf]
  %v791 = vld [vmem:[%s1 + $0x1404] sm:$0xff]
  %v792 = vld [vmem:[%s1 + $0x140c] sm:$0xff]
  %v793 = vld [vmem:[%s1 + $0x1414] sm:$0xff]
  %v794 = vld [vmem:[%s1 + $0x141c] sm:$0xf]
  %v795 = vld [vmem:[%s1 + $0x1420] sm:$0xff]
  %v796 = vld [vmem:[%s1 + $0x1428] sm:$0xff]
  %v797 = vld [vmem:[%s1 + $0x1430] sm:$0xff]
  %v798 = vld [vmem:[%s1 + $0x1438] sm:$0xf]
  %v799 = vld [vmem:[%s1 + $0x143c] sm:$0xff]
  %v800 = vld [vmem:[%s1 + $0x1444] sm:$0xff]
  %v801 = vld [vmem:[%s1 + $0x144c] sm:$0xff]
  %v802 = vld [vmem:[%s1 + $0x1454] sm:$0xf]
  %v803 = vld [vmem:[%s1 + $0x1458] sm:$0xff]
  %v804 = vld [vmem:[%s1 + $0x1460] sm:$0xff]
  %v805 = vld [vmem:[%s1 + $0x1468] sm:$0xff]
  %v806 = vld [vmem:[%s1 + $0x1470] sm:$0xf]
  %v807 = vld [vmem:[%s1 + $0x1474] sm:$0xff]
  %v808 = vld [vmem:[%s1 + $0x147c] sm:$0xff]
  %v809 = vld [vmem:[%s1 + $0x1484] sm:$0xff]
  %v810 = vld [vmem:[%s1 + $0x148c] sm:$0xf]
  %v811 = vld [vmem:[%s1 + $0x1490] sm:$0xff]
  %v812 = vld [vmem:[%s1 + $0x1498] sm:$0xff]
  %v813 = vld [vmem:[%s1 + $0x14a0] sm:$0xff]
  %v814 = vld [vmem:[%s1 + $0x14a8] sm:$0xf]
  %v815 = vld [vmem:[%s1 + $0x14ac] sm:$0xff]
  %v816 = vld [vmem:[%s1 + $0x14b4] sm:$0xff]
  %v817 = vld [vmem:[%s1 + $0x14bc] sm:$0xff]
  %v818 = vld [vmem:[%s1 + $0x14c4] sm:$0xf]
  %v819 = vld [vmem:[%s1 + $0x14c8] sm:$0xff]
  %v820 = vld [vmem:[%s1 + $0x14d0] sm:$0xff]
  %v821 = vld [vmem:[%s1 + $0x14d8] sm:$0xff]
  %v822 = vld [vmem:[%s1 + $0x14e0] sm:$0xf]
  %v823 = vld [vmem:[%s1 + $0x14e4] sm:$0xff]
  %v824 = vld [vmem:[%s1 + $0x14ec] sm:$0xff]
  %v825 = vld [vmem:[%s1 + $0x14f4] sm:$0xff]
  %v826 = vld [vmem:[%s1 + $0x14fc] sm:$0xf]
  %v827 = vld [vmem:[%s1 + $0x1500] sm:$0xff]
  %v828 = vld [vmem:[%s1 + $0x1508] sm:$0xff]
  %v829 = vld [vmem:[%s1 + $0x1510] sm:$0xff]
  %v830 = vld [vmem:[%s1 + $0x1518] sm:$0xf]
  %v831 = vld [vmem:[%s1 + $0x151c] sm:$0xff]
  %v832 = vld [vmem:[%s1 + $0x1524] sm:$0xff]
  %v833 = vld [vmem:[%s1 + $0x152c] sm:$0xff]
  %v834 = vld [vmem:[%s1 + $0x1534] sm:$0xf]
  %v835 = vld [vmem:[%s1 + $0x1538] sm:$0xff]
  %v836 = vld [vmem:[%s1 + $0x1540] sm:$0xff]
  %v837 = vld [vmem:[%s1 + $0x1548] sm:$0xff]
  %v838 = vld [vmem:[%s1 + $0x1550] sm:$0xf]
  %v839 = vld [vmem:[%s1 + $0x1554] sm:$0xff]
  %v840 = vld [vmem:[%s1 + $0x155c] sm:$0xff]
  %v841 = vld [vmem:[%s1 + $0x1564] sm:$0xff]
  %v842 = vld [vmem:[%s1 + $0x156c] sm:$0xf]
  %v843 = vld [vmem:[%s1 + $0x1570] sm:$0xff]
  %v844 = vld [vmem:[%s1 + $0x1578] sm:$0xff]
  %v845 = vld [vmem:[%s1 + $0x1580] sm:$0xff]
  %v846 = vld [vmem:[%s1 + $0x1588] sm:$0xf]
  %v847 = vld [vmem:[%s1 + $0x158c] sm:$0xff]
  %v848 = vld [vmem:[%s1 + $0x1594] sm:$0xff]
  %v849 = vld [vmem:[%s1 + $0x159c] sm:$0xff]
  %v850 = vld [vmem:[%s1 + $0x15a4] sm:$0xf]
  %v851 = vld [vmem:[%s1 + $0x15a8] sm:$0xff]
  %v852 = vld [vmem:[%s1 + $0x15b0] sm:$0xff]
  %v853 = vld [vmem:[%s1 + $0x15b8] sm:$0xff]
  %v854 = vld [vmem:[%s1 + $0x15c0] sm:$0xf]
  %v855 = vld [vmem:[%s1 + $0x15c4] sm:$0xff]
  %v856 = vld [vmem:[%s1 + $0x15cc] sm:$0xff]
  %v857 = vld [vmem:[%s1 + $0x15d4] sm:$0xff]
  %v858 = vld [vmem:[%s1 + $0x15dc] sm:$0xf]
  %v859 = vld [vmem:[%s1 + $0x15e0] sm:$0xff]
  %v860 = vld [vmem:[%s1 + $0x15e8] sm:$0xff]
  %v861 = vld [vmem:[%s1 + $0x15f0] sm:$0xff]
  %v862 = vld [vmem:[%s1 + $0x15f8] sm:$0xf]
  %v863 = vld [vmem:[%s1 + $0x15fc] sm:$0xff]
  %v864 = vld [vmem:[%s1 + $0x1604] sm:$0xff]
  %v865 = vld [vmem:[%s1 + $0x160c] sm:$0xff]
  %v866 = vld [vmem:[%s1 + $0x1614] sm:$0xf]
  %v867 = vld [vmem:[%s1 + $0x1618] sm:$0xff]
  %v868 = vld [vmem:[%s1 + $0x1620] sm:$0xff]
  %v869 = vld [vmem:[%s1 + $0x1628] sm:$0xff]
  %v870 = vld [vmem:[%s1 + $0x1630] sm:$0xf]
  %v871 = vld [vmem:[%s1 + $0x1634] sm:$0xff]
  %v872 = vld [vmem:[%s1 + $0x163c] sm:$0xff]
  %v873 = vld [vmem:[%s1 + $0x1644] sm:$0xff]
  %v874 = vld [vmem:[%s1 + $0x164c] sm:$0xf]
  %v875 = vld [vmem:[%s1 + $0x1650] sm:$0xff]
  %v876 = vld [vmem:[%s1 + $0x1658] sm:$0xff]
  %v877 = vld [vmem:[%s1 + $0x1660] sm:$0xff]
  %v878 = vld [vmem:[%s1 + $0x1668] sm:$0xf]
  %v879 = vld [vmem:[%s1 + $0x166c] sm:$0xff]
  %v880 = vld [vmem:[%s1 + $0x1674] sm:$0xff]
  %v881 = vld [vmem:[%s1 + $0x167c] sm:$0xff]
  %v882 = vld [vmem:[%s1 + $0x1684] sm:$0xf]
  %v883 = vld [vmem:[%s1 + $0x1688] sm:$0xff]
  %v884 = vld [vmem:[%s1 + $0x1690] sm:$0xff]
  %v885 = vld [vmem:[%s1 + $0x1698] sm:$0xff]
  %v886 = vld [vmem:[%s1 + $0x16a0] sm:$0xf]
  %v887 = vld [vmem:[%s1 + $0x16a4] sm:$0xff]
  %v888 = vld [vmem:[%s1 + $0x16ac] sm:$0xff]
  %v889 = vld [vmem:[%s1 + $0x16b4] sm:$0xff]
  %v890 = vld [vmem:[%s1 + $0x16bc] sm:$0xf]
  %v891 = vld [vmem:[%s1 + $0x16c0] sm:$0xff]
  %v892 = vld [vmem:[%s1 + $0x16c8] sm:$0xff]
  %v893 = vld [vmem:[%s1 + $0x16d0] sm:$0xff]
  %v894 = vld [vmem:[%s1 + $0x16d8] sm:$0xf]
  %v895 = vld [vmem:[%s1 + $0x16dc] sm:$0xff]
  %v896 = vld [vmem:[%s1 + $0x16e4] sm:$0xff]
  %v897 = vld [vmem:[%s1 + $0x16ec] sm:$0xff]
  %v898 = vld [vmem:[%s1 + $0x16f4] sm:$0xf]
  %v899 = vld [vmem:[%s1 + $0x16f8] sm:$0xff]
  %v900 = vld [vmem:[%s1 + $0x1700] sm:$0xff]
  %v901 = vld [vmem:[%s1 + $0x1708] sm:$0xff]
  %v902 = vld [vmem:[%s1 + $0x1710] sm:$0xf]
  %v903 = vld [vmem:[%s1 + $0x1714] sm:$0xff]
  %v904 = vld [vmem:[%s1 + $0x171c] sm:$0xff]
  %v905 = vld [vmem:[%s1 + $0x1724] sm:$0xff]
  %v906 = vld [vmem:[%s1 + $0x172c] sm:$0xf]
  %v907 = vld [vmem:[%s1 + $0x1730] sm:$0xff]
  %v908 = vld [vmem:[%s1 + $0x1738] sm:$0xff]
  %v909 = vld [vmem:[%s1 + $0x1740] sm:$0xff]
  %v910 = vld [vmem:[%s1 + $0x1748] sm:$0xf]
  %v911 = vld [vmem:[%s1 + $0x174c] sm:$0xff]
  %v912 = vld [vmem:[%s1 + $0x1754] sm:$0xff]
  %v913 = vld [vmem:[%s1 + $0x175c] sm:$0xff]
  %v914 = vld [vmem:[%s1 + $0x1764] sm:$0xf]
  %v915 = vld [vmem:[%s1 + $0x1768] sm:$0xff]
  %v916 = vld [vmem:[%s1 + $0x1770] sm:$0xff]
  %v917 = vld [vmem:[%s1 + $0x1778] sm:$0xff]
  %v918 = vld [vmem:[%s1 + $0x1780] sm:$0xf]
  %v919 = vld [vmem:[%s1 + $0x1784] sm:$0xff]
  %v920 = vld [vmem:[%s1 + $0x178c] sm:$0xff]
  %v921 = vld [vmem:[%s1 + $0x1794] sm:$0xff]
  %v922 = vld [vmem:[%s1 + $0x179c] sm:$0xf]
  %v923 = vld [vmem:[%s1 + $0x17a0] sm:$0xff]
  %v924 = vld [vmem:[%s1 + $0x17a8] sm:$0xff]
  %v925 = vld [vmem:[%s1 + $0x17b0] sm:$0xff]
  %v926 = vld [vmem:[%s1 + $0x17b8] sm:$0xf]
  %v927 = vld [vmem:[%s1 + $0x17bc] sm:$0xff]
  %v928 = vld [vmem:[%s1 + $0x17c4] sm:$0xff]
  %v929 = vld [vmem:[%s1 + $0x17cc] sm:$0xff]
  %v930 = vld [vmem:[%s1 + $0x17d4] sm:$0xf]
  %v931 = vld [vmem:[%s1 + $0x17d8] sm:$0xff]
  %v932 = vld [vmem:[%s1 + $0x17e0] sm:$0xff]
  %v933 = vld [vmem:[%s1 + $0x17e8] sm:$0xff]
  %v934 = vld [vmem:[%s1 + $0x17f0] sm:$0xf]
  %v935 = vld [vmem:[%s1 + $0x17f4] sm:$0xff]
  %v936 = vld [vmem:[%s1 + $0x17fc] sm:$0xff]
  %v937 = vld [vmem:[%s1 + $0x1804] sm:$0xff]
  %v938 = vld [vmem:[%s1 + $0x180c] sm:$0xf]
  %v939 = vld [vmem:[%s1 + $0x1810] sm:$0xff]
  %v940 = vld [vmem:[%s1 + $0x1818] sm:$0xff]
  %v941 = vld [vmem:[%s1 + $0x1820] sm:$0xff]
  %v942 = vld [vmem:[%s1 + $0x1828] sm:$0xf]
  %v943 = vld [vmem:[%s1 + $0x182c] sm:$0xff]
  %v944 = vld [vmem:[%s1 + $0x1834] sm:$0xff]
  %v945 = vld [vmem:[%s1 + $0x183c] sm:$0xff]
  %v946 = vld [vmem:[%s1 + $0x1844] sm:$0xf]
  %v947 = vld [vmem:[%s1 + $0x1848] sm:$0xff]
  %v948 = vld [vmem:[%s1 + $0x1850] sm:$0xff]
  %v949 = vld [vmem:[%s1 + $0x1858] sm:$0xff]
  %v950 = vld [vmem:[%s1 + $0x1860] sm:$0xf]
  %v951 = vld [vmem:[%s1 + $0x1864] sm:$0xff]
  %v952 = vld [vmem:[%s1 + $0x186c] sm:$0xff]
  %v953 = vld [vmem:[%s1 + $0x1874] sm:$0xff]
  %v954 = vld [vmem:[%s1 + $0x187c] sm:$0xf]
  %v955 = vld [vmem:[%s1 + $0x1880] sm:$0xff]
  %v956 = vld [vmem:[%s1 + $0x1888] sm:$0xff]
  %v957 = vld [vmem:[%s1 + $0x1890] sm:$0xff]
  %v958 = vld [vmem:[%s1 + $0x1898] sm:$0xf]
  %v959 = vld [vmem:[%s1 + $0x189c] sm:$0xff]
  %v960 = vld [vmem:[%s1 + $0x18a4] sm:$0xff]
  %v961 = vld [vmem:[%s1 + $0x18ac] sm:$0xff]
  %v962 = vld [vmem:[%s1 + $0x18b4] sm:$0xf]
  %v963 = vld [vmem:[%s1 + $0x18b8] sm:$0xff]
  %v964 = vld [vmem:[%s1 + $0x18c0] sm:$0xff]
  %v965 = vld [vmem:[%s1 + $0x18c8] sm:$0xff]
  %v966 = vld [vmem:[%s1 + $0x18d0] sm:$0xf]
  %v967 = vld [vmem:[%s1 + $0x18d4] sm:$0xff]
  %v968 = vld [vmem:[%s1 + $0x18dc] sm:$0xff]
  %v969 = vld [vmem:[%s1 + $0x18e4] sm:$0xff]
  %v970 = vld [vmem:[%s1 + $0x18ec] sm:$0xf]
  %v971 = vld [vmem:[%s1 + $0x18f0] sm:$0xff]
  %v972 = vld [vmem:[%s1 + $0x18f8] sm:$0xff]
  %v973 = vld [vmem:[%s1 + $0x1900] sm:$0xff]
  %v974 = vld [vmem:[%s1 + $0x1908] sm:$0xf]
  %v975 = vld [vmem:[%s1 + $0x190c] sm:$0xff]
  %v976 = vld [vmem:[%s1 + $0x1914] sm:$0xff]
  %v977 = vld [vmem:[%s1 + $0x191c] sm:$0xff]
  %v978 = vld [vmem:[%s1 + $0x1924] sm:$0xf]
  %v979 = vld [vmem:[%s1 + $0x1928] sm:$0xff]
  %v980 = vld [vmem:[%s1 + $0x1930] sm:$0xff]
  %v981 = vld [vmem:[%s1 + $0x1938] sm:$0xff]
  %v982 = vld [vmem:[%s1 + $0x1940] sm:$0xf]
  %v983 = vld [vmem:[%s1 + $0x1944] sm:$0xff]
  %v984 = vld [vmem:[%s1 + $0x194c] sm:$0xff]
  %v985 = vld [vmem:[%s1 + $0x1954] sm:$0xff]
  %v986 = vld [vmem:[%s1 + $0x195c] sm:$0xf]
  %v987 = vld [vmem:[%s1 + $0x1960] sm:$0xff]
  %v988 = vld [vmem:[%s1 + $0x1968] sm:$0xff]
  %v989 = vld [vmem:[%s1 + $0x1970] sm:$0xff]
  %v990 = vld [vmem:[%s1 + $0x1978] sm:$0xf]
  %v991 = vld [vmem:[%s1 + $0x197c] sm:$0xff]
  %v992 = vld [vmem:[%s1 + $0x1984] sm:$0xff]
  %v993 = vld [vmem:[%s1 + $0x198c] sm:$0xff]
  %v994 = vld [vmem:[%s1 + $0x1994] sm:$0xf]
  %v995 = vld [vmem:[%s1 + $0x1998] sm:$0xff]
  %v996 = vld [vmem:[%s1 + $0x19a0] sm:$0xff]
  %v997 = vld [vmem:[%s1 + $0x19a8] sm:$0xff]
  %v998 = vld [vmem:[%s1 + $0x19b0] sm:$0xf]
  %v999 = vld [vmem:[%s1 + $0x19b4] sm:$0xff]
  %v1000 = vld [vmem:[%s1 + $0x19bc] sm:$0xff]
  %v1001 = vld [vmem:[%s1 + $0x19c4] sm:$0xff]
  %v1002 = vld [vmem:[%s1 + $0x19cc] sm:$0xf]
  %v1003 = vld [vmem:[%s1 + $0x19d0] sm:$0xff]
  %v1004 = vld [vmem:[%s1 + $0x19d8] sm:$0xff]
  %v1005 = vld [vmem:[%s1 + $0x19e0] sm:$0xff]
  %v1006 = vld [vmem:[%s1 + $0x19e8] sm:$0xf]
  %v1007 = vld [vmem:[%s1 + $0x19ec] sm:$0xff]
  %v1008 = vld [vmem:[%s1 + $0x19f4] sm:$0xff]
  %v1009 = vld [vmem:[%s1 + $0x19fc] sm:$0xff]
  %v1010 = vld [vmem:[%s1 + $0x1a04] sm:$0xf]
  %v1011 = vld [vmem:[%s1 + $0x1a08] sm:$0xff]
  %v1012 = vld [vmem:[%s1 + $0x1a10] sm:$0xff]
  %v1013 = vld [vmem:[%s1 + $0x1a18] sm:$0xff]
  %v1014 = vld [vmem:[%s1 + $0x1a20] sm:$0xf]
  %v1015 = vld [vmem:[%s1 + $0x1a24] sm:$0xff]
  %v1016 = vld [vmem:[%s1 + $0x1a2c] sm:$0xff]
  %v1017 = vld [vmem:[%s1 + $0x1a34] sm:$0xff]
  %v1018 = vld [vmem:[%s1 + $0x1a3c] sm:$0xf]
  %v1019 = vld [vmem:[%s1 + $0x1a40] sm:$0xff]
  %v1020 = vld [vmem:[%s1 + $0x1a48] sm:$0xff]
  %v1021 = vld [vmem:[%s1 + $0x1a50] sm:$0xff]
  %v1022 = vld [vmem:[%s1 + $0x1a58] sm:$0xf]
  %v1023 = vld [vmem:[%s1 + $0x1a5c] sm:$0xff]
  %v1024 = vld [vmem:[%s1 + $0x1a64] sm:$0xff]
  %v1025 = vld [vmem:[%s1 + $0x1a6c] sm:$0xff]
  %v1026 = vld [vmem:[%s1 + $0x1a74] sm:$0xf]
  %v1027 = vld [vmem:[%s1 + $0x1a78] sm:$0xff]
  %v1028 = vld [vmem:[%s1 + $0x1a80] sm:$0xff]
  %v1029 = vld [vmem:[%s1 + $0x1a88] sm:$0xff]
  %v1030 = vld [vmem:[%s1 + $0x1a90] sm:$0xf]
  %v1031 = vld [vmem:[%s1 + $0x1a94] sm:$0xff]
  %v1032 = vld [vmem:[%s1 + $0x1a9c] sm:$0xff]
  %v1033 = vld [vmem:[%s1 + $0x1aa4] sm:$0xff]
  %v1034 = vld [vmem:[%s1 + $0x1aac] sm:$0xf]
  %v1035 = vld [vmem:[%s1 + $0x1ab0] sm:$0xff]
  %v1036 = vld [vmem:[%s1 + $0x1ab8] sm:$0xff]
  %v1037 = vld [vmem:[%s1 + $0x1ac0] sm:$0xff]
  %v1038 = vld [vmem:[%s1 + $0x1ac8] sm:$0xf]
  %v1039 = vld [vmem:[%s1 + $0x1acc] sm:$0xff]
  %v1040 = vld [vmem:[%s1 + $0x1ad4] sm:$0xff]
  %v1041 = vld [vmem:[%s1 + $0x1adc] sm:$0xff]
  %v1042 = vld [vmem:[%s1 + $0x1ae4] sm:$0xf]
  %v1043 = vld [vmem:[%s1 + $0x1ae8] sm:$0xff]
  %v1044 = vld [vmem:[%s1 + $0x1af0] sm:$0xff]
  %v1045 = vld [vmem:[%s1 + $0x1af8] sm:$0xff]
  %v1046 = vld [vmem:[%s1 + $0x1b00] sm:$0xf]
  %v1047 = vld [vmem:[%s1 + $0x1b04] sm:$0xff]
  %v1048 = vld [vmem:[%s1 + $0x1b0c] sm:$0xff]
  %v1049 = vld [vmem:[%s1 + $0x1b14] sm:$0xff]
  %v1050 = vld [vmem:[%s1 + $0x1b1c] sm:$0xf]
  %v1051 = vld [vmem:[%s1 + $0x1b20] sm:$0xff]
  %v1052 = vld [vmem:[%s1 + $0x1b28] sm:$0xff]
  %v1053 = vld [vmem:[%s1 + $0x1b30] sm:$0xff]
  %v1054 = vld [vmem:[%s1 + $0x1b38] sm:$0xf]
  %v1055 = vld [vmem:[%s1 + $0x1b3c] sm:$0xff]
  %v1056 = vld [vmem:[%s1 + $0x1b44] sm:$0xff]
  %v1057 = vld [vmem:[%s1 + $0x1b4c] sm:$0xff]
  %v1058 = vld [vmem:[%s1 + $0x1b54] sm:$0xf]
  %v1059 = vld [vmem:[%s1 + $0x1b58] sm:$0xff]
  %v1060 = vld [vmem:[%s1 + $0x1b60] sm:$0xff]
  %v1061 = vld [vmem:[%s1 + $0x1b68] sm:$0xff]
  %v1062 = vld [vmem:[%s1 + $0x1b70] sm:$0xf]
  %v1063 = vld [vmem:[%s1 + $0x1b74] sm:$0xff]
  %v1064 = vld [vmem:[%s1 + $0x1b7c] sm:$0xff]
  %v1065 = vld [vmem:[%s1 + $0x1b84] sm:$0xff]
  %v1066 = vld [vmem:[%s1 + $0x1b8c] sm:$0xf]
  %v1067 = vld [vmem:[%s1 + $0x1b90] sm:$0xff]
  %v1068 = vld [vmem:[%s1 + $0x1b98] sm:$0xff]
  %v1069 = vld [vmem:[%s1 + $0x1ba0] sm:$0xff]
  %v1070 = vld [vmem:[%s1 + $0x1ba8] sm:$0xf]
  %v1071 = vld [vmem:[%s1 + $0x1bac] sm:$0xff]
  %v1072 = vld [vmem:[%s1 + $0x1bb4] sm:$0xff]
  %v1073 = vld [vmem:[%s1 + $0x1bbc] sm:$0xff]
  %v1074 = vld [vmem:[%s1 + $0x1bc4] sm:$0xf]
  %v1075 = vld [vmem:[%s1 + $0x1bc8] sm:$0xff]
  %v1076 = vld [vmem:[%s1 + $0x1bd0] sm:$0xff]
  %v1077 = vld [vmem:[%s1 + $0x1bd8] sm:$0xff]
  %v1078 = vld [vmem:[%s1 + $0x1be0] sm:$0xf]
  %v1079 = vld [vmem:[%s1 + $0x1be4] sm:$0xff]
  %v1080 = vld [vmem:[%s1 + $0x1bec] sm:$0xff]
  %v1081 = vld [vmem:[%s1 + $0x1bf4] sm:$0xff]
  %v1082 = vld [vmem:[%s1 + $0x1bfc] sm:$0xf]
  %v1083 = vld [vmem:[%s1 + $0x1c00] sm:$0xff]
  %v1084 = vld [vmem:[%s1 + $0x1c08] sm:$0xff]
  %v1085 = vld [vmem:[%s1 + $0x1c10] sm:$0xff]
  %v1086 = vld [vmem:[%s1 + $0x1c18] sm:$0xf]
  %v1087 = vld [vmem:[%s1 + $0x1c1c] sm:$0xff]
  %v1088 = vld [vmem:[%s1 + $0x1c24] sm:$0xff]
  %v1089 = vld [vmem:[%s1 + $0x1c2c] sm:$0xff]
  %v1090 = vld [vmem:[%s1 + $0x1c34] sm:$0xf]
  %v1091 = vld [vmem:[%s1 + $0x1c38] sm:$0xff]
  %v1092 = vld [vmem:[%s1 + $0x1c40] sm:$0xff]
  %v1093 = vld [vmem:[%s1 + $0x1c48] sm:$0xff]
  %v1094 = vld [vmem:[%s1 + $0x1c50] sm:$0xf]
  %v1095 = vld [vmem:[%s1 + $0x1c54] sm:$0xff]
  %v1096 = vld [vmem:[%s1 + $0x1c5c] sm:$0xff]
  %v1097 = vld [vmem:[%s1 + $0x1c64] sm:$0xff]
  %v1098 = vld [vmem:[%s1 + $0x1c6c] sm:$0xf]
  %v1099 = vld [vmem:[%s1 + $0x1c70] sm:$0xff]
  %v1100 = vld [vmem:[%s1 + $0x1c78] sm:$0xff]
  %v1101 = vld [vmem:[%s1 + $0x1c80] sm:$0xff]
  %v1102 = vld [vmem:[%s1 + $0x1c88] sm:$0xf]
  %v1103 = vld [vmem:[%s1 + $0x1c8c] sm:$0xff]
  %v1104 = vld [vmem:[%s1 + $0x1c94] sm:$0xff]
  %v1105 = vld [vmem:[%s1 + $0x1c9c] sm:$0xff]
  %v1106 = vld [vmem:[%s1 + $0x1ca4] sm:$0xf]
  %v1107 = vld [vmem:[%s1 + $0x1ca8] sm:$0xff]
  %v1108 = vld [vmem:[%s1 + $0x1cb0] sm:$0xff]
  %v1109 = vld [vmem:[%s1 + $0x1cb8] sm:$0xff]
  %v1110 = vld [vmem:[%s1 + $0x1cc0] sm:$0xf]
  %v1111 = vld [vmem:[%s1 + $0x1cc4] sm:$0xff]
  %v1112 = vld [vmem:[%s1 + $0x1ccc] sm:$0xff]
  %v1113 = vld [vmem:[%s1 + $0x1cd4] sm:$0xff]
  %v1114 = vld [vmem:[%s1 + $0x1cdc] sm:$0xf]
  %v1115 = vld [vmem:[%s1 + $0x1ce0] sm:$0xff]
  %v1116 = vld [vmem:[%s1 + $0x1ce8] sm:$0xff]
  %v1117 = vld [vmem:[%s1 + $0x1cf0] sm:$0xff]
  %v1118 = vld [vmem:[%s1 + $0x1cf8] sm:$0xf]
  %v1119 = vld [vmem:[%s1 + $0x1cfc] sm:$0xff]
  %v1120 = vld [vmem:[%s1 + $0x1d04] sm:$0xff]
  %v1121 = vld [vmem:[%s1 + $0x1d0c] sm:$0xff]
  %v1122 = vld [vmem:[%s1 + $0x1d14] sm:$0xf]
  %v1123 = vld [vmem:[%s1 + $0x1d18] sm:$0xff]
  %v1124 = vld [vmem:[%s1 + $0x1d20] sm:$0xff]
  %v1125 = vld [vmem:[%s1 + $0x1d28] sm:$0xff]
  %v1126 = vld [vmem:[%s1 + $0x1d30] sm:$0xf]
  %v1127 = vld [vmem:[%s1 + $0x1d34] sm:$0xff]
  %v1128 = vld [vmem:[%s1 + $0x1d3c] sm:$0xff]
  %v1129 = vld [vmem:[%s1 + $0x1d44] sm:$0xff]
  %v1130 = vld [vmem:[%s1 + $0x1d4c] sm:$0xf]
  %v1131 = vld [vmem:[%s1 + $0x1d50] sm:$0xff]
  %v1132 = vld [vmem:[%s1 + $0x1d58] sm:$0xff]
  %v1133 = vld [vmem:[%s1 + $0x1d60] sm:$0xff]
  %v1134 = vld [vmem:[%s1 + $0x1d68] sm:$0xf]
  %v1135 = vld [vmem:[%s1 + $0x1d6c] sm:$0xff]
  %v1136 = vld [vmem:[%s1 + $0x1d74] sm:$0xff]
  %v1137 = vld [vmem:[%s1 + $0x1d7c] sm:$0xff]
  %v1138 = vld [vmem:[%s1 + $0x1d84] sm:$0xf]
  %v1139 = vld [vmem:[%s1 + $0x1d88] sm:$0xff]
  %v1140 = vld [vmem:[%s1 + $0x1d90] sm:$0xff]
  %v1141 = vld [vmem:[%s1 + $0x1d98] sm:$0xff]
  %v1142 = vld [vmem:[%s1 + $0x1da0] sm:$0xf]
  %v1143 = vld [vmem:[%s1 + $0x1da4] sm:$0xff]
  %v1144 = vld [vmem:[%s1 + $0x1dac] sm:$0xff]
  %v1145 = vld [vmem:[%s1 + $0x1db4] sm:$0xff]
  %v1146 = vld [vmem:[%s1 + $0x1dbc] sm:$0xf]
  %v1147 = vld [vmem:[%s1 + $0x1dc0] sm:$0xff]
  %v1148 = vld [vmem:[%s1 + $0x1dc8] sm:$0xff]
  %v1149 = vld [vmem:[%s1 + $0x1dd0] sm:$0xff]
  %v1150 = vld [vmem:[%s1 + $0x1dd8] sm:$0xf]
  %v1151 = vld [vmem:[%s1 + $0x1ddc] sm:$0xff]
  %v1152 = vld [vmem:[%s1 + $0x1de4] sm:$0xff]
  %v1153 = vld [vmem:[%s1 + $0x1dec] sm:$0xff]
  %v1154 = vld [vmem:[%s1 + $0x1df4] sm:$0xf]
  %v1155 = vld [vmem:[%s1 + $0x1df8] sm:$0xff]
  %v1156 = vld [vmem:[%s1 + $0x1e00] sm:$0xff]
  %v1157 = vld [vmem:[%s1 + $0x1e08] sm:$0xff]
  %v1158 = vld [vmem:[%s1 + $0x1e10] sm:$0xf]
  %v1159 = vld [vmem:[%s1 + $0x1e14] sm:$0xff]
  %v1160 = vld [vmem:[%s1 + $0x1e1c] sm:$0xff]
  %v1161 = vld [vmem:[%s1 + $0x1e24] sm:$0xff]
  %v1162 = vld [vmem:[%s1 + $0x1e2c] sm:$0xf]
  %v1163 = vld [vmem:[%s1 + $0x1e30] sm:$0xff]
  %v1164 = vld [vmem:[%s1 + $0x1e38] sm:$0xff]
  %v1165 = vld [vmem:[%s1 + $0x1e40] sm:$0xff]
  %v1166 = vld [vmem:[%s1 + $0x1e48] sm:$0xf]
  %v1167 = vld [vmem:[%s1 + $0x1e4c] sm:$0xff]
  %v1168 = vld [vmem:[%s1 + $0x1e54] sm:$0xff]
  %v1169 = vld [vmem:[%s1 + $0x1e5c] sm:$0xff]
  %v1170 = vld [vmem:[%s1 + $0x1e64] sm:$0xf]
  %v1171 = vld [vmem:[%s1 + $0x1e68] sm:$0xff]
  %v1172 = vld [vmem:[%s1 + $0x1e70] sm:$0xff]
  %v1173 = vld [vmem:[%s1 + $0x1e78] sm:$0xff]
  %v1174 = vld [vmem:[%s1 + $0x1e80] sm:$0xf]
  %v1175 = vld [vmem:[%s1 + $0x1e84] sm:$0xff]
  %v1176 = vld [vmem:[%s1 + $0x1e8c] sm:$0xff]
  %v1177 = vld [vmem:[%s1 + $0x1e94] sm:$0xff]
  %v1178 = vld [vmem:[%s1 + $0x1e9c] sm:$0xf]
  %v1179 = vld [vmem:[%s1 + $0x1ea0] sm:$0xff]
  %v1180 = vld [vmem:[%s1 + $0x1ea8] sm:$0xff]
  %v1181 = vld [vmem:[%s1 + $0x1eb0] sm:$0xff]
  %v1182 = vld [vmem:[%s1 + $0x1eb8] sm:$0xf]
  %v1183 = vld [vmem:[%s1 + $0x1ebc] sm:$0xff]
  %v1184 = vld [vmem:[%s1 + $0x1ec4] sm:$0xff]
  %v1185 = vld [vmem:[%s1 + $0x1ecc] sm:$0xff]
  %v1186 = vld [vmem:[%s1 + $0x1ed4] sm:$0xf]
  %v1187 = vld [vmem:[%s1 + $0x1ed8] sm:$0xff]
  %v1188 = vld [vmem:[%s1 + $0x1ee0] sm:$0xff]
  %v1189 = vld [vmem:[%s1 + $0x1ee8] sm:$0xff]
  %v1190 = vld [vmem:[%s1 + $0x1ef0] sm:$0xf]
  %v1191 = vld [vmem:[%s1 + $0x1ef4] sm:$0xff]
  %v1192 = vld [vmem:[%s1 + $0x1efc] sm:$0xff]
  %v1193 = vld [vmem:[%s1 + $0x1f04] sm:$0xff]
  %v1194 = vld [vmem:[%s1 + $0x1f0c] sm:$0xf]
  %v1195 = vld [vmem:[%s1 + $0x1f10] sm:$0xff]
  %v1196 = vld [vmem:[%s1 + $0x1f18] sm:$0xff]
  %v1197 = vld [vmem:[%s1 + $0x1f20] sm:$0xff]
  %v1198 = vld [vmem:[%s1 + $0x1f28] sm:$0xf]
  %v1199 = vld [vmem:[%s1 + $0x1f2c] sm:$0xff]
  %v1200 = vld [vmem:[%s1 + $0x1f34] sm:$0xff]
  %v1201 = vld [vmem:[%s1 + $0x1f3c] sm:$0xff]
  %v1202 = vld [vmem:[%s1 + $0x1f44] sm:$0xf]
  %v1203 = vld [vmem:[%s1 + $0x1f48] sm:$0xff]
  %v1204 = vld [vmem:[%s1 + $0x1f50] sm:$0xff]
  %v1205 = vld [vmem:[%s1 + $0x1f58] sm:$0xff]
  %v1206 = vld [vmem:[%s1 + $0x1f60] sm:$0xf]
  %v1207 = vld [vmem:[%s1 + $0x1f64] sm:$0xff]
  %v1208 = vld [vmem:[%s1 + $0x1f6c] sm:$0xff]
  %v1209 = vld [vmem:[%s1 + $0x1f74] sm:$0xff]
  %v1210 = vld [vmem:[%s1 + $0x1f7c] sm:$0xf]
  %v1211 = vld [vmem:[%s1 + $0x1f80] sm:$0xff]
  %v1212 = vld [vmem:[%s1 + $0x1f88] sm:$0xff]
  %v1213 = vld [vmem:[%s1 + $0x1f90] sm:$0xff]
  %v1214 = vld [vmem:[%s1 + $0x1f98] sm:$0xf]
  %v1215 = vld [vmem:[%s1 + $0x1f9c] sm:$0xff]
  %v1216 = vld [vmem:[%s1 + $0x1fa4] sm:$0xff]
  %v1217 = vld [vmem:[%s1 + $0x1fac] sm:$0xff]
  %v1218 = vld [vmem:[%s1 + $0x1fb4] sm:$0xf]
  %v1219 = vld [vmem:[%s1 + $0x1fb8] sm:$0xff]
  %v1220 = vld [vmem:[%s1 + $0x1fc0] sm:$0xff]
  %v1221 = vld [vmem:[%s1 + $0x1fc8] sm:$0xff]
  %v1222 = vld [vmem:[%s1 + $0x1fd0] sm:$0xf]
  %v1223 = vld [vmem:[%s1 + $0x1fd4] sm:$0xff]
  %v1224 = vld [vmem:[%s1 + $0x1fdc] sm:$0xff]
  %v1225 = vld [vmem:[%s1 + $0x1fe4] sm:$0xff]
  %v1226 = vld [vmem:[%s1 + $0x1fec] sm:$0xf]
  %v1227 = vld [vmem:[%s1 + $0x1ff0] sm:$0xff]
  %v1228 = vld [vmem:[%s1 + $0x1ff8] sm:$0xff]
  %v1229 = vld [vmem:[%s1 + $0x2000] sm:$0xff]
  %v1230 = vld [vmem:[%s1 + $0x2008] sm:$0xf]
  %v1231 = vld [vmem:[%s1 + $0x200c] sm:$0xff]
  %v1232 = vld [vmem:[%s1 + $0x2014] sm:$0xff]
  %v1233 = vld [vmem:[%s1 + $0x201c] sm:$0xff]
  %v1234 = vld [vmem:[%s1 + $0x2024] sm:$0xf]
  %v1235 = vld [vmem:[%s1 + $0x2028] sm:$0xff]
  %v1236 = vld [vmem:[%s1 + $0x2030] sm:$0xff]
  %v1237 = vld [vmem:[%s1 + $0x2038] sm:$0xff]
  %v1238 = vld [vmem:[%s1 + $0x2040] sm:$0xf]
  %v1239 = vld [vmem:[%s1 + $0x2044] sm:$0xff]
  %v1240 = vld [vmem:[%s1 + $0x204c] sm:$0xff]
  %v1241 = vld [vmem:[%s1 + $0x2054] sm:$0xff]
  %v1242 = vld [vmem:[%s1 + $0x205c] sm:$0xf]
  %v1243 = vld [vmem:[%s1 + $0x2060] sm:$0xff]
  %v1244 = vld [vmem:[%s1 + $0x2068] sm:$0xff]
  %v1245 = vld [vmem:[%s1 + $0x2070] sm:$0xff]
  %v1246 = vld [vmem:[%s1 + $0x2078] sm:$0xf]
  %v1247 = vld [vmem:[%s1 + $0x207c] sm:$0xff]
  %v1248 = vld [vmem:[%s1 + $0x2084] sm:$0xff]
  %v1249 = vld [vmem:[%s1 + $0x208c] sm:$0xff]
  %v1250 = vld [vmem:[%s1 + $0x2094] sm:$0xf]
  %v1251 = vld [vmem:[%s1 + $0x2098] sm:$0xff]
  %v1252 = vld [vmem:[%s1 + $0x20a0] sm:$0xff]
  %v1253 = vld [vmem:[%s1 + $0x20a8] sm:$0xff]
  %v1254 = vld [vmem:[%s1 + $0x20b0] sm:$0xf]
  %v1255 = vld [vmem:[%s1 + $0x20b4] sm:$0xff]
  %v1256 = vld [vmem:[%s1 + $0x20bc] sm:$0xff]
  %v1257 = vld [vmem:[%s1 + $0x20c4] sm:$0xff]
  %v1258 = vld [vmem:[%s1 + $0x20cc] sm:$0xf]
  %v1259 = vld [vmem:[%s1 + $0x20d0] sm:$0xff]
  %v1260 = vld [vmem:[%s1 + $0x20d8] sm:$0xff]
  %v1261 = vld [vmem:[%s1 + $0x20e0] sm:$0xff]
  %v1262 = vld [vmem:[%s1 + $0x20e8] sm:$0xf]
  %v1263 = vld [vmem:[%s1 + $0x20ec] sm:$0xff]
  %v1264 = vld [vmem:[%s1 + $0x20f4] sm:$0xff]
  %v1265 = vld [vmem:[%s1 + $0x20fc] sm:$0xff]
  %v1266 = vld [vmem:[%s1 + $0x2104] sm:$0xf]
  %v1267 = vld [vmem:[%s1 + $0x2108] sm:$0xff]
  %v1268 = vld [vmem:[%s1 + $0x2110] sm:$0xff]
  %v1269 = vld [vmem:[%s1 + $0x2118] sm:$0xff]
  %v1270 = vld [vmem:[%s1 + $0x2120] sm:$0xf]
  %v1271 = vld [vmem:[%s1 + $0x2124] sm:$0xff]
  %v1272 = vld [vmem:[%s1 + $0x212c] sm:$0xff]
  %v1273 = vld [vmem:[%s1 + $0x2134] sm:$0xff]
  %v1274 = vld [vmem:[%s1 + $0x213c] sm:$0xf]
  %v1275 = vld [vmem:[%s1 + $0x2140] sm:$0xff]
  %v1276 = vld [vmem:[%s1 + $0x2148] sm:$0xff]
  %v1277 = vld [vmem:[%s1 + $0x2150] sm:$0xff]
  %v1278 = vld [vmem:[%s1 + $0x2158] sm:$0xf]
  %v1279 = vld [vmem:[%s1 + $0x215c] sm:$0xff]
  %v1280 = vld [vmem:[%s1 + $0x2164] sm:$0xff]
  %v1281 = vld [vmem:[%s1 + $0x216c] sm:$0xff]
  %v1282 = vld [vmem:[%s1 + $0x2174] sm:$0xf]
  %v1283 = vld [vmem:[%s1 + $0x2178] sm:$0xff]
  %v1284 = vld [vmem:[%s1 + $0x2180] sm:$0xff]
  %v1285 = vld [vmem:[%s1 + $0x2188] sm:$0xff]
  %v1286 = vld [vmem:[%s1 + $0x2190] sm:$0xf]
  %v1287 = vld [vmem:[%s1 + $0x2194] sm:$0xff]
  %v1288 = vld [vmem:[%s1 + $0x219c] sm:$0xff]
  %v1289 = vld [vmem:[%s1 + $0x21a4] sm:$0xff]
  %v1290 = vld [vmem:[%s1 + $0x21ac] sm:$0xf]
  %v1291 = vld [vmem:[%s1 + $0x21b0] sm:$0xff]
  %v1292 = vld [vmem:[%s1 + $0x21b8] sm:$0xff]
  %v1293 = vld [vmem:[%s1 + $0x21c0] sm:$0xff]
  %v1294 = vld [vmem:[%s1 + $0x21c8] sm:$0xf]
  %v1295 = vld [vmem:[%s1 + $0x21cc] sm:$0xff]
  %v1296 = vld [vmem:[%s1 + $0x21d4] sm:$0xff]
  %v1297 = vld [vmem:[%s1 + $0x21dc] sm:$0xff]
  %v1298 = vld [vmem:[%s1 + $0x21e4] sm:$0xf]
  %v1299 = vld [vmem:[%s1 + $0x21e8] sm:$0xff]
  %v1300 = vld [vmem:[%s1 + $0x21f0] sm:$0xff]
  %v1301 = vld [vmem:[%s1 + $0x21f8] sm:$0xff]
  %v1302 = vld [vmem:[%s1 + $0x2200] sm:$0xf]
  %v1303 = vld [vmem:[%s1 + $0x2204] sm:$0xff]
  %v1304 = vld [vmem:[%s1 + $0x220c] sm:$0xff]
  %v1305 = vld [vmem:[%s1 + $0x2214] sm:$0xff]
  %v1306 = vld [vmem:[%s1 + $0x221c] sm:$0xf]
  %v1307 = vld [vmem:[%s1 + $0x2220] sm:$0xff]
  %v1308 = vld [vmem:[%s1 + $0x2228] sm:$0xff]
  %v1309 = vld [vmem:[%s1 + $0x2230] sm:$0xff]
  %v1310 = vld [vmem:[%s1 + $0x2238] sm:$0xf]
  %v1311 = vld [vmem:[%s1 + $0x223c] sm:$0xff]
  %v1312 = vld [vmem:[%s1 + $0x2244] sm:$0xff]
  %v1313 = vld [vmem:[%s1 + $0x224c] sm:$0xff]
  %v1314 = vld [vmem:[%s1 + $0x2254] sm:$0xf]
  %v1315 = vld [vmem:[%s1 + $0x2258] sm:$0xff]
  %v1316 = vld [vmem:[%s1 + $0x2260] sm:$0xff]
  %v1317 = vld [vmem:[%s1 + $0x2268] sm:$0xff]
  %v1318 = vld [vmem:[%s1 + $0x2270] sm:$0xf]
  %v1319 = vld [vmem:[%s1 + $0x2274] sm:$0xff]
  %v1320 = vld [vmem:[%s1 + $0x227c] sm:$0xff]
  %v1321 = vld [vmem:[%s1 + $0x2284] sm:$0xff]
  %v1322 = vld [vmem:[%s1 + $0x228c] sm:$0xf]
  %v1323 = vld [vmem:[%s1 + $0x2290] sm:$0xff]
  %v1324 = vld [vmem:[%s1 + $0x2298] sm:$0xff]
  %v1325 = vld [vmem:[%s1 + $0x22a0] sm:$0xff]
  %v1326 = vld [vmem:[%s1 + $0x22a8] sm:$0xf]
  %v1327 = vld [vmem:[%s1 + $0x22ac] sm:$0xff]
  %v1328 = vld [vmem:[%s1 + $0x22b4] sm:$0xff]
  %v1329 = vld [vmem:[%s1 + $0x22bc] sm:$0xff]
  %v1330 = vld [vmem:[%s1 + $0x22c4] sm:$0xf]
  %v1331 = vld [vmem:[%s1 + $0x22c8] sm:$0xff]
  %v1332 = vld [vmem:[%s1 + $0x22d0] sm:$0xff]
  %v1333 = vld [vmem:[%s1 + $0x22d8] sm:$0xff]
  %v1334 = vld [vmem:[%s1 + $0x22e0] sm:$0xf]
  %v1335 = vld [vmem:[%s1 + $0x22e4] sm:$0xff]
  %v1336 = vld [vmem:[%s1 + $0x22ec] sm:$0xff]
  %v1337 = vld [vmem:[%s1 + $0x22f4] sm:$0xff]
  %v1338 = vld [vmem:[%s1 + $0x22fc] sm:$0xf]
  %v1339 = vld [vmem:[%s1 + $0x2300] sm:$0xff]
  %v1340 = vld [vmem:[%s1 + $0x2308] sm:$0xff]
  %v1341 = vld [vmem:[%s1 + $0x2310] sm:$0xff]
  %v1342 = vld [vmem:[%s1 + $0x2318] sm:$0xf]
  %v1343 = vld [vmem:[%s1 + $0x231c] sm:$0xff]
  %v1344 = vld [vmem:[%s1 + $0x2324] sm:$0xff]
  %v1345 = vld [vmem:[%s1 + $0x232c] sm:$0xff]
  %v1346 = vld [vmem:[%s1 + $0x2334] sm:$0xf]
  %v1347 = vld [vmem:[%s1 + $0x2338] sm:$0xff]
  %v1348 = vld [vmem:[%s1 + $0x2340] sm:$0xff]
  %v1349 = vld [vmem:[%s1 + $0x2348] sm:$0xff]
  %v1350 = vld [vmem:[%s1 + $0x2350] sm:$0xf]
  %v1351 = vld [vmem:[%s1 + $0x2354] sm:$0xff]
  %v1352 = vld [vmem:[%s1 + $0x235c] sm:$0xff]
  %v1353 = vld [vmem:[%s1 + $0x2364] sm:$0xff]
  %v1354 = vld [vmem:[%s1 + $0x236c] sm:$0xf]
  %v1355 = vld [vmem:[%s1 + $0x2370] sm:$0xff]
  %v1356 = vld [vmem:[%s1 + $0x2378] sm:$0xff]
  %v1357 = vld [vmem:[%s1 + $0x2380] sm:$0xff]
  %v1358 = vld [vmem:[%s1 + $0x2388] sm:$0xf]
  %v1359 = vld [vmem:[%s1 + $0x238c] sm:$0xff]
  %v1360 = vld [vmem:[%s1 + $0x2394] sm:$0xff]
  %v1361 = vld [vmem:[%s1 + $0x239c] sm:$0xff]
  %v1362 = vld [vmem:[%s1 + $0x23a4] sm:$0xf]
  %v1363 = vld [vmem:[%s1 + $0x23a8] sm:$0xff]
  %v1364 = vld [vmem:[%s1 + $0x23b0] sm:$0xff]
  %v1365 = vld [vmem:[%s1 + $0x23b8] sm:$0xff]
  %v1366 = vld [vmem:[%s1 + $0x23c0] sm:$0xf]
  %v1367 = vld [vmem:[%s1 + $0x23c4] sm:$0xff]
  %v1368 = vld [vmem:[%s1 + $0x23cc] sm:$0xff]
  %v1369 = vld [vmem:[%s1 + $0x23d4] sm:$0xff]
  %v1370 = vld [vmem:[%s1 + $0x23dc] sm:$0xf]
  %v1371 = vld [vmem:[%s1 + $0x23e0] sm:$0xff]
  %v1372 = vld [vmem:[%s1 + $0x23e8] sm:$0xff]
  %v1373 = vld [vmem:[%s1 + $0x23f0] sm:$0xff]
  %v1374 = vld [vmem:[%s1 + $0x23f8] sm:$0xf]
  %v1375 = vld [vmem:[%s1 + $0x23fc] sm:$0xff]
  %v1376 = vld [vmem:[%s1 + $0x2404] sm:$0xff]
  %v1377 = vld [vmem:[%s1 + $0x240c] sm:$0xff]
  %v1378 = vld [vmem:[%s1 + $0x2414] sm:$0xf]
  %v1379 = vld [vmem:[%s1 + $0x2418] sm:$0xff]
  %v1380 = vld [vmem:[%s1 + $0x2420] sm:$0xff]
  %v1381 = vld [vmem:[%s1 + $0x2428] sm:$0xff]
  %v1382 = vld [vmem:[%s1 + $0x2430] sm:$0xf]
  %v1383 = vld [vmem:[%s1 + $0x2434] sm:$0xff]
  %v1384 = vld [vmem:[%s1 + $0x243c] sm:$0xff]
  %v1385 = vld [vmem:[%s1 + $0x2444] sm:$0xff]
  %v1386 = vld [vmem:[%s1 + $0x244c] sm:$0xf]
  %v1387 = vld [vmem:[%s1 + $0x2450] sm:$0xff]
  %v1388 = vld [vmem:[%s1 + $0x2458] sm:$0xff]
  %v1389 = vld [vmem:[%s1 + $0x2460] sm:$0xff]
  %v1390 = vld [vmem:[%s1 + $0x2468] sm:$0xf]
  %v1391 = vld [vmem:[%s1 + $0x246c] sm:$0xff]
  %v1392 = vld [vmem:[%s1 + $0x2474] sm:$0xff]
  %v1393 = vld [vmem:[%s1 + $0x247c] sm:$0xff]
  %v1394 = vld [vmem:[%s1 + $0x2484] sm:$0xf]
  %v1395 = vld [vmem:[%s1 + $0x2488] sm:$0xff]
  %v1396 = vld [vmem:[%s1 + $0x2490] sm:$0xff]
  %v1397 = vld [vmem:[%s1 + $0x2498] sm:$0xff]
  %v1398 = vld [vmem:[%s1 + $0x24a0] sm:$0xf]
  %v1399 = vld [vmem:[%s1 + $0x24a4] sm:$0xff]
  %v1400 = vld [vmem:[%s1 + $0x24ac] sm:$0xff]
  %v1401 = vld [vmem:[%s1 + $0x24b4] sm:$0xff]
  %v1402 = vld [vmem:[%s1 + $0x24bc] sm:$0xf]
  %v1403 = vld [vmem:[%s1 + $0x24c0] sm:$0xff]
  %v1404 = vld [vmem:[%s1 + $0x24c8] sm:$0xff]
  %v1405 = vld [vmem:[%s1 + $0x24d0] sm:$0xff]
  %v1406 = vld [vmem:[%s1 + $0x24d8] sm:$0xf]
  %v1407 = vld [vmem:[%s1 + $0x24dc] sm:$0xff]
  %v1408 = vld [vmem:[%s1 + $0x24e4] sm:$0xff]
  %v1409 = vld [vmem:[%s1 + $0x24ec] sm:$0xff]
  %v1410 = vld [vmem:[%s1 + $0x24f4] sm:$0xf]
  %v1411 = vld [vmem:[%s2] sm:$0x3f]
  %1413 = vset.pattern.permute.xlu0 0
  %1414 = vperm.xlu0 %1413, %v1411
  %v1415 = vpop.permute.xlu0 %1414
  %v2769 = vunpack.c.l.b16 %v59
  %v2770 = vunpack.c.h.b16 %v59
  %v2771 = vunpack.c.l.b16 %v60
  %v2772 = vunpack.c.h.b16 %v60
  %v2773 = vunpack.c.l.b16 %v61
  %v2774 = vunpack.c.h.b16 %v61
  %v2775 = vunpack.c.l.b16 %v62
  %v2776 = vunpack.c.l.b16 %v63
  %v2777 = vunpack.c.h.b16 %v63
  %v2778 = vunpack.c.l.b16 %v64
  %v2779 = vunpack.c.h.b16 %v64
  %v2780 = vunpack.c.l.b16 %v65
  %v2781 = vunpack.c.h.b16 %v65
  %v2782 = vunpack.c.l.b16 %v66
  %v2783 = vunpack.c.l.b16 %v67
  %v2784 = vunpack.c.h.b16 %v67
  %v2785 = vunpack.c.l.b16 %v68
  %v2786 = vunpack.c.h.b16 %v68
  %v2787 = vunpack.c.l.b16 %v69
  %v2788 = vunpack.c.h.b16 %v69
  %v2789 = vunpack.c.l.b16 %v70
  %v2790 = vunpack.c.l.b16 %v71
  %v2791 = vunpack.c.h.b16 %v71
  %v2792 = vunpack.c.l.b16 %v72
  %v2793 = vunpack.c.h.b16 %v72
  %v2794 = vunpack.c.l.b16 %v73
  %v2795 = vunpack.c.h.b16 %v73
  %v2796 = vunpack.c.l.b16 %v74
  %v2797 = vunpack.c.l.b16 %v75
  %v2798 = vunpack.c.h.b16 %v75
  %v2799 = vunpack.c.l.b16 %v76
  %v2800 = vunpack.c.h.b16 %v76
  %v2801 = vunpack.c.l.b16 %v77
  %v2802 = vunpack.c.h.b16 %v77
  %v2803 = vunpack.c.l.b16 %v78
  %v2804 = vunpack.c.l.b16 %v79
  %v2805 = vunpack.c.h.b16 %v79
  %v2806 = vunpack.c.l.b16 %v80
  %v2807 = vunpack.c.h.b16 %v80
  %v2808 = vunpack.c.l.b16 %v81
  %v2809 = vunpack.c.h.b16 %v81
  %v2810 = vunpack.c.l.b16 %v82
  %v2811 = vunpack.c.l.b16 %v83
  %v2812 = vunpack.c.h.b16 %v83
  %v2813 = vunpack.c.l.b16 %v84
  %v2814 = vunpack.c.h.b16 %v84
  %v2815 = vunpack.c.l.b16 %v85
  %v2816 = vunpack.c.h.b16 %v85
  %v2817 = vunpack.c.l.b16 %v86
  %v2818 = vunpack.c.l.b16 %v87
  %v2819 = vunpack.c.h.b16 %v87
  %v2820 = vunpack.c.l.b16 %v88
  %v2821 = vunpack.c.h.b16 %v88
  %v2822 = vunpack.c.l.b16 %v89
  %v2823 = vunpack.c.h.b16 %v89
  %v2824 = vunpack.c.l.b16 %v90
  %v2825 = vunpack.c.l.b16 %v91
  %v2826 = vunpack.c.h.b16 %v91
  %v2827 = vunpack.c.l.b16 %v92
  %v2828 = vunpack.c.h.b16 %v92
  %v2829 = vunpack.c.l.b16 %v93
  %v2830 = vunpack.c.h.b16 %v93
  %v2831 = vunpack.c.l.b16 %v94
  %v2832 = vunpack.c.l.b16 %v95
  %v2833 = vunpack.c.h.b16 %v95
  %v2834 = vunpack.c.l.b16 %v96
  %v2835 = vunpack.c.h.b16 %v96
  %v2836 = vunpack.c.l.b16 %v97
  %v2837 = vunpack.c.h.b16 %v97
  %v2838 = vunpack.c.l.b16 %v98
  %v2839 = vunpack.c.l.b16 %v99
  %v2840 = vunpack.c.h.b16 %v99
  %v2841 = vunpack.c.l.b16 %v100
  %v2842 = vunpack.c.h.b16 %v100
  %v2843 = vunpack.c.l.b16 %v101
  %v2844 = vunpack.c.h.b16 %v101
  %v2845 = vunpack.c.l.b16 %v102
  %v2846 = vunpack.c.l.b16 %v103
  %v2847 = vunpack.c.h.b16 %v103
  %v2848 = vunpack.c.l.b16 %v104
  %v2849 = vunpack.c.h.b16 %v104
  %v2850 = vunpack.c.l.b16 %v105
  %v2851 = vunpack.c.h.b16 %v105
  %v2852 = vunpack.c.l.b16 %v106
  %v2853 = vunpack.c.l.b16 %v107
  %v2854 = vunpack.c.h.b16 %v107
  %v2855 = vunpack.c.l.b16 %v108
  %v2856 = vunpack.c.h.b16 %v108
  %v2857 = vunpack.c.l.b16 %v109
  %v2858 = vunpack.c.h.b16 %v109
  %v2859 = vunpack.c.l.b16 %v110
  %v2860 = vunpack.c.l.b16 %v111
  %v2861 = vunpack.c.h.b16 %v111
  %v2862 = vunpack.c.l.b16 %v112
  %v2863 = vunpack.c.h.b16 %v112
  %v2864 = vunpack.c.l.b16 %v113
  %v2865 = vunpack.c.h.b16 %v113
  %v2866 = vunpack.c.l.b16 %v114
  %v2867 = vunpack.c.l.b16 %v115
  %v2868 = vunpack.c.h.b16 %v115
  %v2869 = vunpack.c.l.b16 %v116
  %v2870 = vunpack.c.h.b16 %v116
  %v2871 = vunpack.c.l.b16 %v117
  %v2872 = vunpack.c.h.b16 %v117
  %v2873 = vunpack.c.l.b16 %v118
  %v2874 = vunpack.c.l.b16 %v119
  %v2875 = vunpack.c.h.b16 %v119
  %v2876 = vunpack.c.l.b16 %v120
  %v2877 = vunpack.c.h.b16 %v120
  %v2878 = vunpack.c.l.b16 %v121
  %v2879 = vunpack.c.h.b16 %v121
  %v2880 = vunpack.c.l.b16 %v122
  %v2881 = vunpack.c.l.b16 %v123
  %v2882 = vunpack.c.h.b16 %v123
  %v2883 = vunpack.c.l.b16 %v124
  %v2884 = vunpack.c.h.b16 %v124
  %v2885 = vunpack.c.l.b16 %v125
  %v2886 = vunpack.c.h.b16 %v125
  %v2887 = vunpack.c.l.b16 %v126
  %v2888 = vunpack.c.l.b16 %v127
  %v2889 = vunpack.c.h.b16 %v127
  %v2890 = vunpack.c.l.b16 %v128
  %v2891 = vunpack.c.h.b16 %v128
  %v2892 = vunpack.c.l.b16 %v129
  %v2893 = vunpack.c.h.b16 %v129
  %v2894 = vunpack.c.l.b16 %v130
  %v2895 = vunpack.c.l.b16 %v131
  %v2896 = vunpack.c.h.b16 %v131
  %v2897 = vunpack.c.l.b16 %v132
  %v2898 = vunpack.c.h.b16 %v132
  %v2899 = vunpack.c.l.b16 %v133
  %v2900 = vunpack.c.h.b16 %v133
  %v2901 = vunpack.c.l.b16 %v134
  %v2902 = vunpack.c.l.b16 %v135
  %v2903 = vunpack.c.h.b16 %v135
  %v2904 = vunpack.c.l.b16 %v136
  %v2905 = vunpack.c.h.b16 %v136
  %v2906 = vunpack.c.l.b16 %v137
  %v2907 = vunpack.c.h.b16 %v137
  %v2908 = vunpack.c.l.b16 %v138
  %v2909 = vunpack.c.l.b16 %v139
  %v2910 = vunpack.c.h.b16 %v139
  %v2911 = vunpack.c.l.b16 %v140
  %v2912 = vunpack.c.h.b16 %v140
  %v2913 = vunpack.c.l.b16 %v141
  %v2914 = vunpack.c.h.b16 %v141
  %v2915 = vunpack.c.l.b16 %v142
  %v2916 = vunpack.c.l.b16 %v143
  %v2917 = vunpack.c.h.b16 %v143
  %v2918 = vunpack.c.l.b16 %v144
  %v2919 = vunpack.c.h.b16 %v144
  %v2920 = vunpack.c.l.b16 %v145
  %v2921 = vunpack.c.h.b16 %v145
  %v2922 = vunpack.c.l.b16 %v146
  %v2923 = vunpack.c.l.b16 %v147
  %v2924 = vunpack.c.h.b16 %v147
  %v2925 = vunpack.c.l.b16 %v148
  %v2926 = vunpack.c.h.b16 %v148
  %v2927 = vunpack.c.l.b16 %v149
  %v2928 = vunpack.c.h.b16 %v149
  %v2929 = vunpack.c.l.b16 %v150
  %v2930 = vunpack.c.l.b16 %v151
  %v2931 = vunpack.c.h.b16 %v151
  %v2932 = vunpack.c.l.b16 %v152
  %v2933 = vunpack.c.h.b16 %v152
  %v2934 = vunpack.c.l.b16 %v153
  %v2935 = vunpack.c.h.b16 %v153
  %v2936 = vunpack.c.l.b16 %v154
  %v2937 = vunpack.c.l.b16 %v155
  %v2938 = vunpack.c.h.b16 %v155
  %v2939 = vunpack.c.l.b16 %v156
  %v2940 = vunpack.c.h.b16 %v156
  %v2941 = vunpack.c.l.b16 %v157
  %v2942 = vunpack.c.h.b16 %v157
  %v2943 = vunpack.c.l.b16 %v158
  %v2944 = vunpack.c.l.b16 %v159
  %v2945 = vunpack.c.h.b16 %v159
  %v2946 = vunpack.c.l.b16 %v160
  %v2947 = vunpack.c.h.b16 %v160
  %v2948 = vunpack.c.l.b16 %v161
  %v2949 = vunpack.c.h.b16 %v161
  %v2950 = vunpack.c.l.b16 %v162
  %v2951 = vunpack.c.l.b16 %v163
  %v2952 = vunpack.c.h.b16 %v163
  %v2953 = vunpack.c.l.b16 %v164
  %v2954 = vunpack.c.h.b16 %v164
  %v2955 = vunpack.c.l.b16 %v165
  %v2956 = vunpack.c.h.b16 %v165
  %v2957 = vunpack.c.l.b16 %v166
  %v2958 = vunpack.c.l.b16 %v167
  %v2959 = vunpack.c.h.b16 %v167
  %v2960 = vunpack.c.l.b16 %v168
  %v2961 = vunpack.c.h.b16 %v168
  %v2962 = vunpack.c.l.b16 %v169
  %v2963 = vunpack.c.h.b16 %v169
  %v2964 = vunpack.c.l.b16 %v170
  %v2965 = vunpack.c.l.b16 %v171
  %v2966 = vunpack.c.h.b16 %v171
  %v2967 = vunpack.c.l.b16 %v172
  %v2968 = vunpack.c.h.b16 %v172
  %v2969 = vunpack.c.l.b16 %v173
  %v2970 = vunpack.c.h.b16 %v173
  %v2971 = vunpack.c.l.b16 %v174
  %v2972 = vunpack.c.l.b16 %v175
  %v2973 = vunpack.c.h.b16 %v175
  %v2974 = vunpack.c.l.b16 %v176
  %v2975 = vunpack.c.h.b16 %v176
  %v2976 = vunpack.c.l.b16 %v177
  %v2977 = vunpack.c.h.b16 %v177
  %v2978 = vunpack.c.l.b16 %v178
  %v2979 = vunpack.c.l.b16 %v179
  %v2980 = vunpack.c.h.b16 %v179
  %v2981 = vunpack.c.l.b16 %v180
  %v2982 = vunpack.c.h.b16 %v180
  %v2983 = vunpack.c.l.b16 %v181
  %v2984 = vunpack.c.h.b16 %v181
  %v2985 = vunpack.c.l.b16 %v182
  %v2986 = vunpack.c.l.b16 %v183
  %v2987 = vunpack.c.h.b16 %v183
  %v2988 = vunpack.c.l.b16 %v184
  %v2989 = vunpack.c.h.b16 %v184
  %v2990 = vunpack.c.l.b16 %v185
  %v2991 = vunpack.c.h.b16 %v185
  %v2992 = vunpack.c.l.b16 %v186
  %v2993 = vunpack.c.l.b16 %v187
  %v2994 = vunpack.c.h.b16 %v187
  %v2995 = vunpack.c.l.b16 %v188
  %v2996 = vunpack.c.h.b16 %v188
  %v2997 = vunpack.c.l.b16 %v189
  %v2998 = vunpack.c.h.b16 %v189
  %v2999 = vunpack.c.l.b16 %v190
  %v3000 = vunpack.c.l.b16 %v191
  %v3001 = vunpack.c.h.b16 %v191
  %v3002 = vunpack.c.l.b16 %v192
  %v3003 = vunpack.c.h.b16 %v192
  %v3004 = vunpack.c.l.b16 %v193
  %v3005 = vunpack.c.h.b16 %v193
  %v3006 = vunpack.c.l.b16 %v194
  %v3007 = vunpack.c.l.b16 %v195
  %v3008 = vunpack.c.h.b16 %v195
  %v3009 = vunpack.c.l.b16 %v196
  %v3010 = vunpack.c.h.b16 %v196
  %v3011 = vunpack.c.l.b16 %v197
  %v3012 = vunpack.c.h.b16 %v197
  %v3013 = vunpack.c.l.b16 %v198
  %v3014 = vunpack.c.l.b16 %v199
  %v3015 = vunpack.c.h.b16 %v199
  %v3016 = vunpack.c.l.b16 %v200
  %v3017 = vunpack.c.h.b16 %v200
  %v3018 = vunpack.c.l.b16 %v201
  %v3019 = vunpack.c.h.b16 %v201
  %v3020 = vunpack.c.l.b16 %v202
  %v3021 = vunpack.c.l.b16 %v203
  %v3022 = vunpack.c.h.b16 %v203
  %v3023 = vunpack.c.l.b16 %v204
  %v3024 = vunpack.c.h.b16 %v204
  %v3025 = vunpack.c.l.b16 %v205
  %v3026 = vunpack.c.h.b16 %v205
  %v3027 = vunpack.c.l.b16 %v206
  %v3028 = vunpack.c.l.b16 %v207
  %v3029 = vunpack.c.h.b16 %v207
  %v3030 = vunpack.c.l.b16 %v208
  %v3031 = vunpack.c.h.b16 %v208
  %v3032 = vunpack.c.l.b16 %v209
  %v3033 = vunpack.c.h.b16 %v209
  %v3034 = vunpack.c.l.b16 %v210
  %v3035 = vunpack.c.l.b16 %v211
  %v3036 = vunpack.c.h.b16 %v211
  %v3037 = vunpack.c.l.b16 %v212
  %v3038 = vunpack.c.h.b16 %v212
  %v3039 = vunpack.c.l.b16 %v213
  %v3040 = vunpack.c.h.b16 %v213
  %v3041 = vunpack.c.l.b16 %v214
  %v3042 = vunpack.c.l.b16 %v215
  %v3043 = vunpack.c.h.b16 %v215
  %v3044 = vunpack.c.l.b16 %v216
  %v3045 = vunpack.c.h.b16 %v216
  %v3046 = vunpack.c.l.b16 %v217
  %v3047 = vunpack.c.h.b16 %v217
  %v3048 = vunpack.c.l.b16 %v218
  %v3049 = vunpack.c.l.b16 %v219
  %v3050 = vunpack.c.h.b16 %v219
  %v3051 = vunpack.c.l.b16 %v220
  %v3052 = vunpack.c.h.b16 %v220
  %v3053 = vunpack.c.l.b16 %v221
  %v3054 = vunpack.c.h.b16 %v221
  %v3055 = vunpack.c.l.b16 %v222
  %v3056 = vunpack.c.l.b16 %v223
  %v3057 = vunpack.c.h.b16 %v223
  %v3058 = vunpack.c.l.b16 %v224
  %v3059 = vunpack.c.h.b16 %v224
  %v3060 = vunpack.c.l.b16 %v225
  %v3061 = vunpack.c.h.b16 %v225
  %v3062 = vunpack.c.l.b16 %v226
  %v3063 = vunpack.c.l.b16 %v227
  %v3064 = vunpack.c.h.b16 %v227
  %v3065 = vunpack.c.l.b16 %v228
  %v3066 = vunpack.c.h.b16 %v228
  %v3067 = vunpack.c.l.b16 %v229
  %v3068 = vunpack.c.h.b16 %v229
  %v3069 = vunpack.c.l.b16 %v230
  %v3070 = vunpack.c.l.b16 %v231
  %v3071 = vunpack.c.h.b16 %v231
  %v3072 = vunpack.c.l.b16 %v232
  %v3073 = vunpack.c.h.b16 %v232
  %v3074 = vunpack.c.l.b16 %v233
  %v3075 = vunpack.c.h.b16 %v233
  %v3076 = vunpack.c.l.b16 %v234
  %v3077 = vunpack.c.l.b16 %v235
  %v3078 = vunpack.c.h.b16 %v235
  %v3079 = vunpack.c.l.b16 %v236
  %v3080 = vunpack.c.h.b16 %v236
  %v3081 = vunpack.c.l.b16 %v237
  %v3082 = vunpack.c.h.b16 %v237
  %v3083 = vunpack.c.l.b16 %v238
  %v3084 = vunpack.c.l.b16 %v239
  %v3085 = vunpack.c.h.b16 %v239
  %v3086 = vunpack.c.l.b16 %v240
  %v3087 = vunpack.c.h.b16 %v240
  %v3088 = vunpack.c.l.b16 %v241
  %v3089 = vunpack.c.h.b16 %v241
  %v3090 = vunpack.c.l.b16 %v242
  %v3091 = vunpack.c.l.b16 %v243
  %v3092 = vunpack.c.h.b16 %v243
  %v3093 = vunpack.c.l.b16 %v244
  %v3094 = vunpack.c.h.b16 %v244
  %v3095 = vunpack.c.l.b16 %v245
  %v3096 = vunpack.c.h.b16 %v245
  %v3097 = vunpack.c.l.b16 %v246
  %v3098 = vunpack.c.l.b16 %v247
  %v3099 = vunpack.c.h.b16 %v247
  %v3100 = vunpack.c.l.b16 %v248
  %v3101 = vunpack.c.h.b16 %v248
  %v3102 = vunpack.c.l.b16 %v249
  %v3103 = vunpack.c.h.b16 %v249
  %v3104 = vunpack.c.l.b16 %v250
  %v3105 = vunpack.c.l.b16 %v251
  %v3106 = vunpack.c.h.b16 %v251
  %v3107 = vunpack.c.l.b16 %v252
  %v3108 = vunpack.c.h.b16 %v252
  %v3109 = vunpack.c.l.b16 %v253
  %v3110 = vunpack.c.h.b16 %v253
  %v3111 = vunpack.c.l.b16 %v254
  %v3112 = vunpack.c.l.b16 %v255
  %v3113 = vunpack.c.h.b16 %v255
  %v3114 = vunpack.c.l.b16 %v256
  %v3115 = vunpack.c.h.b16 %v256
  %v3116 = vunpack.c.l.b16 %v257
  %v3117 = vunpack.c.h.b16 %v257
  %v3118 = vunpack.c.l.b16 %v258
  %v3119 = vunpack.c.l.b16 %v259
  %v3120 = vunpack.c.h.b16 %v259
  %v3121 = vunpack.c.l.b16 %v260
  %v3122 = vunpack.c.h.b16 %v260
  %v3123 = vunpack.c.l.b16 %v261
  %v3124 = vunpack.c.h.b16 %v261
  %v3125 = vunpack.c.l.b16 %v262
  %v3126 = vunpack.c.l.b16 %v263
  %v3127 = vunpack.c.h.b16 %v263
  %v3128 = vunpack.c.l.b16 %v264
  %v3129 = vunpack.c.h.b16 %v264
  %v3130 = vunpack.c.l.b16 %v265
  %v3131 = vunpack.c.h.b16 %v265
  %v3132 = vunpack.c.l.b16 %v266
  %v3133 = vunpack.c.l.b16 %v267
  %v3134 = vunpack.c.h.b16 %v267
  %v3135 = vunpack.c.l.b16 %v268
  %v3136 = vunpack.c.h.b16 %v268
  %v3137 = vunpack.c.l.b16 %v269
  %v3138 = vunpack.c.h.b16 %v269
  %v3139 = vunpack.c.l.b16 %v270
  %v3140 = vunpack.c.l.b16 %v271
  %v3141 = vunpack.c.h.b16 %v271
  %v3142 = vunpack.c.l.b16 %v272
  %v3143 = vunpack.c.h.b16 %v272
  %v3144 = vunpack.c.l.b16 %v273
  %v3145 = vunpack.c.h.b16 %v273
  %v3146 = vunpack.c.l.b16 %v274
  %v3147 = vunpack.c.l.b16 %v275
  %v3148 = vunpack.c.h.b16 %v275
  %v3149 = vunpack.c.l.b16 %v276
  %v3150 = vunpack.c.h.b16 %v276
  %v3151 = vunpack.c.l.b16 %v277
  %v3152 = vunpack.c.h.b16 %v277
  %v3153 = vunpack.c.l.b16 %v278
  %v3154 = vunpack.c.l.b16 %v279
  %v3155 = vunpack.c.h.b16 %v279
  %v3156 = vunpack.c.l.b16 %v280
  %v3157 = vunpack.c.h.b16 %v280
  %v3158 = vunpack.c.l.b16 %v281
  %v3159 = vunpack.c.h.b16 %v281
  %v3160 = vunpack.c.l.b16 %v282
  %v3161 = vunpack.c.l.b16 %v283
  %v3162 = vunpack.c.h.b16 %v283
  %v3163 = vunpack.c.l.b16 %v284
  %v3164 = vunpack.c.h.b16 %v284
  %v3165 = vunpack.c.l.b16 %v285
  %v3166 = vunpack.c.h.b16 %v285
  %v3167 = vunpack.c.l.b16 %v286
  %v3168 = vunpack.c.l.b16 %v287
  %v3169 = vunpack.c.h.b16 %v287
  %v3170 = vunpack.c.l.b16 %v288
  %v3171 = vunpack.c.h.b16 %v288
  %v3172 = vunpack.c.l.b16 %v289
  %v3173 = vunpack.c.h.b16 %v289
  %v3174 = vunpack.c.l.b16 %v290
  %v3175 = vunpack.c.l.b16 %v291
  %v3176 = vunpack.c.h.b16 %v291
  %v3177 = vunpack.c.l.b16 %v292
  %v3178 = vunpack.c.h.b16 %v292
  %v3179 = vunpack.c.l.b16 %v293
  %v3180 = vunpack.c.h.b16 %v293
  %v3181 = vunpack.c.l.b16 %v294
  %v3182 = vunpack.c.l.b16 %v295
  %v3183 = vunpack.c.h.b16 %v295
  %v3184 = vunpack.c.l.b16 %v296
  %v3185 = vunpack.c.h.b16 %v296
  %v3186 = vunpack.c.l.b16 %v297
  %v3187 = vunpack.c.h.b16 %v297
  %v3188 = vunpack.c.l.b16 %v298
  %v3189 = vunpack.c.l.b16 %v299
  %v3190 = vunpack.c.h.b16 %v299
  %v3191 = vunpack.c.l.b16 %v300
  %v3192 = vunpack.c.h.b16 %v300
  %v3193 = vunpack.c.l.b16 %v301
  %v3194 = vunpack.c.h.b16 %v301
  %v3195 = vunpack.c.l.b16 %v302
  %v3196 = vunpack.c.l.b16 %v303
  %v3197 = vunpack.c.h.b16 %v303
  %v3198 = vunpack.c.l.b16 %v304
  %v3199 = vunpack.c.h.b16 %v304
  %v3200 = vunpack.c.l.b16 %v305
  %v3201 = vunpack.c.h.b16 %v305
  %v3202 = vunpack.c.l.b16 %v306
  %v3203 = vunpack.c.l.b16 %v307
  %v3204 = vunpack.c.h.b16 %v307
  %v3205 = vunpack.c.l.b16 %v308
  %v3206 = vunpack.c.h.b16 %v308
  %v3207 = vunpack.c.l.b16 %v309
  %v3208 = vunpack.c.h.b16 %v309
  %v3209 = vunpack.c.l.b16 %v310
  %v3210 = vunpack.c.l.b16 %v311
  %v3211 = vunpack.c.h.b16 %v311
  %v3212 = vunpack.c.l.b16 %v312
  %v3213 = vunpack.c.h.b16 %v312
  %v3214 = vunpack.c.l.b16 %v313
  %v3215 = vunpack.c.h.b16 %v313
  %v3216 = vunpack.c.l.b16 %v314
  %v3217 = vunpack.c.l.b16 %v315
  %v3218 = vunpack.c.h.b16 %v315
  %v3219 = vunpack.c.l.b16 %v316
  %v3220 = vunpack.c.h.b16 %v316
  %v3221 = vunpack.c.l.b16 %v317
  %v3222 = vunpack.c.h.b16 %v317
  %v3223 = vunpack.c.l.b16 %v318
  %v3224 = vunpack.c.l.b16 %v319
  %v3225 = vunpack.c.h.b16 %v319
  %v3226 = vunpack.c.l.b16 %v320
  %v3227 = vunpack.c.h.b16 %v320
  %v3228 = vunpack.c.l.b16 %v321
  %v3229 = vunpack.c.h.b16 %v321
  %v3230 = vunpack.c.l.b16 %v322
  %v3231 = vunpack.c.l.b16 %v323
  %v3232 = vunpack.c.h.b16 %v323
  %v3233 = vunpack.c.l.b16 %v324
  %v3234 = vunpack.c.h.b16 %v324
  %v3235 = vunpack.c.l.b16 %v325
  %v3236 = vunpack.c.h.b16 %v325
  %v3237 = vunpack.c.l.b16 %v326
  %v3238 = vunpack.c.l.b16 %v327
  %v3239 = vunpack.c.h.b16 %v327
  %v3240 = vunpack.c.l.b16 %v328
  %v3241 = vunpack.c.h.b16 %v328
  %v3242 = vunpack.c.l.b16 %v329
  %v3243 = vunpack.c.h.b16 %v329
  %v3244 = vunpack.c.l.b16 %v330
  %v3245 = vunpack.c.l.b16 %v331
  %v3246 = vunpack.c.h.b16 %v331
  %v3247 = vunpack.c.l.b16 %v332
  %v3248 = vunpack.c.h.b16 %v332
  %v3249 = vunpack.c.l.b16 %v333
  %v3250 = vunpack.c.h.b16 %v333
  %v3251 = vunpack.c.l.b16 %v334
  %v3252 = vunpack.c.l.b16 %v335
  %v3253 = vunpack.c.h.b16 %v335
  %v3254 = vunpack.c.l.b16 %v336
  %v3255 = vunpack.c.h.b16 %v336
  %v3256 = vunpack.c.l.b16 %v337
  %v3257 = vunpack.c.h.b16 %v337
  %v3258 = vunpack.c.l.b16 %v338
  %v3259 = vunpack.c.l.b16 %v339
  %v3260 = vunpack.c.h.b16 %v339
  %v3261 = vunpack.c.l.b16 %v340
  %v3262 = vunpack.c.h.b16 %v340
  %v3263 = vunpack.c.l.b16 %v341
  %v3264 = vunpack.c.h.b16 %v341
  %v3265 = vunpack.c.l.b16 %v342
  %v3266 = vunpack.c.l.b16 %v343
  %v3267 = vunpack.c.h.b16 %v343
  %v3268 = vunpack.c.l.b16 %v344
  %v3269 = vunpack.c.h.b16 %v344
  %v3270 = vunpack.c.l.b16 %v345
  %v3271 = vunpack.c.h.b16 %v345
  %v3272 = vunpack.c.l.b16 %v346
  %v3273 = vunpack.c.l.b16 %v347
  %v3274 = vunpack.c.h.b16 %v347
  %v3275 = vunpack.c.l.b16 %v348
  %v3276 = vunpack.c.h.b16 %v348
  %v3277 = vunpack.c.l.b16 %v349
  %v3278 = vunpack.c.h.b16 %v349
  %v3279 = vunpack.c.l.b16 %v350
  %v3280 = vunpack.c.l.b16 %v351
  %v3281 = vunpack.c.h.b16 %v351
  %v3282 = vunpack.c.l.b16 %v352
  %v3283 = vunpack.c.h.b16 %v352
  %v3284 = vunpack.c.l.b16 %v353
  %v3285 = vunpack.c.h.b16 %v353
  %v3286 = vunpack.c.l.b16 %v354
  %v3287 = vunpack.c.l.b16 %v355
  %v3288 = vunpack.c.h.b16 %v355
  %v3289 = vunpack.c.l.b16 %v356
  %v3290 = vunpack.c.h.b16 %v356
  %v3291 = vunpack.c.l.b16 %v357
  %v3292 = vunpack.c.h.b16 %v357
  %v3293 = vunpack.c.l.b16 %v358
  %v3294 = vunpack.c.l.b16 %v359
  %v3295 = vunpack.c.h.b16 %v359
  %v3296 = vunpack.c.l.b16 %v360
  %v3297 = vunpack.c.h.b16 %v360
  %v3298 = vunpack.c.l.b16 %v361
  %v3299 = vunpack.c.h.b16 %v361
  %v3300 = vunpack.c.l.b16 %v362
  %v3301 = vunpack.c.l.b16 %v363
  %v3302 = vunpack.c.h.b16 %v363
  %v3303 = vunpack.c.l.b16 %v364
  %v3304 = vunpack.c.h.b16 %v364
  %v3305 = vunpack.c.l.b16 %v365
  %v3306 = vunpack.c.h.b16 %v365
  %v3307 = vunpack.c.l.b16 %v366
  %v3308 = vunpack.c.l.b16 %v367
  %v3309 = vunpack.c.h.b16 %v367
  %v3310 = vunpack.c.l.b16 %v368
  %v3311 = vunpack.c.h.b16 %v368
  %v3312 = vunpack.c.l.b16 %v369
  %v3313 = vunpack.c.h.b16 %v369
  %v3314 = vunpack.c.l.b16 %v370
  %v3315 = vunpack.c.l.b16 %v371
  %v3316 = vunpack.c.h.b16 %v371
  %v3317 = vunpack.c.l.b16 %v372
  %v3318 = vunpack.c.h.b16 %v372
  %v3319 = vunpack.c.l.b16 %v373
  %v3320 = vunpack.c.h.b16 %v373
  %v3321 = vunpack.c.l.b16 %v374
  %v3322 = vunpack.c.l.b16 %v375
  %v3323 = vunpack.c.h.b16 %v375
  %v3324 = vunpack.c.l.b16 %v376
  %v3325 = vunpack.c.h.b16 %v376
  %v3326 = vunpack.c.l.b16 %v377
  %v3327 = vunpack.c.h.b16 %v377
  %v3328 = vunpack.c.l.b16 %v378
  %v3329 = vunpack.c.l.b16 %v379
  %v3330 = vunpack.c.h.b16 %v379
  %v3331 = vunpack.c.l.b16 %v380
  %v3332 = vunpack.c.h.b16 %v380
  %v3333 = vunpack.c.l.b16 %v381
  %v3334 = vunpack.c.h.b16 %v381
  %v3335 = vunpack.c.l.b16 %v382
  %v3336 = vunpack.c.l.b16 %v383
  %v3337 = vunpack.c.h.b16 %v383
  %v3338 = vunpack.c.l.b16 %v384
  %v3339 = vunpack.c.h.b16 %v384
  %v3340 = vunpack.c.l.b16 %v385
  %v3341 = vunpack.c.h.b16 %v385
  %v3342 = vunpack.c.l.b16 %v386
  %v3343 = vunpack.c.l.b16 %v387
  %v3344 = vunpack.c.h.b16 %v387
  %v3345 = vunpack.c.l.b16 %v388
  %v3346 = vunpack.c.h.b16 %v388
  %v3347 = vunpack.c.l.b16 %v389
  %v3348 = vunpack.c.h.b16 %v389
  %v3349 = vunpack.c.l.b16 %v390
  %v3350 = vunpack.c.l.b16 %v391
  %v3351 = vunpack.c.h.b16 %v391
  %v3352 = vunpack.c.l.b16 %v392
  %v3353 = vunpack.c.h.b16 %v392
  %v3354 = vunpack.c.l.b16 %v393
  %v3355 = vunpack.c.h.b16 %v393
  %v3356 = vunpack.c.l.b16 %v394
  %v3357 = vunpack.c.l.b16 %v395
  %v3358 = vunpack.c.h.b16 %v395
  %v3359 = vunpack.c.l.b16 %v396
  %v3360 = vunpack.c.h.b16 %v396
  %v3361 = vunpack.c.l.b16 %v397
  %v3362 = vunpack.c.h.b16 %v397
  %v3363 = vunpack.c.l.b16 %v398
  %v3364 = vunpack.c.l.b16 %v399
  %v3365 = vunpack.c.h.b16 %v399
  %v3366 = vunpack.c.l.b16 %v400
  %v3367 = vunpack.c.h.b16 %v400
  %v3368 = vunpack.c.l.b16 %v401
  %v3369 = vunpack.c.h.b16 %v401
  %v3370 = vunpack.c.l.b16 %v402
  %v3371 = vunpack.c.l.b16 %v403
  %v3372 = vunpack.c.h.b16 %v403
  %v3373 = vunpack.c.l.b16 %v404
  %v3374 = vunpack.c.h.b16 %v404
  %v3375 = vunpack.c.l.b16 %v405
  %v3376 = vunpack.c.h.b16 %v405
  %v3377 = vunpack.c.l.b16 %v406
  %v3378 = vunpack.c.l.b16 %v407
  %v3379 = vunpack.c.h.b16 %v407
  %v3380 = vunpack.c.l.b16 %v408
  %v3381 = vunpack.c.h.b16 %v408
  %v3382 = vunpack.c.l.b16 %v409
  %v3383 = vunpack.c.h.b16 %v409
  %v3384 = vunpack.c.l.b16 %v410
  %v3385 = vunpack.c.l.b16 %v411
  %v3386 = vunpack.c.h.b16 %v411
  %v3387 = vunpack.c.l.b16 %v412
  %v3388 = vunpack.c.h.b16 %v412
  %v3389 = vunpack.c.l.b16 %v413
  %v3390 = vunpack.c.h.b16 %v413
  %v3391 = vunpack.c.l.b16 %v414
  %v3392 = vunpack.c.l.b16 %v415
  %v3393 = vunpack.c.h.b16 %v415
  %v3394 = vunpack.c.l.b16 %v416
  %v3395 = vunpack.c.h.b16 %v416
  %v3396 = vunpack.c.l.b16 %v417
  %v3397 = vunpack.c.h.b16 %v417
  %v3398 = vunpack.c.l.b16 %v418
  %v3399 = vunpack.c.l.b16 %v419
  %v3400 = vunpack.c.h.b16 %v419
  %v3401 = vunpack.c.l.b16 %v420
  %v3402 = vunpack.c.h.b16 %v420
  %v3403 = vunpack.c.l.b16 %v421
  %v3404 = vunpack.c.h.b16 %v421
  %v3405 = vunpack.c.l.b16 %v422
  %v3406 = vunpack.c.l.b16 %v423
  %v3407 = vunpack.c.h.b16 %v423
  %v3408 = vunpack.c.l.b16 %v424
  %v3409 = vunpack.c.h.b16 %v424
  %v3410 = vunpack.c.l.b16 %v425
  %v3411 = vunpack.c.h.b16 %v425
  %v3412 = vunpack.c.l.b16 %v426
  %v3413 = vunpack.c.l.b16 %v427
  %v3414 = vunpack.c.h.b16 %v427
  %v3415 = vunpack.c.l.b16 %v428
  %v3416 = vunpack.c.h.b16 %v428
  %v3417 = vunpack.c.l.b16 %v429
  %v3418 = vunpack.c.h.b16 %v429
  %v3419 = vunpack.c.l.b16 %v430
  %v3420 = vunpack.c.l.b16 %v431
  %v3421 = vunpack.c.h.b16 %v431
  %v3422 = vunpack.c.l.b16 %v432
  %v3423 = vunpack.c.h.b16 %v432
  %v3424 = vunpack.c.l.b16 %v433
  %v3425 = vunpack.c.h.b16 %v433
  %v3426 = vunpack.c.l.b16 %v434
  %v3427 = vunpack.c.l.b16 %v435
  %v3428 = vunpack.c.h.b16 %v435
  %v3429 = vunpack.c.l.b16 %v436
  %v3430 = vunpack.c.h.b16 %v436
  %v3431 = vunpack.c.l.b16 %v437
  %v3432 = vunpack.c.h.b16 %v437
  %v3433 = vunpack.c.l.b16 %v438
  %v3434 = vunpack.c.l.b16 %v439
  %v3435 = vunpack.c.h.b16 %v439
  %v3436 = vunpack.c.l.b16 %v440
  %v3437 = vunpack.c.h.b16 %v440
  %v3438 = vunpack.c.l.b16 %v441
  %v3439 = vunpack.c.h.b16 %v441
  %v3440 = vunpack.c.l.b16 %v442
  %v3441 = vunpack.c.l.b16 %v443
  %v3442 = vunpack.c.h.b16 %v443
  %v3443 = vunpack.c.l.b16 %v444
  %v3444 = vunpack.c.h.b16 %v444
  %v3445 = vunpack.c.l.b16 %v445
  %v3446 = vunpack.c.h.b16 %v445
  %v3447 = vunpack.c.l.b16 %v446
  %v3448 = vunpack.c.l.b16 %v447
  %v3449 = vunpack.c.h.b16 %v447
  %v3450 = vunpack.c.l.b16 %v448
  %v3451 = vunpack.c.h.b16 %v448
  %v3452 = vunpack.c.l.b16 %v449
  %v3453 = vunpack.c.h.b16 %v449
  %v3454 = vunpack.c.l.b16 %v450
  %v3455 = vunpack.c.l.b16 %v451
  %v3456 = vunpack.c.h.b16 %v451
  %v3457 = vunpack.c.l.b16 %v452
  %v3458 = vunpack.c.h.b16 %v452
  %v3459 = vunpack.c.l.b16 %v453
  %v3460 = vunpack.c.h.b16 %v453
  %v3461 = vunpack.c.l.b16 %v454
  %v3462 = vunpack.c.l.b16 %v455
  %v3463 = vunpack.c.h.b16 %v455
  %v3464 = vunpack.c.l.b16 %v456
  %v3465 = vunpack.c.h.b16 %v456
  %v3466 = vunpack.c.l.b16 %v457
  %v3467 = vunpack.c.h.b16 %v457
  %v3468 = vunpack.c.l.b16 %v458
  %v3469 = vunpack.c.l.b16 %v459
  %v3470 = vunpack.c.h.b16 %v459
  %v3471 = vunpack.c.l.b16 %v460
  %v3472 = vunpack.c.h.b16 %v460
  %v3473 = vunpack.c.l.b16 %v461
  %v3474 = vunpack.c.h.b16 %v461
  %v3475 = vunpack.c.l.b16 %v462
  %v3476 = vunpack.c.l.b16 %v463
  %v3477 = vunpack.c.h.b16 %v463
  %v3478 = vunpack.c.l.b16 %v464
  %v3479 = vunpack.c.h.b16 %v464
  %v3480 = vunpack.c.l.b16 %v465
  %v3481 = vunpack.c.h.b16 %v465
  %v3482 = vunpack.c.l.b16 %v466
  %v3483 = vunpack.c.l.b16 %v467
  %v3484 = vunpack.c.h.b16 %v467
  %v3485 = vunpack.c.l.b16 %v468
  %v3486 = vunpack.c.h.b16 %v468
  %v3487 = vunpack.c.l.b16 %v469
  %v3488 = vunpack.c.h.b16 %v469
  %v3489 = vunpack.c.l.b16 %v470
  %v3490 = vunpack.c.l.b16 %v471
  %v3491 = vunpack.c.h.b16 %v471
  %v3492 = vunpack.c.l.b16 %v472
  %v3493 = vunpack.c.h.b16 %v472
  %v3494 = vunpack.c.l.b16 %v473
  %v3495 = vunpack.c.h.b16 %v473
  %v3496 = vunpack.c.l.b16 %v474
  %v3497 = vunpack.c.l.b16 %v475
  %v3498 = vunpack.c.h.b16 %v475
  %v3499 = vunpack.c.l.b16 %v476
  %v3500 = vunpack.c.h.b16 %v476
  %v3501 = vunpack.c.l.b16 %v477
  %v3502 = vunpack.c.h.b16 %v477
  %v3503 = vunpack.c.l.b16 %v478
  %v3504 = vunpack.c.l.b16 %v479
  %v3505 = vunpack.c.h.b16 %v479
  %v3506 = vunpack.c.l.b16 %v480
  %v3507 = vunpack.c.h.b16 %v480
  %v3508 = vunpack.c.l.b16 %v481
  %v3509 = vunpack.c.h.b16 %v481
  %v3510 = vunpack.c.l.b16 %v482
  %v3511 = vunpack.c.l.b16 %v483
  %v3512 = vunpack.c.h.b16 %v483
  %v3513 = vunpack.c.l.b16 %v484
  %v3514 = vunpack.c.h.b16 %v484
  %v3515 = vunpack.c.l.b16 %v485
  %v3516 = vunpack.c.h.b16 %v485
  %v3517 = vunpack.c.l.b16 %v486
  %v3518 = vunpack.c.l.b16 %v487
  %v3519 = vunpack.c.h.b16 %v487
  %v3520 = vunpack.c.l.b16 %v488
  %v3521 = vunpack.c.h.b16 %v488
  %v3522 = vunpack.c.l.b16 %v489
  %v3523 = vunpack.c.h.b16 %v489
  %v3524 = vunpack.c.l.b16 %v490
  %v3525 = vunpack.c.l.b16 %v491
  %v3526 = vunpack.c.h.b16 %v491
  %v3527 = vunpack.c.l.b16 %v492
  %v3528 = vunpack.c.h.b16 %v492
  %v3529 = vunpack.c.l.b16 %v493
  %v3530 = vunpack.c.h.b16 %v493
  %v3531 = vunpack.c.l.b16 %v494
  %v3532 = vunpack.c.l.b16 %v495
  %v3533 = vunpack.c.h.b16 %v495
  %v3534 = vunpack.c.l.b16 %v496
  %v3535 = vunpack.c.h.b16 %v496
  %v3536 = vunpack.c.l.b16 %v497
  %v3537 = vunpack.c.h.b16 %v497
  %v3538 = vunpack.c.l.b16 %v498
  %v3539 = vunpack.c.l.b16 %v499
  %v3540 = vunpack.c.h.b16 %v499
  %v3541 = vunpack.c.l.b16 %v500
  %v3542 = vunpack.c.h.b16 %v500
  %v3543 = vunpack.c.l.b16 %v501
  %v3544 = vunpack.c.h.b16 %v501
  %v3545 = vunpack.c.l.b16 %v502
  %v3546 = vunpack.c.l.b16 %v503
  %v3547 = vunpack.c.h.b16 %v503
  %v3548 = vunpack.c.l.b16 %v504
  %v3549 = vunpack.c.h.b16 %v504
  %v3550 = vunpack.c.l.b16 %v505
  %v3551 = vunpack.c.h.b16 %v505
  %v3552 = vunpack.c.l.b16 %v506
  %v3553 = vunpack.c.l.b16 %v507
  %v3554 = vunpack.c.h.b16 %v507
  %v3555 = vunpack.c.l.b16 %v508
  %v3556 = vunpack.c.h.b16 %v508
  %v3557 = vunpack.c.l.b16 %v509
  %v3558 = vunpack.c.h.b16 %v509
  %v3559 = vunpack.c.l.b16 %v510
  %v3560 = vunpack.c.l.b16 %v511
  %v3561 = vunpack.c.h.b16 %v511
  %v3562 = vunpack.c.l.b16 %v512
  %v3563 = vunpack.c.h.b16 %v512
  %v3564 = vunpack.c.l.b16 %v513
  %v3565 = vunpack.c.h.b16 %v513
  %v3566 = vunpack.c.l.b16 %v514
  %v3567 = vunpack.c.l.b16 %v515
  %v3568 = vunpack.c.h.b16 %v515
  %v3569 = vunpack.c.l.b16 %v516
  %v3570 = vunpack.c.h.b16 %v516
  %v3571 = vunpack.c.l.b16 %v517
  %v3572 = vunpack.c.h.b16 %v517
  %v3573 = vunpack.c.l.b16 %v518
  %v3574 = vunpack.c.l.b16 %v519
  %v3575 = vunpack.c.h.b16 %v519
  %v3576 = vunpack.c.l.b16 %v520
  %v3577 = vunpack.c.h.b16 %v520
  %v3578 = vunpack.c.l.b16 %v521
  %v3579 = vunpack.c.h.b16 %v521
  %v3580 = vunpack.c.l.b16 %v522
  %v3581 = vunpack.c.l.b16 %v523
  %v3582 = vunpack.c.h.b16 %v523
  %v3583 = vunpack.c.l.b16 %v524
  %v3584 = vunpack.c.h.b16 %v524
  %v3585 = vunpack.c.l.b16 %v525
  %v3586 = vunpack.c.h.b16 %v525
  %v3587 = vunpack.c.l.b16 %v526
  %v3588 = vunpack.c.l.b16 %v527
  %v3589 = vunpack.c.h.b16 %v527
  %v3590 = vunpack.c.l.b16 %v528
  %v3591 = vunpack.c.h.b16 %v528
  %v3592 = vunpack.c.l.b16 %v529
  %v3593 = vunpack.c.h.b16 %v529
  %v3594 = vunpack.c.l.b16 %v530
  %v3595 = vunpack.c.l.b16 %v531
  %v3596 = vunpack.c.h.b16 %v531
  %v3597 = vunpack.c.l.b16 %v532
  %v3598 = vunpack.c.h.b16 %v532
  %v3599 = vunpack.c.l.b16 %v533
  %v3600 = vunpack.c.h.b16 %v533
  %v3601 = vunpack.c.l.b16 %v534
  %v3602 = vunpack.c.l.b16 %v535
  %v3603 = vunpack.c.h.b16 %v535
  %v3604 = vunpack.c.l.b16 %v536
  %v3605 = vunpack.c.h.b16 %v536
  %v3606 = vunpack.c.l.b16 %v537
  %v3607 = vunpack.c.h.b16 %v537
  %v3608 = vunpack.c.l.b16 %v538
  %v3609 = vunpack.c.l.b16 %v539
  %v3610 = vunpack.c.h.b16 %v539
  %v3611 = vunpack.c.l.b16 %v540
  %v3612 = vunpack.c.h.b16 %v540
  %v3613 = vunpack.c.l.b16 %v541
  %v3614 = vunpack.c.h.b16 %v541
  %v3615 = vunpack.c.l.b16 %v542
  %v3616 = vunpack.c.l.b16 %v543
  %v3617 = vunpack.c.h.b16 %v543
  %v3618 = vunpack.c.l.b16 %v544
  %v3619 = vunpack.c.h.b16 %v544
  %v3620 = vunpack.c.l.b16 %v545
  %v3621 = vunpack.c.h.b16 %v545
  %v3622 = vunpack.c.l.b16 %v546
  %v3623 = vunpack.c.l.b16 %v547
  %v3624 = vunpack.c.h.b16 %v547
  %v3625 = vunpack.c.l.b16 %v548
  %v3626 = vunpack.c.h.b16 %v548
  %v3627 = vunpack.c.l.b16 %v549
  %v3628 = vunpack.c.h.b16 %v549
  %v3629 = vunpack.c.l.b16 %v550
  %v3630 = vunpack.c.l.b16 %v551
  %v3631 = vunpack.c.h.b16 %v551
  %v3632 = vunpack.c.l.b16 %v552
  %v3633 = vunpack.c.h.b16 %v552
  %v3634 = vunpack.c.l.b16 %v553
  %v3635 = vunpack.c.h.b16 %v553
  %v3636 = vunpack.c.l.b16 %v554
  %v3637 = vunpack.c.l.b16 %v555
  %v3638 = vunpack.c.h.b16 %v555
  %v3639 = vunpack.c.l.b16 %v556
  %v3640 = vunpack.c.h.b16 %v556
  %v3641 = vunpack.c.l.b16 %v557
  %v3642 = vunpack.c.h.b16 %v557
  %v3643 = vunpack.c.l.b16 %v558
  %v3644 = vunpack.c.l.b16 %v559
  %v3645 = vunpack.c.h.b16 %v559
  %v3646 = vunpack.c.l.b16 %v560
  %v3647 = vunpack.c.h.b16 %v560
  %v3648 = vunpack.c.l.b16 %v561
  %v3649 = vunpack.c.h.b16 %v561
  %v3650 = vunpack.c.l.b16 %v562
  %v3651 = vunpack.c.l.b16 %v563
  %v3652 = vunpack.c.h.b16 %v563
  %v3653 = vunpack.c.l.b16 %v564
  %v3654 = vunpack.c.h.b16 %v564
  %v3655 = vunpack.c.l.b16 %v565
  %v3656 = vunpack.c.h.b16 %v565
  %v3657 = vunpack.c.l.b16 %v566
  %v3658 = vunpack.c.l.b16 %v567
  %v3659 = vunpack.c.h.b16 %v567
  %v3660 = vunpack.c.l.b16 %v568
  %v3661 = vunpack.c.h.b16 %v568
  %v3662 = vunpack.c.l.b16 %v569
  %v3663 = vunpack.c.h.b16 %v569
  %v3664 = vunpack.c.l.b16 %v570
  %v3665 = vunpack.c.l.b16 %v571
  %v3666 = vunpack.c.h.b16 %v571
  %v3667 = vunpack.c.l.b16 %v572
  %v3668 = vunpack.c.h.b16 %v572
  %v3669 = vunpack.c.l.b16 %v573
  %v3670 = vunpack.c.h.b16 %v573
  %v3671 = vunpack.c.l.b16 %v574
  %v3672 = vunpack.c.l.b16 %v575
  %v3673 = vunpack.c.h.b16 %v575
  %v3674 = vunpack.c.l.b16 %v576
  %v3675 = vunpack.c.h.b16 %v576
  %v3676 = vunpack.c.l.b16 %v577
  %v3677 = vunpack.c.h.b16 %v577
  %v3678 = vunpack.c.l.b16 %v578
  %v3679 = vunpack.c.l.b16 %v579
  %v3680 = vunpack.c.h.b16 %v579
  %v3681 = vunpack.c.l.b16 %v580
  %v3682 = vunpack.c.h.b16 %v580
  %v3683 = vunpack.c.l.b16 %v581
  %v3684 = vunpack.c.h.b16 %v581
  %v3685 = vunpack.c.l.b16 %v582
  %v3686 = vunpack.c.l.b16 %v583
  %v3687 = vunpack.c.h.b16 %v583
  %v3688 = vunpack.c.l.b16 %v584
  %v3689 = vunpack.c.h.b16 %v584
  %v3690 = vunpack.c.l.b16 %v585
  %v3691 = vunpack.c.h.b16 %v585
  %v3692 = vunpack.c.l.b16 %v586
  %v3693 = vunpack.c.l.b16 %v587
  %v3694 = vunpack.c.h.b16 %v587
  %v3695 = vunpack.c.l.b16 %v588
  %v3696 = vunpack.c.h.b16 %v588
  %v3697 = vunpack.c.l.b16 %v589
  %v3698 = vunpack.c.h.b16 %v589
  %v3699 = vunpack.c.l.b16 %v590
  %v3700 = vunpack.c.l.b16 %v591
  %v3701 = vunpack.c.h.b16 %v591
  %v3702 = vunpack.c.l.b16 %v592
  %v3703 = vunpack.c.h.b16 %v592
  %v3704 = vunpack.c.l.b16 %v593
  %v3705 = vunpack.c.h.b16 %v593
  %v3706 = vunpack.c.l.b16 %v594
  %v3707 = vunpack.c.l.b16 %v595
  %v3708 = vunpack.c.h.b16 %v595
  %v3709 = vunpack.c.l.b16 %v596
  %v3710 = vunpack.c.h.b16 %v596
  %v3711 = vunpack.c.l.b16 %v597
  %v3712 = vunpack.c.h.b16 %v597
  %v3713 = vunpack.c.l.b16 %v598
  %v3714 = vunpack.c.l.b16 %v599
  %v3715 = vunpack.c.h.b16 %v599
  %v3716 = vunpack.c.l.b16 %v600
  %v3717 = vunpack.c.h.b16 %v600
  %v3718 = vunpack.c.l.b16 %v601
  %v3719 = vunpack.c.h.b16 %v601
  %v3720 = vunpack.c.l.b16 %v602
  %v3721 = vunpack.c.l.b16 %v603
  %v3722 = vunpack.c.h.b16 %v603
  %v3723 = vunpack.c.l.b16 %v604
  %v3724 = vunpack.c.h.b16 %v604
  %v3725 = vunpack.c.l.b16 %v605
  %v3726 = vunpack.c.h.b16 %v605
  %v3727 = vunpack.c.l.b16 %v606
  %v3728 = vunpack.c.l.b16 %v607
  %v3729 = vunpack.c.h.b16 %v607
  %v3730 = vunpack.c.l.b16 %v608
  %v3731 = vunpack.c.h.b16 %v608
  %v3732 = vunpack.c.l.b16 %v609
  %v3733 = vunpack.c.h.b16 %v609
  %v3734 = vunpack.c.l.b16 %v610
  %v3735 = vunpack.c.l.b16 %v611
  %v3736 = vunpack.c.h.b16 %v611
  %v3737 = vunpack.c.l.b16 %v612
  %v3738 = vunpack.c.h.b16 %v612
  %v3739 = vunpack.c.l.b16 %v613
  %v3740 = vunpack.c.h.b16 %v613
  %v3741 = vunpack.c.l.b16 %v614
  %v3742 = vunpack.c.l.b16 %v615
  %v3743 = vunpack.c.h.b16 %v615
  %v3744 = vunpack.c.l.b16 %v616
  %v3745 = vunpack.c.h.b16 %v616
  %v3746 = vunpack.c.l.b16 %v617
  %v3747 = vunpack.c.h.b16 %v617
  %v3748 = vunpack.c.l.b16 %v618
  %v3749 = vunpack.c.l.b16 %v619
  %v3750 = vunpack.c.h.b16 %v619
  %v3751 = vunpack.c.l.b16 %v620
  %v3752 = vunpack.c.h.b16 %v620
  %v3753 = vunpack.c.l.b16 %v621
  %v3754 = vunpack.c.h.b16 %v621
  %v3755 = vunpack.c.l.b16 %v622
  %v3756 = vunpack.c.l.b16 %v623
  %v3757 = vunpack.c.h.b16 %v623
  %v3758 = vunpack.c.l.b16 %v624
  %v3759 = vunpack.c.h.b16 %v624
  %v3760 = vunpack.c.l.b16 %v625
  %v3761 = vunpack.c.h.b16 %v625
  %v3762 = vunpack.c.l.b16 %v626
  %v3763 = vunpack.c.l.b16 %v627
  %v3764 = vunpack.c.h.b16 %v627
  %v3765 = vunpack.c.l.b16 %v628
  %v3766 = vunpack.c.h.b16 %v628
  %v3767 = vunpack.c.l.b16 %v629
  %v3768 = vunpack.c.h.b16 %v629
  %v3769 = vunpack.c.l.b16 %v630
  %v3770 = vunpack.c.l.b16 %v631
  %v3771 = vunpack.c.h.b16 %v631
  %v3772 = vunpack.c.l.b16 %v632
  %v3773 = vunpack.c.h.b16 %v632
  %v3774 = vunpack.c.l.b16 %v633
  %v3775 = vunpack.c.h.b16 %v633
  %v3776 = vunpack.c.l.b16 %v634
  %v3777 = vunpack.c.l.b16 %v635
  %v3778 = vunpack.c.h.b16 %v635
  %v3779 = vunpack.c.l.b16 %v636
  %v3780 = vunpack.c.h.b16 %v636
  %v3781 = vunpack.c.l.b16 %v637
  %v3782 = vunpack.c.h.b16 %v637
  %v3783 = vunpack.c.l.b16 %v638
  %v3784 = vunpack.c.l.b16 %v639
  %v3785 = vunpack.c.h.b16 %v639
  %v3786 = vunpack.c.l.b16 %v640
  %v3787 = vunpack.c.h.b16 %v640
  %v3788 = vunpack.c.l.b16 %v641
  %v3789 = vunpack.c.h.b16 %v641
  %v3790 = vunpack.c.l.b16 %v642
  %v3791 = vunpack.c.l.b16 %v643
  %v3792 = vunpack.c.h.b16 %v643
  %v3793 = vunpack.c.l.b16 %v644
  %v3794 = vunpack.c.h.b16 %v644
  %v3795 = vunpack.c.l.b16 %v645
  %v3796 = vunpack.c.h.b16 %v645
  %v3797 = vunpack.c.l.b16 %v646
  %v3798 = vunpack.c.l.b16 %v647
  %v3799 = vunpack.c.h.b16 %v647
  %v3800 = vunpack.c.l.b16 %v648
  %v3801 = vunpack.c.h.b16 %v648
  %v3802 = vunpack.c.l.b16 %v649
  %v3803 = vunpack.c.h.b16 %v649
  %v3804 = vunpack.c.l.b16 %v650
  %v3805 = vunpack.c.l.b16 %v651
  %v3806 = vunpack.c.h.b16 %v651
  %v3807 = vunpack.c.l.b16 %v652
  %v3808 = vunpack.c.h.b16 %v652
  %v3809 = vunpack.c.l.b16 %v653
  %v3810 = vunpack.c.h.b16 %v653
  %v3811 = vunpack.c.l.b16 %v654
  %v3812 = vunpack.c.l.b16 %v655
  %v3813 = vunpack.c.h.b16 %v655
  %v3814 = vunpack.c.l.b16 %v656
  %v3815 = vunpack.c.h.b16 %v656
  %v3816 = vunpack.c.l.b16 %v657
  %v3817 = vunpack.c.h.b16 %v657
  %v3818 = vunpack.c.l.b16 %v658
  %v3819 = vunpack.c.l.b16 %v659
  %v3820 = vunpack.c.h.b16 %v659
  %v3821 = vunpack.c.l.b16 %v660
  %v3822 = vunpack.c.h.b16 %v660
  %v3823 = vunpack.c.l.b16 %v661
  %v3824 = vunpack.c.h.b16 %v661
  %v3825 = vunpack.c.l.b16 %v662
  %v3826 = vunpack.c.l.b16 %v663
  %v3827 = vunpack.c.h.b16 %v663
  %v3828 = vunpack.c.l.b16 %v664
  %v3829 = vunpack.c.h.b16 %v664
  %v3830 = vunpack.c.l.b16 %v665
  %v3831 = vunpack.c.h.b16 %v665
  %v3832 = vunpack.c.l.b16 %v666
  %v3833 = vunpack.c.l.b16 %v667
  %v3834 = vunpack.c.h.b16 %v667
  %v3835 = vunpack.c.l.b16 %v668
  %v3836 = vunpack.c.h.b16 %v668
  %v3837 = vunpack.c.l.b16 %v669
  %v3838 = vunpack.c.h.b16 %v669
  %v3839 = vunpack.c.l.b16 %v670
  %v3840 = vunpack.c.l.b16 %v671
  %v3841 = vunpack.c.h.b16 %v671
  %v3842 = vunpack.c.l.b16 %v672
  %v3843 = vunpack.c.h.b16 %v672
  %v3844 = vunpack.c.l.b16 %v673
  %v3845 = vunpack.c.h.b16 %v673
  %v3846 = vunpack.c.l.b16 %v674
  %v3847 = vunpack.c.l.b16 %v675
  %v3848 = vunpack.c.h.b16 %v675
  %v3849 = vunpack.c.l.b16 %v676
  %v3850 = vunpack.c.h.b16 %v676
  %v3851 = vunpack.c.l.b16 %v677
  %v3852 = vunpack.c.h.b16 %v677
  %v3853 = vunpack.c.l.b16 %v678
  %v3854 = vunpack.c.l.b16 %v679
  %v3855 = vunpack.c.h.b16 %v679
  %v3856 = vunpack.c.l.b16 %v680
  %v3857 = vunpack.c.h.b16 %v680
  %v3858 = vunpack.c.l.b16 %v681
  %v3859 = vunpack.c.h.b16 %v681
  %v3860 = vunpack.c.l.b16 %v682
  %v3861 = vunpack.c.l.b16 %v683
  %v3862 = vunpack.c.h.b16 %v683
  %v3863 = vunpack.c.l.b16 %v684
  %v3864 = vunpack.c.h.b16 %v684
  %v3865 = vunpack.c.l.b16 %v685
  %v3866 = vunpack.c.h.b16 %v685
  %v3867 = vunpack.c.l.b16 %v686
  %v3868 = vunpack.c.l.b16 %v687
  %v3869 = vunpack.c.h.b16 %v687
  %v3870 = vunpack.c.l.b16 %v688
  %v3871 = vunpack.c.h.b16 %v688
  %v3872 = vunpack.c.l.b16 %v689
  %v3873 = vunpack.c.h.b16 %v689
  %v3874 = vunpack.c.l.b16 %v690
  %v3875 = vunpack.c.l.b16 %v691
  %v3876 = vunpack.c.h.b16 %v691
  %v3877 = vunpack.c.l.b16 %v692
  %v3878 = vunpack.c.h.b16 %v692
  %v3879 = vunpack.c.l.b16 %v693
  %v3880 = vunpack.c.h.b16 %v693
  %v3881 = vunpack.c.l.b16 %v694
  %v3882 = vunpack.c.l.b16 %v695
  %v3883 = vunpack.c.h.b16 %v695
  %v3884 = vunpack.c.l.b16 %v696
  %v3885 = vunpack.c.h.b16 %v696
  %v3886 = vunpack.c.l.b16 %v697
  %v3887 = vunpack.c.h.b16 %v697
  %v3888 = vunpack.c.l.b16 %v698
  %v3889 = vunpack.c.l.b16 %v699
  %v3890 = vunpack.c.h.b16 %v699
  %v3891 = vunpack.c.l.b16 %v700
  %v3892 = vunpack.c.h.b16 %v700
  %v3893 = vunpack.c.l.b16 %v701
  %v3894 = vunpack.c.h.b16 %v701
  %v3895 = vunpack.c.l.b16 %v702
  %v3896 = vunpack.c.l.b16 %v703
  %v3897 = vunpack.c.h.b16 %v703
  %v3898 = vunpack.c.l.b16 %v704
  %v3899 = vunpack.c.h.b16 %v704
  %v3900 = vunpack.c.l.b16 %v705
  %v3901 = vunpack.c.h.b16 %v705
  %v3902 = vunpack.c.l.b16 %v706
  %v3903 = vunpack.c.l.b16 %v707
  %v3904 = vunpack.c.h.b16 %v707
  %v3905 = vunpack.c.l.b16 %v708
  %v3906 = vunpack.c.h.b16 %v708
  %v3907 = vunpack.c.l.b16 %v709
  %v3908 = vunpack.c.h.b16 %v709
  %v3909 = vunpack.c.l.b16 %v710
  %v3910 = vunpack.c.l.b16 %v711
  %v3911 = vunpack.c.h.b16 %v711
  %v3912 = vunpack.c.l.b16 %v712
  %v3913 = vunpack.c.h.b16 %v712
  %v3914 = vunpack.c.l.b16 %v713
  %v3915 = vunpack.c.h.b16 %v713
  %v3916 = vunpack.c.l.b16 %v714
  %v3917 = vunpack.c.l.b16 %v715
  %v3918 = vunpack.c.h.b16 %v715
  %v3919 = vunpack.c.l.b16 %v716
  %v3920 = vunpack.c.h.b16 %v716
  %v3921 = vunpack.c.l.b16 %v717
  %v3922 = vunpack.c.h.b16 %v717
  %v3923 = vunpack.c.l.b16 %v718
  %v3924 = vunpack.c.l.b16 %v719
  %v3925 = vunpack.c.h.b16 %v719
  %v3926 = vunpack.c.l.b16 %v720
  %v3927 = vunpack.c.h.b16 %v720
  %v3928 = vunpack.c.l.b16 %v721
  %v3929 = vunpack.c.h.b16 %v721
  %v3930 = vunpack.c.l.b16 %v722
  %v3931 = vunpack.c.l.b16 %v723
  %v3932 = vunpack.c.h.b16 %v723
  %v3933 = vunpack.c.l.b16 %v724
  %v3934 = vunpack.c.h.b16 %v724
  %v3935 = vunpack.c.l.b16 %v725
  %v3936 = vunpack.c.h.b16 %v725
  %v3937 = vunpack.c.l.b16 %v726
  %v3938 = vunpack.c.l.b16 %v727
  %v3939 = vunpack.c.h.b16 %v727
  %v3940 = vunpack.c.l.b16 %v728
  %v3941 = vunpack.c.h.b16 %v728
  %v3942 = vunpack.c.l.b16 %v729
  %v3943 = vunpack.c.h.b16 %v729
  %v3944 = vunpack.c.l.b16 %v730
  %v3945 = vunpack.c.l.b16 %v731
  %v3946 = vunpack.c.h.b16 %v731
  %v3947 = vunpack.c.l.b16 %v732
  %v3948 = vunpack.c.h.b16 %v732
  %v3949 = vunpack.c.l.b16 %v733
  %v3950 = vunpack.c.h.b16 %v733
  %v3951 = vunpack.c.l.b16 %v734
  %v3952 = vunpack.c.l.b16 %v735
  %v3953 = vunpack.c.h.b16 %v735
  %v3954 = vunpack.c.l.b16 %v736
  %v3955 = vunpack.c.h.b16 %v736
  %v3956 = vunpack.c.l.b16 %v737
  %v3957 = vunpack.c.h.b16 %v737
  %v3958 = vunpack.c.l.b16 %v738
  %v3959 = vunpack.c.l.b16 %v739
  %v3960 = vunpack.c.h.b16 %v739
  %v3961 = vunpack.c.l.b16 %v740
  %v3962 = vunpack.c.h.b16 %v740
  %v3963 = vunpack.c.l.b16 %v741
  %v3964 = vunpack.c.h.b16 %v741
  %v3965 = vunpack.c.l.b16 %v742
  %v3966 = vunpack.c.l.b16 %v743
  %v3967 = vunpack.c.h.b16 %v743
  %v3968 = vunpack.c.l.b16 %v744
  %v3969 = vunpack.c.h.b16 %v744
  %v3970 = vunpack.c.l.b16 %v745
  %v3971 = vunpack.c.h.b16 %v745
  %v3972 = vunpack.c.l.b16 %v746
  %v3973 = vunpack.c.l.b16 %v747
  %v3974 = vunpack.c.h.b16 %v747
  %v3975 = vunpack.c.l.b16 %v748
  %v3976 = vunpack.c.h.b16 %v748
  %v3977 = vunpack.c.l.b16 %v749
  %v3978 = vunpack.c.h.b16 %v749
  %v3979 = vunpack.c.l.b16 %v750
  %v3980 = vunpack.c.l.b16 %v751
  %v3981 = vunpack.c.h.b16 %v751
  %v3982 = vunpack.c.l.b16 %v752
  %v3983 = vunpack.c.h.b16 %v752
  %v3984 = vunpack.c.l.b16 %v753
  %v3985 = vunpack.c.h.b16 %v753
  %v3986 = vunpack.c.l.b16 %v754
  %v3987 = vunpack.c.l.b16 %v755
  %v3988 = vunpack.c.h.b16 %v755
  %v3989 = vunpack.c.l.b16 %v756
  %v3990 = vunpack.c.h.b16 %v756
  %v3991 = vunpack.c.l.b16 %v757
  %v3992 = vunpack.c.h.b16 %v757
  %v3993 = vunpack.c.l.b16 %v758
  %v3994 = vunpack.c.l.b16 %v759
  %v3995 = vunpack.c.h.b16 %v759
  %v3996 = vunpack.c.l.b16 %v760
  %v3997 = vunpack.c.h.b16 %v760
  %v3998 = vunpack.c.l.b16 %v761
  %v3999 = vunpack.c.h.b16 %v761
  %v4000 = vunpack.c.l.b16 %v762
  %v4001 = vunpack.c.l.b16 %v763
  %v4002 = vunpack.c.h.b16 %v763
  %v4003 = vunpack.c.l.b16 %v764
  %v4004 = vunpack.c.h.b16 %v764
  %v4005 = vunpack.c.l.b16 %v765
  %v4006 = vunpack.c.h.b16 %v765
  %v4007 = vunpack.c.l.b16 %v766
  %v4008 = vunpack.c.l.b16 %v767
  %v4009 = vunpack.c.h.b16 %v767
  %v4010 = vunpack.c.l.b16 %v768
  %v4011 = vunpack.c.h.b16 %v768
  %v4012 = vunpack.c.l.b16 %v769
  %v4013 = vunpack.c.h.b16 %v769
  %v4014 = vunpack.c.l.b16 %v770
  %v4015 = vunpack.c.l.b16 %v771
  %v4016 = vunpack.c.h.b16 %v771
  %v4017 = vunpack.c.l.b16 %v772
  %v4018 = vunpack.c.h.b16 %v772
  %v4019 = vunpack.c.l.b16 %v773
  %v4020 = vunpack.c.h.b16 %v773
  %v4021 = vunpack.c.l.b16 %v774
  %v4022 = vunpack.c.l.b16 %v775
  %v4023 = vunpack.c.h.b16 %v775
  %v4024 = vunpack.c.l.b16 %v776
  %v4025 = vunpack.c.h.b16 %v776
  %v4026 = vunpack.c.l.b16 %v777
  %v4027 = vunpack.c.h.b16 %v777
  %v4028 = vunpack.c.l.b16 %v778
  %v4029 = vunpack.c.l.b16 %v779
  %v4030 = vunpack.c.h.b16 %v779
  %v4031 = vunpack.c.l.b16 %v780
  %v4032 = vunpack.c.h.b16 %v780
  %v4033 = vunpack.c.l.b16 %v781
  %v4034 = vunpack.c.h.b16 %v781
  %v4035 = vunpack.c.l.b16 %v782
  %v4036 = vunpack.c.l.b16 %v783
  %v4037 = vunpack.c.h.b16 %v783
  %v4038 = vunpack.c.l.b16 %v784
  %v4039 = vunpack.c.h.b16 %v784
  %v4040 = vunpack.c.l.b16 %v785
  %v4041 = vunpack.c.h.b16 %v785
  %v4042 = vunpack.c.l.b16 %v786
  %v4043 = vunpack.c.l.b16 %v787
  %v4044 = vunpack.c.h.b16 %v787
  %v4045 = vunpack.c.l.b16 %v788
  %v4046 = vunpack.c.h.b16 %v788
  %v4047 = vunpack.c.l.b16 %v789
  %v4048 = vunpack.c.h.b16 %v789
  %v4049 = vunpack.c.l.b16 %v790
  %v4050 = vunpack.c.l.b16 %v791
  %v4051 = vunpack.c.h.b16 %v791
  %v4052 = vunpack.c.l.b16 %v792
  %v4053 = vunpack.c.h.b16 %v792
  %v4054 = vunpack.c.l.b16 %v793
  %v4055 = vunpack.c.h.b16 %v793
  %v4056 = vunpack.c.l.b16 %v794
  %v4057 = vunpack.c.l.b16 %v795
  %v4058 = vunpack.c.h.b16 %v795
  %v4059 = vunpack.c.l.b16 %v796
  %v4060 = vunpack.c.h.b16 %v796
  %v4061 = vunpack.c.l.b16 %v797
  %v4062 = vunpack.c.h.b16 %v797
  %v4063 = vunpack.c.l.b16 %v798
  %v4064 = vunpack.c.l.b16 %v799
  %v4065 = vunpack.c.h.b16 %v799
  %v4066 = vunpack.c.l.b16 %v800
  %v4067 = vunpack.c.h.b16 %v800
  %v4068 = vunpack.c.l.b16 %v801
  %v4069 = vunpack.c.h.b16 %v801
  %v4070 = vunpack.c.l.b16 %v802
  %v4071 = vunpack.c.l.b16 %v803
  %v4072 = vunpack.c.h.b16 %v803
  %v4073 = vunpack.c.l.b16 %v804
  %v4074 = vunpack.c.h.b16 %v804
  %v4075 = vunpack.c.l.b16 %v805
  %v4076 = vunpack.c.h.b16 %v805
  %v4077 = vunpack.c.l.b16 %v806
  %v4078 = vunpack.c.l.b16 %v807
  %v4079 = vunpack.c.h.b16 %v807
  %v4080 = vunpack.c.l.b16 %v808
  %v4081 = vunpack.c.h.b16 %v808
  %v4082 = vunpack.c.l.b16 %v809
  %v4083 = vunpack.c.h.b16 %v809
  %v4084 = vunpack.c.l.b16 %v810
  %v4085 = vunpack.c.l.b16 %v811
  %v4086 = vunpack.c.h.b16 %v811
  %v4087 = vunpack.c.l.b16 %v812
  %v4088 = vunpack.c.h.b16 %v812
  %v4089 = vunpack.c.l.b16 %v813
  %v4090 = vunpack.c.h.b16 %v813
  %v4091 = vunpack.c.l.b16 %v814
  %v4092 = vunpack.c.l.b16 %v815
  %v4093 = vunpack.c.h.b16 %v815
  %v4094 = vunpack.c.l.b16 %v816
  %v4095 = vunpack.c.h.b16 %v816
  %v4096 = vunpack.c.l.b16 %v817
  %v4097 = vunpack.c.h.b16 %v817
  %v4098 = vunpack.c.l.b16 %v818
  %v4099 = vunpack.c.l.b16 %v819
  %v4100 = vunpack.c.h.b16 %v819
  %v4101 = vunpack.c.l.b16 %v820
  %v4102 = vunpack.c.h.b16 %v820
  %v4103 = vunpack.c.l.b16 %v821
  %v4104 = vunpack.c.h.b16 %v821
  %v4105 = vunpack.c.l.b16 %v822
  %v4106 = vunpack.c.l.b16 %v823
  %v4107 = vunpack.c.h.b16 %v823
  %v4108 = vunpack.c.l.b16 %v824
  %v4109 = vunpack.c.h.b16 %v824
  %v4110 = vunpack.c.l.b16 %v825
  %v4111 = vunpack.c.h.b16 %v825
  %v4112 = vunpack.c.l.b16 %v826
  %v4113 = vunpack.c.l.b16 %v827
  %v4114 = vunpack.c.h.b16 %v827
  %v4115 = vunpack.c.l.b16 %v828
  %v4116 = vunpack.c.h.b16 %v828
  %v4117 = vunpack.c.l.b16 %v829
  %v4118 = vunpack.c.h.b16 %v829
  %v4119 = vunpack.c.l.b16 %v830
  %v4120 = vunpack.c.l.b16 %v831
  %v4121 = vunpack.c.h.b16 %v831
  %v4122 = vunpack.c.l.b16 %v832
  %v4123 = vunpack.c.h.b16 %v832
  %v4124 = vunpack.c.l.b16 %v833
  %v4125 = vunpack.c.h.b16 %v833
  %v4126 = vunpack.c.l.b16 %v834
  %v4127 = vunpack.c.l.b16 %v835
  %v4128 = vunpack.c.h.b16 %v835
  %v4129 = vunpack.c.l.b16 %v836
  %v4130 = vunpack.c.h.b16 %v836
  %v4131 = vunpack.c.l.b16 %v837
  %v4132 = vunpack.c.h.b16 %v837
  %v4133 = vunpack.c.l.b16 %v838
  %v4134 = vunpack.c.l.b16 %v839
  %v4135 = vunpack.c.h.b16 %v839
  %v4136 = vunpack.c.l.b16 %v840
  %v4137 = vunpack.c.h.b16 %v840
  %v4138 = vunpack.c.l.b16 %v841
  %v4139 = vunpack.c.h.b16 %v841
  %v4140 = vunpack.c.l.b16 %v842
  %v4141 = vunpack.c.l.b16 %v843
  %v4142 = vunpack.c.h.b16 %v843
  %v4143 = vunpack.c.l.b16 %v844
  %v4144 = vunpack.c.h.b16 %v844
  %v4145 = vunpack.c.l.b16 %v845
  %v4146 = vunpack.c.h.b16 %v845
  %v4147 = vunpack.c.l.b16 %v846
  %v4148 = vunpack.c.l.b16 %v847
  %v4149 = vunpack.c.h.b16 %v847
  %v4150 = vunpack.c.l.b16 %v848
  %v4151 = vunpack.c.h.b16 %v848
  %v4152 = vunpack.c.l.b16 %v849
  %v4153 = vunpack.c.h.b16 %v849
  %v4154 = vunpack.c.l.b16 %v850
  %v4155 = vunpack.c.l.b16 %v851
  %v4156 = vunpack.c.h.b16 %v851
  %v4157 = vunpack.c.l.b16 %v852
  %v4158 = vunpack.c.h.b16 %v852
  %v4159 = vunpack.c.l.b16 %v853
  %v4160 = vunpack.c.h.b16 %v853
  %v4161 = vunpack.c.l.b16 %v854
  %v4162 = vunpack.c.l.b16 %v855
  %v4163 = vunpack.c.h.b16 %v855
  %v4164 = vunpack.c.l.b16 %v856
  %v4165 = vunpack.c.h.b16 %v856
  %v4166 = vunpack.c.l.b16 %v857
  %v4167 = vunpack.c.h.b16 %v857
  %v4168 = vunpack.c.l.b16 %v858
  %v4169 = vunpack.c.l.b16 %v859
  %v4170 = vunpack.c.h.b16 %v859
  %v4171 = vunpack.c.l.b16 %v860
  %v4172 = vunpack.c.h.b16 %v860
  %v4173 = vunpack.c.l.b16 %v861
  %v4174 = vunpack.c.h.b16 %v861
  %v4175 = vunpack.c.l.b16 %v862
  %v4176 = vunpack.c.l.b16 %v863
  %v4177 = vunpack.c.h.b16 %v863
  %v4178 = vunpack.c.l.b16 %v864
  %v4179 = vunpack.c.h.b16 %v864
  %v4180 = vunpack.c.l.b16 %v865
  %v4181 = vunpack.c.h.b16 %v865
  %v4182 = vunpack.c.l.b16 %v866
  %v4183 = vunpack.c.l.b16 %v867
  %v4184 = vunpack.c.h.b16 %v867
  %v4185 = vunpack.c.l.b16 %v868
  %v4186 = vunpack.c.h.b16 %v868
  %v4187 = vunpack.c.l.b16 %v869
  %v4188 = vunpack.c.h.b16 %v869
  %v4189 = vunpack.c.l.b16 %v870
  %v4190 = vunpack.c.l.b16 %v871
  %v4191 = vunpack.c.h.b16 %v871
  %v4192 = vunpack.c.l.b16 %v872
  %v4193 = vunpack.c.h.b16 %v872
  %v4194 = vunpack.c.l.b16 %v873
  %v4195 = vunpack.c.h.b16 %v873
  %v4196 = vunpack.c.l.b16 %v874
  %v4197 = vunpack.c.l.b16 %v875
  %v4198 = vunpack.c.h.b16 %v875
  %v4199 = vunpack.c.l.b16 %v876
  %v4200 = vunpack.c.h.b16 %v876
  %v4201 = vunpack.c.l.b16 %v877
  %v4202 = vunpack.c.h.b16 %v877
  %v4203 = vunpack.c.l.b16 %v878
  %v4204 = vunpack.c.l.b16 %v879
  %v4205 = vunpack.c.h.b16 %v879
  %v4206 = vunpack.c.l.b16 %v880
  %v4207 = vunpack.c.h.b16 %v880
  %v4208 = vunpack.c.l.b16 %v881
  %v4209 = vunpack.c.h.b16 %v881
  %v4210 = vunpack.c.l.b16 %v882
  %v4211 = vunpack.c.l.b16 %v883
  %v4212 = vunpack.c.h.b16 %v883
  %v4213 = vunpack.c.l.b16 %v884
  %v4214 = vunpack.c.h.b16 %v884
  %v4215 = vunpack.c.l.b16 %v885
  %v4216 = vunpack.c.h.b16 %v885
  %v4217 = vunpack.c.l.b16 %v886
  %v4218 = vunpack.c.l.b16 %v887
  %v4219 = vunpack.c.h.b16 %v887
  %v4220 = vunpack.c.l.b16 %v888
  %v4221 = vunpack.c.h.b16 %v888
  %v4222 = vunpack.c.l.b16 %v889
  %v4223 = vunpack.c.h.b16 %v889
  %v4224 = vunpack.c.l.b16 %v890
  %v4225 = vunpack.c.l.b16 %v891
  %v4226 = vunpack.c.h.b16 %v891
  %v4227 = vunpack.c.l.b16 %v892
  %v4228 = vunpack.c.h.b16 %v892
  %v4229 = vunpack.c.l.b16 %v893
  %v4230 = vunpack.c.h.b16 %v893
  %v4231 = vunpack.c.l.b16 %v894
  %v4232 = vunpack.c.l.b16 %v895
  %v4233 = vunpack.c.h.b16 %v895
  %v4234 = vunpack.c.l.b16 %v896
  %v4235 = vunpack.c.h.b16 %v896
  %v4236 = vunpack.c.l.b16 %v897
  %v4237 = vunpack.c.h.b16 %v897
  %v4238 = vunpack.c.l.b16 %v898
  %v4239 = vunpack.c.l.b16 %v899
  %v4240 = vunpack.c.h.b16 %v899
  %v4241 = vunpack.c.l.b16 %v900
  %v4242 = vunpack.c.h.b16 %v900
  %v4243 = vunpack.c.l.b16 %v901
  %v4244 = vunpack.c.h.b16 %v901
  %v4245 = vunpack.c.l.b16 %v902
  %v4246 = vunpack.c.l.b16 %v903
  %v4247 = vunpack.c.h.b16 %v903
  %v4248 = vunpack.c.l.b16 %v904
  %v4249 = vunpack.c.h.b16 %v904
  %v4250 = vunpack.c.l.b16 %v905
  %v4251 = vunpack.c.h.b16 %v905
  %v4252 = vunpack.c.l.b16 %v906
  %v4253 = vunpack.c.l.b16 %v907
  %v4254 = vunpack.c.h.b16 %v907
  %v4255 = vunpack.c.l.b16 %v908
  %v4256 = vunpack.c.h.b16 %v908
  %v4257 = vunpack.c.l.b16 %v909
  %v4258 = vunpack.c.h.b16 %v909
  %v4259 = vunpack.c.l.b16 %v910
  %v4260 = vunpack.c.l.b16 %v911
  %v4261 = vunpack.c.h.b16 %v911
  %v4262 = vunpack.c.l.b16 %v912
  %v4263 = vunpack.c.h.b16 %v912
  %v4264 = vunpack.c.l.b16 %v913
  %v4265 = vunpack.c.h.b16 %v913
  %v4266 = vunpack.c.l.b16 %v914
  %v4267 = vunpack.c.l.b16 %v915
  %v4268 = vunpack.c.h.b16 %v915
  %v4269 = vunpack.c.l.b16 %v916
  %v4270 = vunpack.c.h.b16 %v916
  %v4271 = vunpack.c.l.b16 %v917
  %v4272 = vunpack.c.h.b16 %v917
  %v4273 = vunpack.c.l.b16 %v918
  %v4274 = vunpack.c.l.b16 %v919
  %v4275 = vunpack.c.h.b16 %v919
  %v4276 = vunpack.c.l.b16 %v920
  %v4277 = vunpack.c.h.b16 %v920
  %v4278 = vunpack.c.l.b16 %v921
  %v4279 = vunpack.c.h.b16 %v921
  %v4280 = vunpack.c.l.b16 %v922
  %v4281 = vunpack.c.l.b16 %v923
  %v4282 = vunpack.c.h.b16 %v923
  %v4283 = vunpack.c.l.b16 %v924
  %v4284 = vunpack.c.h.b16 %v924
  %v4285 = vunpack.c.l.b16 %v925
  %v4286 = vunpack.c.h.b16 %v925
  %v4287 = vunpack.c.l.b16 %v926
  %v4288 = vunpack.c.l.b16 %v927
  %v4289 = vunpack.c.h.b16 %v927
  %v4290 = vunpack.c.l.b16 %v928
  %v4291 = vunpack.c.h.b16 %v928
  %v4292 = vunpack.c.l.b16 %v929
  %v4293 = vunpack.c.h.b16 %v929
  %v4294 = vunpack.c.l.b16 %v930
  %v4295 = vunpack.c.l.b16 %v931
  %v4296 = vunpack.c.h.b16 %v931
  %v4297 = vunpack.c.l.b16 %v932
  %v4298 = vunpack.c.h.b16 %v932
  %v4299 = vunpack.c.l.b16 %v933
  %v4300 = vunpack.c.h.b16 %v933
  %v4301 = vunpack.c.l.b16 %v934
  %v4302 = vunpack.c.l.b16 %v935
  %v4303 = vunpack.c.h.b16 %v935
  %v4304 = vunpack.c.l.b16 %v936
  %v4305 = vunpack.c.h.b16 %v936
  %v4306 = vunpack.c.l.b16 %v937
  %v4307 = vunpack.c.h.b16 %v937
  %v4308 = vunpack.c.l.b16 %v938
  %v4309 = vunpack.c.l.b16 %v939
  %v4310 = vunpack.c.h.b16 %v939
  %v4311 = vunpack.c.l.b16 %v940
  %v4312 = vunpack.c.h.b16 %v940
  %v4313 = vunpack.c.l.b16 %v941
  %v4314 = vunpack.c.h.b16 %v941
  %v4315 = vunpack.c.l.b16 %v942
  %v4316 = vunpack.c.l.b16 %v943
  %v4317 = vunpack.c.h.b16 %v943
  %v4318 = vunpack.c.l.b16 %v944
  %v4319 = vunpack.c.h.b16 %v944
  %v4320 = vunpack.c.l.b16 %v945
  %v4321 = vunpack.c.h.b16 %v945
  %v4322 = vunpack.c.l.b16 %v946
  %v4323 = vunpack.c.l.b16 %v947
  %v4324 = vunpack.c.h.b16 %v947
  %v4325 = vunpack.c.l.b16 %v948
  %v4326 = vunpack.c.h.b16 %v948
  %v4327 = vunpack.c.l.b16 %v949
  %v4328 = vunpack.c.h.b16 %v949
  %v4329 = vunpack.c.l.b16 %v950
  %v4330 = vunpack.c.l.b16 %v951
  %v4331 = vunpack.c.h.b16 %v951
  %v4332 = vunpack.c.l.b16 %v952
  %v4333 = vunpack.c.h.b16 %v952
  %v4334 = vunpack.c.l.b16 %v953
  %v4335 = vunpack.c.h.b16 %v953
  %v4336 = vunpack.c.l.b16 %v954
  %v4337 = vunpack.c.l.b16 %v955
  %v4338 = vunpack.c.h.b16 %v955
  %v4339 = vunpack.c.l.b16 %v956
  %v4340 = vunpack.c.h.b16 %v956
  %v4341 = vunpack.c.l.b16 %v957
  %v4342 = vunpack.c.h.b16 %v957
  %v4343 = vunpack.c.l.b16 %v958
  %v4344 = vunpack.c.l.b16 %v959
  %v4345 = vunpack.c.h.b16 %v959
  %v4346 = vunpack.c.l.b16 %v960
  %v4347 = vunpack.c.h.b16 %v960
  %v4348 = vunpack.c.l.b16 %v961
  %v4349 = vunpack.c.h.b16 %v961
  %v4350 = vunpack.c.l.b16 %v962
  %v4351 = vunpack.c.l.b16 %v963
  %v4352 = vunpack.c.h.b16 %v963
  %v4353 = vunpack.c.l.b16 %v964
  %v4354 = vunpack.c.h.b16 %v964
  %v4355 = vunpack.c.l.b16 %v965
  %v4356 = vunpack.c.h.b16 %v965
  %v4357 = vunpack.c.l.b16 %v966
  %v4358 = vunpack.c.l.b16 %v967
  %v4359 = vunpack.c.h.b16 %v967
  %v4360 = vunpack.c.l.b16 %v968
  %v4361 = vunpack.c.h.b16 %v968
  %v4362 = vunpack.c.l.b16 %v969
  %v4363 = vunpack.c.h.b16 %v969
  %v4364 = vunpack.c.l.b16 %v970
  %v4365 = vunpack.c.l.b16 %v971
  %v4366 = vunpack.c.h.b16 %v971
  %v4367 = vunpack.c.l.b16 %v972
  %v4368 = vunpack.c.h.b16 %v972
  %v4369 = vunpack.c.l.b16 %v973
  %v4370 = vunpack.c.h.b16 %v973
  %v4371 = vunpack.c.l.b16 %v974
  %v4372 = vunpack.c.l.b16 %v975
  %v4373 = vunpack.c.h.b16 %v975
  %v4374 = vunpack.c.l.b16 %v976
  %v4375 = vunpack.c.h.b16 %v976
  %v4376 = vunpack.c.l.b16 %v977
  %v4377 = vunpack.c.h.b16 %v977
  %v4378 = vunpack.c.l.b16 %v978
  %v4379 = vunpack.c.l.b16 %v979
  %v4380 = vunpack.c.h.b16 %v979
  %v4381 = vunpack.c.l.b16 %v980
  %v4382 = vunpack.c.h.b16 %v980
  %v4383 = vunpack.c.l.b16 %v981
  %v4384 = vunpack.c.h.b16 %v981
  %v4385 = vunpack.c.l.b16 %v982
  %v4386 = vunpack.c.l.b16 %v983
  %v4387 = vunpack.c.h.b16 %v983
  %v4388 = vunpack.c.l.b16 %v984
  %v4389 = vunpack.c.h.b16 %v984
  %v4390 = vunpack.c.l.b16 %v985
  %v4391 = vunpack.c.h.b16 %v985
  %v4392 = vunpack.c.l.b16 %v986
  %v4393 = vunpack.c.l.b16 %v987
  %v4394 = vunpack.c.h.b16 %v987
  %v4395 = vunpack.c.l.b16 %v988
  %v4396 = vunpack.c.h.b16 %v988
  %v4397 = vunpack.c.l.b16 %v989
  %v4398 = vunpack.c.h.b16 %v989
  %v4399 = vunpack.c.l.b16 %v990
  %v4400 = vunpack.c.l.b16 %v991
  %v4401 = vunpack.c.h.b16 %v991
  %v4402 = vunpack.c.l.b16 %v992
  %v4403 = vunpack.c.h.b16 %v992
  %v4404 = vunpack.c.l.b16 %v993
  %v4405 = vunpack.c.h.b16 %v993
  %v4406 = vunpack.c.l.b16 %v994
  %v4407 = vunpack.c.l.b16 %v995
  %v4408 = vunpack.c.h.b16 %v995
  %v4409 = vunpack.c.l.b16 %v996
  %v4410 = vunpack.c.h.b16 %v996
  %v4411 = vunpack.c.l.b16 %v997
  %v4412 = vunpack.c.h.b16 %v997
  %v4413 = vunpack.c.l.b16 %v998
  %v4414 = vunpack.c.l.b16 %v999
  %v4415 = vunpack.c.h.b16 %v999
  %v4416 = vunpack.c.l.b16 %v1000
  %v4417 = vunpack.c.h.b16 %v1000
  %v4418 = vunpack.c.l.b16 %v1001
  %v4419 = vunpack.c.h.b16 %v1001
  %v4420 = vunpack.c.l.b16 %v1002
  %v4421 = vunpack.c.l.b16 %v1003
  %v4422 = vunpack.c.h.b16 %v1003
  %v4423 = vunpack.c.l.b16 %v1004
  %v4424 = vunpack.c.h.b16 %v1004
  %v4425 = vunpack.c.l.b16 %v1005
  %v4426 = vunpack.c.h.b16 %v1005
  %v4427 = vunpack.c.l.b16 %v1006
  %v4428 = vunpack.c.l.b16 %v1007
  %v4429 = vunpack.c.h.b16 %v1007
  %v4430 = vunpack.c.l.b16 %v1008
  %v4431 = vunpack.c.h.b16 %v1008
  %v4432 = vunpack.c.l.b16 %v1009
  %v4433 = vunpack.c.h.b16 %v1009
  %v4434 = vunpack.c.l.b16 %v1010
  %v4435 = vunpack.c.l.b16 %v1011
  %v4436 = vunpack.c.h.b16 %v1011
  %v4437 = vunpack.c.l.b16 %v1012
  %v4438 = vunpack.c.h.b16 %v1012
  %v4439 = vunpack.c.l.b16 %v1013
  %v4440 = vunpack.c.h.b16 %v1013
  %v4441 = vunpack.c.l.b16 %v1014
  %v4442 = vunpack.c.l.b16 %v1015
  %v4443 = vunpack.c.h.b16 %v1015
  %v4444 = vunpack.c.l.b16 %v1016
  %v4445 = vunpack.c.h.b16 %v1016
  %v4446 = vunpack.c.l.b16 %v1017
  %v4447 = vunpack.c.h.b16 %v1017
  %v4448 = vunpack.c.l.b16 %v1018
  %v4449 = vunpack.c.l.b16 %v1019
  %v4450 = vunpack.c.h.b16 %v1019
  %v4451 = vunpack.c.l.b16 %v1020
  %v4452 = vunpack.c.h.b16 %v1020
  %v4453 = vunpack.c.l.b16 %v1021
  %v4454 = vunpack.c.h.b16 %v1021
  %v4455 = vunpack.c.l.b16 %v1022
  %v4456 = vunpack.c.l.b16 %v1023
  %v4457 = vunpack.c.h.b16 %v1023
  %v4458 = vunpack.c.l.b16 %v1024
  %v4459 = vunpack.c.h.b16 %v1024
  %v4460 = vunpack.c.l.b16 %v1025
  %v4461 = vunpack.c.h.b16 %v1025
  %v4462 = vunpack.c.l.b16 %v1026
  %v4463 = vunpack.c.l.b16 %v1027
  %v4464 = vunpack.c.h.b16 %v1027
  %v4465 = vunpack.c.l.b16 %v1028
  %v4466 = vunpack.c.h.b16 %v1028
  %v4467 = vunpack.c.l.b16 %v1029
  %v4468 = vunpack.c.h.b16 %v1029
  %v4469 = vunpack.c.l.b16 %v1030
  %v4470 = vunpack.c.l.b16 %v1031
  %v4471 = vunpack.c.h.b16 %v1031
  %v4472 = vunpack.c.l.b16 %v1032
  %v4473 = vunpack.c.h.b16 %v1032
  %v4474 = vunpack.c.l.b16 %v1033
  %v4475 = vunpack.c.h.b16 %v1033
  %v4476 = vunpack.c.l.b16 %v1034
  %v4477 = vunpack.c.l.b16 %v1035
  %v4478 = vunpack.c.h.b16 %v1035
  %v4479 = vunpack.c.l.b16 %v1036
  %v4480 = vunpack.c.h.b16 %v1036
  %v4481 = vunpack.c.l.b16 %v1037
  %v4482 = vunpack.c.h.b16 %v1037
  %v4483 = vunpack.c.l.b16 %v1038
  %v4484 = vunpack.c.l.b16 %v1039
  %v4485 = vunpack.c.h.b16 %v1039
  %v4486 = vunpack.c.l.b16 %v1040
  %v4487 = vunpack.c.h.b16 %v1040
  %v4488 = vunpack.c.l.b16 %v1041
  %v4489 = vunpack.c.h.b16 %v1041
  %v4490 = vunpack.c.l.b16 %v1042
  %v4491 = vunpack.c.l.b16 %v1043
  %v4492 = vunpack.c.h.b16 %v1043
  %v4493 = vunpack.c.l.b16 %v1044
  %v4494 = vunpack.c.h.b16 %v1044
  %v4495 = vunpack.c.l.b16 %v1045
  %v4496 = vunpack.c.h.b16 %v1045
  %v4497 = vunpack.c.l.b16 %v1046
  %v4498 = vunpack.c.l.b16 %v1047
  %v4499 = vunpack.c.h.b16 %v1047
  %v4500 = vunpack.c.l.b16 %v1048
  %v4501 = vunpack.c.h.b16 %v1048
  %v4502 = vunpack.c.l.b16 %v1049
  %v4503 = vunpack.c.h.b16 %v1049
  %v4504 = vunpack.c.l.b16 %v1050
  %v4505 = vunpack.c.l.b16 %v1051
  %v4506 = vunpack.c.h.b16 %v1051
  %v4507 = vunpack.c.l.b16 %v1052
  %v4508 = vunpack.c.h.b16 %v1052
  %v4509 = vunpack.c.l.b16 %v1053
  %v4510 = vunpack.c.h.b16 %v1053
  %v4511 = vunpack.c.l.b16 %v1054
  %v4512 = vunpack.c.l.b16 %v1055
  %v4513 = vunpack.c.h.b16 %v1055
  %v4514 = vunpack.c.l.b16 %v1056
  %v4515 = vunpack.c.h.b16 %v1056
  %v4516 = vunpack.c.l.b16 %v1057
  %v4517 = vunpack.c.h.b16 %v1057
  %v4518 = vunpack.c.l.b16 %v1058
  %v4519 = vunpack.c.l.b16 %v1059
  %v4520 = vunpack.c.h.b16 %v1059
  %v4521 = vunpack.c.l.b16 %v1060
  %v4522 = vunpack.c.h.b16 %v1060
  %v4523 = vunpack.c.l.b16 %v1061
  %v4524 = vunpack.c.h.b16 %v1061
  %v4525 = vunpack.c.l.b16 %v1062
  %v4526 = vunpack.c.l.b16 %v1063
  %v4527 = vunpack.c.h.b16 %v1063
  %v4528 = vunpack.c.l.b16 %v1064
  %v4529 = vunpack.c.h.b16 %v1064
  %v4530 = vunpack.c.l.b16 %v1065
  %v4531 = vunpack.c.h.b16 %v1065
  %v4532 = vunpack.c.l.b16 %v1066
  %v4533 = vunpack.c.l.b16 %v1067
  %v4534 = vunpack.c.h.b16 %v1067
  %v4535 = vunpack.c.l.b16 %v1068
  %v4536 = vunpack.c.h.b16 %v1068
  %v4537 = vunpack.c.l.b16 %v1069
  %v4538 = vunpack.c.h.b16 %v1069
  %v4539 = vunpack.c.l.b16 %v1070
  %v4540 = vunpack.c.l.b16 %v1071
  %v4541 = vunpack.c.h.b16 %v1071
  %v4542 = vunpack.c.l.b16 %v1072
  %v4543 = vunpack.c.h.b16 %v1072
  %v4544 = vunpack.c.l.b16 %v1073
  %v4545 = vunpack.c.h.b16 %v1073
  %v4546 = vunpack.c.l.b16 %v1074
  %v4547 = vunpack.c.l.b16 %v1075
  %v4548 = vunpack.c.h.b16 %v1075
  %v4549 = vunpack.c.l.b16 %v1076
  %v4550 = vunpack.c.h.b16 %v1076
  %v4551 = vunpack.c.l.b16 %v1077
  %v4552 = vunpack.c.h.b16 %v1077
  %v4553 = vunpack.c.l.b16 %v1078
  %v4554 = vunpack.c.l.b16 %v1079
  %v4555 = vunpack.c.h.b16 %v1079
  %v4556 = vunpack.c.l.b16 %v1080
  %v4557 = vunpack.c.h.b16 %v1080
  %v4558 = vunpack.c.l.b16 %v1081
  %v4559 = vunpack.c.h.b16 %v1081
  %v4560 = vunpack.c.l.b16 %v1082
  %v4561 = vunpack.c.l.b16 %v1083
  %v4562 = vunpack.c.h.b16 %v1083
  %v4563 = vunpack.c.l.b16 %v1084
  %v4564 = vunpack.c.h.b16 %v1084
  %v4565 = vunpack.c.l.b16 %v1085
  %v4566 = vunpack.c.h.b16 %v1085
  %v4567 = vunpack.c.l.b16 %v1086
  %v4568 = vunpack.c.l.b16 %v1087
  %v4569 = vunpack.c.h.b16 %v1087
  %v4570 = vunpack.c.l.b16 %v1088
  %v4571 = vunpack.c.h.b16 %v1088
  %v4572 = vunpack.c.l.b16 %v1089
  %v4573 = vunpack.c.h.b16 %v1089
  %v4574 = vunpack.c.l.b16 %v1090
  %v4575 = vunpack.c.l.b16 %v1091
  %v4576 = vunpack.c.h.b16 %v1091
  %v4577 = vunpack.c.l.b16 %v1092
  %v4578 = vunpack.c.h.b16 %v1092
  %v4579 = vunpack.c.l.b16 %v1093
  %v4580 = vunpack.c.h.b16 %v1093
  %v4581 = vunpack.c.l.b16 %v1094
  %v4582 = vunpack.c.l.b16 %v1095
  %v4583 = vunpack.c.h.b16 %v1095
  %v4584 = vunpack.c.l.b16 %v1096
  %v4585 = vunpack.c.h.b16 %v1096
  %v4586 = vunpack.c.l.b16 %v1097
  %v4587 = vunpack.c.h.b16 %v1097
  %v4588 = vunpack.c.l.b16 %v1098
  %v4589 = vunpack.c.l.b16 %v1099
  %v4590 = vunpack.c.h.b16 %v1099
  %v4591 = vunpack.c.l.b16 %v1100
  %v4592 = vunpack.c.h.b16 %v1100
  %v4593 = vunpack.c.l.b16 %v1101
  %v4594 = vunpack.c.h.b16 %v1101
  %v4595 = vunpack.c.l.b16 %v1102
  %v4596 = vunpack.c.l.b16 %v1103
  %v4597 = vunpack.c.h.b16 %v1103
  %v4598 = vunpack.c.l.b16 %v1104
  %v4599 = vunpack.c.h.b16 %v1104
  %v4600 = vunpack.c.l.b16 %v1105
  %v4601 = vunpack.c.h.b16 %v1105
  %v4602 = vunpack.c.l.b16 %v1106
  %v4603 = vunpack.c.l.b16 %v1107
  %v4604 = vunpack.c.h.b16 %v1107
  %v4605 = vunpack.c.l.b16 %v1108
  %v4606 = vunpack.c.h.b16 %v1108
  %v4607 = vunpack.c.l.b16 %v1109
  %v4608 = vunpack.c.h.b16 %v1109
  %v4609 = vunpack.c.l.b16 %v1110
  %v4610 = vunpack.c.l.b16 %v1111
  %v4611 = vunpack.c.h.b16 %v1111
  %v4612 = vunpack.c.l.b16 %v1112
  %v4613 = vunpack.c.h.b16 %v1112
  %v4614 = vunpack.c.l.b16 %v1113
  %v4615 = vunpack.c.h.b16 %v1113
  %v4616 = vunpack.c.l.b16 %v1114
  %v4617 = vunpack.c.l.b16 %v1115
  %v4618 = vunpack.c.h.b16 %v1115
  %v4619 = vunpack.c.l.b16 %v1116
  %v4620 = vunpack.c.h.b16 %v1116
  %v4621 = vunpack.c.l.b16 %v1117
  %v4622 = vunpack.c.h.b16 %v1117
  %v4623 = vunpack.c.l.b16 %v1118
  %v4624 = vunpack.c.l.b16 %v1119
  %v4625 = vunpack.c.h.b16 %v1119
  %v4626 = vunpack.c.l.b16 %v1120
  %v4627 = vunpack.c.h.b16 %v1120
  %v4628 = vunpack.c.l.b16 %v1121
  %v4629 = vunpack.c.h.b16 %v1121
  %v4630 = vunpack.c.l.b16 %v1122
  %v4631 = vunpack.c.l.b16 %v1123
  %v4632 = vunpack.c.h.b16 %v1123
  %v4633 = vunpack.c.l.b16 %v1124
  %v4634 = vunpack.c.h.b16 %v1124
  %v4635 = vunpack.c.l.b16 %v1125
  %v4636 = vunpack.c.h.b16 %v1125
  %v4637 = vunpack.c.l.b16 %v1126
  %v4638 = vunpack.c.l.b16 %v1127
  %v4639 = vunpack.c.h.b16 %v1127
  %v4640 = vunpack.c.l.b16 %v1128
  %v4641 = vunpack.c.h.b16 %v1128
  %v4642 = vunpack.c.l.b16 %v1129
  %v4643 = vunpack.c.h.b16 %v1129
  %v4644 = vunpack.c.l.b16 %v1130
  %v4645 = vunpack.c.l.b16 %v1131
  %v4646 = vunpack.c.h.b16 %v1131
  %v4647 = vunpack.c.l.b16 %v1132
  %v4648 = vunpack.c.h.b16 %v1132
  %v4649 = vunpack.c.l.b16 %v1133
  %v4650 = vunpack.c.h.b16 %v1133
  %v4651 = vunpack.c.l.b16 %v1134
  %v4652 = vunpack.c.l.b16 %v1135
  %v4653 = vunpack.c.h.b16 %v1135
  %v4654 = vunpack.c.l.b16 %v1136
  %v4655 = vunpack.c.h.b16 %v1136
  %v4656 = vunpack.c.l.b16 %v1137
  %v4657 = vunpack.c.h.b16 %v1137
  %v4658 = vunpack.c.l.b16 %v1138
  %v4659 = vunpack.c.l.b16 %v1139
  %v4660 = vunpack.c.h.b16 %v1139
  %v4661 = vunpack.c.l.b16 %v1140
  %v4662 = vunpack.c.h.b16 %v1140
  %v4663 = vunpack.c.l.b16 %v1141
  %v4664 = vunpack.c.h.b16 %v1141
  %v4665 = vunpack.c.l.b16 %v1142
  %v4666 = vunpack.c.l.b16 %v1143
  %v4667 = vunpack.c.h.b16 %v1143
  %v4668 = vunpack.c.l.b16 %v1144
  %v4669 = vunpack.c.h.b16 %v1144
  %v4670 = vunpack.c.l.b16 %v1145
  %v4671 = vunpack.c.h.b16 %v1145
  %v4672 = vunpack.c.l.b16 %v1146
  %v4673 = vunpack.c.l.b16 %v1147
  %v4674 = vunpack.c.h.b16 %v1147
  %v4675 = vunpack.c.l.b16 %v1148
  %v4676 = vunpack.c.h.b16 %v1148
  %v4677 = vunpack.c.l.b16 %v1149
  %v4678 = vunpack.c.h.b16 %v1149
  %v4679 = vunpack.c.l.b16 %v1150
  %v4680 = vunpack.c.l.b16 %v1151
  %v4681 = vunpack.c.h.b16 %v1151
  %v4682 = vunpack.c.l.b16 %v1152
  %v4683 = vunpack.c.h.b16 %v1152
  %v4684 = vunpack.c.l.b16 %v1153
  %v4685 = vunpack.c.h.b16 %v1153
  %v4686 = vunpack.c.l.b16 %v1154
  %v4687 = vunpack.c.l.b16 %v1155
  %v4688 = vunpack.c.h.b16 %v1155
  %v4689 = vunpack.c.l.b16 %v1156
  %v4690 = vunpack.c.h.b16 %v1156
  %v4691 = vunpack.c.l.b16 %v1157
  %v4692 = vunpack.c.h.b16 %v1157
  %v4693 = vunpack.c.l.b16 %v1158
  %v4694 = vunpack.c.l.b16 %v1159
  %v4695 = vunpack.c.h.b16 %v1159
  %v4696 = vunpack.c.l.b16 %v1160
  %v4697 = vunpack.c.h.b16 %v1160
  %v4698 = vunpack.c.l.b16 %v1161
  %v4699 = vunpack.c.h.b16 %v1161
  %v4700 = vunpack.c.l.b16 %v1162
  %v4701 = vunpack.c.l.b16 %v1163
  %v4702 = vunpack.c.h.b16 %v1163
  %v4703 = vunpack.c.l.b16 %v1164
  %v4704 = vunpack.c.h.b16 %v1164
  %v4705 = vunpack.c.l.b16 %v1165
  %v4706 = vunpack.c.h.b16 %v1165
  %v4707 = vunpack.c.l.b16 %v1166
  %v4708 = vunpack.c.l.b16 %v1167
  %v4709 = vunpack.c.h.b16 %v1167
  %v4710 = vunpack.c.l.b16 %v1168
  %v4711 = vunpack.c.h.b16 %v1168
  %v4712 = vunpack.c.l.b16 %v1169
  %v4713 = vunpack.c.h.b16 %v1169
  %v4714 = vunpack.c.l.b16 %v1170
  %v4715 = vunpack.c.l.b16 %v1171
  %v4716 = vunpack.c.h.b16 %v1171
  %v4717 = vunpack.c.l.b16 %v1172
  %v4718 = vunpack.c.h.b16 %v1172
  %v4719 = vunpack.c.l.b16 %v1173
  %v4720 = vunpack.c.h.b16 %v1173
  %v4721 = vunpack.c.l.b16 %v1174
  %v4722 = vunpack.c.l.b16 %v1175
  %v4723 = vunpack.c.h.b16 %v1175
  %v4724 = vunpack.c.l.b16 %v1176
  %v4725 = vunpack.c.h.b16 %v1176
  %v4726 = vunpack.c.l.b16 %v1177
  %v4727 = vunpack.c.h.b16 %v1177
  %v4728 = vunpack.c.l.b16 %v1178
  %v4729 = vunpack.c.l.b16 %v1179
  %v4730 = vunpack.c.h.b16 %v1179
  %v4731 = vunpack.c.l.b16 %v1180
  %v4732 = vunpack.c.h.b16 %v1180
  %v4733 = vunpack.c.l.b16 %v1181
  %v4734 = vunpack.c.h.b16 %v1181
  %v4735 = vunpack.c.l.b16 %v1182
  %v4736 = vunpack.c.l.b16 %v1183
  %v4737 = vunpack.c.h.b16 %v1183
  %v4738 = vunpack.c.l.b16 %v1184
  %v4739 = vunpack.c.h.b16 %v1184
  %v4740 = vunpack.c.l.b16 %v1185
  %v4741 = vunpack.c.h.b16 %v1185
  %v4742 = vunpack.c.l.b16 %v1186
  %v4743 = vunpack.c.l.b16 %v1187
  %v4744 = vunpack.c.h.b16 %v1187
  %v4745 = vunpack.c.l.b16 %v1188
  %v4746 = vunpack.c.h.b16 %v1188
  %v4747 = vunpack.c.l.b16 %v1189
  %v4748 = vunpack.c.h.b16 %v1189
  %v4749 = vunpack.c.l.b16 %v1190
  %v4750 = vunpack.c.l.b16 %v1191
  %v4751 = vunpack.c.h.b16 %v1191
  %v4752 = vunpack.c.l.b16 %v1192
  %v4753 = vunpack.c.h.b16 %v1192
  %v4754 = vunpack.c.l.b16 %v1193
  %v4755 = vunpack.c.h.b16 %v1193
  %v4756 = vunpack.c.l.b16 %v1194
  %v4757 = vunpack.c.l.b16 %v1195
  %v4758 = vunpack.c.h.b16 %v1195
  %v4759 = vunpack.c.l.b16 %v1196
  %v4760 = vunpack.c.h.b16 %v1196
  %v4761 = vunpack.c.l.b16 %v1197
  %v4762 = vunpack.c.h.b16 %v1197
  %v4763 = vunpack.c.l.b16 %v1198
  %v4764 = vunpack.c.l.b16 %v1199
  %v4765 = vunpack.c.h.b16 %v1199
  %v4766 = vunpack.c.l.b16 %v1200
  %v4767 = vunpack.c.h.b16 %v1200
  %v4768 = vunpack.c.l.b16 %v1201
  %v4769 = vunpack.c.h.b16 %v1201
  %v4770 = vunpack.c.l.b16 %v1202
  %v4771 = vunpack.c.l.b16 %v1203
  %v4772 = vunpack.c.h.b16 %v1203
  %v4773 = vunpack.c.l.b16 %v1204
  %v4774 = vunpack.c.h.b16 %v1204
  %v4775 = vunpack.c.l.b16 %v1205
  %v4776 = vunpack.c.h.b16 %v1205
  %v4777 = vunpack.c.l.b16 %v1206
  %v4778 = vunpack.c.l.b16 %v1207
  %v4779 = vunpack.c.h.b16 %v1207
  %v4780 = vunpack.c.l.b16 %v1208
  %v4781 = vunpack.c.h.b16 %v1208
  %v4782 = vunpack.c.l.b16 %v1209
  %v4783 = vunpack.c.h.b16 %v1209
  %v4784 = vunpack.c.l.b16 %v1210
  %v4785 = vunpack.c.l.b16 %v1211
  %v4786 = vunpack.c.h.b16 %v1211
  %v4787 = vunpack.c.l.b16 %v1212
  %v4788 = vunpack.c.h.b16 %v1212
  %v4789 = vunpack.c.l.b16 %v1213
  %v4790 = vunpack.c.h.b16 %v1213
  %v4791 = vunpack.c.l.b16 %v1214
  %v4792 = vunpack.c.l.b16 %v1215
  %v4793 = vunpack.c.h.b16 %v1215
  %v4794 = vunpack.c.l.b16 %v1216
  %v4795 = vunpack.c.h.b16 %v1216
  %v4796 = vunpack.c.l.b16 %v1217
  %v4797 = vunpack.c.h.b16 %v1217
  %v4798 = vunpack.c.l.b16 %v1218
  %v4799 = vunpack.c.l.b16 %v1219
  %v4800 = vunpack.c.h.b16 %v1219
  %v4801 = vunpack.c.l.b16 %v1220
  %v4802 = vunpack.c.h.b16 %v1220
  %v4803 = vunpack.c.l.b16 %v1221
  %v4804 = vunpack.c.h.b16 %v1221
  %v4805 = vunpack.c.l.b16 %v1222
  %v4806 = vunpack.c.l.b16 %v1223
  %v4807 = vunpack.c.h.b16 %v1223
  %v4808 = vunpack.c.l.b16 %v1224
  %v4809 = vunpack.c.h.b16 %v1224
  %v4810 = vunpack.c.l.b16 %v1225
  %v4811 = vunpack.c.h.b16 %v1225
  %v4812 = vunpack.c.l.b16 %v1226
  %v4813 = vunpack.c.l.b16 %v1227
  %v4814 = vunpack.c.h.b16 %v1227
  %v4815 = vunpack.c.l.b16 %v1228
  %v4816 = vunpack.c.h.b16 %v1228
  %v4817 = vunpack.c.l.b16 %v1229
  %v4818 = vunpack.c.h.b16 %v1229
  %v4819 = vunpack.c.l.b16 %v1230
  %v4820 = vunpack.c.l.b16 %v1231
  %v4821 = vunpack.c.h.b16 %v1231
  %v4822 = vunpack.c.l.b16 %v1232
  %v4823 = vunpack.c.h.b16 %v1232
  %v4824 = vunpack.c.l.b16 %v1233
  %v4825 = vunpack.c.h.b16 %v1233
  %v4826 = vunpack.c.l.b16 %v1234
  %v4827 = vunpack.c.l.b16 %v1235
  %v4828 = vunpack.c.h.b16 %v1235
  %v4829 = vunpack.c.l.b16 %v1236
  %v4830 = vunpack.c.h.b16 %v1236
  %v4831 = vunpack.c.l.b16 %v1237
  %v4832 = vunpack.c.h.b16 %v1237
  %v4833 = vunpack.c.l.b16 %v1238
  %v4834 = vunpack.c.l.b16 %v1239
  %v4835 = vunpack.c.h.b16 %v1239
  %v4836 = vunpack.c.l.b16 %v1240
  %v4837 = vunpack.c.h.b16 %v1240
  %v4838 = vunpack.c.l.b16 %v1241
  %v4839 = vunpack.c.h.b16 %v1241
  %v4840 = vunpack.c.l.b16 %v1242
  %v4841 = vunpack.c.l.b16 %v1243
  %v4842 = vunpack.c.h.b16 %v1243
  %v4843 = vunpack.c.l.b16 %v1244
  %v4844 = vunpack.c.h.b16 %v1244
  %v4845 = vunpack.c.l.b16 %v1245
  %v4846 = vunpack.c.h.b16 %v1245
  %v4847 = vunpack.c.l.b16 %v1246
  %v4848 = vunpack.c.l.b16 %v1247
  %v4849 = vunpack.c.h.b16 %v1247
  %v4850 = vunpack.c.l.b16 %v1248
  %v4851 = vunpack.c.h.b16 %v1248
  %v4852 = vunpack.c.l.b16 %v1249
  %v4853 = vunpack.c.h.b16 %v1249
  %v4854 = vunpack.c.l.b16 %v1250
  %v4855 = vunpack.c.l.b16 %v1251
  %v4856 = vunpack.c.h.b16 %v1251
  %v4857 = vunpack.c.l.b16 %v1252
  %v4858 = vunpack.c.h.b16 %v1252
  %v4859 = vunpack.c.l.b16 %v1253
  %v4860 = vunpack.c.h.b16 %v1253
  %v4861 = vunpack.c.l.b16 %v1254
  %v4862 = vunpack.c.l.b16 %v1255
  %v4863 = vunpack.c.h.b16 %v1255
  %v4864 = vunpack.c.l.b16 %v1256
  %v4865 = vunpack.c.h.b16 %v1256
  %v4866 = vunpack.c.l.b16 %v1257
  %v4867 = vunpack.c.h.b16 %v1257
  %v4868 = vunpack.c.l.b16 %v1258
  %v4869 = vunpack.c.l.b16 %v1259
  %v4870 = vunpack.c.h.b16 %v1259
  %v4871 = vunpack.c.l.b16 %v1260
  %v4872 = vunpack.c.h.b16 %v1260
  %v4873 = vunpack.c.l.b16 %v1261
  %v4874 = vunpack.c.h.b16 %v1261
  %v4875 = vunpack.c.l.b16 %v1262
  %v4876 = vunpack.c.l.b16 %v1263
  %v4877 = vunpack.c.h.b16 %v1263
  %v4878 = vunpack.c.l.b16 %v1264
  %v4879 = vunpack.c.h.b16 %v1264
  %v4880 = vunpack.c.l.b16 %v1265
  %v4881 = vunpack.c.h.b16 %v1265
  %v4882 = vunpack.c.l.b16 %v1266
  %v4883 = vunpack.c.l.b16 %v1267
  %v4884 = vunpack.c.h.b16 %v1267
  %v4885 = vunpack.c.l.b16 %v1268
  %v4886 = vunpack.c.h.b16 %v1268
  %v4887 = vunpack.c.l.b16 %v1269
  %v4888 = vunpack.c.h.b16 %v1269
  %v4889 = vunpack.c.l.b16 %v1270
  %v4890 = vunpack.c.l.b16 %v1271
  %v4891 = vunpack.c.h.b16 %v1271
  %v4892 = vunpack.c.l.b16 %v1272
  %v4893 = vunpack.c.h.b16 %v1272
  %v4894 = vunpack.c.l.b16 %v1273
  %v4895 = vunpack.c.h.b16 %v1273
  %v4896 = vunpack.c.l.b16 %v1274
  %v4897 = vunpack.c.l.b16 %v1275
  %v4898 = vunpack.c.h.b16 %v1275
  %v4899 = vunpack.c.l.b16 %v1276
  %v4900 = vunpack.c.h.b16 %v1276
  %v4901 = vunpack.c.l.b16 %v1277
  %v4902 = vunpack.c.h.b16 %v1277
  %v4903 = vunpack.c.l.b16 %v1278
  %v4904 = vunpack.c.l.b16 %v1279
  %v4905 = vunpack.c.h.b16 %v1279
  %v4906 = vunpack.c.l.b16 %v1280
  %v4907 = vunpack.c.h.b16 %v1280
  %v4908 = vunpack.c.l.b16 %v1281
  %v4909 = vunpack.c.h.b16 %v1281
  %v4910 = vunpack.c.l.b16 %v1282
  %v4911 = vunpack.c.l.b16 %v1283
  %v4912 = vunpack.c.h.b16 %v1283
  %v4913 = vunpack.c.l.b16 %v1284
  %v4914 = vunpack.c.h.b16 %v1284
  %v4915 = vunpack.c.l.b16 %v1285
  %v4916 = vunpack.c.h.b16 %v1285
  %v4917 = vunpack.c.l.b16 %v1286
  %v4918 = vunpack.c.l.b16 %v1287
  %v4919 = vunpack.c.h.b16 %v1287
  %v4920 = vunpack.c.l.b16 %v1288
  %v4921 = vunpack.c.h.b16 %v1288
  %v4922 = vunpack.c.l.b16 %v1289
  %v4923 = vunpack.c.h.b16 %v1289
  %v4924 = vunpack.c.l.b16 %v1290
  %v4925 = vunpack.c.l.b16 %v1291
  %v4926 = vunpack.c.h.b16 %v1291
  %v4927 = vunpack.c.l.b16 %v1292
  %v4928 = vunpack.c.h.b16 %v1292
  %v4929 = vunpack.c.l.b16 %v1293
  %v4930 = vunpack.c.h.b16 %v1293
  %v4931 = vunpack.c.l.b16 %v1294
  %v4932 = vunpack.c.l.b16 %v1295
  %v4933 = vunpack.c.h.b16 %v1295
  %v4934 = vunpack.c.l.b16 %v1296
  %v4935 = vunpack.c.h.b16 %v1296
  %v4936 = vunpack.c.l.b16 %v1297
  %v4937 = vunpack.c.h.b16 %v1297
  %v4938 = vunpack.c.l.b16 %v1298
  %v4939 = vunpack.c.l.b16 %v1299
  %v4940 = vunpack.c.h.b16 %v1299
  %v4941 = vunpack.c.l.b16 %v1300
  %v4942 = vunpack.c.h.b16 %v1300
  %v4943 = vunpack.c.l.b16 %v1301
  %v4944 = vunpack.c.h.b16 %v1301
  %v4945 = vunpack.c.l.b16 %v1302
  %v4946 = vunpack.c.l.b16 %v1303
  %v4947 = vunpack.c.h.b16 %v1303
  %v4948 = vunpack.c.l.b16 %v1304
  %v4949 = vunpack.c.h.b16 %v1304
  %v4950 = vunpack.c.l.b16 %v1305
  %v4951 = vunpack.c.h.b16 %v1305
  %v4952 = vunpack.c.l.b16 %v1306
  %v4953 = vunpack.c.l.b16 %v1307
  %v4954 = vunpack.c.h.b16 %v1307
  %v4955 = vunpack.c.l.b16 %v1308
  %v4956 = vunpack.c.h.b16 %v1308
  %v4957 = vunpack.c.l.b16 %v1309
  %v4958 = vunpack.c.h.b16 %v1309
  %v4959 = vunpack.c.l.b16 %v1310
  %v4960 = vunpack.c.l.b16 %v1311
  %v4961 = vunpack.c.h.b16 %v1311
  %v4962 = vunpack.c.l.b16 %v1312
  %v4963 = vunpack.c.h.b16 %v1312
  %v4964 = vunpack.c.l.b16 %v1313
  %v4965 = vunpack.c.h.b16 %v1313
  %v4966 = vunpack.c.l.b16 %v1314
  %v4967 = vunpack.c.l.b16 %v1315
  %v4968 = vunpack.c.h.b16 %v1315
  %v4969 = vunpack.c.l.b16 %v1316
  %v4970 = vunpack.c.h.b16 %v1316
  %v4971 = vunpack.c.l.b16 %v1317
  %v4972 = vunpack.c.h.b16 %v1317
  %v4973 = vunpack.c.l.b16 %v1318
  %v4974 = vunpack.c.l.b16 %v1319
  %v4975 = vunpack.c.h.b16 %v1319
  %v4976 = vunpack.c.l.b16 %v1320
  %v4977 = vunpack.c.h.b16 %v1320
  %v4978 = vunpack.c.l.b16 %v1321
  %v4979 = vunpack.c.h.b16 %v1321
  %v4980 = vunpack.c.l.b16 %v1322
  %v4981 = vunpack.c.l.b16 %v1323
  %v4982 = vunpack.c.h.b16 %v1323
  %v4983 = vunpack.c.l.b16 %v1324
  %v4984 = vunpack.c.h.b16 %v1324
  %v4985 = vunpack.c.l.b16 %v1325
  %v4986 = vunpack.c.h.b16 %v1325
  %v4987 = vunpack.c.l.b16 %v1326
  %v4988 = vunpack.c.l.b16 %v1327
  %v4989 = vunpack.c.h.b16 %v1327
  %v4990 = vunpack.c.l.b16 %v1328
  %v4991 = vunpack.c.h.b16 %v1328
  %v4992 = vunpack.c.l.b16 %v1329
  %v4993 = vunpack.c.h.b16 %v1329
  %v4994 = vunpack.c.l.b16 %v1330
  %v4995 = vunpack.c.l.b16 %v1331
  %v4996 = vunpack.c.h.b16 %v1331
  %v4997 = vunpack.c.l.b16 %v1332
  %v4998 = vunpack.c.h.b16 %v1332
  %v4999 = vunpack.c.l.b16 %v1333
  %v5000 = vunpack.c.h.b16 %v1333
  %v5001 = vunpack.c.l.b16 %v1334
  %v5002 = vunpack.c.l.b16 %v1335
  %v5003 = vunpack.c.h.b16 %v1335
  %v5004 = vunpack.c.l.b16 %v1336
  %v5005 = vunpack.c.h.b16 %v1336
  %v5006 = vunpack.c.l.b16 %v1337
  %v5007 = vunpack.c.h.b16 %v1337
  %v5008 = vunpack.c.l.b16 %v1338
  %v5009 = vunpack.c.l.b16 %v1339
  %v5010 = vunpack.c.h.b16 %v1339
  %v5011 = vunpack.c.l.b16 %v1340
  %v5012 = vunpack.c.h.b16 %v1340
  %v5013 = vunpack.c.l.b16 %v1341
  %v5014 = vunpack.c.h.b16 %v1341
  %v5015 = vunpack.c.l.b16 %v1342
  %v5016 = vunpack.c.l.b16 %v1343
  %v5017 = vunpack.c.h.b16 %v1343
  %v5018 = vunpack.c.l.b16 %v1344
  %v5019 = vunpack.c.h.b16 %v1344
  %v5020 = vunpack.c.l.b16 %v1345
  %v5021 = vunpack.c.h.b16 %v1345
  %v5022 = vunpack.c.l.b16 %v1346
  %v5023 = vunpack.c.l.b16 %v1347
  %v5024 = vunpack.c.h.b16 %v1347
  %v5025 = vunpack.c.l.b16 %v1348
  %v5026 = vunpack.c.h.b16 %v1348
  %v5027 = vunpack.c.l.b16 %v1349
  %v5028 = vunpack.c.h.b16 %v1349
  %v5029 = vunpack.c.l.b16 %v1350
  %v5030 = vunpack.c.l.b16 %v1351
  %v5031 = vunpack.c.h.b16 %v1351
  %v5032 = vunpack.c.l.b16 %v1352
  %v5033 = vunpack.c.h.b16 %v1352
  %v5034 = vunpack.c.l.b16 %v1353
  %v5035 = vunpack.c.h.b16 %v1353
  %v5036 = vunpack.c.l.b16 %v1354
  %v5037 = vunpack.c.l.b16 %v1355
  %v5038 = vunpack.c.h.b16 %v1355
  %v5039 = vunpack.c.l.b16 %v1356
  %v5040 = vunpack.c.h.b16 %v1356
  %v5041 = vunpack.c.l.b16 %v1357
  %v5042 = vunpack.c.h.b16 %v1357
  %v5043 = vunpack.c.l.b16 %v1358
  %v5044 = vunpack.c.l.b16 %v1359
  %v5045 = vunpack.c.h.b16 %v1359
  %v5046 = vunpack.c.l.b16 %v1360
  %v5047 = vunpack.c.h.b16 %v1360
  %v5048 = vunpack.c.l.b16 %v1361
  %v5049 = vunpack.c.h.b16 %v1361
  %v5050 = vunpack.c.l.b16 %v1362
  %v5051 = vunpack.c.l.b16 %v1363
  %v5052 = vunpack.c.h.b16 %v1363
  %v5053 = vunpack.c.l.b16 %v1364
  %v5054 = vunpack.c.h.b16 %v1364
  %v5055 = vunpack.c.l.b16 %v1365
  %v5056 = vunpack.c.h.b16 %v1365
  %v5057 = vunpack.c.l.b16 %v1366
  %v5058 = vunpack.c.l.b16 %v1367
  %v5059 = vunpack.c.h.b16 %v1367
  %v5060 = vunpack.c.l.b16 %v1368
  %v5061 = vunpack.c.h.b16 %v1368
  %v5062 = vunpack.c.l.b16 %v1369
  %v5063 = vunpack.c.h.b16 %v1369
  %v5064 = vunpack.c.l.b16 %v1370
  %v5065 = vunpack.c.l.b16 %v1371
  %v5066 = vunpack.c.h.b16 %v1371
  %v5067 = vunpack.c.l.b16 %v1372
  %v5068 = vunpack.c.h.b16 %v1372
  %v5069 = vunpack.c.l.b16 %v1373
  %v5070 = vunpack.c.h.b16 %v1373
  %v5071 = vunpack.c.l.b16 %v1374
  %v5072 = vunpack.c.l.b16 %v1375
  %v5073 = vunpack.c.h.b16 %v1375
  %v5074 = vunpack.c.l.b16 %v1376
  %v5075 = vunpack.c.h.b16 %v1376
  %v5076 = vunpack.c.l.b16 %v1377
  %v5077 = vunpack.c.h.b16 %v1377
  %v5078 = vunpack.c.l.b16 %v1378
  %v5079 = vunpack.c.l.b16 %v1379
  %v5080 = vunpack.c.h.b16 %v1379
  %v5081 = vunpack.c.l.b16 %v1380
  %v5082 = vunpack.c.h.b16 %v1380
  %v5083 = vunpack.c.l.b16 %v1381
  %v5084 = vunpack.c.h.b16 %v1381
  %v5085 = vunpack.c.l.b16 %v1382
  %v5086 = vunpack.c.l.b16 %v1383
  %v5087 = vunpack.c.h.b16 %v1383
  %v5088 = vunpack.c.l.b16 %v1384
  %v5089 = vunpack.c.h.b16 %v1384
  %v5090 = vunpack.c.l.b16 %v1385
  %v5091 = vunpack.c.h.b16 %v1385
  %v5092 = vunpack.c.l.b16 %v1386
  %v5093 = vunpack.c.l.b16 %v1387
  %v5094 = vunpack.c.h.b16 %v1387
  %v5095 = vunpack.c.l.b16 %v1388
  %v5096 = vunpack.c.h.b16 %v1388
  %v5097 = vunpack.c.l.b16 %v1389
  %v5098 = vunpack.c.h.b16 %v1389
  %v5099 = vunpack.c.l.b16 %v1390
  %v5100 = vunpack.c.l.b16 %v1391
  %v5101 = vunpack.c.h.b16 %v1391
  %v5102 = vunpack.c.l.b16 %v1392
  %v5103 = vunpack.c.h.b16 %v1392
  %v5104 = vunpack.c.l.b16 %v1393
  %v5105 = vunpack.c.h.b16 %v1393
  %v5106 = vunpack.c.l.b16 %v1394
  %v5107 = vunpack.c.l.b16 %v1395
  %v5108 = vunpack.c.h.b16 %v1395
  %v5109 = vunpack.c.l.b16 %v1396
  %v5110 = vunpack.c.h.b16 %v1396
  %v5111 = vunpack.c.l.b16 %v1397
  %v5112 = vunpack.c.h.b16 %v1397
  %v5113 = vunpack.c.l.b16 %v1398
  %v5114 = vunpack.c.l.b16 %v1399
  %v5115 = vunpack.c.h.b16 %v1399
  %v5116 = vunpack.c.l.b16 %v1400
  %v5117 = vunpack.c.h.b16 %v1400
  %v5118 = vunpack.c.l.b16 %v1401
  %v5119 = vunpack.c.h.b16 %v1401
  %v5120 = vunpack.c.l.b16 %v1402
  %v5121 = vunpack.c.l.b16 %v1403
  %v5122 = vunpack.c.h.b16 %v1403
  %v5123 = vunpack.c.l.b16 %v1404
  %v5124 = vunpack.c.h.b16 %v1404
  %v5125 = vunpack.c.l.b16 %v1405
  %v5126 = vunpack.c.h.b16 %v1405
  %v5127 = vunpack.c.l.b16 %v1406
  %v5128 = vunpack.c.l.b16 %v1407
  %v5129 = vunpack.c.h.b16 %v1407
  %v5130 = vunpack.c.l.b16 %v1408
  %v5131 = vunpack.c.h.b16 %v1408
  %v5132 = vunpack.c.l.b16 %v1409
  %v5133 = vunpack.c.h.b16 %v1409
  %v5134 = vunpack.c.l.b16 %v1410
  %v5135 = vpack.c.b16 %v2776, %v2769
  %v5136 = vpack.c.b16 %v2777, %v2770
  %v5137 = vpack.c.b16 %v2778, %v2771
  %v5138 = vpack.c.b16 %v2779, %v2772
  %v5139 = vpack.c.b16 %v2780, %v2773
  %v5140 = vpack.c.b16 %v2781, %v2774
  %v5141 = vpack.c.b16 %v2782, %v2775
  %v5142 = vpack.c.b16 %v2790, %v2783
  %v5143 = vpack.c.b16 %v2791, %v2784
  %v5144 = vpack.c.b16 %v2792, %v2785
  %v5145 = vpack.c.b16 %v2793, %v2786
  %v5146 = vpack.c.b16 %v2794, %v2787
  %v5147 = vpack.c.b16 %v2795, %v2788
  %v5148 = vpack.c.b16 %v2796, %v2789
  %v5149 = vpack.c.b16 %v2804, %v2797
  %v5150 = vpack.c.b16 %v2805, %v2798
  %v5151 = vpack.c.b16 %v2806, %v2799
  %v5152 = vpack.c.b16 %v2807, %v2800
  %v5153 = vpack.c.b16 %v2808, %v2801
  %v5154 = vpack.c.b16 %v2809, %v2802
  %v5155 = vpack.c.b16 %v2810, %v2803
  %v5156 = vpack.c.b16 %v2818, %v2811
  %v5157 = vpack.c.b16 %v2819, %v2812
  %v5158 = vpack.c.b16 %v2820, %v2813
  %v5159 = vpack.c.b16 %v2821, %v2814
  %v5160 = vpack.c.b16 %v2822, %v2815
  %v5161 = vpack.c.b16 %v2823, %v2816
  %v5162 = vpack.c.b16 %v2824, %v2817
  %v5163 = vpack.c.b16 %v2832, %v2825
  %v5164 = vpack.c.b16 %v2833, %v2826
  %v5165 = vpack.c.b16 %v2834, %v2827
  %v5166 = vpack.c.b16 %v2835, %v2828
  %v5167 = vpack.c.b16 %v2836, %v2829
  %v5168 = vpack.c.b16 %v2837, %v2830
  %v5169 = vpack.c.b16 %v2838, %v2831
  %v5170 = vpack.c.b16 %v2846, %v2839
  %v5171 = vpack.c.b16 %v2847, %v2840
  %v5172 = vpack.c.b16 %v2848, %v2841
  %v5173 = vpack.c.b16 %v2849, %v2842
  %v5174 = vpack.c.b16 %v2850, %v2843
  %v5175 = vpack.c.b16 %v2851, %v2844
  %v5176 = vpack.c.b16 %v2852, %v2845
  %v5177 = vpack.c.b16 %v2860, %v2853
  %v5178 = vpack.c.b16 %v2861, %v2854
  %v5179 = vpack.c.b16 %v2862, %v2855
  %v5180 = vpack.c.b16 %v2863, %v2856
  %v5181 = vpack.c.b16 %v2864, %v2857
  %v5182 = vpack.c.b16 %v2865, %v2858
  %v5183 = vpack.c.b16 %v2866, %v2859
  %v5184 = vpack.c.b16 %v2874, %v2867
  %v5185 = vpack.c.b16 %v2875, %v2868
  %v5186 = vpack.c.b16 %v2876, %v2869
  %v5187 = vpack.c.b16 %v2877, %v2870
  %v5188 = vpack.c.b16 %v2878, %v2871
  %v5189 = vpack.c.b16 %v2879, %v2872
  %v5190 = vpack.c.b16 %v2880, %v2873
  %v5191 = vpack.c.b16 %v2888, %v2881
  %v5192 = vpack.c.b16 %v2889, %v2882
  %v5193 = vpack.c.b16 %v2890, %v2883
  %v5194 = vpack.c.b16 %v2891, %v2884
  %v5195 = vpack.c.b16 %v2892, %v2885
  %v5196 = vpack.c.b16 %v2893, %v2886
  %v5197 = vpack.c.b16 %v2894, %v2887
  %v5198 = vpack.c.b16 %v2902, %v2895
  %v5199 = vpack.c.b16 %v2903, %v2896
  %v5200 = vpack.c.b16 %v2904, %v2897
  %v5201 = vpack.c.b16 %v2905, %v2898
  %v5202 = vpack.c.b16 %v2906, %v2899
  %v5203 = vpack.c.b16 %v2907, %v2900
  %v5204 = vpack.c.b16 %v2908, %v2901
  %v5205 = vpack.c.b16 %v2916, %v2909
  %v5206 = vpack.c.b16 %v2917, %v2910
  %v5207 = vpack.c.b16 %v2918, %v2911
  %v5208 = vpack.c.b16 %v2919, %v2912
  %v5209 = vpack.c.b16 %v2920, %v2913
  %v5210 = vpack.c.b16 %v2921, %v2914
  %v5211 = vpack.c.b16 %v2922, %v2915
  %v5212 = vpack.c.b16 %v2930, %v2923
  %v5213 = vpack.c.b16 %v2931, %v2924
  %v5214 = vpack.c.b16 %v2932, %v2925
  %v5215 = vpack.c.b16 %v2933, %v2926
  %v5216 = vpack.c.b16 %v2934, %v2927
  %v5217 = vpack.c.b16 %v2935, %v2928
  %v5218 = vpack.c.b16 %v2936, %v2929
  %v5219 = vpack.c.b16 %v2944, %v2937
  %v5220 = vpack.c.b16 %v2945, %v2938
  %v5221 = vpack.c.b16 %v2946, %v2939
  %v5222 = vpack.c.b16 %v2947, %v2940
  %v5223 = vpack.c.b16 %v2948, %v2941
  %v5224 = vpack.c.b16 %v2949, %v2942
  %v5225 = vpack.c.b16 %v2950, %v2943
  %v5226 = vpack.c.b16 %v2958, %v2951
  %v5227 = vpack.c.b16 %v2959, %v2952
  %v5228 = vpack.c.b16 %v2960, %v2953
  %v5229 = vpack.c.b16 %v2961, %v2954
  %v5230 = vpack.c.b16 %v2962, %v2955
  %v5231 = vpack.c.b16 %v2963, %v2956
  %v5232 = vpack.c.b16 %v2964, %v2957
  %v5233 = vpack.c.b16 %v2972, %v2965
  %v5234 = vpack.c.b16 %v2973, %v2966
  %v5235 = vpack.c.b16 %v2974, %v2967
  %v5236 = vpack.c.b16 %v2975, %v2968
  %v5237 = vpack.c.b16 %v2976, %v2969
  %v5238 = vpack.c.b16 %v2977, %v2970
  %v5239 = vpack.c.b16 %v2978, %v2971
  %v5240 = vpack.c.b16 %v2986, %v2979
  %v5241 = vpack.c.b16 %v2987, %v2980
  %v5242 = vpack.c.b16 %v2988, %v2981
  %v5243 = vpack.c.b16 %v2989, %v2982
  %v5244 = vpack.c.b16 %v2990, %v2983
  %v5245 = vpack.c.b16 %v2991, %v2984
  %v5246 = vpack.c.b16 %v2992, %v2985
  %v5247 = vpack.c.b16 %v3000, %v2993
  %v5248 = vpack.c.b16 %v3001, %v2994
  %v5249 = vpack.c.b16 %v3002, %v2995
  %v5250 = vpack.c.b16 %v3003, %v2996
  %v5251 = vpack.c.b16 %v3004, %v2997
  %v5252 = vpack.c.b16 %v3005, %v2998
  %v5253 = vpack.c.b16 %v3006, %v2999
  %v5254 = vpack.c.b16 %v3014, %v3007
  %v5255 = vpack.c.b16 %v3015, %v3008
  %v5256 = vpack.c.b16 %v3016, %v3009
  %v5257 = vpack.c.b16 %v3017, %v3010
  %v5258 = vpack.c.b16 %v3018, %v3011
  %v5259 = vpack.c.b16 %v3019, %v3012
  %v5260 = vpack.c.b16 %v3020, %v3013
  %v5261 = vpack.c.b16 %v3028, %v3021
  %v5262 = vpack.c.b16 %v3029, %v3022
  %v5263 = vpack.c.b16 %v3030, %v3023
  %v5264 = vpack.c.b16 %v3031, %v3024
  %v5265 = vpack.c.b16 %v3032, %v3025
  %v5266 = vpack.c.b16 %v3033, %v3026
  %v5267 = vpack.c.b16 %v3034, %v3027
  %v5268 = vpack.c.b16 %v3042, %v3035
  %v5269 = vpack.c.b16 %v3043, %v3036
  %v5270 = vpack.c.b16 %v3044, %v3037
  %v5271 = vpack.c.b16 %v3045, %v3038
  %v5272 = vpack.c.b16 %v3046, %v3039
  %v5273 = vpack.c.b16 %v3047, %v3040
  %v5274 = vpack.c.b16 %v3048, %v3041
  %v5275 = vpack.c.b16 %v3056, %v3049
  %v5276 = vpack.c.b16 %v3057, %v3050
  %v5277 = vpack.c.b16 %v3058, %v3051
  %v5278 = vpack.c.b16 %v3059, %v3052
  %v5279 = vpack.c.b16 %v3060, %v3053
  %v5280 = vpack.c.b16 %v3061, %v3054
  %v5281 = vpack.c.b16 %v3062, %v3055
  %v5282 = vpack.c.b16 %v3070, %v3063
  %v5283 = vpack.c.b16 %v3071, %v3064
  %v5284 = vpack.c.b16 %v3072, %v3065
  %v5285 = vpack.c.b16 %v3073, %v3066
  %v5286 = vpack.c.b16 %v3074, %v3067
  %v5287 = vpack.c.b16 %v3075, %v3068
  %v5288 = vpack.c.b16 %v3076, %v3069
  %v5289 = vpack.c.b16 %v3084, %v3077
  %v5290 = vpack.c.b16 %v3085, %v3078
  %v5291 = vpack.c.b16 %v3086, %v3079
  %v5292 = vpack.c.b16 %v3087, %v3080
  %v5293 = vpack.c.b16 %v3088, %v3081
  %v5294 = vpack.c.b16 %v3089, %v3082
  %v5295 = vpack.c.b16 %v3090, %v3083
  %v5296 = vpack.c.b16 %v3098, %v3091
  %v5297 = vpack.c.b16 %v3099, %v3092
  %v5298 = vpack.c.b16 %v3100, %v3093
  %v5299 = vpack.c.b16 %v3101, %v3094
  %v5300 = vpack.c.b16 %v3102, %v3095
  %v5301 = vpack.c.b16 %v3103, %v3096
  %v5302 = vpack.c.b16 %v3104, %v3097
  %v5303 = vpack.c.b16 %v3112, %v3105
  %v5304 = vpack.c.b16 %v3113, %v3106
  %v5305 = vpack.c.b16 %v3114, %v3107
  %v5306 = vpack.c.b16 %v3115, %v3108
  %v5307 = vpack.c.b16 %v3116, %v3109
  %v5308 = vpack.c.b16 %v3117, %v3110
  %v5309 = vpack.c.b16 %v3118, %v3111
  %v5310 = vpack.c.b16 %v3126, %v3119
  %v5311 = vpack.c.b16 %v3127, %v3120
  %v5312 = vpack.c.b16 %v3128, %v3121
  %v5313 = vpack.c.b16 %v3129, %v3122
  %v5314 = vpack.c.b16 %v3130, %v3123
  %v5315 = vpack.c.b16 %v3131, %v3124
  %v5316 = vpack.c.b16 %v3132, %v3125
  %v5317 = vpack.c.b16 %v3140, %v3133
  %v5318 = vpack.c.b16 %v3141, %v3134
  %v5319 = vpack.c.b16 %v3142, %v3135
  %v5320 = vpack.c.b16 %v3143, %v3136
  %v5321 = vpack.c.b16 %v3144, %v3137
  %v5322 = vpack.c.b16 %v3145, %v3138
  %v5323 = vpack.c.b16 %v3146, %v3139
  %v5324 = vpack.c.b16 %v3154, %v3147
  %v5325 = vpack.c.b16 %v3155, %v3148
  %v5326 = vpack.c.b16 %v3156, %v3149
  %v5327 = vpack.c.b16 %v3157, %v3150
  %v5328 = vpack.c.b16 %v3158, %v3151
  %v5329 = vpack.c.b16 %v3159, %v3152
  %v5330 = vpack.c.b16 %v3160, %v3153
  %v5331 = vpack.c.b16 %v3168, %v3161
  %v5332 = vpack.c.b16 %v3169, %v3162
  %v5333 = vpack.c.b16 %v3170, %v3163
  %v5334 = vpack.c.b16 %v3171, %v3164
  %v5335 = vpack.c.b16 %v3172, %v3165
  %v5336 = vpack.c.b16 %v3173, %v3166
  %v5337 = vpack.c.b16 %v3174, %v3167
  %v5338 = vpack.c.b16 %v3182, %v3175
  %v5339 = vpack.c.b16 %v3183, %v3176
  %v5340 = vpack.c.b16 %v3184, %v3177
  %v5341 = vpack.c.b16 %v3185, %v3178
  %v5342 = vpack.c.b16 %v3186, %v3179
  %v5343 = vpack.c.b16 %v3187, %v3180
  %v5344 = vpack.c.b16 %v3188, %v3181
  %v5345 = vpack.c.b16 %v3196, %v3189
  %v5346 = vpack.c.b16 %v3197, %v3190
  %v5347 = vpack.c.b16 %v3198, %v3191
  %v5348 = vpack.c.b16 %v3199, %v3192
  %v5349 = vpack.c.b16 %v3200, %v3193
  %v5350 = vpack.c.b16 %v3201, %v3194
  %v5351 = vpack.c.b16 %v3202, %v3195
  %v5352 = vpack.c.b16 %v3210, %v3203
  %v5353 = vpack.c.b16 %v3211, %v3204
  %v5354 = vpack.c.b16 %v3212, %v3205
  %v5355 = vpack.c.b16 %v3213, %v3206
  %v5356 = vpack.c.b16 %v3214, %v3207
  %v5357 = vpack.c.b16 %v3215, %v3208
  %v5358 = vpack.c.b16 %v3216, %v3209
  %v5359 = vpack.c.b16 %v3224, %v3217
  %v5360 = vpack.c.b16 %v3225, %v3218
  %v5361 = vpack.c.b16 %v3226, %v3219
  %v5362 = vpack.c.b16 %v3227, %v3220
  %v5363 = vpack.c.b16 %v3228, %v3221
  %v5364 = vpack.c.b16 %v3229, %v3222
  %v5365 = vpack.c.b16 %v3230, %v3223
  %v5366 = vpack.c.b16 %v3238, %v3231
  %v5367 = vpack.c.b16 %v3239, %v3232
  %v5368 = vpack.c.b16 %v3240, %v3233
  %v5369 = vpack.c.b16 %v3241, %v3234
  %v5370 = vpack.c.b16 %v3242, %v3235
  %v5371 = vpack.c.b16 %v3243, %v3236
  %v5372 = vpack.c.b16 %v3244, %v3237
  %v5373 = vpack.c.b16 %v3252, %v3245
  %v5374 = vpack.c.b16 %v3253, %v3246
  %v5375 = vpack.c.b16 %v3254, %v3247
  %v5376 = vpack.c.b16 %v3255, %v3248
  %v5377 = vpack.c.b16 %v3256, %v3249
  %v5378 = vpack.c.b16 %v3257, %v3250
  %v5379 = vpack.c.b16 %v3258, %v3251
  %v5380 = vpack.c.b16 %v3266, %v3259
  %v5381 = vpack.c.b16 %v3267, %v3260
  %v5382 = vpack.c.b16 %v3268, %v3261
  %v5383 = vpack.c.b16 %v3269, %v3262
  %v5384 = vpack.c.b16 %v3270, %v3263
  %v5385 = vpack.c.b16 %v3271, %v3264
  %v5386 = vpack.c.b16 %v3272, %v3265
  %v5387 = vpack.c.b16 %v3280, %v3273
  %v5388 = vpack.c.b16 %v3281, %v3274
  %v5389 = vpack.c.b16 %v3282, %v3275
  %v5390 = vpack.c.b16 %v3283, %v3276
  %v5391 = vpack.c.b16 %v3284, %v3277
  %v5392 = vpack.c.b16 %v3285, %v3278
  %v5393 = vpack.c.b16 %v3286, %v3279
  %v5394 = vpack.c.b16 %v3294, %v3287
  %v5395 = vpack.c.b16 %v3295, %v3288
  %v5396 = vpack.c.b16 %v3296, %v3289
  %v5397 = vpack.c.b16 %v3297, %v3290
  %v5398 = vpack.c.b16 %v3298, %v3291
  %v5399 = vpack.c.b16 %v3299, %v3292
  %v5400 = vpack.c.b16 %v3300, %v3293
  %v5401 = vpack.c.b16 %v3308, %v3301
  %v5402 = vpack.c.b16 %v3309, %v3302
  %v5403 = vpack.c.b16 %v3310, %v3303
  %v5404 = vpack.c.b16 %v3311, %v3304
  %v5405 = vpack.c.b16 %v3312, %v3305
  %v5406 = vpack.c.b16 %v3313, %v3306
  %v5407 = vpack.c.b16 %v3314, %v3307
  %v5408 = vpack.c.b16 %v3322, %v3315
  %v5409 = vpack.c.b16 %v3323, %v3316
  %v5410 = vpack.c.b16 %v3324, %v3317
  %v5411 = vpack.c.b16 %v3325, %v3318
  %v5412 = vpack.c.b16 %v3326, %v3319
  %v5413 = vpack.c.b16 %v3327, %v3320
  %v5414 = vpack.c.b16 %v3328, %v3321
  %v5415 = vpack.c.b16 %v3336, %v3329
  %v5416 = vpack.c.b16 %v3337, %v3330
  %v5417 = vpack.c.b16 %v3338, %v3331
  %v5418 = vpack.c.b16 %v3339, %v3332
  %v5419 = vpack.c.b16 %v3340, %v3333
  %v5420 = vpack.c.b16 %v3341, %v3334
  %v5421 = vpack.c.b16 %v3342, %v3335
  %v5422 = vpack.c.b16 %v3350, %v3343
  %v5423 = vpack.c.b16 %v3351, %v3344
  %v5424 = vpack.c.b16 %v3352, %v3345
  %v5425 = vpack.c.b16 %v3353, %v3346
  %v5426 = vpack.c.b16 %v3354, %v3347
  %v5427 = vpack.c.b16 %v3355, %v3348
  %v5428 = vpack.c.b16 %v3356, %v3349
  %v5429 = vpack.c.b16 %v3364, %v3357
  %v5430 = vpack.c.b16 %v3365, %v3358
  %v5431 = vpack.c.b16 %v3366, %v3359
  %v5432 = vpack.c.b16 %v3367, %v3360
  %v5433 = vpack.c.b16 %v3368, %v3361
  %v5434 = vpack.c.b16 %v3369, %v3362
  %v5435 = vpack.c.b16 %v3370, %v3363
  %v5436 = vpack.c.b16 %v3378, %v3371
  %v5437 = vpack.c.b16 %v3379, %v3372
  %v5438 = vpack.c.b16 %v3380, %v3373
  %v5439 = vpack.c.b16 %v3381, %v3374
  %v5440 = vpack.c.b16 %v3382, %v3375
  %v5441 = vpack.c.b16 %v3383, %v3376
  %v5442 = vpack.c.b16 %v3384, %v3377
  %v5443 = vpack.c.b16 %v3392, %v3385
  %v5444 = vpack.c.b16 %v3393, %v3386
  %v5445 = vpack.c.b16 %v3394, %v3387
  %v5446 = vpack.c.b16 %v3395, %v3388
  %v5447 = vpack.c.b16 %v3396, %v3389
  %v5448 = vpack.c.b16 %v3397, %v3390
  %v5449 = vpack.c.b16 %v3398, %v3391
  %v5450 = vpack.c.b16 %v3406, %v3399
  %v5451 = vpack.c.b16 %v3407, %v3400
  %v5452 = vpack.c.b16 %v3408, %v3401
  %v5453 = vpack.c.b16 %v3409, %v3402
  %v5454 = vpack.c.b16 %v3410, %v3403
  %v5455 = vpack.c.b16 %v3411, %v3404
  %v5456 = vpack.c.b16 %v3412, %v3405
  %v5457 = vpack.c.b16 %v3420, %v3413
  %v5458 = vpack.c.b16 %v3421, %v3414
  %v5459 = vpack.c.b16 %v3422, %v3415
  %v5460 = vpack.c.b16 %v3423, %v3416
  %v5461 = vpack.c.b16 %v3424, %v3417
  %v5462 = vpack.c.b16 %v3425, %v3418
  %v5463 = vpack.c.b16 %v3426, %v3419
  %v5464 = vpack.c.b16 %v3434, %v3427
  %v5465 = vpack.c.b16 %v3435, %v3428
  %v5466 = vpack.c.b16 %v3436, %v3429
  %v5467 = vpack.c.b16 %v3437, %v3430
  %v5468 = vpack.c.b16 %v3438, %v3431
  %v5469 = vpack.c.b16 %v3439, %v3432
  %v5470 = vpack.c.b16 %v3440, %v3433
  %v5471 = vpack.c.b16 %v3448, %v3441
  %v5472 = vpack.c.b16 %v3449, %v3442
  %v5473 = vpack.c.b16 %v3450, %v3443
  %v5474 = vpack.c.b16 %v3451, %v3444
  %v5475 = vpack.c.b16 %v3452, %v3445
  %v5476 = vpack.c.b16 %v3453, %v3446
  %v5477 = vpack.c.b16 %v3454, %v3447
  %v5478 = vpack.c.b16 %v3462, %v3455
  %v5479 = vpack.c.b16 %v3463, %v3456
  %v5480 = vpack.c.b16 %v3464, %v3457
  %v5481 = vpack.c.b16 %v3465, %v3458
  %v5482 = vpack.c.b16 %v3466, %v3459
  %v5483 = vpack.c.b16 %v3467, %v3460
  %v5484 = vpack.c.b16 %v3468, %v3461
  %v5485 = vpack.c.b16 %v3476, %v3469
  %v5486 = vpack.c.b16 %v3477, %v3470
  %v5487 = vpack.c.b16 %v3478, %v3471
  %v5488 = vpack.c.b16 %v3479, %v3472
  %v5489 = vpack.c.b16 %v3480, %v3473
  %v5490 = vpack.c.b16 %v3481, %v3474
  %v5491 = vpack.c.b16 %v3482, %v3475
  %v5492 = vpack.c.b16 %v3490, %v3483
  %v5493 = vpack.c.b16 %v3491, %v3484
  %v5494 = vpack.c.b16 %v3492, %v3485
  %v5495 = vpack.c.b16 %v3493, %v3486
  %v5496 = vpack.c.b16 %v3494, %v3487
  %v5497 = vpack.c.b16 %v3495, %v3488
  %v5498 = vpack.c.b16 %v3496, %v3489
  %v5499 = vpack.c.b16 %v3504, %v3497
  %v5500 = vpack.c.b16 %v3505, %v3498
  %v5501 = vpack.c.b16 %v3506, %v3499
  %v5502 = vpack.c.b16 %v3507, %v3500
  %v5503 = vpack.c.b16 %v3508, %v3501
  %v5504 = vpack.c.b16 %v3509, %v3502
  %v5505 = vpack.c.b16 %v3510, %v3503
  %v5506 = vpack.c.b16 %v3518, %v3511
  %v5507 = vpack.c.b16 %v3519, %v3512
  %v5508 = vpack.c.b16 %v3520, %v3513
  %v5509 = vpack.c.b16 %v3521, %v3514
  %v5510 = vpack.c.b16 %v3522, %v3515
  %v5511 = vpack.c.b16 %v3523, %v3516
  %v5512 = vpack.c.b16 %v3524, %v3517
  %v5513 = vpack.c.b16 %v3532, %v3525
  %v5514 = vpack.c.b16 %v3533, %v3526
  %v5515 = vpack.c.b16 %v3534, %v3527
  %v5516 = vpack.c.b16 %v3535, %v3528
  %v5517 = vpack.c.b16 %v3536, %v3529
  %v5518 = vpack.c.b16 %v3537, %v3530
  %v5519 = vpack.c.b16 %v3538, %v3531
  %v5520 = vpack.c.b16 %v3546, %v3539
  %v5521 = vpack.c.b16 %v3547, %v3540
  %v5522 = vpack.c.b16 %v3548, %v3541
  %v5523 = vpack.c.b16 %v3549, %v3542
  %v5524 = vpack.c.b16 %v3550, %v3543
  %v5525 = vpack.c.b16 %v3551, %v3544
  %v5526 = vpack.c.b16 %v3552, %v3545
  %v5527 = vpack.c.b16 %v3560, %v3553
  %v5528 = vpack.c.b16 %v3561, %v3554
  %v5529 = vpack.c.b16 %v3562, %v3555
  %v5530 = vpack.c.b16 %v3563, %v3556
  %v5531 = vpack.c.b16 %v3564, %v3557
  %v5532 = vpack.c.b16 %v3565, %v3558
  %v5533 = vpack.c.b16 %v3566, %v3559
  %v5534 = vpack.c.b16 %v3574, %v3567
  %v5535 = vpack.c.b16 %v3575, %v3568
  %v5536 = vpack.c.b16 %v3576, %v3569
  %v5537 = vpack.c.b16 %v3577, %v3570
  %v5538 = vpack.c.b16 %v3578, %v3571
  %v5539 = vpack.c.b16 %v3579, %v3572
  %v5540 = vpack.c.b16 %v3580, %v3573
  %v5541 = vpack.c.b16 %v3588, %v3581
  %v5542 = vpack.c.b16 %v3589, %v3582
  %v5543 = vpack.c.b16 %v3590, %v3583
  %v5544 = vpack.c.b16 %v3591, %v3584
  %v5545 = vpack.c.b16 %v3592, %v3585
  %v5546 = vpack.c.b16 %v3593, %v3586
  %v5547 = vpack.c.b16 %v3594, %v3587
  %v5548 = vpack.c.b16 %v3602, %v3595
  %v5549 = vpack.c.b16 %v3603, %v3596
  %v5550 = vpack.c.b16 %v3604, %v3597
  %v5551 = vpack.c.b16 %v3605, %v3598
  %v5552 = vpack.c.b16 %v3606, %v3599
  %v5553 = vpack.c.b16 %v3607, %v3600
  %v5554 = vpack.c.b16 %v3608, %v3601
  %v5555 = vpack.c.b16 %v3616, %v3609
  %v5556 = vpack.c.b16 %v3617, %v3610
  %v5557 = vpack.c.b16 %v3618, %v3611
  %v5558 = vpack.c.b16 %v3619, %v3612
  %v5559 = vpack.c.b16 %v3620, %v3613
  %v5560 = vpack.c.b16 %v3621, %v3614
  %v5561 = vpack.c.b16 %v3622, %v3615
  %v5562 = vpack.c.b16 %v3630, %v3623
  %v5563 = vpack.c.b16 %v3631, %v3624
  %v5564 = vpack.c.b16 %v3632, %v3625
  %v5565 = vpack.c.b16 %v3633, %v3626
  %v5566 = vpack.c.b16 %v3634, %v3627
  %v5567 = vpack.c.b16 %v3635, %v3628
  %v5568 = vpack.c.b16 %v3636, %v3629
  %v5569 = vpack.c.b16 %v3644, %v3637
  %v5570 = vpack.c.b16 %v3645, %v3638
  %v5571 = vpack.c.b16 %v3646, %v3639
  %v5572 = vpack.c.b16 %v3647, %v3640
  %v5573 = vpack.c.b16 %v3648, %v3641
  %v5574 = vpack.c.b16 %v3649, %v3642
  %v5575 = vpack.c.b16 %v3650, %v3643
  %v5576 = vpack.c.b16 %v3658, %v3651
  %v5577 = vpack.c.b16 %v3659, %v3652
  %v5578 = vpack.c.b16 %v3660, %v3653
  %v5579 = vpack.c.b16 %v3661, %v3654
  %v5580 = vpack.c.b16 %v3662, %v3655
  %v5581 = vpack.c.b16 %v3663, %v3656
  %v5582 = vpack.c.b16 %v3664, %v3657
  %v5583 = vpack.c.b16 %v3672, %v3665
  %v5584 = vpack.c.b16 %v3673, %v3666
  %v5585 = vpack.c.b16 %v3674, %v3667
  %v5586 = vpack.c.b16 %v3675, %v3668
  %v5587 = vpack.c.b16 %v3676, %v3669
  %v5588 = vpack.c.b16 %v3677, %v3670
  %v5589 = vpack.c.b16 %v3678, %v3671
  %v5590 = vpack.c.b16 %v3686, %v3679
  %v5591 = vpack.c.b16 %v3687, %v3680
  %v5592 = vpack.c.b16 %v3688, %v3681
  %v5593 = vpack.c.b16 %v3689, %v3682
  %v5594 = vpack.c.b16 %v3690, %v3683
  %v5595 = vpack.c.b16 %v3691, %v3684
  %v5596 = vpack.c.b16 %v3692, %v3685
  %v5597 = vpack.c.b16 %v3700, %v3693
  %v5598 = vpack.c.b16 %v3701, %v3694
  %v5599 = vpack.c.b16 %v3702, %v3695
  %v5600 = vpack.c.b16 %v3703, %v3696
  %v5601 = vpack.c.b16 %v3704, %v3697
  %v5602 = vpack.c.b16 %v3705, %v3698
  %v5603 = vpack.c.b16 %v3706, %v3699
  %v5604 = vpack.c.b16 %v3714, %v3707
  %v5605 = vpack.c.b16 %v3715, %v3708
  %v5606 = vpack.c.b16 %v3716, %v3709
  %v5607 = vpack.c.b16 %v3717, %v3710
  %v5608 = vpack.c.b16 %v3718, %v3711
  %v5609 = vpack.c.b16 %v3719, %v3712
  %v5610 = vpack.c.b16 %v3720, %v3713
  %v5611 = vpack.c.b16 %v3728, %v3721
  %v5612 = vpack.c.b16 %v3729, %v3722
  %v5613 = vpack.c.b16 %v3730, %v3723
  %v5614 = vpack.c.b16 %v3731, %v3724
  %v5615 = vpack.c.b16 %v3732, %v3725
  %v5616 = vpack.c.b16 %v3733, %v3726
  %v5617 = vpack.c.b16 %v3734, %v3727
  %v5618 = vpack.c.b16 %v3742, %v3735
  %v5619 = vpack.c.b16 %v3743, %v3736
  %v5620 = vpack.c.b16 %v3744, %v3737
  %v5621 = vpack.c.b16 %v3745, %v3738
  %v5622 = vpack.c.b16 %v3746, %v3739
  %v5623 = vpack.c.b16 %v3747, %v3740
  %v5624 = vpack.c.b16 %v3748, %v3741
  %v5625 = vpack.c.b16 %v3756, %v3749
  %v5626 = vpack.c.b16 %v3757, %v3750
  %v5627 = vpack.c.b16 %v3758, %v3751
  %v5628 = vpack.c.b16 %v3759, %v3752
  %v5629 = vpack.c.b16 %v3760, %v3753
  %v5630 = vpack.c.b16 %v3761, %v3754
  %v5631 = vpack.c.b16 %v3762, %v3755
  %v5632 = vpack.c.b16 %v3770, %v3763
  %v5633 = vpack.c.b16 %v3771, %v3764
  %v5634 = vpack.c.b16 %v3772, %v3765
  %v5635 = vpack.c.b16 %v3773, %v3766
  %v5636 = vpack.c.b16 %v3774, %v3767
  %v5637 = vpack.c.b16 %v3775, %v3768
  %v5638 = vpack.c.b16 %v3776, %v3769
  %v5639 = vpack.c.b16 %v3784, %v3777
  %v5640 = vpack.c.b16 %v3785, %v3778
  %v5641 = vpack.c.b16 %v3786, %v3779
  %v5642 = vpack.c.b16 %v3787, %v3780
  %v5643 = vpack.c.b16 %v3788, %v3781
  %v5644 = vpack.c.b16 %v3789, %v3782
  %v5645 = vpack.c.b16 %v3790, %v3783
  %v5646 = vpack.c.b16 %v3798, %v3791
  %v5647 = vpack.c.b16 %v3799, %v3792
  %v5648 = vpack.c.b16 %v3800, %v3793
  %v5649 = vpack.c.b16 %v3801, %v3794
  %v5650 = vpack.c.b16 %v3802, %v3795
  %v5651 = vpack.c.b16 %v3803, %v3796
  %v5652 = vpack.c.b16 %v3804, %v3797
  %v5653 = vpack.c.b16 %v3812, %v3805
  %v5654 = vpack.c.b16 %v3813, %v3806
  %v5655 = vpack.c.b16 %v3814, %v3807
  %v5656 = vpack.c.b16 %v3815, %v3808
  %v5657 = vpack.c.b16 %v3816, %v3809
  %v5658 = vpack.c.b16 %v3817, %v3810
  %v5659 = vpack.c.b16 %v3818, %v3811
  %v5660 = vpack.c.b16 %v3826, %v3819
  %v5661 = vpack.c.b16 %v3827, %v3820
  %v5662 = vpack.c.b16 %v3828, %v3821
  %v5663 = vpack.c.b16 %v3829, %v3822
  %v5664 = vpack.c.b16 %v3830, %v3823
  %v5665 = vpack.c.b16 %v3831, %v3824
  %v5666 = vpack.c.b16 %v3832, %v3825
  %v5667 = vpack.c.b16 %v3840, %v3833
  %v5668 = vpack.c.b16 %v3841, %v3834
  %v5669 = vpack.c.b16 %v3842, %v3835
  %v5670 = vpack.c.b16 %v3843, %v3836
  %v5671 = vpack.c.b16 %v3844, %v3837
  %v5672 = vpack.c.b16 %v3845, %v3838
  %v5673 = vpack.c.b16 %v3846, %v3839
  %v5674 = vpack.c.b16 %v3854, %v3847
  %v5675 = vpack.c.b16 %v3855, %v3848
  %v5676 = vpack.c.b16 %v3856, %v3849
  %v5677 = vpack.c.b16 %v3857, %v3850
  %v5678 = vpack.c.b16 %v3858, %v3851
  %v5679 = vpack.c.b16 %v3859, %v3852
  %v5680 = vpack.c.b16 %v3860, %v3853
  %v5681 = vpack.c.b16 %v3868, %v3861
  %v5682 = vpack.c.b16 %v3869, %v3862
  %v5683 = vpack.c.b16 %v3870, %v3863
  %v5684 = vpack.c.b16 %v3871, %v3864
  %v5685 = vpack.c.b16 %v3872, %v3865
  %v5686 = vpack.c.b16 %v3873, %v3866
  %v5687 = vpack.c.b16 %v3874, %v3867
  %v5688 = vpack.c.b16 %v3882, %v3875
  %v5689 = vpack.c.b16 %v3883, %v3876
  %v5690 = vpack.c.b16 %v3884, %v3877
  %v5691 = vpack.c.b16 %v3885, %v3878
  %v5692 = vpack.c.b16 %v3886, %v3879
  %v5693 = vpack.c.b16 %v3887, %v3880
  %v5694 = vpack.c.b16 %v3888, %v3881
  %v5695 = vpack.c.b16 %v3896, %v3889
  %v5696 = vpack.c.b16 %v3897, %v3890
  %v5697 = vpack.c.b16 %v3898, %v3891
  %v5698 = vpack.c.b16 %v3899, %v3892
  %v5699 = vpack.c.b16 %v3900, %v3893
  %v5700 = vpack.c.b16 %v3901, %v3894
  %v5701 = vpack.c.b16 %v3902, %v3895
  %v5702 = vpack.c.b16 %v3910, %v3903
  %v5703 = vpack.c.b16 %v3911, %v3904
  %v5704 = vpack.c.b16 %v3912, %v3905
  %v5705 = vpack.c.b16 %v3913, %v3906
  %v5706 = vpack.c.b16 %v3914, %v3907
  %v5707 = vpack.c.b16 %v3915, %v3908
  %v5708 = vpack.c.b16 %v3916, %v3909
  %v5709 = vpack.c.b16 %v3924, %v3917
  %v5710 = vpack.c.b16 %v3925, %v3918
  %v5711 = vpack.c.b16 %v3926, %v3919
  %v5712 = vpack.c.b16 %v3927, %v3920
  %v5713 = vpack.c.b16 %v3928, %v3921
  %v5714 = vpack.c.b16 %v3929, %v3922
  %v5715 = vpack.c.b16 %v3930, %v3923
  %v5716 = vpack.c.b16 %v3938, %v3931
  %v5717 = vpack.c.b16 %v3939, %v3932
  %v5718 = vpack.c.b16 %v3940, %v3933
  %v5719 = vpack.c.b16 %v3941, %v3934
  %v5720 = vpack.c.b16 %v3942, %v3935
  %v5721 = vpack.c.b16 %v3943, %v3936
  %v5722 = vpack.c.b16 %v3944, %v3937
  %v5723 = vpack.c.b16 %v3952, %v3945
  %v5724 = vpack.c.b16 %v3953, %v3946
  %v5725 = vpack.c.b16 %v3954, %v3947
  %v5726 = vpack.c.b16 %v3955, %v3948
  %v5727 = vpack.c.b16 %v3956, %v3949
  %v5728 = vpack.c.b16 %v3957, %v3950
  %v5729 = vpack.c.b16 %v3958, %v3951
  %v5730 = vpack.c.b16 %v3966, %v3959
  %v5731 = vpack.c.b16 %v3967, %v3960
  %v5732 = vpack.c.b16 %v3968, %v3961
  %v5733 = vpack.c.b16 %v3969, %v3962
  %v5734 = vpack.c.b16 %v3970, %v3963
  %v5735 = vpack.c.b16 %v3971, %v3964
  %v5736 = vpack.c.b16 %v3972, %v3965
  %v5737 = vpack.c.b16 %v3980, %v3973
  %v5738 = vpack.c.b16 %v3981, %v3974
  %v5739 = vpack.c.b16 %v3982, %v3975
  %v5740 = vpack.c.b16 %v3983, %v3976
  %v5741 = vpack.c.b16 %v3984, %v3977
  %v5742 = vpack.c.b16 %v3985, %v3978
  %v5743 = vpack.c.b16 %v3986, %v3979
  %v5744 = vpack.c.b16 %v3994, %v3987
  %v5745 = vpack.c.b16 %v3995, %v3988
  %v5746 = vpack.c.b16 %v3996, %v3989
  %v5747 = vpack.c.b16 %v3997, %v3990
  %v5748 = vpack.c.b16 %v3998, %v3991
  %v5749 = vpack.c.b16 %v3999, %v3992
  %v5750 = vpack.c.b16 %v4000, %v3993
  %v5751 = vpack.c.b16 %v4008, %v4001
  %v5752 = vpack.c.b16 %v4009, %v4002
  %v5753 = vpack.c.b16 %v4010, %v4003
  %v5754 = vpack.c.b16 %v4011, %v4004
  %v5755 = vpack.c.b16 %v4012, %v4005
  %v5756 = vpack.c.b16 %v4013, %v4006
  %v5757 = vpack.c.b16 %v4014, %v4007
  %v5758 = vpack.c.b16 %v4022, %v4015
  %v5759 = vpack.c.b16 %v4023, %v4016
  %v5760 = vpack.c.b16 %v4024, %v4017
  %v5761 = vpack.c.b16 %v4025, %v4018
  %v5762 = vpack.c.b16 %v4026, %v4019
  %v5763 = vpack.c.b16 %v4027, %v4020
  %v5764 = vpack.c.b16 %v4028, %v4021
  %v5765 = vpack.c.b16 %v4036, %v4029
  %v5766 = vpack.c.b16 %v4037, %v4030
  %v5767 = vpack.c.b16 %v4038, %v4031
  %v5768 = vpack.c.b16 %v4039, %v4032
  %v5769 = vpack.c.b16 %v4040, %v4033
  %v5770 = vpack.c.b16 %v4041, %v4034
  %v5771 = vpack.c.b16 %v4042, %v4035
  %v5772 = vpack.c.b16 %v4050, %v4043
  %v5773 = vpack.c.b16 %v4051, %v4044
  %v5774 = vpack.c.b16 %v4052, %v4045
  %v5775 = vpack.c.b16 %v4053, %v4046
  %v5776 = vpack.c.b16 %v4054, %v4047
  %v5777 = vpack.c.b16 %v4055, %v4048
  %v5778 = vpack.c.b16 %v4056, %v4049
  %v5779 = vpack.c.b16 %v4064, %v4057
  %v5780 = vpack.c.b16 %v4065, %v4058
  %v5781 = vpack.c.b16 %v4066, %v4059
  %v5782 = vpack.c.b16 %v4067, %v4060
  %v5783 = vpack.c.b16 %v4068, %v4061
  %v5784 = vpack.c.b16 %v4069, %v4062
  %v5785 = vpack.c.b16 %v4070, %v4063
  %v5786 = vpack.c.b16 %v4078, %v4071
  %v5787 = vpack.c.b16 %v4079, %v4072
  %v5788 = vpack.c.b16 %v4080, %v4073
  %v5789 = vpack.c.b16 %v4081, %v4074
  %v5790 = vpack.c.b16 %v4082, %v4075
  %v5791 = vpack.c.b16 %v4083, %v4076
  %v5792 = vpack.c.b16 %v4084, %v4077
  %v5793 = vpack.c.b16 %v4092, %v4085
  %v5794 = vpack.c.b16 %v4093, %v4086
  %v5795 = vpack.c.b16 %v4094, %v4087
  %v5796 = vpack.c.b16 %v4095, %v4088
  %v5797 = vpack.c.b16 %v4096, %v4089
  %v5798 = vpack.c.b16 %v4097, %v4090
  %v5799 = vpack.c.b16 %v4098, %v4091
  %v5800 = vpack.c.b16 %v4106, %v4099
  %v5801 = vpack.c.b16 %v4107, %v4100
  %v5802 = vpack.c.b16 %v4108, %v4101
  %v5803 = vpack.c.b16 %v4109, %v4102
  %v5804 = vpack.c.b16 %v4110, %v4103
  %v5805 = vpack.c.b16 %v4111, %v4104
  %v5806 = vpack.c.b16 %v4112, %v4105
  %v5807 = vpack.c.b16 %v4120, %v4113
  %v5808 = vpack.c.b16 %v4121, %v4114
  %v5809 = vpack.c.b16 %v4122, %v4115
  %v5810 = vpack.c.b16 %v4123, %v4116
  %v5811 = vpack.c.b16 %v4124, %v4117
  %v5812 = vpack.c.b16 %v4125, %v4118
  %v5813 = vpack.c.b16 %v4126, %v4119
  %v5814 = vpack.c.b16 %v4134, %v4127
  %v5815 = vpack.c.b16 %v4135, %v4128
  %v5816 = vpack.c.b16 %v4136, %v4129
  %v5817 = vpack.c.b16 %v4137, %v4130
  %v5818 = vpack.c.b16 %v4138, %v4131
  %v5819 = vpack.c.b16 %v4139, %v4132
  %v5820 = vpack.c.b16 %v4140, %v4133
  %v5821 = vpack.c.b16 %v4148, %v4141
  %v5822 = vpack.c.b16 %v4149, %v4142
  %v5823 = vpack.c.b16 %v4150, %v4143
  %v5824 = vpack.c.b16 %v4151, %v4144
  %v5825 = vpack.c.b16 %v4152, %v4145
  %v5826 = vpack.c.b16 %v4153, %v4146
  %v5827 = vpack.c.b16 %v4154, %v4147
  %v5828 = vpack.c.b16 %v4162, %v4155
  %v5829 = vpack.c.b16 %v4163, %v4156
  %v5830 = vpack.c.b16 %v4164, %v4157
  %v5831 = vpack.c.b16 %v4165, %v4158
  %v5832 = vpack.c.b16 %v4166, %v4159
  %v5833 = vpack.c.b16 %v4167, %v4160
  %v5834 = vpack.c.b16 %v4168, %v4161
  %v5835 = vpack.c.b16 %v4176, %v4169
  %v5836 = vpack.c.b16 %v4177, %v4170
  %v5837 = vpack.c.b16 %v4178, %v4171
  %v5838 = vpack.c.b16 %v4179, %v4172
  %v5839 = vpack.c.b16 %v4180, %v4173
  %v5840 = vpack.c.b16 %v4181, %v4174
  %v5841 = vpack.c.b16 %v4182, %v4175
  %v5842 = vpack.c.b16 %v4190, %v4183
  %v5843 = vpack.c.b16 %v4191, %v4184
  %v5844 = vpack.c.b16 %v4192, %v4185
  %v5845 = vpack.c.b16 %v4193, %v4186
  %v5846 = vpack.c.b16 %v4194, %v4187
  %v5847 = vpack.c.b16 %v4195, %v4188
  %v5848 = vpack.c.b16 %v4196, %v4189
  %v5849 = vpack.c.b16 %v4204, %v4197
  %v5850 = vpack.c.b16 %v4205, %v4198
  %v5851 = vpack.c.b16 %v4206, %v4199
  %v5852 = vpack.c.b16 %v4207, %v4200
  %v5853 = vpack.c.b16 %v4208, %v4201
  %v5854 = vpack.c.b16 %v4209, %v4202
  %v5855 = vpack.c.b16 %v4210, %v4203
  %v5856 = vpack.c.b16 %v4218, %v4211
  %v5857 = vpack.c.b16 %v4219, %v4212
  %v5858 = vpack.c.b16 %v4220, %v4213
  %v5859 = vpack.c.b16 %v4221, %v4214
  %v5860 = vpack.c.b16 %v4222, %v4215
  %v5861 = vpack.c.b16 %v4223, %v4216
  %v5862 = vpack.c.b16 %v4224, %v4217
  %v5863 = vpack.c.b16 %v4232, %v4225
  %v5864 = vpack.c.b16 %v4233, %v4226
  %v5865 = vpack.c.b16 %v4234, %v4227
  %v5866 = vpack.c.b16 %v4235, %v4228
  %v5867 = vpack.c.b16 %v4236, %v4229
  %v5868 = vpack.c.b16 %v4237, %v4230
  %v5869 = vpack.c.b16 %v4238, %v4231
  %v5870 = vpack.c.b16 %v4246, %v4239
  %v5871 = vpack.c.b16 %v4247, %v4240
  %v5872 = vpack.c.b16 %v4248, %v4241
  %v5873 = vpack.c.b16 %v4249, %v4242
  %v5874 = vpack.c.b16 %v4250, %v4243
  %v5875 = vpack.c.b16 %v4251, %v4244
  %v5876 = vpack.c.b16 %v4252, %v4245
  %v5877 = vpack.c.b16 %v4260, %v4253
  %v5878 = vpack.c.b16 %v4261, %v4254
  %v5879 = vpack.c.b16 %v4262, %v4255
  %v5880 = vpack.c.b16 %v4263, %v4256
  %v5881 = vpack.c.b16 %v4264, %v4257
  %v5882 = vpack.c.b16 %v4265, %v4258
  %v5883 = vpack.c.b16 %v4266, %v4259
  %v5884 = vpack.c.b16 %v4274, %v4267
  %v5885 = vpack.c.b16 %v4275, %v4268
  %v5886 = vpack.c.b16 %v4276, %v4269
  %v5887 = vpack.c.b16 %v4277, %v4270
  %v5888 = vpack.c.b16 %v4278, %v4271
  %v5889 = vpack.c.b16 %v4279, %v4272
  %v5890 = vpack.c.b16 %v4280, %v4273
  %v5891 = vpack.c.b16 %v4288, %v4281
  %v5892 = vpack.c.b16 %v4289, %v4282
  %v5893 = vpack.c.b16 %v4290, %v4283
  %v5894 = vpack.c.b16 %v4291, %v4284
  %v5895 = vpack.c.b16 %v4292, %v4285
  %v5896 = vpack.c.b16 %v4293, %v4286
  %v5897 = vpack.c.b16 %v4294, %v4287
  %v5898 = vpack.c.b16 %v4302, %v4295
  %v5899 = vpack.c.b16 %v4303, %v4296
  %v5900 = vpack.c.b16 %v4304, %v4297
  %v5901 = vpack.c.b16 %v4305, %v4298
  %v5902 = vpack.c.b16 %v4306, %v4299
  %v5903 = vpack.c.b16 %v4307, %v4300
  %v5904 = vpack.c.b16 %v4308, %v4301
  %v5905 = vpack.c.b16 %v4316, %v4309
  %v5906 = vpack.c.b16 %v4317, %v4310
  %v5907 = vpack.c.b16 %v4318, %v4311
  %v5908 = vpack.c.b16 %v4319, %v4312
  %v5909 = vpack.c.b16 %v4320, %v4313
  %v5910 = vpack.c.b16 %v4321, %v4314
  %v5911 = vpack.c.b16 %v4322, %v4315
  %v5912 = vpack.c.b16 %v4330, %v4323
  %v5913 = vpack.c.b16 %v4331, %v4324
  %v5914 = vpack.c.b16 %v4332, %v4325
  %v5915 = vpack.c.b16 %v4333, %v4326
  %v5916 = vpack.c.b16 %v4334, %v4327
  %v5917 = vpack.c.b16 %v4335, %v4328
  %v5918 = vpack.c.b16 %v4336, %v4329
  %v5919 = vpack.c.b16 %v4344, %v4337
  %v5920 = vpack.c.b16 %v4345, %v4338
  %v5921 = vpack.c.b16 %v4346, %v4339
  %v5922 = vpack.c.b16 %v4347, %v4340
  %v5923 = vpack.c.b16 %v4348, %v4341
  %v5924 = vpack.c.b16 %v4349, %v4342
  %v5925 = vpack.c.b16 %v4350, %v4343
  %v5926 = vpack.c.b16 %v4358, %v4351
  %v5927 = vpack.c.b16 %v4359, %v4352
  %v5928 = vpack.c.b16 %v4360, %v4353
  %v5929 = vpack.c.b16 %v4361, %v4354
  %v5930 = vpack.c.b16 %v4362, %v4355
  %v5931 = vpack.c.b16 %v4363, %v4356
  %v5932 = vpack.c.b16 %v4364, %v4357
  %v5933 = vpack.c.b16 %v4372, %v4365
  %v5934 = vpack.c.b16 %v4373, %v4366
  %v5935 = vpack.c.b16 %v4374, %v4367
  %v5936 = vpack.c.b16 %v4375, %v4368
  %v5937 = vpack.c.b16 %v4376, %v4369
  %v5938 = vpack.c.b16 %v4377, %v4370
  %v5939 = vpack.c.b16 %v4378, %v4371
  %v5940 = vpack.c.b16 %v4386, %v4379
  %v5941 = vpack.c.b16 %v4387, %v4380
  %v5942 = vpack.c.b16 %v4388, %v4381
  %v5943 = vpack.c.b16 %v4389, %v4382
  %v5944 = vpack.c.b16 %v4390, %v4383
  %v5945 = vpack.c.b16 %v4391, %v4384
  %v5946 = vpack.c.b16 %v4392, %v4385
  %v5947 = vpack.c.b16 %v4400, %v4393
  %v5948 = vpack.c.b16 %v4401, %v4394
  %v5949 = vpack.c.b16 %v4402, %v4395
  %v5950 = vpack.c.b16 %v4403, %v4396
  %v5951 = vpack.c.b16 %v4404, %v4397
  %v5952 = vpack.c.b16 %v4405, %v4398
  %v5953 = vpack.c.b16 %v4406, %v4399
  %v5954 = vpack.c.b16 %v4414, %v4407
  %v5955 = vpack.c.b16 %v4415, %v4408
  %v5956 = vpack.c.b16 %v4416, %v4409
  %v5957 = vpack.c.b16 %v4417, %v4410
  %v5958 = vpack.c.b16 %v4418, %v4411
  %v5959 = vpack.c.b16 %v4419, %v4412
  %v5960 = vpack.c.b16 %v4420, %v4413
  %v5961 = vpack.c.b16 %v4428, %v4421
  %v5962 = vpack.c.b16 %v4429, %v4422
  %v5963 = vpack.c.b16 %v4430, %v4423
  %v5964 = vpack.c.b16 %v4431, %v4424
  %v5965 = vpack.c.b16 %v4432, %v4425
  %v5966 = vpack.c.b16 %v4433, %v4426
  %v5967 = vpack.c.b16 %v4434, %v4427
  %v5968 = vpack.c.b16 %v4442, %v4435
  %v5969 = vpack.c.b16 %v4443, %v4436
  %v5970 = vpack.c.b16 %v4444, %v4437
  %v5971 = vpack.c.b16 %v4445, %v4438
  %v5972 = vpack.c.b16 %v4446, %v4439
  %v5973 = vpack.c.b16 %v4447, %v4440
  %v5974 = vpack.c.b16 %v4448, %v4441
  %v5975 = vpack.c.b16 %v4456, %v4449
  %v5976 = vpack.c.b16 %v4457, %v4450
  %v5977 = vpack.c.b16 %v4458, %v4451
  %v5978 = vpack.c.b16 %v4459, %v4452
  %v5979 = vpack.c.b16 %v4460, %v4453
  %v5980 = vpack.c.b16 %v4461, %v4454
  %v5981 = vpack.c.b16 %v4462, %v4455
  %v5982 = vpack.c.b16 %v4470, %v4463
  %v5983 = vpack.c.b16 %v4471, %v4464
  %v5984 = vpack.c.b16 %v4472, %v4465
  %v5985 = vpack.c.b16 %v4473, %v4466
  %v5986 = vpack.c.b16 %v4474, %v4467
  %v5987 = vpack.c.b16 %v4475, %v4468
  %v5988 = vpack.c.b16 %v4476, %v4469
  %v5989 = vpack.c.b16 %v4484, %v4477
  %v5990 = vpack.c.b16 %v4485, %v4478
  %v5991 = vpack.c.b16 %v4486, %v4479
  %v5992 = vpack.c.b16 %v4487, %v4480
  %v5993 = vpack.c.b16 %v4488, %v4481
  %v5994 = vpack.c.b16 %v4489, %v4482
  %v5995 = vpack.c.b16 %v4490, %v4483
  %v5996 = vpack.c.b16 %v4498, %v4491
  %v5997 = vpack.c.b16 %v4499, %v4492
  %v5998 = vpack.c.b16 %v4500, %v4493
  %v5999 = vpack.c.b16 %v4501, %v4494
  %v6000 = vpack.c.b16 %v4502, %v4495
  %v6001 = vpack.c.b16 %v4503, %v4496
  %v6002 = vpack.c.b16 %v4504, %v4497
  %v6003 = vpack.c.b16 %v4512, %v4505
  %v6004 = vpack.c.b16 %v4513, %v4506
  %v6005 = vpack.c.b16 %v4514, %v4507
  %v6006 = vpack.c.b16 %v4515, %v4508
  %v6007 = vpack.c.b16 %v4516, %v4509
  %v6008 = vpack.c.b16 %v4517, %v4510
  %v6009 = vpack.c.b16 %v4518, %v4511
  %v6010 = vpack.c.b16 %v4526, %v4519
  %v6011 = vpack.c.b16 %v4527, %v4520
  %v6012 = vpack.c.b16 %v4528, %v4521
  %v6013 = vpack.c.b16 %v4529, %v4522
  %v6014 = vpack.c.b16 %v4530, %v4523
  %v6015 = vpack.c.b16 %v4531, %v4524
  %v6016 = vpack.c.b16 %v4532, %v4525
  %v6017 = vpack.c.b16 %v4540, %v4533
  %v6018 = vpack.c.b16 %v4541, %v4534
  %v6019 = vpack.c.b16 %v4542, %v4535
  %v6020 = vpack.c.b16 %v4543, %v4536
  %v6021 = vpack.c.b16 %v4544, %v4537
  %v6022 = vpack.c.b16 %v4545, %v4538
  %v6023 = vpack.c.b16 %v4546, %v4539
  %v6024 = vpack.c.b16 %v4554, %v4547
  %v6025 = vpack.c.b16 %v4555, %v4548
  %v6026 = vpack.c.b16 %v4556, %v4549
  %v6027 = vpack.c.b16 %v4557, %v4550
  %v6028 = vpack.c.b16 %v4558, %v4551
  %v6029 = vpack.c.b16 %v4559, %v4552
  %v6030 = vpack.c.b16 %v4560, %v4553
  %v6031 = vpack.c.b16 %v4568, %v4561
  %v6032 = vpack.c.b16 %v4569, %v4562
  %v6033 = vpack.c.b16 %v4570, %v4563
  %v6034 = vpack.c.b16 %v4571, %v4564
  %v6035 = vpack.c.b16 %v4572, %v4565
  %v6036 = vpack.c.b16 %v4573, %v4566
  %v6037 = vpack.c.b16 %v4574, %v4567
  %v6038 = vpack.c.b16 %v4582, %v4575
  %v6039 = vpack.c.b16 %v4583, %v4576
  %v6040 = vpack.c.b16 %v4584, %v4577
  %v6041 = vpack.c.b16 %v4585, %v4578
  %v6042 = vpack.c.b16 %v4586, %v4579
  %v6043 = vpack.c.b16 %v4587, %v4580
  %v6044 = vpack.c.b16 %v4588, %v4581
  %v6045 = vpack.c.b16 %v4596, %v4589
  %v6046 = vpack.c.b16 %v4597, %v4590
  %v6047 = vpack.c.b16 %v4598, %v4591
  %v6048 = vpack.c.b16 %v4599, %v4592
  %v6049 = vpack.c.b16 %v4600, %v4593
  %v6050 = vpack.c.b16 %v4601, %v4594
  %v6051 = vpack.c.b16 %v4602, %v4595
  %v6052 = vpack.c.b16 %v4610, %v4603
  %v6053 = vpack.c.b16 %v4611, %v4604
  %v6054 = vpack.c.b16 %v4612, %v4605
  %v6055 = vpack.c.b16 %v4613, %v4606
  %v6056 = vpack.c.b16 %v4614, %v4607
  %v6057 = vpack.c.b16 %v4615, %v4608
  %v6058 = vpack.c.b16 %v4616, %v4609
  %v6059 = vpack.c.b16 %v4624, %v4617
  %v6060 = vpack.c.b16 %v4625, %v4618
  %v6061 = vpack.c.b16 %v4626, %v4619
  %v6062 = vpack.c.b16 %v4627, %v4620
  %v6063 = vpack.c.b16 %v4628, %v4621
  %v6064 = vpack.c.b16 %v4629, %v4622
  %v6065 = vpack.c.b16 %v4630, %v4623
  %v6066 = vpack.c.b16 %v4638, %v4631
  %v6067 = vpack.c.b16 %v4639, %v4632
  %v6068 = vpack.c.b16 %v4640, %v4633
  %v6069 = vpack.c.b16 %v4641, %v4634
  %v6070 = vpack.c.b16 %v4642, %v4635
  %v6071 = vpack.c.b16 %v4643, %v4636
  %v6072 = vpack.c.b16 %v4644, %v4637
  %v6073 = vpack.c.b16 %v4652, %v4645
  %v6074 = vpack.c.b16 %v4653, %v4646
  %v6075 = vpack.c.b16 %v4654, %v4647
  %v6076 = vpack.c.b16 %v4655, %v4648
  %v6077 = vpack.c.b16 %v4656, %v4649
  %v6078 = vpack.c.b16 %v4657, %v4650
  %v6079 = vpack.c.b16 %v4658, %v4651
  %v6080 = vpack.c.b16 %v4666, %v4659
  %v6081 = vpack.c.b16 %v4667, %v4660
  %v6082 = vpack.c.b16 %v4668, %v4661
  %v6083 = vpack.c.b16 %v4669, %v4662
  %v6084 = vpack.c.b16 %v4670, %v4663
  %v6085 = vpack.c.b16 %v4671, %v4664
  %v6086 = vpack.c.b16 %v4672, %v4665
  %v6087 = vpack.c.b16 %v4680, %v4673
  %v6088 = vpack.c.b16 %v4681, %v4674
  %v6089 = vpack.c.b16 %v4682, %v4675
  %v6090 = vpack.c.b16 %v4683, %v4676
  %v6091 = vpack.c.b16 %v4684, %v4677
  %v6092 = vpack.c.b16 %v4685, %v4678
  %v6093 = vpack.c.b16 %v4686, %v4679
  %v6094 = vpack.c.b16 %v4694, %v4687
  %v6095 = vpack.c.b16 %v4695, %v4688
  %v6096 = vpack.c.b16 %v4696, %v4689
  %v6097 = vpack.c.b16 %v4697, %v4690
  %v6098 = vpack.c.b16 %v4698, %v4691
  %v6099 = vpack.c.b16 %v4699, %v4692
  %v6100 = vpack.c.b16 %v4700, %v4693
  %v6101 = vpack.c.b16 %v4708, %v4701
  %v6102 = vpack.c.b16 %v4709, %v4702
  %v6103 = vpack.c.b16 %v4710, %v4703
  %v6104 = vpack.c.b16 %v4711, %v4704
  %v6105 = vpack.c.b16 %v4712, %v4705
  %v6106 = vpack.c.b16 %v4713, %v4706
  %v6107 = vpack.c.b16 %v4714, %v4707
  %v6108 = vpack.c.b16 %v4722, %v4715
  %v6109 = vpack.c.b16 %v4723, %v4716
  %v6110 = vpack.c.b16 %v4724, %v4717
  %v6111 = vpack.c.b16 %v4725, %v4718
  %v6112 = vpack.c.b16 %v4726, %v4719
  %v6113 = vpack.c.b16 %v4727, %v4720
  %v6114 = vpack.c.b16 %v4728, %v4721
  %v6115 = vpack.c.b16 %v4736, %v4729
  %v6116 = vpack.c.b16 %v4737, %v4730
  %v6117 = vpack.c.b16 %v4738, %v4731
  %v6118 = vpack.c.b16 %v4739, %v4732
  %v6119 = vpack.c.b16 %v4740, %v4733
  %v6120 = vpack.c.b16 %v4741, %v4734
  %v6121 = vpack.c.b16 %v4742, %v4735
  %v6122 = vpack.c.b16 %v4750, %v4743
  %v6123 = vpack.c.b16 %v4751, %v4744
  %v6124 = vpack.c.b16 %v4752, %v4745
  %v6125 = vpack.c.b16 %v4753, %v4746
  %v6126 = vpack.c.b16 %v4754, %v4747
  %v6127 = vpack.c.b16 %v4755, %v4748
  %v6128 = vpack.c.b16 %v4756, %v4749
  %v6129 = vpack.c.b16 %v4764, %v4757
  %v6130 = vpack.c.b16 %v4765, %v4758
  %v6131 = vpack.c.b16 %v4766, %v4759
  %v6132 = vpack.c.b16 %v4767, %v4760
  %v6133 = vpack.c.b16 %v4768, %v4761
  %v6134 = vpack.c.b16 %v4769, %v4762
  %v6135 = vpack.c.b16 %v4770, %v4763
  %v6136 = vpack.c.b16 %v4778, %v4771
  %v6137 = vpack.c.b16 %v4779, %v4772
  %v6138 = vpack.c.b16 %v4780, %v4773
  %v6139 = vpack.c.b16 %v4781, %v4774
  %v6140 = vpack.c.b16 %v4782, %v4775
  %v6141 = vpack.c.b16 %v4783, %v4776
  %v6142 = vpack.c.b16 %v4784, %v4777
  %v6143 = vpack.c.b16 %v4792, %v4785
  %v6144 = vpack.c.b16 %v4793, %v4786
  %v6145 = vpack.c.b16 %v4794, %v4787
  %v6146 = vpack.c.b16 %v4795, %v4788
  %v6147 = vpack.c.b16 %v4796, %v4789
  %v6148 = vpack.c.b16 %v4797, %v4790
  %v6149 = vpack.c.b16 %v4798, %v4791
  %v6150 = vpack.c.b16 %v4806, %v4799
  %v6151 = vpack.c.b16 %v4807, %v4800
  %v6152 = vpack.c.b16 %v4808, %v4801
  %v6153 = vpack.c.b16 %v4809, %v4802
  %v6154 = vpack.c.b16 %v4810, %v4803
  %v6155 = vpack.c.b16 %v4811, %v4804
  %v6156 = vpack.c.b16 %v4812, %v4805
  %v6157 = vpack.c.b16 %v4820, %v4813
  %v6158 = vpack.c.b16 %v4821, %v4814
  %v6159 = vpack.c.b16 %v4822, %v4815
  %v6160 = vpack.c.b16 %v4823, %v4816
  %v6161 = vpack.c.b16 %v4824, %v4817
  %v6162 = vpack.c.b16 %v4825, %v4818
  %v6163 = vpack.c.b16 %v4826, %v4819
  %v6164 = vpack.c.b16 %v4834, %v4827
  %v6165 = vpack.c.b16 %v4835, %v4828
  %v6166 = vpack.c.b16 %v4836, %v4829
  %v6167 = vpack.c.b16 %v4837, %v4830
  %v6168 = vpack.c.b16 %v4838, %v4831
  %v6169 = vpack.c.b16 %v4839, %v4832
  %v6170 = vpack.c.b16 %v4840, %v4833
  %v6171 = vpack.c.b16 %v4848, %v4841
  %v6172 = vpack.c.b16 %v4849, %v4842
  %v6173 = vpack.c.b16 %v4850, %v4843
  %v6174 = vpack.c.b16 %v4851, %v4844
  %v6175 = vpack.c.b16 %v4852, %v4845
  %v6176 = vpack.c.b16 %v4853, %v4846
  %v6177 = vpack.c.b16 %v4854, %v4847
  %v6178 = vpack.c.b16 %v4862, %v4855
  %v6179 = vpack.c.b16 %v4863, %v4856
  %v6180 = vpack.c.b16 %v4864, %v4857
  %v6181 = vpack.c.b16 %v4865, %v4858
  %v6182 = vpack.c.b16 %v4866, %v4859
  %v6183 = vpack.c.b16 %v4867, %v4860
  %v6184 = vpack.c.b16 %v4868, %v4861
  %v6185 = vpack.c.b16 %v4876, %v4869
  %v6186 = vpack.c.b16 %v4877, %v4870
  %v6187 = vpack.c.b16 %v4878, %v4871
  %v6188 = vpack.c.b16 %v4879, %v4872
  %v6189 = vpack.c.b16 %v4880, %v4873
  %v6190 = vpack.c.b16 %v4881, %v4874
  %v6191 = vpack.c.b16 %v4882, %v4875
  %v6192 = vpack.c.b16 %v4890, %v4883
  %v6193 = vpack.c.b16 %v4891, %v4884
  %v6194 = vpack.c.b16 %v4892, %v4885
  %v6195 = vpack.c.b16 %v4893, %v4886
  %v6196 = vpack.c.b16 %v4894, %v4887
  %v6197 = vpack.c.b16 %v4895, %v4888
  %v6198 = vpack.c.b16 %v4896, %v4889
  %v6199 = vpack.c.b16 %v4904, %v4897
  %v6200 = vpack.c.b16 %v4905, %v4898
  %v6201 = vpack.c.b16 %v4906, %v4899
  %v6202 = vpack.c.b16 %v4907, %v4900
  %v6203 = vpack.c.b16 %v4908, %v4901
  %v6204 = vpack.c.b16 %v4909, %v4902
  %v6205 = vpack.c.b16 %v4910, %v4903
  %v6206 = vpack.c.b16 %v4918, %v4911
  %v6207 = vpack.c.b16 %v4919, %v4912
  %v6208 = vpack.c.b16 %v4920, %v4913
  %v6209 = vpack.c.b16 %v4921, %v4914
  %v6210 = vpack.c.b16 %v4922, %v4915
  %v6211 = vpack.c.b16 %v4923, %v4916
  %v6212 = vpack.c.b16 %v4924, %v4917
  %v6213 = vpack.c.b16 %v4932, %v4925
  %v6214 = vpack.c.b16 %v4933, %v4926
  %v6215 = vpack.c.b16 %v4934, %v4927
  %v6216 = vpack.c.b16 %v4935, %v4928
  %v6217 = vpack.c.b16 %v4936, %v4929
  %v6218 = vpack.c.b16 %v4937, %v4930
  %v6219 = vpack.c.b16 %v4938, %v4931
  %v6220 = vpack.c.b16 %v4946, %v4939
  %v6221 = vpack.c.b16 %v4947, %v4940
  %v6222 = vpack.c.b16 %v4948, %v4941
  %v6223 = vpack.c.b16 %v4949, %v4942
  %v6224 = vpack.c.b16 %v4950, %v4943
  %v6225 = vpack.c.b16 %v4951, %v4944
  %v6226 = vpack.c.b16 %v4952, %v4945
  %v6227 = vpack.c.b16 %v4960, %v4953
  %v6228 = vpack.c.b16 %v4961, %v4954
  %v6229 = vpack.c.b16 %v4962, %v4955
  %v6230 = vpack.c.b16 %v4963, %v4956
  %v6231 = vpack.c.b16 %v4964, %v4957
  %v6232 = vpack.c.b16 %v4965, %v4958
  %v6233 = vpack.c.b16 %v4966, %v4959
  %v6234 = vpack.c.b16 %v4974, %v4967
  %v6235 = vpack.c.b16 %v4975, %v4968
  %v6236 = vpack.c.b16 %v4976, %v4969
  %v6237 = vpack.c.b16 %v4977, %v4970
  %v6238 = vpack.c.b16 %v4978, %v4971
  %v6239 = vpack.c.b16 %v4979, %v4972
  %v6240 = vpack.c.b16 %v4980, %v4973
  %v6241 = vpack.c.b16 %v4988, %v4981
  %v6242 = vpack.c.b16 %v4989, %v4982
  %v6243 = vpack.c.b16 %v4990, %v4983
  %v6244 = vpack.c.b16 %v4991, %v4984
  %v6245 = vpack.c.b16 %v4992, %v4985
  %v6246 = vpack.c.b16 %v4993, %v4986
  %v6247 = vpack.c.b16 %v4994, %v4987
  %v6248 = vpack.c.b16 %v5002, %v4995
  %v6249 = vpack.c.b16 %v5003, %v4996
  %v6250 = vpack.c.b16 %v5004, %v4997
  %v6251 = vpack.c.b16 %v5005, %v4998
  %v6252 = vpack.c.b16 %v5006, %v4999
  %v6253 = vpack.c.b16 %v5007, %v5000
  %v6254 = vpack.c.b16 %v5008, %v5001
  %v6255 = vpack.c.b16 %v5016, %v5009
  %v6256 = vpack.c.b16 %v5017, %v5010
  %v6257 = vpack.c.b16 %v5018, %v5011
  %v6258 = vpack.c.b16 %v5019, %v5012
  %v6259 = vpack.c.b16 %v5020, %v5013
  %v6260 = vpack.c.b16 %v5021, %v5014
  %v6261 = vpack.c.b16 %v5022, %v5015
  %v6262 = vpack.c.b16 %v5030, %v5023
  %v6263 = vpack.c.b16 %v5031, %v5024
  %v6264 = vpack.c.b16 %v5032, %v5025
  %v6265 = vpack.c.b16 %v5033, %v5026
  %v6266 = vpack.c.b16 %v5034, %v5027
  %v6267 = vpack.c.b16 %v5035, %v5028
  %v6268 = vpack.c.b16 %v5036, %v5029
  %v6269 = vpack.c.b16 %v5044, %v5037
  %v6270 = vpack.c.b16 %v5045, %v5038
  %v6271 = vpack.c.b16 %v5046, %v5039
  %v6272 = vpack.c.b16 %v5047, %v5040
  %v6273 = vpack.c.b16 %v5048, %v5041
  %v6274 = vpack.c.b16 %v5049, %v5042
  %v6275 = vpack.c.b16 %v5050, %v5043
  %v6276 = vpack.c.b16 %v5058, %v5051
  %v6277 = vpack.c.b16 %v5059, %v5052
  %v6278 = vpack.c.b16 %v5060, %v5053
  %v6279 = vpack.c.b16 %v5061, %v5054
  %v6280 = vpack.c.b16 %v5062, %v5055
  %v6281 = vpack.c.b16 %v5063, %v5056
  %v6282 = vpack.c.b16 %v5064, %v5057
  %v6283 = vpack.c.b16 %v5072, %v5065
  %v6284 = vpack.c.b16 %v5073, %v5066
  %v6285 = vpack.c.b16 %v5074, %v5067
  %v6286 = vpack.c.b16 %v5075, %v5068
  %v6287 = vpack.c.b16 %v5076, %v5069
  %v6288 = vpack.c.b16 %v5077, %v5070
  %v6289 = vpack.c.b16 %v5078, %v5071
  %v6290 = vpack.c.b16 %v5086, %v5079
  %v6291 = vpack.c.b16 %v5087, %v5080
  %v6292 = vpack.c.b16 %v5088, %v5081
  %v6293 = vpack.c.b16 %v5089, %v5082
  %v6294 = vpack.c.b16 %v5090, %v5083
  %v6295 = vpack.c.b16 %v5091, %v5084
  %v6296 = vpack.c.b16 %v5092, %v5085
  %v6297 = vpack.c.b16 %v5100, %v5093
  %v6298 = vpack.c.b16 %v5101, %v5094
  %v6299 = vpack.c.b16 %v5102, %v5095
  %v6300 = vpack.c.b16 %v5103, %v5096
  %v6301 = vpack.c.b16 %v5104, %v5097
  %v6302 = vpack.c.b16 %v5105, %v5098
  %v6303 = vpack.c.b16 %v5106, %v5099
  %v6304 = vpack.c.b16 %v5114, %v5107
  %v6305 = vpack.c.b16 %v5115, %v5108
  %v6306 = vpack.c.b16 %v5116, %v5109
  %v6307 = vpack.c.b16 %v5117, %v5110
  %v6308 = vpack.c.b16 %v5118, %v5111
  %v6309 = vpack.c.b16 %v5119, %v5112
  %v6310 = vpack.c.b16 %v5120, %v5113
  %v6311 = vpack.c.b16 %v5128, %v5121
  %v6312 = vpack.c.b16 %v5129, %v5122
  %v6313 = vpack.c.b16 %v5130, %v5123
  %v6314 = vpack.c.b16 %v5131, %v5124
  %v6315 = vpack.c.b16 %v5132, %v5125
  %v6316 = vpack.c.b16 %v5133, %v5126
  %v6317 = vpack.c.b16 %v5134, %v5127
  %vm7501 = vcmask 130048
  %v7503 = vsel %vm7501, %v58, 0
  %7505 = vmatpush.bf16.msra.mxu0 %v5184
  %7506 = vmatpush.bf16.msra.mxu0 %v5177
  %7507 = vmatpush.bf16.msra.mxu0 %v5170
  %7508 = vmatpush.bf16.msra.mxu0 %v5163
  %7509 = vmatpush.bf16.msra.mxu0 %v5156
  %7510 = vmatpush.bf16.msra.mxu0 %v5149
  %7511 = vmatpush.bf16.msra.mxu0 %v5142
  %7512 = vmatpush.bf16.msra.mxu0 %v5135
  %7513 = vmatmul.bf16.gmra.mxu0 %v37
  %v7514 = vpop.f32.mrf.mxu0
  %v7515 = vadd.f32 %v1415, %v7514
  %v7516 = vpop.f32.mrf.mxu0
  %7517 = vdwg.mxu0
  %7518 = vmatpush.bf16.msra.mxu0 %v5240
  %7519 = vmatpush.bf16.msra.mxu0 %v5233
  %7520 = vmatpush.bf16.msra.mxu0 %v5226
  %7521 = vmatpush.bf16.msra.mxu0 %v5219
  %7522 = vmatpush.bf16.msra.mxu0 %v5212
  %7523 = vmatpush.bf16.msra.mxu0 %v5205
  %7524 = vmatpush.bf16.msra.mxu0 %v5198
  %7525 = vmatpush.bf16.msra.mxu0 %v5191
  %7526 = vmatmul.bf16.gmra.mxu0 %v38
  %v7527 = vpop.f32.mrf.mxu0
  %v7528 = vadd.f32 %v7515, %v7527
  %v7529 = vpop.f32.mrf.mxu0
  %7530 = vdwg.mxu0
  %7531 = vmatpush.bf16.msra.mxu0 %v5296
  %7532 = vmatpush.bf16.msra.mxu0 %v5289
  %7533 = vmatpush.bf16.msra.mxu0 %v5282
  %7534 = vmatpush.bf16.msra.mxu0 %v5275
  %7535 = vmatpush.bf16.msra.mxu0 %v5268
  %7536 = vmatpush.bf16.msra.mxu0 %v5261
  %7537 = vmatpush.bf16.msra.mxu0 %v5254
  %7538 = vmatpush.bf16.msra.mxu0 %v5247
  %7539 = vmatmul.bf16.gmra.mxu0 %v39
  %v7540 = vpop.f32.mrf.mxu0
  %v7541 = vadd.f32 %v7528, %v7540
  %v7542 = vpop.f32.mrf.mxu0
  %7543 = vdwg.mxu0
  %7544 = vmatpush.bf16.msra.mxu0 %v5352
  %7545 = vmatpush.bf16.msra.mxu0 %v5345
  %7546 = vmatpush.bf16.msra.mxu0 %v5338
  %7547 = vmatpush.bf16.msra.mxu0 %v5331
  %7548 = vmatpush.bf16.msra.mxu0 %v5324
  %7549 = vmatpush.bf16.msra.mxu0 %v5317
  %7550 = vmatpush.bf16.msra.mxu0 %v5310
  %7551 = vmatpush.bf16.msra.mxu0 %v5303
  %7552 = vmatmul.bf16.gmra.mxu0 %v40
  %v7553 = vpop.f32.mrf.mxu0
  %v7554 = vadd.f32 %v7541, %v7553
  %v7555 = vpop.f32.mrf.mxu0
  %7556 = vdwg.mxu0
  %7557 = vmatpush.bf16.msra.mxu0 %v5408
  %7558 = vmatpush.bf16.msra.mxu0 %v5401
  %7559 = vmatpush.bf16.msra.mxu0 %v5394
  %7560 = vmatpush.bf16.msra.mxu0 %v5387
  %7561 = vmatpush.bf16.msra.mxu0 %v5380
  %7562 = vmatpush.bf16.msra.mxu0 %v5373
  %7563 = vmatpush.bf16.msra.mxu0 %v5366
  %7564 = vmatpush.bf16.msra.mxu0 %v5359
  %7565 = vmatmul.bf16.gmra.mxu0 %v41
  %v7566 = vpop.f32.mrf.mxu0
  %v7567 = vadd.f32 %v7554, %v7566
  %v7568 = vpop.f32.mrf.mxu0
  %7569 = vdwg.mxu0
  %7570 = vmatpush.bf16.msra.mxu0 %v5464
  %7571 = vmatpush.bf16.msra.mxu0 %v5457
  %7572 = vmatpush.bf16.msra.mxu0 %v5450
  %7573 = vmatpush.bf16.msra.mxu0 %v5443
  %7574 = vmatpush.bf16.msra.mxu0 %v5436
  %7575 = vmatpush.bf16.msra.mxu0 %v5429
  %7576 = vmatpush.bf16.msra.mxu0 %v5422
  %7577 = vmatpush.bf16.msra.mxu0 %v5415
  %7578 = vmatmul.bf16.gmra.mxu0 %v42
  %v7579 = vpop.f32.mrf.mxu0
  %v7580 = vadd.f32 %v7567, %v7579
  %v7581 = vpop.f32.mrf.mxu0
  %7582 = vdwg.mxu0
  %7583 = vmatpush.bf16.msra.mxu0 %v5520
  %7584 = vmatpush.bf16.msra.mxu0 %v5513
  %7585 = vmatpush.bf16.msra.mxu0 %v5506
  %7586 = vmatpush.bf16.msra.mxu0 %v5499
  %7587 = vmatpush.bf16.msra.mxu0 %v5492
  %7588 = vmatpush.bf16.msra.mxu0 %v5485
  %7589 = vmatpush.bf16.msra.mxu0 %v5478
  %7590 = vmatpush.bf16.msra.mxu0 %v5471
  %7591 = vmatmul.bf16.gmra.mxu0 %v43
  %v7592 = vpop.f32.mrf.mxu0
  %v7593 = vadd.f32 %v7580, %v7592
  %v7594 = vpop.f32.mrf.mxu0
  %7595 = vdwg.mxu0
  %7596 = vmatpush.bf16.msra.mxu0 %v5576
  %7597 = vmatpush.bf16.msra.mxu0 %v5569
  %7598 = vmatpush.bf16.msra.mxu0 %v5562
  %7599 = vmatpush.bf16.msra.mxu0 %v5555
  %7600 = vmatpush.bf16.msra.mxu0 %v5548
  %7601 = vmatpush.bf16.msra.mxu0 %v5541
  %7602 = vmatpush.bf16.msra.mxu0 %v5534
  %7603 = vmatpush.bf16.msra.mxu0 %v5527
  %7604 = vmatmul.bf16.gmra.mxu0 %v44
  %v7605 = vpop.f32.mrf.mxu0
  %v7606 = vadd.f32 %v7593, %v7605
  %v7607 = vpop.f32.mrf.mxu0
  %7608 = vdwg.mxu0
  %7609 = vmatpush.bf16.msra.mxu0 %v5632
  %7610 = vmatpush.bf16.msra.mxu0 %v5625
  %7611 = vmatpush.bf16.msra.mxu0 %v5618
  %7612 = vmatpush.bf16.msra.mxu0 %v5611
  %7613 = vmatpush.bf16.msra.mxu0 %v5604
  %7614 = vmatpush.bf16.msra.mxu0 %v5597
  %7615 = vmatpush.bf16.msra.mxu0 %v5590
  %7616 = vmatpush.bf16.msra.mxu0 %v5583
  %7617 = vmatmul.bf16.gmra.mxu0 %v45
  %v7618 = vpop.f32.mrf.mxu0
  %v7619 = vadd.f32 %v7606, %v7618
  %v7620 = vpop.f32.mrf.mxu0
  %7621 = vdwg.mxu0
  %7622 = vmatpush.bf16.msra.mxu0 %v5688
  %7623 = vmatpush.bf16.msra.mxu0 %v5681
  %7624 = vmatpush.bf16.msra.mxu0 %v5674
  %7625 = vmatpush.bf16.msra.mxu0 %v5667
  %7626 = vmatpush.bf16.msra.mxu0 %v5660
  %7627 = vmatpush.bf16.msra.mxu0 %v5653
  %7628 = vmatpush.bf16.msra.mxu0 %v5646
  %7629 = vmatpush.bf16.msra.mxu0 %v5639
  %7630 = vmatmul.bf16.gmra.mxu0 %v46
  %v7631 = vpop.f32.mrf.mxu0
  %v7632 = vadd.f32 %v7619, %v7631
  %v7633 = vpop.f32.mrf.mxu0
  %7634 = vdwg.mxu0
  %7635 = vmatpush.bf16.msra.mxu0 %v5744
  %7636 = vmatpush.bf16.msra.mxu0 %v5737
  %7637 = vmatpush.bf16.msra.mxu0 %v5730
  %7638 = vmatpush.bf16.msra.mxu0 %v5723
  %7639 = vmatpush.bf16.msra.mxu0 %v5716
  %7640 = vmatpush.bf16.msra.mxu0 %v5709
  %7641 = vmatpush.bf16.msra.mxu0 %v5702
  %7642 = vmatpush.bf16.msra.mxu0 %v5695
  %7643 = vmatmul.bf16.gmra.mxu0 %v47
  %v7644 = vpop.f32.mrf.mxu0
  %v7645 = vadd.f32 %v7632, %v7644
  %v7646 = vpop.f32.mrf.mxu0
  %7647 = vdwg.mxu0
  %7648 = vmatpush.bf16.msra.mxu0 %v5800
  %7649 = vmatpush.bf16.msra.mxu0 %v5793
  %7650 = vmatpush.bf16.msra.mxu0 %v5786
  %7651 = vmatpush.bf16.msra.mxu0 %v5779
  %7652 = vmatpush.bf16.msra.mxu0 %v5772
  %7653 = vmatpush.bf16.msra.mxu0 %v5765
  %7654 = vmatpush.bf16.msra.mxu0 %v5758
  %7655 = vmatpush.bf16.msra.mxu0 %v5751
  %7656 = vmatmul.bf16.gmra.mxu0 %v48
  %v7657 = vpop.f32.mrf.mxu0
  %v7658 = vadd.f32 %v7645, %v7657
  %v7659 = vpop.f32.mrf.mxu0
  %7660 = vdwg.mxu0
  %7661 = vmatpush.bf16.msra.mxu0 %v5856
  %7662 = vmatpush.bf16.msra.mxu0 %v5849
  %7663 = vmatpush.bf16.msra.mxu0 %v5842
  %7664 = vmatpush.bf16.msra.mxu0 %v5835
  %7665 = vmatpush.bf16.msra.mxu0 %v5828
  %7666 = vmatpush.bf16.msra.mxu0 %v5821
  %7667 = vmatpush.bf16.msra.mxu0 %v5814
  %7668 = vmatpush.bf16.msra.mxu0 %v5807
  %7669 = vmatmul.bf16.gmra.mxu0 %v49
  %v7670 = vpop.f32.mrf.mxu0
  %v7671 = vadd.f32 %v7658, %v7670
  %v7672 = vpop.f32.mrf.mxu0
  %7673 = vdwg.mxu0
  %7674 = vmatpush.bf16.msra.mxu0 %v5912
  %7675 = vmatpush.bf16.msra.mxu0 %v5905
  %7676 = vmatpush.bf16.msra.mxu0 %v5898
  %7677 = vmatpush.bf16.msra.mxu0 %v5891
  %7678 = vmatpush.bf16.msra.mxu0 %v5884
  %7679 = vmatpush.bf16.msra.mxu0 %v5877
  %7680 = vmatpush.bf16.msra.mxu0 %v5870
  %7681 = vmatpush.bf16.msra.mxu0 %v5863
  %7682 = vmatmul.bf16.gmra.mxu0 %v50
  %v7683 = vpop.f32.mrf.mxu0
  %v7684 = vadd.f32 %v7671, %v7683
  %v7685 = vpop.f32.mrf.mxu0
  %7686 = vdwg.mxu0
  %7687 = vmatpush.bf16.msra.mxu0 %v5968
  %7688 = vmatpush.bf16.msra.mxu0 %v5961
  %7689 = vmatpush.bf16.msra.mxu0 %v5954
  %7690 = vmatpush.bf16.msra.mxu0 %v5947
  %7691 = vmatpush.bf16.msra.mxu0 %v5940
  %7692 = vmatpush.bf16.msra.mxu0 %v5933
  %7693 = vmatpush.bf16.msra.mxu0 %v5926
  %7694 = vmatpush.bf16.msra.mxu0 %v5919
  %7695 = vmatmul.bf16.gmra.mxu0 %v51
  %v7696 = vpop.f32.mrf.mxu0
  %v7697 = vadd.f32 %v7684, %v7696
  %v7698 = vpop.f32.mrf.mxu0
  %7699 = vdwg.mxu0
  %7700 = vmatpush.bf16.msra.mxu0 %v6024
  %7701 = vmatpush.bf16.msra.mxu0 %v6017
  %7702 = vmatpush.bf16.msra.mxu0 %v6010
  %7703 = vmatpush.bf16.msra.mxu0 %v6003
  %7704 = vmatpush.bf16.msra.mxu0 %v5996
  %7705 = vmatpush.bf16.msra.mxu0 %v5989
  %7706 = vmatpush.bf16.msra.mxu0 %v5982
  %7707 = vmatpush.bf16.msra.mxu0 %v5975
  %7708 = vmatmul.bf16.gmra.mxu0 %v52
  %v7709 = vpop.f32.mrf.mxu0
  %v7710 = vadd.f32 %v7697, %v7709
  %v7711 = vpop.f32.mrf.mxu0
  %7712 = vdwg.mxu0
  %7713 = vmatpush.bf16.msra.mxu0 %v6080
  %7714 = vmatpush.bf16.msra.mxu0 %v6073
  %7715 = vmatpush.bf16.msra.mxu0 %v6066
  %7716 = vmatpush.bf16.msra.mxu0 %v6059
  %7717 = vmatpush.bf16.msra.mxu0 %v6052
  %7718 = vmatpush.bf16.msra.mxu0 %v6045
  %7719 = vmatpush.bf16.msra.mxu0 %v6038
  %7720 = vmatpush.bf16.msra.mxu0 %v6031
  %7721 = vmatmul.bf16.gmra.mxu0 %v53
  %v7722 = vpop.f32.mrf.mxu0
  %v7723 = vadd.f32 %v7710, %v7722
  %v7724 = vpop.f32.mrf.mxu0
  %7725 = vdwg.mxu0
  %7726 = vmatpush.bf16.msra.mxu0 %v6136
  %7727 = vmatpush.bf16.msra.mxu0 %v6129
  %7728 = vmatpush.bf16.msra.mxu0 %v6122
  %7729 = vmatpush.bf16.msra.mxu0 %v6115
  %7730 = vmatpush.bf16.msra.mxu0 %v6108
  %7731 = vmatpush.bf16.msra.mxu0 %v6101
  %7732 = vmatpush.bf16.msra.mxu0 %v6094
  %7733 = vmatpush.bf16.msra.mxu0 %v6087
  %7734 = vmatmul.bf16.gmra.mxu0 %v54
  %v7735 = vpop.f32.mrf.mxu0
  %v7736 = vadd.f32 %v7723, %v7735
  %v7737 = vpop.f32.mrf.mxu0
  %7738 = vdwg.mxu0
  %7739 = vmatpush.bf16.msra.mxu0 %v6192
  %7740 = vmatpush.bf16.msra.mxu0 %v6185
  %7741 = vmatpush.bf16.msra.mxu0 %v6178
  %7742 = vmatpush.bf16.msra.mxu0 %v6171
  %7743 = vmatpush.bf16.msra.mxu0 %v6164
  %7744 = vmatpush.bf16.msra.mxu0 %v6157
  %7745 = vmatpush.bf16.msra.mxu0 %v6150
  %7746 = vmatpush.bf16.msra.mxu0 %v6143
  %7747 = vmatmul.bf16.gmra.mxu0 %v55
  %v7748 = vpop.f32.mrf.mxu0
  %v7749 = vadd.f32 %v7736, %v7748
  %v7750 = vpop.f32.mrf.mxu0
  %7751 = vdwg.mxu0
  %7752 = vmatpush.bf16.msra.mxu0 %v6248
  %7753 = vmatpush.bf16.msra.mxu0 %v6241
  %7754 = vmatpush.bf16.msra.mxu0 %v6234
  %7755 = vmatpush.bf16.msra.mxu0 %v6227
  %7756 = vmatpush.bf16.msra.mxu0 %v6220
  %7757 = vmatpush.bf16.msra.mxu0 %v6213
  %7758 = vmatpush.bf16.msra.mxu0 %v6206
  %7759 = vmatpush.bf16.msra.mxu0 %v6199
  %7760 = vmatmul.bf16.gmra.mxu0 %v56
  %v7761 = vpop.f32.mrf.mxu0
  %v7762 = vadd.f32 %v7749, %v7761
  %v7763 = vpop.f32.mrf.mxu0
  %7764 = vdwg.mxu0
  %7765 = vmatpush.bf16.msra.mxu0 %v6304
  %7766 = vmatpush.bf16.msra.mxu0 %v6297
  %7767 = vmatpush.bf16.msra.mxu0 %v6290
  %7768 = vmatpush.bf16.msra.mxu0 %v6283
  %7769 = vmatpush.bf16.msra.mxu0 %v6276
  %7770 = vmatpush.bf16.msra.mxu0 %v6269
  %7771 = vmatpush.bf16.msra.mxu0 %v6262
  %7772 = vmatpush.bf16.msra.mxu0 %v6255
  %7773 = vmatmul.bf16.gmra.mxu0 %v57
  %v7774 = vpop.f32.mrf.mxu0
  %v7775 = vadd.f32 %v7762, %v7774
  %v7776 = vpop.f32.mrf.mxu0
  %7777 = vdwg.mxu0
  %7778 = vmatpush.bf16.msra.mxu0 0
  %7779 = vmatpush.bf16.msra.mxu0 0
  %7780 = vmatpush.bf16.msra.mxu0 0
  %7781 = vmatpush.bf16.msra.mxu0 0
  %7782 = vmatpush.bf16.msra.mxu0 0
  %7783 = vmatpush.bf16.msra.mxu0 0
  %7784 = vmatpush.bf16.msra.mxu0 0
  %7785 = vmatpush.bf16.msra.mxu0 %v6311
  %7786 = vmatmul.bf16.gmra.mxu0 %v7503
  %v7787 = vpop.f32.mrf.mxu0
  %v7788 = vadd.f32 %v7775, %v7787
  %v7789 = vpop.f32.mrf.mxu0
  %7790 = vdwg.mxu0
  %7791 = vmatpush.bf16.msra.mxu0 %v5185
  %7792 = vmatpush.bf16.msra.mxu0 %v5178
  %7793 = vmatpush.bf16.msra.mxu0 %v5171
  %7794 = vmatpush.bf16.msra.mxu0 %v5164
  %7795 = vmatpush.bf16.msra.mxu0 %v5157
  %7796 = vmatpush.bf16.msra.mxu0 %v5150
  %7797 = vmatpush.bf16.msra.mxu0 %v5143
  %7798 = vmatpush.bf16.msra.mxu0 %v5136
  %7799 = vmatmul.bf16.gmra.mxu0 %v37
  %v7800 = vpop.f32.mrf.mxu0
  %v7801 = vadd.f32 %v1415, %v7800
  %v7802 = vpop.f32.mrf.mxu0
  %7803 = vdwg.mxu0
  %7804 = vmatpush.bf16.msra.mxu0 %v5241
  %7805 = vmatpush.bf16.msra.mxu0 %v5234
  %7806 = vmatpush.bf16.msra.mxu0 %v5227
  %7807 = vmatpush.bf16.msra.mxu0 %v5220
  %7808 = vmatpush.bf16.msra.mxu0 %v5213
  %7809 = vmatpush.bf16.msra.mxu0 %v5206
  %7810 = vmatpush.bf16.msra.mxu0 %v5199
  %7811 = vmatpush.bf16.msra.mxu0 %v5192
  %7812 = vmatmul.bf16.gmra.mxu0 %v38
  %v7813 = vpop.f32.mrf.mxu0
  %v7814 = vadd.f32 %v7801, %v7813
  %v7815 = vpop.f32.mrf.mxu0
  %7816 = vdwg.mxu0
  %7817 = vmatpush.bf16.msra.mxu0 %v5297
  %7818 = vmatpush.bf16.msra.mxu0 %v5290
  %7819 = vmatpush.bf16.msra.mxu0 %v5283
  %7820 = vmatpush.bf16.msra.mxu0 %v5276
  %7821 = vmatpush.bf16.msra.mxu0 %v5269
  %7822 = vmatpush.bf16.msra.mxu0 %v5262
  %7823 = vmatpush.bf16.msra.mxu0 %v5255
  %7824 = vmatpush.bf16.msra.mxu0 %v5248
  %7825 = vmatmul.bf16.gmra.mxu0 %v39
  %v7826 = vpop.f32.mrf.mxu0
  %v7827 = vadd.f32 %v7814, %v7826
  %v7828 = vpop.f32.mrf.mxu0
  %7829 = vdwg.mxu0
  %7830 = vmatpush.bf16.msra.mxu0 %v5353
  %7831 = vmatpush.bf16.msra.mxu0 %v5346
  %7832 = vmatpush.bf16.msra.mxu0 %v5339
  %7833 = vmatpush.bf16.msra.mxu0 %v5332
  %7834 = vmatpush.bf16.msra.mxu0 %v5325
  %7835 = vmatpush.bf16.msra.mxu0 %v5318
  %7836 = vmatpush.bf16.msra.mxu0 %v5311
  %7837 = vmatpush.bf16.msra.mxu0 %v5304
  %7838 = vmatmul.bf16.gmra.mxu0 %v40
  %v7839 = vpop.f32.mrf.mxu0
  %v7840 = vadd.f32 %v7827, %v7839
  %v7841 = vpop.f32.mrf.mxu0
  %7842 = vdwg.mxu0
  %7843 = vmatpush.bf16.msra.mxu0 %v5409
  %7844 = vmatpush.bf16.msra.mxu0 %v5402
  %7845 = vmatpush.bf16.msra.mxu0 %v5395
  %7846 = vmatpush.bf16.msra.mxu0 %v5388
  %7847 = vmatpush.bf16.msra.mxu0 %v5381
  %7848 = vmatpush.bf16.msra.mxu0 %v5374
  %7849 = vmatpush.bf16.msra.mxu0 %v5367
  %7850 = vmatpush.bf16.msra.mxu0 %v5360
  %7851 = vmatmul.bf16.gmra.mxu0 %v41
  %v7852 = vpop.f32.mrf.mxu0
  %v7853 = vadd.f32 %v7840, %v7852
  %v7854 = vpop.f32.mrf.mxu0
  %7855 = vdwg.mxu0
  %7856 = vmatpush.bf16.msra.mxu0 %v5465
  %7857 = vmatpush.bf16.msra.mxu0 %v5458
  %7858 = vmatpush.bf16.msra.mxu0 %v5451
  %7859 = vmatpush.bf16.msra.mxu0 %v5444
  %7860 = vmatpush.bf16.msra.mxu0 %v5437
  %7861 = vmatpush.bf16.msra.mxu0 %v5430
  %7862 = vmatpush.bf16.msra.mxu0 %v5423
  %7863 = vmatpush.bf16.msra.mxu0 %v5416
  %7864 = vmatmul.bf16.gmra.mxu0 %v42
  %v7865 = vpop.f32.mrf.mxu0
  %v7866 = vadd.f32 %v7853, %v7865
  %v7867 = vpop.f32.mrf.mxu0
  %7868 = vdwg.mxu0
  %7869 = vmatpush.bf16.msra.mxu0 %v5521
  %7870 = vmatpush.bf16.msra.mxu0 %v5514
  %7871 = vmatpush.bf16.msra.mxu0 %v5507
  %7872 = vmatpush.bf16.msra.mxu0 %v5500
  %7873 = vmatpush.bf16.msra.mxu0 %v5493
  %7874 = vmatpush.bf16.msra.mxu0 %v5486
  %7875 = vmatpush.bf16.msra.mxu0 %v5479
  %7876 = vmatpush.bf16.msra.mxu0 %v5472
  %7877 = vmatmul.bf16.gmra.mxu0 %v43
  %v7878 = vpop.f32.mrf.mxu0
  %v7879 = vadd.f32 %v7866, %v7878
  %v7880 = vpop.f32.mrf.mxu0
  %7881 = vdwg.mxu0
  %7882 = vmatpush.bf16.msra.mxu0 %v5577
  %7883 = vmatpush.bf16.msra.mxu0 %v5570
  %7884 = vmatpush.bf16.msra.mxu0 %v5563
  %7885 = vmatpush.bf16.msra.mxu0 %v5556
  %7886 = vmatpush.bf16.msra.mxu0 %v5549
  %7887 = vmatpush.bf16.msra.mxu0 %v5542
  %7888 = vmatpush.bf16.msra.mxu0 %v5535
  %7889 = vmatpush.bf16.msra.mxu0 %v5528
  %7890 = vmatmul.bf16.gmra.mxu0 %v44
  %v7891 = vpop.f32.mrf.mxu0
  %v7892 = vadd.f32 %v7879, %v7891
  %v7893 = vpop.f32.mrf.mxu0
  %7894 = vdwg.mxu0
  %7895 = vmatpush.bf16.msra.mxu0 %v5633
  %7896 = vmatpush.bf16.msra.mxu0 %v5626
  %7897 = vmatpush.bf16.msra.mxu0 %v5619
  %7898 = vmatpush.bf16.msra.mxu0 %v5612
  %7899 = vmatpush.bf16.msra.mxu0 %v5605
  %7900 = vmatpush.bf16.msra.mxu0 %v5598
  %7901 = vmatpush.bf16.msra.mxu0 %v5591
  %7902 = vmatpush.bf16.msra.mxu0 %v5584
  %7903 = vmatmul.bf16.gmra.mxu0 %v45
  %v7904 = vpop.f32.mrf.mxu0
  %v7905 = vadd.f32 %v7892, %v7904
  %v7906 = vpop.f32.mrf.mxu0
  %7907 = vdwg.mxu0
  %7908 = vmatpush.bf16.msra.mxu0 %v5689
  %7909 = vmatpush.bf16.msra.mxu0 %v5682
  %7910 = vmatpush.bf16.msra.mxu0 %v5675
  %7911 = vmatpush.bf16.msra.mxu0 %v5668
  %7912 = vmatpush.bf16.msra.mxu0 %v5661
  %7913 = vmatpush.bf16.msra.mxu0 %v5654
  %7914 = vmatpush.bf16.msra.mxu0 %v5647
  %7915 = vmatpush.bf16.msra.mxu0 %v5640
  %7916 = vmatmul.bf16.gmra.mxu0 %v46
  %v7917 = vpop.f32.mrf.mxu0
  %v7918 = vadd.f32 %v7905, %v7917
  %v7919 = vpop.f32.mrf.mxu0
  %7920 = vdwg.mxu0
  %7921 = vmatpush.bf16.msra.mxu0 %v5745
  %7922 = vmatpush.bf16.msra.mxu0 %v5738
  %7923 = vmatpush.bf16.msra.mxu0 %v5731
  %7924 = vmatpush.bf16.msra.mxu0 %v5724
  %7925 = vmatpush.bf16.msra.mxu0 %v5717
  %7926 = vmatpush.bf16.msra.mxu0 %v5710
  %7927 = vmatpush.bf16.msra.mxu0 %v5703
  %7928 = vmatpush.bf16.msra.mxu0 %v5696
  %7929 = vmatmul.bf16.gmra.mxu0 %v47
  %v7930 = vpop.f32.mrf.mxu0
  %v7931 = vadd.f32 %v7918, %v7930
  %v7932 = vpop.f32.mrf.mxu0
  %7933 = vdwg.mxu0
  %7934 = vmatpush.bf16.msra.mxu0 %v5801
  %7935 = vmatpush.bf16.msra.mxu0 %v5794
  %7936 = vmatpush.bf16.msra.mxu0 %v5787
  %7937 = vmatpush.bf16.msra.mxu0 %v5780
  %7938 = vmatpush.bf16.msra.mxu0 %v5773
  %7939 = vmatpush.bf16.msra.mxu0 %v5766
  %7940 = vmatpush.bf16.msra.mxu0 %v5759
  %7941 = vmatpush.bf16.msra.mxu0 %v5752
  %7942 = vmatmul.bf16.gmra.mxu0 %v48
  %v7943 = vpop.f32.mrf.mxu0
  %v7944 = vadd.f32 %v7931, %v7943
  %v7945 = vpop.f32.mrf.mxu0
  %7946 = vdwg.mxu0
  %7947 = vmatpush.bf16.msra.mxu0 %v5857
  %7948 = vmatpush.bf16.msra.mxu0 %v5850
  %7949 = vmatpush.bf16.msra.mxu0 %v5843
  %7950 = vmatpush.bf16.msra.mxu0 %v5836
  %7951 = vmatpush.bf16.msra.mxu0 %v5829
  %7952 = vmatpush.bf16.msra.mxu0 %v5822
  %7953 = vmatpush.bf16.msra.mxu0 %v5815
  %7954 = vmatpush.bf16.msra.mxu0 %v5808
  %7955 = vmatmul.bf16.gmra.mxu0 %v49
  %v7956 = vpop.f32.mrf.mxu0
  %v7957 = vadd.f32 %v7944, %v7956
  %v7958 = vpop.f32.mrf.mxu0
  %7959 = vdwg.mxu0
  %7960 = vmatpush.bf16.msra.mxu0 %v5913
  %7961 = vmatpush.bf16.msra.mxu0 %v5906
  %7962 = vmatpush.bf16.msra.mxu0 %v5899
  %7963 = vmatpush.bf16.msra.mxu0 %v5892
  %7964 = vmatpush.bf16.msra.mxu0 %v5885
  %7965 = vmatpush.bf16.msra.mxu0 %v5878
  %7966 = vmatpush.bf16.msra.mxu0 %v5871
  %7967 = vmatpush.bf16.msra.mxu0 %v5864
  %7968 = vmatmul.bf16.gmra.mxu0 %v50
  %v7969 = vpop.f32.mrf.mxu0
  %v7970 = vadd.f32 %v7957, %v7969
  %v7971 = vpop.f32.mrf.mxu0
  %7972 = vdwg.mxu0
  %7973 = vmatpush.bf16.msra.mxu0 %v5969
  %7974 = vmatpush.bf16.msra.mxu0 %v5962
  %7975 = vmatpush.bf16.msra.mxu0 %v5955
  %7976 = vmatpush.bf16.msra.mxu0 %v5948
  %7977 = vmatpush.bf16.msra.mxu0 %v5941
  %7978 = vmatpush.bf16.msra.mxu0 %v5934
  %7979 = vmatpush.bf16.msra.mxu0 %v5927
  %7980 = vmatpush.bf16.msra.mxu0 %v5920
  %7981 = vmatmul.bf16.gmra.mxu0 %v51
  %v7982 = vpop.f32.mrf.mxu0
  %v7983 = vadd.f32 %v7970, %v7982
  %v7984 = vpop.f32.mrf.mxu0
  %7985 = vdwg.mxu0
  %7986 = vmatpush.bf16.msra.mxu0 %v6025
  %7987 = vmatpush.bf16.msra.mxu0 %v6018
  %7988 = vmatpush.bf16.msra.mxu0 %v6011
  %7989 = vmatpush.bf16.msra.mxu0 %v6004
  %7990 = vmatpush.bf16.msra.mxu0 %v5997
  %7991 = vmatpush.bf16.msra.mxu0 %v5990
  %7992 = vmatpush.bf16.msra.mxu0 %v5983
  %7993 = vmatpush.bf16.msra.mxu0 %v5976
  %7994 = vmatmul.bf16.gmra.mxu0 %v52
  %v7995 = vpop.f32.mrf.mxu0
  %v7996 = vadd.f32 %v7983, %v7995
  %v7997 = vpop.f32.mrf.mxu0
  %7998 = vdwg.mxu0
  %7999 = vmatpush.bf16.msra.mxu0 %v6081
  %8000 = vmatpush.bf16.msra.mxu0 %v6074
  %8001 = vmatpush.bf16.msra.mxu0 %v6067
  %8002 = vmatpush.bf16.msra.mxu0 %v6060
  %8003 = vmatpush.bf16.msra.mxu0 %v6053
  %8004 = vmatpush.bf16.msra.mxu0 %v6046
  %8005 = vmatpush.bf16.msra.mxu0 %v6039
  %8006 = vmatpush.bf16.msra.mxu0 %v6032
  %8007 = vmatmul.bf16.gmra.mxu0 %v53
  %v8008 = vpop.f32.mrf.mxu0
  %v8009 = vadd.f32 %v7996, %v8008
  %v8010 = vpop.f32.mrf.mxu0
  %8011 = vdwg.mxu0
  %8012 = vmatpush.bf16.msra.mxu0 %v6137
  %8013 = vmatpush.bf16.msra.mxu0 %v6130
  %8014 = vmatpush.bf16.msra.mxu0 %v6123
  %8015 = vmatpush.bf16.msra.mxu0 %v6116
  %8016 = vmatpush.bf16.msra.mxu0 %v6109
  %8017 = vmatpush.bf16.msra.mxu0 %v6102
  %8018 = vmatpush.bf16.msra.mxu0 %v6095
  %8019 = vmatpush.bf16.msra.mxu0 %v6088
  %8020 = vmatmul.bf16.gmra.mxu0 %v54
  %v8021 = vpop.f32.mrf.mxu0
  %v8022 = vadd.f32 %v8009, %v8021
  %v8023 = vpop.f32.mrf.mxu0
  %8024 = vdwg.mxu0
  %8025 = vmatpush.bf16.msra.mxu0 %v6193
  %8026 = vmatpush.bf16.msra.mxu0 %v6186
  %8027 = vmatpush.bf16.msra.mxu0 %v6179
  %8028 = vmatpush.bf16.msra.mxu0 %v6172
  %8029 = vmatpush.bf16.msra.mxu0 %v6165
  %8030 = vmatpush.bf16.msra.mxu0 %v6158
  %8031 = vmatpush.bf16.msra.mxu0 %v6151
  %8032 = vmatpush.bf16.msra.mxu0 %v6144
  %8033 = vmatmul.bf16.gmra.mxu0 %v55
  %v8034 = vpop.f32.mrf.mxu0
  %v8035 = vadd.f32 %v8022, %v8034
  %v8036 = vpop.f32.mrf.mxu0
  %8037 = vdwg.mxu0
  %8038 = vmatpush.bf16.msra.mxu0 %v6249
  %8039 = vmatpush.bf16.msra.mxu0 %v6242
  %8040 = vmatpush.bf16.msra.mxu0 %v6235
  %8041 = vmatpush.bf16.msra.mxu0 %v6228
  %8042 = vmatpush.bf16.msra.mxu0 %v6221
  %8043 = vmatpush.bf16.msra.mxu0 %v6214
  %8044 = vmatpush.bf16.msra.mxu0 %v6207
  %8045 = vmatpush.bf16.msra.mxu0 %v6200
  %8046 = vmatmul.bf16.gmra.mxu0 %v56
  %v8047 = vpop.f32.mrf.mxu0
  %v8048 = vadd.f32 %v8035, %v8047
  %v8049 = vpop.f32.mrf.mxu0
  %8050 = vdwg.mxu0
  %8051 = vmatpush.bf16.msra.mxu0 %v6305
  %8052 = vmatpush.bf16.msra.mxu0 %v6298
  %8053 = vmatpush.bf16.msra.mxu0 %v6291
  %8054 = vmatpush.bf16.msra.mxu0 %v6284
  %8055 = vmatpush.bf16.msra.mxu0 %v6277
  %8056 = vmatpush.bf16.msra.mxu0 %v6270
  %8057 = vmatpush.bf16.msra.mxu0 %v6263
  %8058 = vmatpush.bf16.msra.mxu0 %v6256
  %8059 = vmatmul.bf16.gmra.mxu0 %v57
  %v8060 = vpop.f32.mrf.mxu0
  %v8061 = vadd.f32 %v8048, %v8060
  %v8062 = vpop.f32.mrf.mxu0
  %8063 = vdwg.mxu0
  %8064 = vmatpush.bf16.msra.mxu0 0
  %8065 = vmatpush.bf16.msra.mxu0 0
  %8066 = vmatpush.bf16.msra.mxu0 0
  %8067 = vmatpush.bf16.msra.mxu0 0
  %8068 = vmatpush.bf16.msra.mxu0 0
  %8069 = vmatpush.bf16.msra.mxu0 0
  %8070 = vmatpush.bf16.msra.mxu0 0
  %8071 = vmatpush.bf16.msra.mxu0 %v6312
  %8072 = vmatmul.bf16.gmra.mxu0 %v7503
  %v8073 = vpop.f32.mrf.mxu0
  %v8074 = vadd.f32 %v8061, %v8073
  %v8075 = vpop.f32.mrf.mxu0
  %8076 = vdwg.mxu0
  %8077 = vmatpush.bf16.msra.mxu0 %v5186
  %8078 = vmatpush.bf16.msra.mxu0 %v5179
  %8079 = vmatpush.bf16.msra.mxu0 %v5172
  %8080 = vmatpush.bf16.msra.mxu0 %v5165
  %8081 = vmatpush.bf16.msra.mxu0 %v5158
  %8082 = vmatpush.bf16.msra.mxu0 %v5151
  %8083 = vmatpush.bf16.msra.mxu0 %v5144
  %8084 = vmatpush.bf16.msra.mxu0 %v5137
  %8085 = vmatmul.bf16.gmra.mxu0 %v37
  %v8086 = vpop.f32.mrf.mxu0
  %v8087 = vadd.f32 %v1415, %v8086
  %v8088 = vpop.f32.mrf.mxu0
  %8089 = vdwg.mxu0
  %8090 = vmatpush.bf16.msra.mxu0 %v5242
  %8091 = vmatpush.bf16.msra.mxu0 %v5235
  %8092 = vmatpush.bf16.msra.mxu0 %v5228
  %8093 = vmatpush.bf16.msra.mxu0 %v5221
  %8094 = vmatpush.bf16.msra.mxu0 %v5214
  %8095 = vmatpush.bf16.msra.mxu0 %v5207
  %8096 = vmatpush.bf16.msra.mxu0 %v5200
  %8097 = vmatpush.bf16.msra.mxu0 %v5193
  %8098 = vmatmul.bf16.gmra.mxu0 %v38
  %v8099 = vpop.f32.mrf.mxu0
  %v8100 = vadd.f32 %v8087, %v8099
  %v8101 = vpop.f32.mrf.mxu0
  %8102 = vdwg.mxu0
  %8103 = vmatpush.bf16.msra.mxu0 %v5298
  %8104 = vmatpush.bf16.msra.mxu0 %v5291
  %8105 = vmatpush.bf16.msra.mxu0 %v5284
  %8106 = vmatpush.bf16.msra.mxu0 %v5277
  %8107 = vmatpush.bf16.msra.mxu0 %v5270
  %8108 = vmatpush.bf16.msra.mxu0 %v5263
  %8109 = vmatpush.bf16.msra.mxu0 %v5256
  %8110 = vmatpush.bf16.msra.mxu0 %v5249
  %8111 = vmatmul.bf16.gmra.mxu0 %v39
  %v8112 = vpop.f32.mrf.mxu0
  %v8113 = vadd.f32 %v8100, %v8112
  %v8114 = vpop.f32.mrf.mxu0
  %8115 = vdwg.mxu0
  %8116 = vmatpush.bf16.msra.mxu0 %v5354
  %8117 = vmatpush.bf16.msra.mxu0 %v5347
  %8118 = vmatpush.bf16.msra.mxu0 %v5340
  %8119 = vmatpush.bf16.msra.mxu0 %v5333
  %8120 = vmatpush.bf16.msra.mxu0 %v5326
  %8121 = vmatpush.bf16.msra.mxu0 %v5319
  %8122 = vmatpush.bf16.msra.mxu0 %v5312
  %8123 = vmatpush.bf16.msra.mxu0 %v5305
  %8124 = vmatmul.bf16.gmra.mxu0 %v40
  %v8125 = vpop.f32.mrf.mxu0
  %v8126 = vadd.f32 %v8113, %v8125
  %v8127 = vpop.f32.mrf.mxu0
  %8128 = vdwg.mxu0
  %8129 = vmatpush.bf16.msra.mxu0 %v5410
  %8130 = vmatpush.bf16.msra.mxu0 %v5403
  %8131 = vmatpush.bf16.msra.mxu0 %v5396
  %8132 = vmatpush.bf16.msra.mxu0 %v5389
  %8133 = vmatpush.bf16.msra.mxu0 %v5382
  %8134 = vmatpush.bf16.msra.mxu0 %v5375
  %8135 = vmatpush.bf16.msra.mxu0 %v5368
  %8136 = vmatpush.bf16.msra.mxu0 %v5361
  %8137 = vmatmul.bf16.gmra.mxu0 %v41
  %v8138 = vpop.f32.mrf.mxu0
  %v8139 = vadd.f32 %v8126, %v8138
  %v8140 = vpop.f32.mrf.mxu0
  %8141 = vdwg.mxu0
  %8142 = vmatpush.bf16.msra.mxu0 %v5466
  %8143 = vmatpush.bf16.msra.mxu0 %v5459
  %8144 = vmatpush.bf16.msra.mxu0 %v5452
  %8145 = vmatpush.bf16.msra.mxu0 %v5445
  %8146 = vmatpush.bf16.msra.mxu0 %v5438
  %8147 = vmatpush.bf16.msra.mxu0 %v5431
  %8148 = vmatpush.bf16.msra.mxu0 %v5424
  %8149 = vmatpush.bf16.msra.mxu0 %v5417
  %8150 = vmatmul.bf16.gmra.mxu0 %v42
  %v8151 = vpop.f32.mrf.mxu0
  %v8152 = vadd.f32 %v8139, %v8151
  %v8153 = vpop.f32.mrf.mxu0
  %8154 = vdwg.mxu0
  %8155 = vmatpush.bf16.msra.mxu0 %v5522
  %8156 = vmatpush.bf16.msra.mxu0 %v5515
  %8157 = vmatpush.bf16.msra.mxu0 %v5508
  %8158 = vmatpush.bf16.msra.mxu0 %v5501
  %8159 = vmatpush.bf16.msra.mxu0 %v5494
  %8160 = vmatpush.bf16.msra.mxu0 %v5487
  %8161 = vmatpush.bf16.msra.mxu0 %v5480
  %8162 = vmatpush.bf16.msra.mxu0 %v5473
  %8163 = vmatmul.bf16.gmra.mxu0 %v43
  %v8164 = vpop.f32.mrf.mxu0
  %v8165 = vadd.f32 %v8152, %v8164
  %v8166 = vpop.f32.mrf.mxu0
  %8167 = vdwg.mxu0
  %8168 = vmatpush.bf16.msra.mxu0 %v5578
  %8169 = vmatpush.bf16.msra.mxu0 %v5571
  %8170 = vmatpush.bf16.msra.mxu0 %v5564
  %8171 = vmatpush.bf16.msra.mxu0 %v5557
  %8172 = vmatpush.bf16.msra.mxu0 %v5550
  %8173 = vmatpush.bf16.msra.mxu0 %v5543
  %8174 = vmatpush.bf16.msra.mxu0 %v5536
  %8175 = vmatpush.bf16.msra.mxu0 %v5529
  %8176 = vmatmul.bf16.gmra.mxu0 %v44
  %v8177 = vpop.f32.mrf.mxu0
  %v8178 = vadd.f32 %v8165, %v8177
  %v8179 = vpop.f32.mrf.mxu0
  %8180 = vdwg.mxu0
  %8181 = vmatpush.bf16.msra.mxu0 %v5634
  %8182 = vmatpush.bf16.msra.mxu0 %v5627
  %8183 = vmatpush.bf16.msra.mxu0 %v5620
  %8184 = vmatpush.bf16.msra.mxu0 %v5613
  %8185 = vmatpush.bf16.msra.mxu0 %v5606
  %8186 = vmatpush.bf16.msra.mxu0 %v5599
  %8187 = vmatpush.bf16.msra.mxu0 %v5592
  %8188 = vmatpush.bf16.msra.mxu0 %v5585
  %8189 = vmatmul.bf16.gmra.mxu0 %v45
  %v8190 = vpop.f32.mrf.mxu0
  %v8191 = vadd.f32 %v8178, %v8190
  %v8192 = vpop.f32.mrf.mxu0
  %8193 = vdwg.mxu0
  %8194 = vmatpush.bf16.msra.mxu0 %v5690
  %8195 = vmatpush.bf16.msra.mxu0 %v5683
  %8196 = vmatpush.bf16.msra.mxu0 %v5676
  %8197 = vmatpush.bf16.msra.mxu0 %v5669
  %8198 = vmatpush.bf16.msra.mxu0 %v5662
  %8199 = vmatpush.bf16.msra.mxu0 %v5655
  %8200 = vmatpush.bf16.msra.mxu0 %v5648
  %8201 = vmatpush.bf16.msra.mxu0 %v5641
  %8202 = vmatmul.bf16.gmra.mxu0 %v46
  %v8203 = vpop.f32.mrf.mxu0
  %v8204 = vadd.f32 %v8191, %v8203
  %v8205 = vpop.f32.mrf.mxu0
  %8206 = vdwg.mxu0
  %8207 = vmatpush.bf16.msra.mxu0 %v5746
  %8208 = vmatpush.bf16.msra.mxu0 %v5739
  %8209 = vmatpush.bf16.msra.mxu0 %v5732
  %8210 = vmatpush.bf16.msra.mxu0 %v5725
  %8211 = vmatpush.bf16.msra.mxu0 %v5718
  %8212 = vmatpush.bf16.msra.mxu0 %v5711
  %8213 = vmatpush.bf16.msra.mxu0 %v5704
  %8214 = vmatpush.bf16.msra.mxu0 %v5697
  %8215 = vmatmul.bf16.gmra.mxu0 %v47
  %v8216 = vpop.f32.mrf.mxu0
  %v8217 = vadd.f32 %v8204, %v8216
  %v8218 = vpop.f32.mrf.mxu0
  %8219 = vdwg.mxu0
  %8220 = vmatpush.bf16.msra.mxu0 %v5802
  %8221 = vmatpush.bf16.msra.mxu0 %v5795
  %8222 = vmatpush.bf16.msra.mxu0 %v5788
  %8223 = vmatpush.bf16.msra.mxu0 %v5781
  %8224 = vmatpush.bf16.msra.mxu0 %v5774
  %8225 = vmatpush.bf16.msra.mxu0 %v5767
  %8226 = vmatpush.bf16.msra.mxu0 %v5760
  %8227 = vmatpush.bf16.msra.mxu0 %v5753
  %8228 = vmatmul.bf16.gmra.mxu0 %v48
  %v8229 = vpop.f32.mrf.mxu0
  %v8230 = vadd.f32 %v8217, %v8229
  %v8231 = vpop.f32.mrf.mxu0
  %8232 = vdwg.mxu0
  %8233 = vmatpush.bf16.msra.mxu0 %v5858
  %8234 = vmatpush.bf16.msra.mxu0 %v5851
  %8235 = vmatpush.bf16.msra.mxu0 %v5844
  %8236 = vmatpush.bf16.msra.mxu0 %v5837
  %8237 = vmatpush.bf16.msra.mxu0 %v5830
  %8238 = vmatpush.bf16.msra.mxu0 %v5823
  %8239 = vmatpush.bf16.msra.mxu0 %v5816
  %8240 = vmatpush.bf16.msra.mxu0 %v5809
  %8241 = vmatmul.bf16.gmra.mxu0 %v49
  %v8242 = vpop.f32.mrf.mxu0
  %v8243 = vadd.f32 %v8230, %v8242
  %v8244 = vpop.f32.mrf.mxu0
  %8245 = vdwg.mxu0
  %8246 = vmatpush.bf16.msra.mxu0 %v5914
  %8247 = vmatpush.bf16.msra.mxu0 %v5907
  %8248 = vmatpush.bf16.msra.mxu0 %v5900
  %8249 = vmatpush.bf16.msra.mxu0 %v5893
  %8250 = vmatpush.bf16.msra.mxu0 %v5886
  %8251 = vmatpush.bf16.msra.mxu0 %v5879
  %8252 = vmatpush.bf16.msra.mxu0 %v5872
  %8253 = vmatpush.bf16.msra.mxu0 %v5865
  %8254 = vmatmul.bf16.gmra.mxu0 %v50
  %v8255 = vpop.f32.mrf.mxu0
  %v8256 = vadd.f32 %v8243, %v8255
  %v8257 = vpop.f32.mrf.mxu0
  %8258 = vdwg.mxu0
  %8259 = vmatpush.bf16.msra.mxu0 %v5970
  %8260 = vmatpush.bf16.msra.mxu0 %v5963
  %8261 = vmatpush.bf16.msra.mxu0 %v5956
  %8262 = vmatpush.bf16.msra.mxu0 %v5949
  %8263 = vmatpush.bf16.msra.mxu0 %v5942
  %8264 = vmatpush.bf16.msra.mxu0 %v5935
  %8265 = vmatpush.bf16.msra.mxu0 %v5928
  %8266 = vmatpush.bf16.msra.mxu0 %v5921
  %8267 = vmatmul.bf16.gmra.mxu0 %v51
  %v8268 = vpop.f32.mrf.mxu0
  %v8269 = vadd.f32 %v8256, %v8268
  %v8270 = vpop.f32.mrf.mxu0
  %8271 = vdwg.mxu0
  %8272 = vmatpush.bf16.msra.mxu0 %v6026
  %8273 = vmatpush.bf16.msra.mxu0 %v6019
  %8274 = vmatpush.bf16.msra.mxu0 %v6012
  %8275 = vmatpush.bf16.msra.mxu0 %v6005
  %8276 = vmatpush.bf16.msra.mxu0 %v5998
  %8277 = vmatpush.bf16.msra.mxu0 %v5991
  %8278 = vmatpush.bf16.msra.mxu0 %v5984
  %8279 = vmatpush.bf16.msra.mxu0 %v5977
  %8280 = vmatmul.bf16.gmra.mxu0 %v52
  %v8281 = vpop.f32.mrf.mxu0
  %v8282 = vadd.f32 %v8269, %v8281
  %v8283 = vpop.f32.mrf.mxu0
  %8284 = vdwg.mxu0
  %8285 = vmatpush.bf16.msra.mxu0 %v6082
  %8286 = vmatpush.bf16.msra.mxu0 %v6075
  %8287 = vmatpush.bf16.msra.mxu0 %v6068
  %8288 = vmatpush.bf16.msra.mxu0 %v6061
  %8289 = vmatpush.bf16.msra.mxu0 %v6054
  %8290 = vmatpush.bf16.msra.mxu0 %v6047
  %8291 = vmatpush.bf16.msra.mxu0 %v6040
  %8292 = vmatpush.bf16.msra.mxu0 %v6033
  %8293 = vmatmul.bf16.gmra.mxu0 %v53
  %v8294 = vpop.f32.mrf.mxu0
  %v8295 = vadd.f32 %v8282, %v8294
  %v8296 = vpop.f32.mrf.mxu0
  %8297 = vdwg.mxu0
  %8298 = vmatpush.bf16.msra.mxu0 %v6138
  %8299 = vmatpush.bf16.msra.mxu0 %v6131
  %8300 = vmatpush.bf16.msra.mxu0 %v6124
  %8301 = vmatpush.bf16.msra.mxu0 %v6117
  %8302 = vmatpush.bf16.msra.mxu0 %v6110
  %8303 = vmatpush.bf16.msra.mxu0 %v6103
  %8304 = vmatpush.bf16.msra.mxu0 %v6096
  %8305 = vmatpush.bf16.msra.mxu0 %v6089
  %8306 = vmatmul.bf16.gmra.mxu0 %v54
  %v8307 = vpop.f32.mrf.mxu0
  %v8308 = vadd.f32 %v8295, %v8307
  %v8309 = vpop.f32.mrf.mxu0
  %8310 = vdwg.mxu0
  %8311 = vmatpush.bf16.msra.mxu0 %v6194
  %8312 = vmatpush.bf16.msra.mxu0 %v6187
  %8313 = vmatpush.bf16.msra.mxu0 %v6180
  %8314 = vmatpush.bf16.msra.mxu0 %v6173
  %8315 = vmatpush.bf16.msra.mxu0 %v6166
  %8316 = vmatpush.bf16.msra.mxu0 %v6159
  %8317 = vmatpush.bf16.msra.mxu0 %v6152
  %8318 = vmatpush.bf16.msra.mxu0 %v6145
  %8319 = vmatmul.bf16.gmra.mxu0 %v55
  %v8320 = vpop.f32.mrf.mxu0
  %v8321 = vadd.f32 %v8308, %v8320
  %v8322 = vpop.f32.mrf.mxu0
  %8323 = vdwg.mxu0
  %8324 = vmatpush.bf16.msra.mxu0 %v6250
  %8325 = vmatpush.bf16.msra.mxu0 %v6243
  %8326 = vmatpush.bf16.msra.mxu0 %v6236
  %8327 = vmatpush.bf16.msra.mxu0 %v6229
  %8328 = vmatpush.bf16.msra.mxu0 %v6222
  %8329 = vmatpush.bf16.msra.mxu0 %v6215
  %8330 = vmatpush.bf16.msra.mxu0 %v6208
  %8331 = vmatpush.bf16.msra.mxu0 %v6201
  %8332 = vmatmul.bf16.gmra.mxu0 %v56
  %v8333 = vpop.f32.mrf.mxu0
  %v8334 = vadd.f32 %v8321, %v8333
  %v8335 = vpop.f32.mrf.mxu0
  %8336 = vdwg.mxu0
  %8337 = vmatpush.bf16.msra.mxu0 %v6306
  %8338 = vmatpush.bf16.msra.mxu0 %v6299
  %8339 = vmatpush.bf16.msra.mxu0 %v6292
  %8340 = vmatpush.bf16.msra.mxu0 %v6285
  %8341 = vmatpush.bf16.msra.mxu0 %v6278
  %8342 = vmatpush.bf16.msra.mxu0 %v6271
  %8343 = vmatpush.bf16.msra.mxu0 %v6264
  %8344 = vmatpush.bf16.msra.mxu0 %v6257
  %8345 = vmatmul.bf16.gmra.mxu0 %v57
  %v8346 = vpop.f32.mrf.mxu0
  %v8347 = vadd.f32 %v8334, %v8346
  %v8348 = vpop.f32.mrf.mxu0
  %8349 = vdwg.mxu0
  %8350 = vmatpush.bf16.msra.mxu0 0
  %8351 = vmatpush.bf16.msra.mxu0 0
  %8352 = vmatpush.bf16.msra.mxu0 0
  %8353 = vmatpush.bf16.msra.mxu0 0
  %8354 = vmatpush.bf16.msra.mxu0 0
  %8355 = vmatpush.bf16.msra.mxu0 0
  %8356 = vmatpush.bf16.msra.mxu0 0
  %8357 = vmatpush.bf16.msra.mxu0 %v6313
  %8358 = vmatmul.bf16.gmra.mxu0 %v7503
  %v8359 = vpop.f32.mrf.mxu0
  %v8360 = vadd.f32 %v8347, %v8359
  %v8361 = vpop.f32.mrf.mxu0
  %8362 = vdwg.mxu0
  %8363 = vmatpush.bf16.msra.mxu0 %v5187
  %8364 = vmatpush.bf16.msra.mxu0 %v5180
  %8365 = vmatpush.bf16.msra.mxu0 %v5173
  %8366 = vmatpush.bf16.msra.mxu0 %v5166
  %8367 = vmatpush.bf16.msra.mxu0 %v5159
  %8368 = vmatpush.bf16.msra.mxu0 %v5152
  %8369 = vmatpush.bf16.msra.mxu0 %v5145
  %8370 = vmatpush.bf16.msra.mxu0 %v5138
  %8371 = vmatmul.bf16.gmra.mxu0 %v37
  %v8372 = vpop.f32.mrf.mxu0
  %v8373 = vadd.f32 %v1415, %v8372
  %v8374 = vpop.f32.mrf.mxu0
  %8375 = vdwg.mxu0
  %8376 = vmatpush.bf16.msra.mxu0 %v5243
  %8377 = vmatpush.bf16.msra.mxu0 %v5236
  %8378 = vmatpush.bf16.msra.mxu0 %v5229
  %8379 = vmatpush.bf16.msra.mxu0 %v5222
  %8380 = vmatpush.bf16.msra.mxu0 %v5215
  %8381 = vmatpush.bf16.msra.mxu0 %v5208
  %8382 = vmatpush.bf16.msra.mxu0 %v5201
  %8383 = vmatpush.bf16.msra.mxu0 %v5194
  %8384 = vmatmul.bf16.gmra.mxu0 %v38
  %v8385 = vpop.f32.mrf.mxu0
  %v8386 = vadd.f32 %v8373, %v8385
  %v8387 = vpop.f32.mrf.mxu0
  %8388 = vdwg.mxu0
  %8389 = vmatpush.bf16.msra.mxu0 %v5299
  %8390 = vmatpush.bf16.msra.mxu0 %v5292
  %8391 = vmatpush.bf16.msra.mxu0 %v5285
  %8392 = vmatpush.bf16.msra.mxu0 %v5278
  %8393 = vmatpush.bf16.msra.mxu0 %v5271
  %8394 = vmatpush.bf16.msra.mxu0 %v5264
  %8395 = vmatpush.bf16.msra.mxu0 %v5257
  %8396 = vmatpush.bf16.msra.mxu0 %v5250
  %8397 = vmatmul.bf16.gmra.mxu0 %v39
  %v8398 = vpop.f32.mrf.mxu0
  %v8399 = vadd.f32 %v8386, %v8398
  %v8400 = vpop.f32.mrf.mxu0
  %8401 = vdwg.mxu0
  %8402 = vmatpush.bf16.msra.mxu0 %v5355
  %8403 = vmatpush.bf16.msra.mxu0 %v5348
  %8404 = vmatpush.bf16.msra.mxu0 %v5341
  %8405 = vmatpush.bf16.msra.mxu0 %v5334
  %8406 = vmatpush.bf16.msra.mxu0 %v5327
  %8407 = vmatpush.bf16.msra.mxu0 %v5320
  %8408 = vmatpush.bf16.msra.mxu0 %v5313
  %8409 = vmatpush.bf16.msra.mxu0 %v5306
  %8410 = vmatmul.bf16.gmra.mxu0 %v40
  %v8411 = vpop.f32.mrf.mxu0
  %v8412 = vadd.f32 %v8399, %v8411
  %v8413 = vpop.f32.mrf.mxu0
  %8414 = vdwg.mxu0
  %8415 = vmatpush.bf16.msra.mxu0 %v5411
  %8416 = vmatpush.bf16.msra.mxu0 %v5404
  %8417 = vmatpush.bf16.msra.mxu0 %v5397
  %8418 = vmatpush.bf16.msra.mxu0 %v5390
  %8419 = vmatpush.bf16.msra.mxu0 %v5383
  %8420 = vmatpush.bf16.msra.mxu0 %v5376
  %8421 = vmatpush.bf16.msra.mxu0 %v5369
  %8422 = vmatpush.bf16.msra.mxu0 %v5362
  %8423 = vmatmul.bf16.gmra.mxu0 %v41
  %v8424 = vpop.f32.mrf.mxu0
  %v8425 = vadd.f32 %v8412, %v8424
  %v8426 = vpop.f32.mrf.mxu0
  %8427 = vdwg.mxu0
  %8428 = vmatpush.bf16.msra.mxu0 %v5467
  %8429 = vmatpush.bf16.msra.mxu0 %v5460
  %8430 = vmatpush.bf16.msra.mxu0 %v5453
  %8431 = vmatpush.bf16.msra.mxu0 %v5446
  %8432 = vmatpush.bf16.msra.mxu0 %v5439
  %8433 = vmatpush.bf16.msra.mxu0 %v5432
  %8434 = vmatpush.bf16.msra.mxu0 %v5425
  %8435 = vmatpush.bf16.msra.mxu0 %v5418
  %8436 = vmatmul.bf16.gmra.mxu0 %v42
  %v8437 = vpop.f32.mrf.mxu0
  %v8438 = vadd.f32 %v8425, %v8437
  %v8439 = vpop.f32.mrf.mxu0
  %8440 = vdwg.mxu0
  %8441 = vmatpush.bf16.msra.mxu0 %v5523
  %8442 = vmatpush.bf16.msra.mxu0 %v5516
  %8443 = vmatpush.bf16.msra.mxu0 %v5509
  %8444 = vmatpush.bf16.msra.mxu0 %v5502
  %8445 = vmatpush.bf16.msra.mxu0 %v5495
  %8446 = vmatpush.bf16.msra.mxu0 %v5488
  %8447 = vmatpush.bf16.msra.mxu0 %v5481
  %8448 = vmatpush.bf16.msra.mxu0 %v5474
  %8449 = vmatmul.bf16.gmra.mxu0 %v43
  %v8450 = vpop.f32.mrf.mxu0
  %v8451 = vadd.f32 %v8438, %v8450
  %v8452 = vpop.f32.mrf.mxu0
  %8453 = vdwg.mxu0
  %8454 = vmatpush.bf16.msra.mxu0 %v5579
  %8455 = vmatpush.bf16.msra.mxu0 %v5572
  %8456 = vmatpush.bf16.msra.mxu0 %v5565
  %8457 = vmatpush.bf16.msra.mxu0 %v5558
  %8458 = vmatpush.bf16.msra.mxu0 %v5551
  %8459 = vmatpush.bf16.msra.mxu0 %v5544
  %8460 = vmatpush.bf16.msra.mxu0 %v5537
  %8461 = vmatpush.bf16.msra.mxu0 %v5530
  %8462 = vmatmul.bf16.gmra.mxu0 %v44
  %v8463 = vpop.f32.mrf.mxu0
  %v8464 = vadd.f32 %v8451, %v8463
  %v8465 = vpop.f32.mrf.mxu0
  %8466 = vdwg.mxu0
  %8467 = vmatpush.bf16.msra.mxu0 %v5635
  %8468 = vmatpush.bf16.msra.mxu0 %v5628
  %8469 = vmatpush.bf16.msra.mxu0 %v5621
  %8470 = vmatpush.bf16.msra.mxu0 %v5614
  %8471 = vmatpush.bf16.msra.mxu0 %v5607
  %8472 = vmatpush.bf16.msra.mxu0 %v5600
  %8473 = vmatpush.bf16.msra.mxu0 %v5593
  %8474 = vmatpush.bf16.msra.mxu0 %v5586
  %8475 = vmatmul.bf16.gmra.mxu0 %v45
  %v8476 = vpop.f32.mrf.mxu0
  %v8477 = vadd.f32 %v8464, %v8476
  %v8478 = vpop.f32.mrf.mxu0
  %8479 = vdwg.mxu0
  %8480 = vmatpush.bf16.msra.mxu0 %v5691
  %8481 = vmatpush.bf16.msra.mxu0 %v5684
  %8482 = vmatpush.bf16.msra.mxu0 %v5677
  %8483 = vmatpush.bf16.msra.mxu0 %v5670
  %8484 = vmatpush.bf16.msra.mxu0 %v5663
  %8485 = vmatpush.bf16.msra.mxu0 %v5656
  %8486 = vmatpush.bf16.msra.mxu0 %v5649
  %8487 = vmatpush.bf16.msra.mxu0 %v5642
  %8488 = vmatmul.bf16.gmra.mxu0 %v46
  %v8489 = vpop.f32.mrf.mxu0
  %v8490 = vadd.f32 %v8477, %v8489
  %v8491 = vpop.f32.mrf.mxu0
  %8492 = vdwg.mxu0
  %8493 = vmatpush.bf16.msra.mxu0 %v5747
  %8494 = vmatpush.bf16.msra.mxu0 %v5740
  %8495 = vmatpush.bf16.msra.mxu0 %v5733
  %8496 = vmatpush.bf16.msra.mxu0 %v5726
  %8497 = vmatpush.bf16.msra.mxu0 %v5719
  %8498 = vmatpush.bf16.msra.mxu0 %v5712
  %8499 = vmatpush.bf16.msra.mxu0 %v5705
  %8500 = vmatpush.bf16.msra.mxu0 %v5698
  %8501 = vmatmul.bf16.gmra.mxu0 %v47
  %v8502 = vpop.f32.mrf.mxu0
  %v8503 = vadd.f32 %v8490, %v8502
  %v8504 = vpop.f32.mrf.mxu0
  %8505 = vdwg.mxu0
  %8506 = vmatpush.bf16.msra.mxu0 %v5803
  %8507 = vmatpush.bf16.msra.mxu0 %v5796
  %8508 = vmatpush.bf16.msra.mxu0 %v5789
  %8509 = vmatpush.bf16.msra.mxu0 %v5782
  %8510 = vmatpush.bf16.msra.mxu0 %v5775
  %8511 = vmatpush.bf16.msra.mxu0 %v5768
  %8512 = vmatpush.bf16.msra.mxu0 %v5761
  %8513 = vmatpush.bf16.msra.mxu0 %v5754
  %8514 = vmatmul.bf16.gmra.mxu0 %v48
  %v8515 = vpop.f32.mrf.mxu0
  %v8516 = vadd.f32 %v8503, %v8515
  %v8517 = vpop.f32.mrf.mxu0
  %8518 = vdwg.mxu0
  %8519 = vmatpush.bf16.msra.mxu0 %v5859
  %8520 = vmatpush.bf16.msra.mxu0 %v5852
  %8521 = vmatpush.bf16.msra.mxu0 %v5845
  %8522 = vmatpush.bf16.msra.mxu0 %v5838
  %8523 = vmatpush.bf16.msra.mxu0 %v5831
  %8524 = vmatpush.bf16.msra.mxu0 %v5824
  %8525 = vmatpush.bf16.msra.mxu0 %v5817
  %8526 = vmatpush.bf16.msra.mxu0 %v5810
  %8527 = vmatmul.bf16.gmra.mxu0 %v49
  %v8528 = vpop.f32.mrf.mxu0
  %v8529 = vadd.f32 %v8516, %v8528
  %v8530 = vpop.f32.mrf.mxu0
  %8531 = vdwg.mxu0
  %8532 = vmatpush.bf16.msra.mxu0 %v5915
  %8533 = vmatpush.bf16.msra.mxu0 %v5908
  %8534 = vmatpush.bf16.msra.mxu0 %v5901
  %8535 = vmatpush.bf16.msra.mxu0 %v5894
  %8536 = vmatpush.bf16.msra.mxu0 %v5887
  %8537 = vmatpush.bf16.msra.mxu0 %v5880
  %8538 = vmatpush.bf16.msra.mxu0 %v5873
  %8539 = vmatpush.bf16.msra.mxu0 %v5866
  %8540 = vmatmul.bf16.gmra.mxu0 %v50
  %v8541 = vpop.f32.mrf.mxu0
  %v8542 = vadd.f32 %v8529, %v8541
  %v8543 = vpop.f32.mrf.mxu0
  %8544 = vdwg.mxu0
  %8545 = vmatpush.bf16.msra.mxu0 %v5971
  %8546 = vmatpush.bf16.msra.mxu0 %v5964
  %8547 = vmatpush.bf16.msra.mxu0 %v5957
  %8548 = vmatpush.bf16.msra.mxu0 %v5950
  %8549 = vmatpush.bf16.msra.mxu0 %v5943
  %8550 = vmatpush.bf16.msra.mxu0 %v5936
  %8551 = vmatpush.bf16.msra.mxu0 %v5929
  %8552 = vmatpush.bf16.msra.mxu0 %v5922
  %8553 = vmatmul.bf16.gmra.mxu0 %v51
  %v8554 = vpop.f32.mrf.mxu0
  %v8555 = vadd.f32 %v8542, %v8554
  %v8556 = vpop.f32.mrf.mxu0
  %8557 = vdwg.mxu0
  %8558 = vmatpush.bf16.msra.mxu0 %v6027
  %8559 = vmatpush.bf16.msra.mxu0 %v6020
  %8560 = vmatpush.bf16.msra.mxu0 %v6013
  %8561 = vmatpush.bf16.msra.mxu0 %v6006
  %8562 = vmatpush.bf16.msra.mxu0 %v5999
  %8563 = vmatpush.bf16.msra.mxu0 %v5992
  %8564 = vmatpush.bf16.msra.mxu0 %v5985
  %8565 = vmatpush.bf16.msra.mxu0 %v5978
  %8566 = vmatmul.bf16.gmra.mxu0 %v52
  %v8567 = vpop.f32.mrf.mxu0
  %v8568 = vadd.f32 %v8555, %v8567
  %v8569 = vpop.f32.mrf.mxu0
  %8570 = vdwg.mxu0
  %8571 = vmatpush.bf16.msra.mxu0 %v6083
  %8572 = vmatpush.bf16.msra.mxu0 %v6076
  %8573 = vmatpush.bf16.msra.mxu0 %v6069
  %8574 = vmatpush.bf16.msra.mxu0 %v6062
  %8575 = vmatpush.bf16.msra.mxu0 %v6055
  %8576 = vmatpush.bf16.msra.mxu0 %v6048
  %8577 = vmatpush.bf16.msra.mxu0 %v6041
  %8578 = vmatpush.bf16.msra.mxu0 %v6034
  %8579 = vmatmul.bf16.gmra.mxu0 %v53
  %v8580 = vpop.f32.mrf.mxu0
  %v8581 = vadd.f32 %v8568, %v8580
  %v8582 = vpop.f32.mrf.mxu0
  %8583 = vdwg.mxu0
  %8584 = vmatpush.bf16.msra.mxu0 %v6139
  %8585 = vmatpush.bf16.msra.mxu0 %v6132
  %8586 = vmatpush.bf16.msra.mxu0 %v6125
  %8587 = vmatpush.bf16.msra.mxu0 %v6118
  %8588 = vmatpush.bf16.msra.mxu0 %v6111
  %8589 = vmatpush.bf16.msra.mxu0 %v6104
  %8590 = vmatpush.bf16.msra.mxu0 %v6097
  %8591 = vmatpush.bf16.msra.mxu0 %v6090
  %8592 = vmatmul.bf16.gmra.mxu0 %v54
  %v8593 = vpop.f32.mrf.mxu0
  %v8594 = vadd.f32 %v8581, %v8593
  %v8595 = vpop.f32.mrf.mxu0
  %8596 = vdwg.mxu0
  %8597 = vmatpush.bf16.msra.mxu0 %v6195
  %8598 = vmatpush.bf16.msra.mxu0 %v6188
  %8599 = vmatpush.bf16.msra.mxu0 %v6181
  %8600 = vmatpush.bf16.msra.mxu0 %v6174
  %8601 = vmatpush.bf16.msra.mxu0 %v6167
  %8602 = vmatpush.bf16.msra.mxu0 %v6160
  %8603 = vmatpush.bf16.msra.mxu0 %v6153
  %8604 = vmatpush.bf16.msra.mxu0 %v6146
  %8605 = vmatmul.bf16.gmra.mxu0 %v55
  %v8606 = vpop.f32.mrf.mxu0
  %v8607 = vadd.f32 %v8594, %v8606
  %v8608 = vpop.f32.mrf.mxu0
  %8609 = vdwg.mxu0
  %8610 = vmatpush.bf16.msra.mxu0 %v6251
  %8611 = vmatpush.bf16.msra.mxu0 %v6244
  %8612 = vmatpush.bf16.msra.mxu0 %v6237
  %8613 = vmatpush.bf16.msra.mxu0 %v6230
  %8614 = vmatpush.bf16.msra.mxu0 %v6223
  %8615 = vmatpush.bf16.msra.mxu0 %v6216
  %8616 = vmatpush.bf16.msra.mxu0 %v6209
  %8617 = vmatpush.bf16.msra.mxu0 %v6202
  %8618 = vmatmul.bf16.gmra.mxu0 %v56
  %v8619 = vpop.f32.mrf.mxu0
  %v8620 = vadd.f32 %v8607, %v8619
  %v8621 = vpop.f32.mrf.mxu0
  %8622 = vdwg.mxu0
  %8623 = vmatpush.bf16.msra.mxu0 %v6307
  %8624 = vmatpush.bf16.msra.mxu0 %v6300
  %8625 = vmatpush.bf16.msra.mxu0 %v6293
  %8626 = vmatpush.bf16.msra.mxu0 %v6286
  %8627 = vmatpush.bf16.msra.mxu0 %v6279
  %8628 = vmatpush.bf16.msra.mxu0 %v6272
  %8629 = vmatpush.bf16.msra.mxu0 %v6265
  %8630 = vmatpush.bf16.msra.mxu0 %v6258
  %8631 = vmatmul.bf16.gmra.mxu0 %v57
  %v8632 = vpop.f32.mrf.mxu0
  %v8633 = vadd.f32 %v8620, %v8632
  %v8634 = vpop.f32.mrf.mxu0
  %8635 = vdwg.mxu0
  %8636 = vmatpush.bf16.msra.mxu0 0
  %8637 = vmatpush.bf16.msra.mxu0 0
  %8638 = vmatpush.bf16.msra.mxu0 0
  %8639 = vmatpush.bf16.msra.mxu0 0
  %8640 = vmatpush.bf16.msra.mxu0 0
  %8641 = vmatpush.bf16.msra.mxu0 0
  %8642 = vmatpush.bf16.msra.mxu0 0
  %8643 = vmatpush.bf16.msra.mxu0 %v6314
  %8644 = vmatmul.bf16.gmra.mxu0 %v7503
  %v8645 = vpop.f32.mrf.mxu0
  %v8646 = vadd.f32 %v8633, %v8645
  %v8647 = vpop.f32.mrf.mxu0
  %8648 = vdwg.mxu0
  %8649 = vmatpush.bf16.msra.mxu0 %v5188
  %8650 = vmatpush.bf16.msra.mxu0 %v5181
  %8651 = vmatpush.bf16.msra.mxu0 %v5174
  %8652 = vmatpush.bf16.msra.mxu0 %v5167
  %8653 = vmatpush.bf16.msra.mxu0 %v5160
  %8654 = vmatpush.bf16.msra.mxu0 %v5153
  %8655 = vmatpush.bf16.msra.mxu0 %v5146
  %8656 = vmatpush.bf16.msra.mxu0 %v5139
  %8657 = vmatmul.bf16.gmra.mxu0 %v37
  %v8658 = vpop.f32.mrf.mxu0
  %v8659 = vadd.f32 %v1415, %v8658
  %v8660 = vpop.f32.mrf.mxu0
  %8661 = vdwg.mxu0
  %8662 = vmatpush.bf16.msra.mxu0 %v5244
  %8663 = vmatpush.bf16.msra.mxu0 %v5237
  %8664 = vmatpush.bf16.msra.mxu0 %v5230
  %8665 = vmatpush.bf16.msra.mxu0 %v5223
  %8666 = vmatpush.bf16.msra.mxu0 %v5216
  %8667 = vmatpush.bf16.msra.mxu0 %v5209
  %8668 = vmatpush.bf16.msra.mxu0 %v5202
  %8669 = vmatpush.bf16.msra.mxu0 %v5195
  %8670 = vmatmul.bf16.gmra.mxu0 %v38
  %v8671 = vpop.f32.mrf.mxu0
  %v8672 = vadd.f32 %v8659, %v8671
  %v8673 = vpop.f32.mrf.mxu0
  %8674 = vdwg.mxu0
  %8675 = vmatpush.bf16.msra.mxu0 %v5300
  %8676 = vmatpush.bf16.msra.mxu0 %v5293
  %8677 = vmatpush.bf16.msra.mxu0 %v5286
  %8678 = vmatpush.bf16.msra.mxu0 %v5279
  %8679 = vmatpush.bf16.msra.mxu0 %v5272
  %8680 = vmatpush.bf16.msra.mxu0 %v5265
  %8681 = vmatpush.bf16.msra.mxu0 %v5258
  %8682 = vmatpush.bf16.msra.mxu0 %v5251
  %8683 = vmatmul.bf16.gmra.mxu0 %v39
  %v8684 = vpop.f32.mrf.mxu0
  %v8685 = vadd.f32 %v8672, %v8684
  %v8686 = vpop.f32.mrf.mxu0
  %8687 = vdwg.mxu0
  %8688 = vmatpush.bf16.msra.mxu0 %v5356
  %8689 = vmatpush.bf16.msra.mxu0 %v5349
  %8690 = vmatpush.bf16.msra.mxu0 %v5342
  %8691 = vmatpush.bf16.msra.mxu0 %v5335
  %8692 = vmatpush.bf16.msra.mxu0 %v5328
  %8693 = vmatpush.bf16.msra.mxu0 %v5321
  %8694 = vmatpush.bf16.msra.mxu0 %v5314
  %8695 = vmatpush.bf16.msra.mxu0 %v5307
  %8696 = vmatmul.bf16.gmra.mxu0 %v40
  %v8697 = vpop.f32.mrf.mxu0
  %v8698 = vadd.f32 %v8685, %v8697
  %v8699 = vpop.f32.mrf.mxu0
  %8700 = vdwg.mxu0
  %8701 = vmatpush.bf16.msra.mxu0 %v5412
  %8702 = vmatpush.bf16.msra.mxu0 %v5405
  %8703 = vmatpush.bf16.msra.mxu0 %v5398
  %8704 = vmatpush.bf16.msra.mxu0 %v5391
  %8705 = vmatpush.bf16.msra.mxu0 %v5384
  %8706 = vmatpush.bf16.msra.mxu0 %v5377
  %8707 = vmatpush.bf16.msra.mxu0 %v5370
  %8708 = vmatpush.bf16.msra.mxu0 %v5363
  %8709 = vmatmul.bf16.gmra.mxu0 %v41
  %v8710 = vpop.f32.mrf.mxu0
  %v8711 = vadd.f32 %v8698, %v8710
  %v8712 = vpop.f32.mrf.mxu0
  %8713 = vdwg.mxu0
  %8714 = vmatpush.bf16.msra.mxu0 %v5468
  %8715 = vmatpush.bf16.msra.mxu0 %v5461
  %8716 = vmatpush.bf16.msra.mxu0 %v5454
  %8717 = vmatpush.bf16.msra.mxu0 %v5447
  %8718 = vmatpush.bf16.msra.mxu0 %v5440
  %8719 = vmatpush.bf16.msra.mxu0 %v5433
  %8720 = vmatpush.bf16.msra.mxu0 %v5426
  %8721 = vmatpush.bf16.msra.mxu0 %v5419
  %8722 = vmatmul.bf16.gmra.mxu0 %v42
  %v8723 = vpop.f32.mrf.mxu0
  %v8724 = vadd.f32 %v8711, %v8723
  %v8725 = vpop.f32.mrf.mxu0
  %8726 = vdwg.mxu0
  %8727 = vmatpush.bf16.msra.mxu0 %v5524
  %8728 = vmatpush.bf16.msra.mxu0 %v5517
  %8729 = vmatpush.bf16.msra.mxu0 %v5510
  %8730 = vmatpush.bf16.msra.mxu0 %v5503
  %8731 = vmatpush.bf16.msra.mxu0 %v5496
  %8732 = vmatpush.bf16.msra.mxu0 %v5489
  %8733 = vmatpush.bf16.msra.mxu0 %v5482
  %8734 = vmatpush.bf16.msra.mxu0 %v5475
  %8735 = vmatmul.bf16.gmra.mxu0 %v43
  %v8736 = vpop.f32.mrf.mxu0
  %v8737 = vadd.f32 %v8724, %v8736
  %v8738 = vpop.f32.mrf.mxu0
  %8739 = vdwg.mxu0
  %8740 = vmatpush.bf16.msra.mxu0 %v5580
  %8741 = vmatpush.bf16.msra.mxu0 %v5573
  %8742 = vmatpush.bf16.msra.mxu0 %v5566
  %8743 = vmatpush.bf16.msra.mxu0 %v5559
  %8744 = vmatpush.bf16.msra.mxu0 %v5552
  %8745 = vmatpush.bf16.msra.mxu0 %v5545
  %8746 = vmatpush.bf16.msra.mxu0 %v5538
  %8747 = vmatpush.bf16.msra.mxu0 %v5531
  %8748 = vmatmul.bf16.gmra.mxu0 %v44
  %v8749 = vpop.f32.mrf.mxu0
  %v8750 = vadd.f32 %v8737, %v8749
  %v8751 = vpop.f32.mrf.mxu0
  %8752 = vdwg.mxu0
  %8753 = vmatpush.bf16.msra.mxu0 %v5636
  %8754 = vmatpush.bf16.msra.mxu0 %v5629
  %8755 = vmatpush.bf16.msra.mxu0 %v5622
  %8756 = vmatpush.bf16.msra.mxu0 %v5615
  %8757 = vmatpush.bf16.msra.mxu0 %v5608
  %8758 = vmatpush.bf16.msra.mxu0 %v5601
  %8759 = vmatpush.bf16.msra.mxu0 %v5594
  %8760 = vmatpush.bf16.msra.mxu0 %v5587
  %8761 = vmatmul.bf16.gmra.mxu0 %v45
  %v8762 = vpop.f32.mrf.mxu0
  %v8763 = vadd.f32 %v8750, %v8762
  %v8764 = vpop.f32.mrf.mxu0
  %8765 = vdwg.mxu0
  %8766 = vmatpush.bf16.msra.mxu0 %v5692
  %8767 = vmatpush.bf16.msra.mxu0 %v5685
  %8768 = vmatpush.bf16.msra.mxu0 %v5678
  %8769 = vmatpush.bf16.msra.mxu0 %v5671
  %8770 = vmatpush.bf16.msra.mxu0 %v5664
  %8771 = vmatpush.bf16.msra.mxu0 %v5657
  %8772 = vmatpush.bf16.msra.mxu0 %v5650
  %8773 = vmatpush.bf16.msra.mxu0 %v5643
  %8774 = vmatmul.bf16.gmra.mxu0 %v46
  %v8775 = vpop.f32.mrf.mxu0
  %v8776 = vadd.f32 %v8763, %v8775
  %v8777 = vpop.f32.mrf.mxu0
  %8778 = vdwg.mxu0
  %8779 = vmatpush.bf16.msra.mxu0 %v5748
  %8780 = vmatpush.bf16.msra.mxu0 %v5741
  %8781 = vmatpush.bf16.msra.mxu0 %v5734
  %8782 = vmatpush.bf16.msra.mxu0 %v5727
  %8783 = vmatpush.bf16.msra.mxu0 %v5720
  %8784 = vmatpush.bf16.msra.mxu0 %v5713
  %8785 = vmatpush.bf16.msra.mxu0 %v5706
  %8786 = vmatpush.bf16.msra.mxu0 %v5699
  %8787 = vmatmul.bf16.gmra.mxu0 %v47
  %v8788 = vpop.f32.mrf.mxu0
  %v8789 = vadd.f32 %v8776, %v8788
  %v8790 = vpop.f32.mrf.mxu0
  %8791 = vdwg.mxu0
  %8792 = vmatpush.bf16.msra.mxu0 %v5804
  %8793 = vmatpush.bf16.msra.mxu0 %v5797
  %8794 = vmatpush.bf16.msra.mxu0 %v5790
  %8795 = vmatpush.bf16.msra.mxu0 %v5783
  %8796 = vmatpush.bf16.msra.mxu0 %v5776
  %8797 = vmatpush.bf16.msra.mxu0 %v5769
  %8798 = vmatpush.bf16.msra.mxu0 %v5762
  %8799 = vmatpush.bf16.msra.mxu0 %v5755
  %8800 = vmatmul.bf16.gmra.mxu0 %v48
  %v8801 = vpop.f32.mrf.mxu0
  %v8802 = vadd.f32 %v8789, %v8801
  %v8803 = vpop.f32.mrf.mxu0
  %8804 = vdwg.mxu0
  %8805 = vmatpush.bf16.msra.mxu0 %v5860
  %8806 = vmatpush.bf16.msra.mxu0 %v5853
  %8807 = vmatpush.bf16.msra.mxu0 %v5846
  %8808 = vmatpush.bf16.msra.mxu0 %v5839
  %8809 = vmatpush.bf16.msra.mxu0 %v5832
  %8810 = vmatpush.bf16.msra.mxu0 %v5825
  %8811 = vmatpush.bf16.msra.mxu0 %v5818
  %8812 = vmatpush.bf16.msra.mxu0 %v5811
  %8813 = vmatmul.bf16.gmra.mxu0 %v49
  %v8814 = vpop.f32.mrf.mxu0
  %v8815 = vadd.f32 %v8802, %v8814
  %v8816 = vpop.f32.mrf.mxu0
  %8817 = vdwg.mxu0
  %8818 = vmatpush.bf16.msra.mxu0 %v5916
  %8819 = vmatpush.bf16.msra.mxu0 %v5909
  %8820 = vmatpush.bf16.msra.mxu0 %v5902
  %8821 = vmatpush.bf16.msra.mxu0 %v5895
  %8822 = vmatpush.bf16.msra.mxu0 %v5888
  %8823 = vmatpush.bf16.msra.mxu0 %v5881
  %8824 = vmatpush.bf16.msra.mxu0 %v5874
  %8825 = vmatpush.bf16.msra.mxu0 %v5867
  %8826 = vmatmul.bf16.gmra.mxu0 %v50
  %v8827 = vpop.f32.mrf.mxu0
  %v8828 = vadd.f32 %v8815, %v8827
  %v8829 = vpop.f32.mrf.mxu0
  %8830 = vdwg.mxu0
  %8831 = vmatpush.bf16.msra.mxu0 %v5972
  %8832 = vmatpush.bf16.msra.mxu0 %v5965
  %8833 = vmatpush.bf16.msra.mxu0 %v5958
  %8834 = vmatpush.bf16.msra.mxu0 %v5951
  %8835 = vmatpush.bf16.msra.mxu0 %v5944
  %8836 = vmatpush.bf16.msra.mxu0 %v5937
  %8837 = vmatpush.bf16.msra.mxu0 %v5930
  %8838 = vmatpush.bf16.msra.mxu0 %v5923
  %8839 = vmatmul.bf16.gmra.mxu0 %v51
  %v8840 = vpop.f32.mrf.mxu0
  %v8841 = vadd.f32 %v8828, %v8840
  %v8842 = vpop.f32.mrf.mxu0
  %8843 = vdwg.mxu0
  %8844 = vmatpush.bf16.msra.mxu0 %v6028
  %8845 = vmatpush.bf16.msra.mxu0 %v6021
  %8846 = vmatpush.bf16.msra.mxu0 %v6014
  %8847 = vmatpush.bf16.msra.mxu0 %v6007
  %8848 = vmatpush.bf16.msra.mxu0 %v6000
  %8849 = vmatpush.bf16.msra.mxu0 %v5993
  %8850 = vmatpush.bf16.msra.mxu0 %v5986
  %8851 = vmatpush.bf16.msra.mxu0 %v5979
  %8852 = vmatmul.bf16.gmra.mxu0 %v52
  %v8853 = vpop.f32.mrf.mxu0
  %v8854 = vadd.f32 %v8841, %v8853
  %v8855 = vpop.f32.mrf.mxu0
  %8856 = vdwg.mxu0
  %8857 = vmatpush.bf16.msra.mxu0 %v6084
  %8858 = vmatpush.bf16.msra.mxu0 %v6077
  %8859 = vmatpush.bf16.msra.mxu0 %v6070
  %8860 = vmatpush.bf16.msra.mxu0 %v6063
  %8861 = vmatpush.bf16.msra.mxu0 %v6056
  %8862 = vmatpush.bf16.msra.mxu0 %v6049
  %8863 = vmatpush.bf16.msra.mxu0 %v6042
  %8864 = vmatpush.bf16.msra.mxu0 %v6035
  %8865 = vmatmul.bf16.gmra.mxu0 %v53
  %v8866 = vpop.f32.mrf.mxu0
  %v8867 = vadd.f32 %v8854, %v8866
  %v8868 = vpop.f32.mrf.mxu0
  %8869 = vdwg.mxu0
  %8870 = vmatpush.bf16.msra.mxu0 %v6140
  %8871 = vmatpush.bf16.msra.mxu0 %v6133
  %8872 = vmatpush.bf16.msra.mxu0 %v6126
  %8873 = vmatpush.bf16.msra.mxu0 %v6119
  %8874 = vmatpush.bf16.msra.mxu0 %v6112
  %8875 = vmatpush.bf16.msra.mxu0 %v6105
  %8876 = vmatpush.bf16.msra.mxu0 %v6098
  %8877 = vmatpush.bf16.msra.mxu0 %v6091
  %8878 = vmatmul.bf16.gmra.mxu0 %v54
  %v8879 = vpop.f32.mrf.mxu0
  %v8880 = vadd.f32 %v8867, %v8879
  %v8881 = vpop.f32.mrf.mxu0
  %8882 = vdwg.mxu0
  %8883 = vmatpush.bf16.msra.mxu0 %v6196
  %8884 = vmatpush.bf16.msra.mxu0 %v6189
  %8885 = vmatpush.bf16.msra.mxu0 %v6182
  %8886 = vmatpush.bf16.msra.mxu0 %v6175
  %8887 = vmatpush.bf16.msra.mxu0 %v6168
  %8888 = vmatpush.bf16.msra.mxu0 %v6161
  %8889 = vmatpush.bf16.msra.mxu0 %v6154
  %8890 = vmatpush.bf16.msra.mxu0 %v6147
  %8891 = vmatmul.bf16.gmra.mxu0 %v55
  %v8892 = vpop.f32.mrf.mxu0
  %v8893 = vadd.f32 %v8880, %v8892
  %v8894 = vpop.f32.mrf.mxu0
  %8895 = vdwg.mxu0
  %8896 = vmatpush.bf16.msra.mxu0 %v6252
  %8897 = vmatpush.bf16.msra.mxu0 %v6245
  %8898 = vmatpush.bf16.msra.mxu0 %v6238
  %8899 = vmatpush.bf16.msra.mxu0 %v6231
  %8900 = vmatpush.bf16.msra.mxu0 %v6224
  %8901 = vmatpush.bf16.msra.mxu0 %v6217
  %8902 = vmatpush.bf16.msra.mxu0 %v6210
  %8903 = vmatpush.bf16.msra.mxu0 %v6203
  %8904 = vmatmul.bf16.gmra.mxu0 %v56
  %v8905 = vpop.f32.mrf.mxu0
  %v8906 = vadd.f32 %v8893, %v8905
  %v8907 = vpop.f32.mrf.mxu0
  %8908 = vdwg.mxu0
  %8909 = vmatpush.bf16.msra.mxu0 %v6308
  %8910 = vmatpush.bf16.msra.mxu0 %v6301
  %8911 = vmatpush.bf16.msra.mxu0 %v6294
  %8912 = vmatpush.bf16.msra.mxu0 %v6287
  %8913 = vmatpush.bf16.msra.mxu0 %v6280
  %8914 = vmatpush.bf16.msra.mxu0 %v6273
  %8915 = vmatpush.bf16.msra.mxu0 %v6266
  %8916 = vmatpush.bf16.msra.mxu0 %v6259
  %8917 = vmatmul.bf16.gmra.mxu0 %v57
  %v8918 = vpop.f32.mrf.mxu0
  %v8919 = vadd.f32 %v8906, %v8918
  %v8920 = vpop.f32.mrf.mxu0
  %8921 = vdwg.mxu0
  %8922 = vmatpush.bf16.msra.mxu0 0
  %8923 = vmatpush.bf16.msra.mxu0 0
  %8924 = vmatpush.bf16.msra.mxu0 0
  %8925 = vmatpush.bf16.msra.mxu0 0
  %8926 = vmatpush.bf16.msra.mxu0 0
  %8927 = vmatpush.bf16.msra.mxu0 0
  %8928 = vmatpush.bf16.msra.mxu0 0
  %8929 = vmatpush.bf16.msra.mxu0 %v6315
  %8930 = vmatmul.bf16.gmra.mxu0 %v7503
  %v8931 = vpop.f32.mrf.mxu0
  %v8932 = vadd.f32 %v8919, %v8931
  %v8933 = vpop.f32.mrf.mxu0
  %8934 = vdwg.mxu0
  %8935 = vmatpush.bf16.msra.mxu0 %v5189
  %8936 = vmatpush.bf16.msra.mxu0 %v5182
  %8937 = vmatpush.bf16.msra.mxu0 %v5175
  %8938 = vmatpush.bf16.msra.mxu0 %v5168
  %8939 = vmatpush.bf16.msra.mxu0 %v5161
  %8940 = vmatpush.bf16.msra.mxu0 %v5154
  %8941 = vmatpush.bf16.msra.mxu0 %v5147
  %8942 = vmatpush.bf16.msra.mxu0 %v5140
  %8943 = vmatmul.bf16.gmra.mxu0 %v37
  %v8944 = vpop.f32.mrf.mxu0
  %v8945 = vadd.f32 %v1415, %v8944
  %v8946 = vpop.f32.mrf.mxu0
  %8947 = vdwg.mxu0
  %8948 = vmatpush.bf16.msra.mxu0 %v5245
  %8949 = vmatpush.bf16.msra.mxu0 %v5238
  %8950 = vmatpush.bf16.msra.mxu0 %v5231
  %8951 = vmatpush.bf16.msra.mxu0 %v5224
  %8952 = vmatpush.bf16.msra.mxu0 %v5217
  %8953 = vmatpush.bf16.msra.mxu0 %v5210
  %8954 = vmatpush.bf16.msra.mxu0 %v5203
  %8955 = vmatpush.bf16.msra.mxu0 %v5196
  %8956 = vmatmul.bf16.gmra.mxu0 %v38
  %v8957 = vpop.f32.mrf.mxu0
  %v8958 = vadd.f32 %v8945, %v8957
  %v8959 = vpop.f32.mrf.mxu0
  %8960 = vdwg.mxu0
  %8961 = vmatpush.bf16.msra.mxu0 %v5301
  %8962 = vmatpush.bf16.msra.mxu0 %v5294
  %8963 = vmatpush.bf16.msra.mxu0 %v5287
  %8964 = vmatpush.bf16.msra.mxu0 %v5280
  %8965 = vmatpush.bf16.msra.mxu0 %v5273
  %8966 = vmatpush.bf16.msra.mxu0 %v5266
  %8967 = vmatpush.bf16.msra.mxu0 %v5259
  %8968 = vmatpush.bf16.msra.mxu0 %v5252
  %8969 = vmatmul.bf16.gmra.mxu0 %v39
  %v8970 = vpop.f32.mrf.mxu0
  %v8971 = vadd.f32 %v8958, %v8970
  %v8972 = vpop.f32.mrf.mxu0
  %8973 = vdwg.mxu0
  %8974 = vmatpush.bf16.msra.mxu0 %v5357
  %8975 = vmatpush.bf16.msra.mxu0 %v5350
  %8976 = vmatpush.bf16.msra.mxu0 %v5343
  %8977 = vmatpush.bf16.msra.mxu0 %v5336
  %8978 = vmatpush.bf16.msra.mxu0 %v5329
  %8979 = vmatpush.bf16.msra.mxu0 %v5322
  %8980 = vmatpush.bf16.msra.mxu0 %v5315
  %8981 = vmatpush.bf16.msra.mxu0 %v5308
  %8982 = vmatmul.bf16.gmra.mxu0 %v40
  %v8983 = vpop.f32.mrf.mxu0
  %v8984 = vadd.f32 %v8971, %v8983
  %v8985 = vpop.f32.mrf.mxu0
  %8986 = vdwg.mxu0
  %8987 = vmatpush.bf16.msra.mxu0 %v5413
  %8988 = vmatpush.bf16.msra.mxu0 %v5406
  %8989 = vmatpush.bf16.msra.mxu0 %v5399
  %8990 = vmatpush.bf16.msra.mxu0 %v5392
  %8991 = vmatpush.bf16.msra.mxu0 %v5385
  %8992 = vmatpush.bf16.msra.mxu0 %v5378
  %8993 = vmatpush.bf16.msra.mxu0 %v5371
  %8994 = vmatpush.bf16.msra.mxu0 %v5364
  %8995 = vmatmul.bf16.gmra.mxu0 %v41
  %v8996 = vpop.f32.mrf.mxu0
  %v8997 = vadd.f32 %v8984, %v8996
  %v8998 = vpop.f32.mrf.mxu0
  %8999 = vdwg.mxu0
  %9000 = vmatpush.bf16.msra.mxu0 %v5469
  %9001 = vmatpush.bf16.msra.mxu0 %v5462
  %9002 = vmatpush.bf16.msra.mxu0 %v5455
  %9003 = vmatpush.bf16.msra.mxu0 %v5448
  %9004 = vmatpush.bf16.msra.mxu0 %v5441
  %9005 = vmatpush.bf16.msra.mxu0 %v5434
  %9006 = vmatpush.bf16.msra.mxu0 %v5427
  %9007 = vmatpush.bf16.msra.mxu0 %v5420
  %9008 = vmatmul.bf16.gmra.mxu0 %v42
  %v9009 = vpop.f32.mrf.mxu0
  %v9010 = vadd.f32 %v8997, %v9009
  %v9011 = vpop.f32.mrf.mxu0
  %9012 = vdwg.mxu0
  %9013 = vmatpush.bf16.msra.mxu0 %v5525
  %9014 = vmatpush.bf16.msra.mxu0 %v5518
  %9015 = vmatpush.bf16.msra.mxu0 %v5511
  %9016 = vmatpush.bf16.msra.mxu0 %v5504
  %9017 = vmatpush.bf16.msra.mxu0 %v5497
  %9018 = vmatpush.bf16.msra.mxu0 %v5490
  %9019 = vmatpush.bf16.msra.mxu0 %v5483
  %9020 = vmatpush.bf16.msra.mxu0 %v5476
  %9021 = vmatmul.bf16.gmra.mxu0 %v43
  %v9022 = vpop.f32.mrf.mxu0
  %v9023 = vadd.f32 %v9010, %v9022
  %v9024 = vpop.f32.mrf.mxu0
  %9025 = vdwg.mxu0
  %9026 = vmatpush.bf16.msra.mxu0 %v5581
  %9027 = vmatpush.bf16.msra.mxu0 %v5574
  %9028 = vmatpush.bf16.msra.mxu0 %v5567
  %9029 = vmatpush.bf16.msra.mxu0 %v5560
  %9030 = vmatpush.bf16.msra.mxu0 %v5553
  %9031 = vmatpush.bf16.msra.mxu0 %v5546
  %9032 = vmatpush.bf16.msra.mxu0 %v5539
  %9033 = vmatpush.bf16.msra.mxu0 %v5532
  %9034 = vmatmul.bf16.gmra.mxu0 %v44
  %v9035 = vpop.f32.mrf.mxu0
  %v9036 = vadd.f32 %v9023, %v9035
  %v9037 = vpop.f32.mrf.mxu0
  %9038 = vdwg.mxu0
  %9039 = vmatpush.bf16.msra.mxu0 %v5637
  %9040 = vmatpush.bf16.msra.mxu0 %v5630
  %9041 = vmatpush.bf16.msra.mxu0 %v5623
  %9042 = vmatpush.bf16.msra.mxu0 %v5616
  %9043 = vmatpush.bf16.msra.mxu0 %v5609
  %9044 = vmatpush.bf16.msra.mxu0 %v5602
  %9045 = vmatpush.bf16.msra.mxu0 %v5595
  %9046 = vmatpush.bf16.msra.mxu0 %v5588
  %9047 = vmatmul.bf16.gmra.mxu0 %v45
  %v9048 = vpop.f32.mrf.mxu0
  %v9049 = vadd.f32 %v9036, %v9048
  %v9050 = vpop.f32.mrf.mxu0
  %9051 = vdwg.mxu0
  %9052 = vmatpush.bf16.msra.mxu0 %v5693
  %9053 = vmatpush.bf16.msra.mxu0 %v5686
  %9054 = vmatpush.bf16.msra.mxu0 %v5679
  %9055 = vmatpush.bf16.msra.mxu0 %v5672
  %9056 = vmatpush.bf16.msra.mxu0 %v5665
  %9057 = vmatpush.bf16.msra.mxu0 %v5658
  %9058 = vmatpush.bf16.msra.mxu0 %v5651
  %9059 = vmatpush.bf16.msra.mxu0 %v5644
  %9060 = vmatmul.bf16.gmra.mxu0 %v46
  %v9061 = vpop.f32.mrf.mxu0
  %v9062 = vadd.f32 %v9049, %v9061
  %v9063 = vpop.f32.mrf.mxu0
  %9064 = vdwg.mxu0
  %9065 = vmatpush.bf16.msra.mxu0 %v5749
  %9066 = vmatpush.bf16.msra.mxu0 %v5742
  %9067 = vmatpush.bf16.msra.mxu0 %v5735
  %9068 = vmatpush.bf16.msra.mxu0 %v5728
  %9069 = vmatpush.bf16.msra.mxu0 %v5721
  %9070 = vmatpush.bf16.msra.mxu0 %v5714
  %9071 = vmatpush.bf16.msra.mxu0 %v5707
  %9072 = vmatpush.bf16.msra.mxu0 %v5700
  %9073 = vmatmul.bf16.gmra.mxu0 %v47
  %v9074 = vpop.f32.mrf.mxu0
  %v9075 = vadd.f32 %v9062, %v9074
  %v9076 = vpop.f32.mrf.mxu0
  %9077 = vdwg.mxu0
  %9078 = vmatpush.bf16.msra.mxu0 %v5805
  %9079 = vmatpush.bf16.msra.mxu0 %v5798
  %9080 = vmatpush.bf16.msra.mxu0 %v5791
  %9081 = vmatpush.bf16.msra.mxu0 %v5784
  %9082 = vmatpush.bf16.msra.mxu0 %v5777
  %9083 = vmatpush.bf16.msra.mxu0 %v5770
  %9084 = vmatpush.bf16.msra.mxu0 %v5763
  %9085 = vmatpush.bf16.msra.mxu0 %v5756
  %9086 = vmatmul.bf16.gmra.mxu0 %v48
  %v9087 = vpop.f32.mrf.mxu0
  %v9088 = vadd.f32 %v9075, %v9087
  %v9089 = vpop.f32.mrf.mxu0
  %9090 = vdwg.mxu0
  %9091 = vmatpush.bf16.msra.mxu0 %v5861
  %9092 = vmatpush.bf16.msra.mxu0 %v5854
  %9093 = vmatpush.bf16.msra.mxu0 %v5847
  %9094 = vmatpush.bf16.msra.mxu0 %v5840
  %9095 = vmatpush.bf16.msra.mxu0 %v5833
  %9096 = vmatpush.bf16.msra.mxu0 %v5826
  %9097 = vmatpush.bf16.msra.mxu0 %v5819
  %9098 = vmatpush.bf16.msra.mxu0 %v5812
  %9099 = vmatmul.bf16.gmra.mxu0 %v49
  %v9100 = vpop.f32.mrf.mxu0
  %v9101 = vadd.f32 %v9088, %v9100
  %v9102 = vpop.f32.mrf.mxu0
  %9103 = vdwg.mxu0
  %9104 = vmatpush.bf16.msra.mxu0 %v5917
  %9105 = vmatpush.bf16.msra.mxu0 %v5910
  %9106 = vmatpush.bf16.msra.mxu0 %v5903
  %9107 = vmatpush.bf16.msra.mxu0 %v5896
  %9108 = vmatpush.bf16.msra.mxu0 %v5889
  %9109 = vmatpush.bf16.msra.mxu0 %v5882
  %9110 = vmatpush.bf16.msra.mxu0 %v5875
  %9111 = vmatpush.bf16.msra.mxu0 %v5868
  %9112 = vmatmul.bf16.gmra.mxu0 %v50
  %v9113 = vpop.f32.mrf.mxu0
  %v9114 = vadd.f32 %v9101, %v9113
  %v9115 = vpop.f32.mrf.mxu0
  %9116 = vdwg.mxu0
  %9117 = vmatpush.bf16.msra.mxu0 %v5973
  %9118 = vmatpush.bf16.msra.mxu0 %v5966
  %9119 = vmatpush.bf16.msra.mxu0 %v5959
  %9120 = vmatpush.bf16.msra.mxu0 %v5952
  %9121 = vmatpush.bf16.msra.mxu0 %v5945
  %9122 = vmatpush.bf16.msra.mxu0 %v5938
  %9123 = vmatpush.bf16.msra.mxu0 %v5931
  %9124 = vmatpush.bf16.msra.mxu0 %v5924
  %9125 = vmatmul.bf16.gmra.mxu0 %v51
  %v9126 = vpop.f32.mrf.mxu0
  %v9127 = vadd.f32 %v9114, %v9126
  %v9128 = vpop.f32.mrf.mxu0
  %9129 = vdwg.mxu0
  %9130 = vmatpush.bf16.msra.mxu0 %v6029
  %9131 = vmatpush.bf16.msra.mxu0 %v6022
  %9132 = vmatpush.bf16.msra.mxu0 %v6015
  %9133 = vmatpush.bf16.msra.mxu0 %v6008
  %9134 = vmatpush.bf16.msra.mxu0 %v6001
  %9135 = vmatpush.bf16.msra.mxu0 %v5994
  %9136 = vmatpush.bf16.msra.mxu0 %v5987
  %9137 = vmatpush.bf16.msra.mxu0 %v5980
  %9138 = vmatmul.bf16.gmra.mxu0 %v52
  %v9139 = vpop.f32.mrf.mxu0
  %v9140 = vadd.f32 %v9127, %v9139
  %v9141 = vpop.f32.mrf.mxu0
  %9142 = vdwg.mxu0
  %9143 = vmatpush.bf16.msra.mxu0 %v6085
  %9144 = vmatpush.bf16.msra.mxu0 %v6078
  %9145 = vmatpush.bf16.msra.mxu0 %v6071
  %9146 = vmatpush.bf16.msra.mxu0 %v6064
  %9147 = vmatpush.bf16.msra.mxu0 %v6057
  %9148 = vmatpush.bf16.msra.mxu0 %v6050
  %9149 = vmatpush.bf16.msra.mxu0 %v6043
  %9150 = vmatpush.bf16.msra.mxu0 %v6036
  %9151 = vmatmul.bf16.gmra.mxu0 %v53
  %v9152 = vpop.f32.mrf.mxu0
  %v9153 = vadd.f32 %v9140, %v9152
  %v9154 = vpop.f32.mrf.mxu0
  %9155 = vdwg.mxu0
  %9156 = vmatpush.bf16.msra.mxu0 %v6141
  %9157 = vmatpush.bf16.msra.mxu0 %v6134
  %9158 = vmatpush.bf16.msra.mxu0 %v6127
  %9159 = vmatpush.bf16.msra.mxu0 %v6120
  %9160 = vmatpush.bf16.msra.mxu0 %v6113
  %9161 = vmatpush.bf16.msra.mxu0 %v6106
  %9162 = vmatpush.bf16.msra.mxu0 %v6099
  %9163 = vmatpush.bf16.msra.mxu0 %v6092
  %9164 = vmatmul.bf16.gmra.mxu0 %v54
  %v9165 = vpop.f32.mrf.mxu0
  %v9166 = vadd.f32 %v9153, %v9165
  %v9167 = vpop.f32.mrf.mxu0
  %9168 = vdwg.mxu0
  %9169 = vmatpush.bf16.msra.mxu0 %v6197
  %9170 = vmatpush.bf16.msra.mxu0 %v6190
  %9171 = vmatpush.bf16.msra.mxu0 %v6183
  %9172 = vmatpush.bf16.msra.mxu0 %v6176
  %9173 = vmatpush.bf16.msra.mxu0 %v6169
  %9174 = vmatpush.bf16.msra.mxu0 %v6162
  %9175 = vmatpush.bf16.msra.mxu0 %v6155
  %9176 = vmatpush.bf16.msra.mxu0 %v6148
  %9177 = vmatmul.bf16.gmra.mxu0 %v55
  %v9178 = vpop.f32.mrf.mxu0
  %v9179 = vadd.f32 %v9166, %v9178
  %v9180 = vpop.f32.mrf.mxu0
  %9181 = vdwg.mxu0
  %9182 = vmatpush.bf16.msra.mxu0 %v6253
  %9183 = vmatpush.bf16.msra.mxu0 %v6246
  %9184 = vmatpush.bf16.msra.mxu0 %v6239
  %9185 = vmatpush.bf16.msra.mxu0 %v6232
  %9186 = vmatpush.bf16.msra.mxu0 %v6225
  %9187 = vmatpush.bf16.msra.mxu0 %v6218
  %9188 = vmatpush.bf16.msra.mxu0 %v6211
  %9189 = vmatpush.bf16.msra.mxu0 %v6204
  %9190 = vmatmul.bf16.gmra.mxu0 %v56
  %v9191 = vpop.f32.mrf.mxu0
  %v9192 = vadd.f32 %v9179, %v9191
  %v9193 = vpop.f32.mrf.mxu0
  %9194 = vdwg.mxu0
  %9195 = vmatpush.bf16.msra.mxu0 %v6309
  %9196 = vmatpush.bf16.msra.mxu0 %v6302
  %9197 = vmatpush.bf16.msra.mxu0 %v6295
  %9198 = vmatpush.bf16.msra.mxu0 %v6288
  %9199 = vmatpush.bf16.msra.mxu0 %v6281
  %9200 = vmatpush.bf16.msra.mxu0 %v6274
  %9201 = vmatpush.bf16.msra.mxu0 %v6267
  %9202 = vmatpush.bf16.msra.mxu0 %v6260
  %9203 = vmatmul.bf16.gmra.mxu0 %v57
  %v9204 = vpop.f32.mrf.mxu0
  %v9205 = vadd.f32 %v9192, %v9204
  %v9206 = vpop.f32.mrf.mxu0
  %9207 = vdwg.mxu0
  %9208 = vmatpush.bf16.msra.mxu0 0
  %9209 = vmatpush.bf16.msra.mxu0 0
  %9210 = vmatpush.bf16.msra.mxu0 0
  %9211 = vmatpush.bf16.msra.mxu0 0
  %9212 = vmatpush.bf16.msra.mxu0 0
  %9213 = vmatpush.bf16.msra.mxu0 0
  %9214 = vmatpush.bf16.msra.mxu0 0
  %9215 = vmatpush.bf16.msra.mxu0 %v6316
  %9216 = vmatmul.bf16.gmra.mxu0 %v7503
  %v9217 = vpop.f32.mrf.mxu0
  %v9218 = vadd.f32 %v9205, %v9217
  %v9219 = vpop.f32.mrf.mxu0
  %9220 = vdwg.mxu0
  %9221 = vmatpush.bf16.msra.mxu0 %v5190
  %9222 = vmatpush.bf16.msra.mxu0 %v5183
  %9223 = vmatpush.bf16.msra.mxu0 %v5176
  %9224 = vmatpush.bf16.msra.mxu0 %v5169
  %9225 = vmatpush.bf16.msra.mxu0 %v5162
  %9226 = vmatpush.bf16.msra.mxu0 %v5155
  %9227 = vmatpush.bf16.msra.mxu0 %v5148
  %9228 = vmatpush.bf16.msra.mxu0 %v5141
  %9229 = vmatmul.bf16.gmra.mxu0 %v37
  %v9230 = vpop.f32.mrf.mxu0
  %v9231 = vadd.f32 %v1415, %v9230
  %v9232 = vpop.f32.mrf.mxu0
  %9233 = vdwg.mxu0
  %9234 = vmatpush.bf16.msra.mxu0 %v5246
  %9235 = vmatpush.bf16.msra.mxu0 %v5239
  %9236 = vmatpush.bf16.msra.mxu0 %v5232
  %9237 = vmatpush.bf16.msra.mxu0 %v5225
  %9238 = vmatpush.bf16.msra.mxu0 %v5218
  %9239 = vmatpush.bf16.msra.mxu0 %v5211
  %9240 = vmatpush.bf16.msra.mxu0 %v5204
  %9241 = vmatpush.bf16.msra.mxu0 %v5197
  %9242 = vmatmul.bf16.gmra.mxu0 %v38
  %v9243 = vpop.f32.mrf.mxu0
  %v9244 = vadd.f32 %v9231, %v9243
  %v9245 = vpop.f32.mrf.mxu0
  %9246 = vdwg.mxu0
  %9247 = vmatpush.bf16.msra.mxu0 %v5302
  %9248 = vmatpush.bf16.msra.mxu0 %v5295
  %9249 = vmatpush.bf16.msra.mxu0 %v5288
  %9250 = vmatpush.bf16.msra.mxu0 %v5281
  %9251 = vmatpush.bf16.msra.mxu0 %v5274
  %9252 = vmatpush.bf16.msra.mxu0 %v5267
  %9253 = vmatpush.bf16.msra.mxu0 %v5260
  %9254 = vmatpush.bf16.msra.mxu0 %v5253
  %9255 = vmatmul.bf16.gmra.mxu0 %v39
  %v9256 = vpop.f32.mrf.mxu0
  %v9257 = vadd.f32 %v9244, %v9256
  %v9258 = vpop.f32.mrf.mxu0
  %9259 = vdwg.mxu0
  %9260 = vmatpush.bf16.msra.mxu0 %v5358
  %9261 = vmatpush.bf16.msra.mxu0 %v5351
  %9262 = vmatpush.bf16.msra.mxu0 %v5344
  %9263 = vmatpush.bf16.msra.mxu0 %v5337
  %9264 = vmatpush.bf16.msra.mxu0 %v5330
  %9265 = vmatpush.bf16.msra.mxu0 %v5323
  %9266 = vmatpush.bf16.msra.mxu0 %v5316
  %9267 = vmatpush.bf16.msra.mxu0 %v5309
  %9268 = vmatmul.bf16.gmra.mxu0 %v40
  %v9269 = vpop.f32.mrf.mxu0
  %v9270 = vadd.f32 %v9257, %v9269
  %v9271 = vpop.f32.mrf.mxu0
  %9272 = vdwg.mxu0
  %9273 = vmatpush.bf16.msra.mxu0 %v5414
  %9274 = vmatpush.bf16.msra.mxu0 %v5407
  %9275 = vmatpush.bf16.msra.mxu0 %v5400
  %9276 = vmatpush.bf16.msra.mxu0 %v5393
  %9277 = vmatpush.bf16.msra.mxu0 %v5386
  %9278 = vmatpush.bf16.msra.mxu0 %v5379
  %9279 = vmatpush.bf16.msra.mxu0 %v5372
  %9280 = vmatpush.bf16.msra.mxu0 %v5365
  %9281 = vmatmul.bf16.gmra.mxu0 %v41
  %v9282 = vpop.f32.mrf.mxu0
  %v9283 = vadd.f32 %v9270, %v9282
  %v9284 = vpop.f32.mrf.mxu0
  %9285 = vdwg.mxu0
  %9286 = vmatpush.bf16.msra.mxu0 %v5470
  %9287 = vmatpush.bf16.msra.mxu0 %v5463
  %9288 = vmatpush.bf16.msra.mxu0 %v5456
  %9289 = vmatpush.bf16.msra.mxu0 %v5449
  %9290 = vmatpush.bf16.msra.mxu0 %v5442
  %9291 = vmatpush.bf16.msra.mxu0 %v5435
  %9292 = vmatpush.bf16.msra.mxu0 %v5428
  %9293 = vmatpush.bf16.msra.mxu0 %v5421
  %9294 = vmatmul.bf16.gmra.mxu0 %v42
  %v9295 = vpop.f32.mrf.mxu0
  %v9296 = vadd.f32 %v9283, %v9295
  %v9297 = vpop.f32.mrf.mxu0
  %9298 = vdwg.mxu0
  %9299 = vmatpush.bf16.msra.mxu0 %v5526
  %9300 = vmatpush.bf16.msra.mxu0 %v5519
  %9301 = vmatpush.bf16.msra.mxu0 %v5512
  %9302 = vmatpush.bf16.msra.mxu0 %v5505
  %9303 = vmatpush.bf16.msra.mxu0 %v5498
  %9304 = vmatpush.bf16.msra.mxu0 %v5491
  %9305 = vmatpush.bf16.msra.mxu0 %v5484
  %9306 = vmatpush.bf16.msra.mxu0 %v5477
  %9307 = vmatmul.bf16.gmra.mxu0 %v43
  %v9308 = vpop.f32.mrf.mxu0
  %v9309 = vadd.f32 %v9296, %v9308
  %v9310 = vpop.f32.mrf.mxu0
  %9311 = vdwg.mxu0
  %9312 = vmatpush.bf16.msra.mxu0 %v5582
  %9313 = vmatpush.bf16.msra.mxu0 %v5575
  %9314 = vmatpush.bf16.msra.mxu0 %v5568
  %9315 = vmatpush.bf16.msra.mxu0 %v5561
  %9316 = vmatpush.bf16.msra.mxu0 %v5554
  %9317 = vmatpush.bf16.msra.mxu0 %v5547
  %9318 = vmatpush.bf16.msra.mxu0 %v5540
  %9319 = vmatpush.bf16.msra.mxu0 %v5533
  %9320 = vmatmul.bf16.gmra.mxu0 %v44
  %v9321 = vpop.f32.mrf.mxu0
  %v9322 = vadd.f32 %v9309, %v9321
  %v9323 = vpop.f32.mrf.mxu0
  %9324 = vdwg.mxu0
  %9325 = vmatpush.bf16.msra.mxu0 %v5638
  %9326 = vmatpush.bf16.msra.mxu0 %v5631
  %9327 = vmatpush.bf16.msra.mxu0 %v5624
  %9328 = vmatpush.bf16.msra.mxu0 %v5617
  %9329 = vmatpush.bf16.msra.mxu0 %v5610
  %9330 = vmatpush.bf16.msra.mxu0 %v5603
  %9331 = vmatpush.bf16.msra.mxu0 %v5596
  %9332 = vmatpush.bf16.msra.mxu0 %v5589
  %9333 = vmatmul.bf16.gmra.mxu0 %v45
  %v9334 = vpop.f32.mrf.mxu0
  %v9335 = vadd.f32 %v9322, %v9334
  %v9336 = vpop.f32.mrf.mxu0
  %9337 = vdwg.mxu0
  %9338 = vmatpush.bf16.msra.mxu0 %v5694
  %9339 = vmatpush.bf16.msra.mxu0 %v5687
  %9340 = vmatpush.bf16.msra.mxu0 %v5680
  %9341 = vmatpush.bf16.msra.mxu0 %v5673
  %9342 = vmatpush.bf16.msra.mxu0 %v5666
  %9343 = vmatpush.bf16.msra.mxu0 %v5659
  %9344 = vmatpush.bf16.msra.mxu0 %v5652
  %9345 = vmatpush.bf16.msra.mxu0 %v5645
  %9346 = vmatmul.bf16.gmra.mxu0 %v46
  %v9347 = vpop.f32.mrf.mxu0
  %v9348 = vadd.f32 %v9335, %v9347
  %v9349 = vpop.f32.mrf.mxu0
  %9350 = vdwg.mxu0
  %9351 = vmatpush.bf16.msra.mxu0 %v5750
  %9352 = vmatpush.bf16.msra.mxu0 %v5743
  %9353 = vmatpush.bf16.msra.mxu0 %v5736
  %9354 = vmatpush.bf16.msra.mxu0 %v5729
  %9355 = vmatpush.bf16.msra.mxu0 %v5722
  %9356 = vmatpush.bf16.msra.mxu0 %v5715
  %9357 = vmatpush.bf16.msra.mxu0 %v5708
  %9358 = vmatpush.bf16.msra.mxu0 %v5701
  %9359 = vmatmul.bf16.gmra.mxu0 %v47
  %v9360 = vpop.f32.mrf.mxu0
  %v9361 = vadd.f32 %v9348, %v9360
  %v9362 = vpop.f32.mrf.mxu0
  %9363 = vdwg.mxu0
  %9364 = vmatpush.bf16.msra.mxu0 %v5806
  %9365 = vmatpush.bf16.msra.mxu0 %v5799
  %9366 = vmatpush.bf16.msra.mxu0 %v5792
  %9367 = vmatpush.bf16.msra.mxu0 %v5785
  %9368 = vmatpush.bf16.msra.mxu0 %v5778
  %9369 = vmatpush.bf16.msra.mxu0 %v5771
  %9370 = vmatpush.bf16.msra.mxu0 %v5764
  %9371 = vmatpush.bf16.msra.mxu0 %v5757
  %9372 = vmatmul.bf16.gmra.mxu0 %v48
  %v9373 = vpop.f32.mrf.mxu0
  %v9374 = vadd.f32 %v9361, %v9373
  %v9375 = vpop.f32.mrf.mxu0
  %9376 = vdwg.mxu0
  %9377 = vmatpush.bf16.msra.mxu0 %v5862
  %9378 = vmatpush.bf16.msra.mxu0 %v5855
  %9379 = vmatpush.bf16.msra.mxu0 %v5848
  %9380 = vmatpush.bf16.msra.mxu0 %v5841
  %9381 = vmatpush.bf16.msra.mxu0 %v5834
  %9382 = vmatpush.bf16.msra.mxu0 %v5827
  %9383 = vmatpush.bf16.msra.mxu0 %v5820
  %9384 = vmatpush.bf16.msra.mxu0 %v5813
  %9385 = vmatmul.bf16.gmra.mxu0 %v49
  %v9386 = vpop.f32.mrf.mxu0
  %v9387 = vadd.f32 %v9374, %v9386
  %v9388 = vpop.f32.mrf.mxu0
  %9389 = vdwg.mxu0
  %9390 = vmatpush.bf16.msra.mxu0 %v5918
  %9391 = vmatpush.bf16.msra.mxu0 %v5911
  %9392 = vmatpush.bf16.msra.mxu0 %v5904
  %9393 = vmatpush.bf16.msra.mxu0 %v5897
  %9394 = vmatpush.bf16.msra.mxu0 %v5890
  %9395 = vmatpush.bf16.msra.mxu0 %v5883
  %9396 = vmatpush.bf16.msra.mxu0 %v5876
  %9397 = vmatpush.bf16.msra.mxu0 %v5869
  %9398 = vmatmul.bf16.gmra.mxu0 %v50
  %v9399 = vpop.f32.mrf.mxu0
  %v9400 = vadd.f32 %v9387, %v9399
  %v9401 = vpop.f32.mrf.mxu0
  %9402 = vdwg.mxu0
  %9403 = vmatpush.bf16.msra.mxu0 %v5974
  %9404 = vmatpush.bf16.msra.mxu0 %v5967
  %9405 = vmatpush.bf16.msra.mxu0 %v5960
  %9406 = vmatpush.bf16.msra.mxu0 %v5953
  %9407 = vmatpush.bf16.msra.mxu0 %v5946
  %9408 = vmatpush.bf16.msra.mxu0 %v5939
  %9409 = vmatpush.bf16.msra.mxu0 %v5932
  %9410 = vmatpush.bf16.msra.mxu0 %v5925
  %9411 = vmatmul.bf16.gmra.mxu0 %v51
  %v9412 = vpop.f32.mrf.mxu0
  %v9413 = vadd.f32 %v9400, %v9412
  %v9414 = vpop.f32.mrf.mxu0
  %9415 = vdwg.mxu0
  %9416 = vmatpush.bf16.msra.mxu0 %v6030
  %9417 = vmatpush.bf16.msra.mxu0 %v6023
  %9418 = vmatpush.bf16.msra.mxu0 %v6016
  %9419 = vmatpush.bf16.msra.mxu0 %v6009
  %9420 = vmatpush.bf16.msra.mxu0 %v6002
  %9421 = vmatpush.bf16.msra.mxu0 %v5995
  %9422 = vmatpush.bf16.msra.mxu0 %v5988
  %9423 = vmatpush.bf16.msra.mxu0 %v5981
  %9424 = vmatmul.bf16.gmra.mxu0 %v52
  %v9425 = vpop.f32.mrf.mxu0
  %v9426 = vadd.f32 %v9413, %v9425
  %v9427 = vpop.f32.mrf.mxu0
  %9428 = vdwg.mxu0
  %9429 = vmatpush.bf16.msra.mxu0 %v6086
  %9430 = vmatpush.bf16.msra.mxu0 %v6079
  %9431 = vmatpush.bf16.msra.mxu0 %v6072
  %9432 = vmatpush.bf16.msra.mxu0 %v6065
  %9433 = vmatpush.bf16.msra.mxu0 %v6058
  %9434 = vmatpush.bf16.msra.mxu0 %v6051
  %9435 = vmatpush.bf16.msra.mxu0 %v6044
  %9436 = vmatpush.bf16.msra.mxu0 %v6037
  %9437 = vmatmul.bf16.gmra.mxu0 %v53
  %v9438 = vpop.f32.mrf.mxu0
  %v9439 = vadd.f32 %v9426, %v9438
  %v9440 = vpop.f32.mrf.mxu0
  %9441 = vdwg.mxu0
  %9442 = vmatpush.bf16.msra.mxu0 %v6142
  %9443 = vmatpush.bf16.msra.mxu0 %v6135
  %9444 = vmatpush.bf16.msra.mxu0 %v6128
  %9445 = vmatpush.bf16.msra.mxu0 %v6121
  %9446 = vmatpush.bf16.msra.mxu0 %v6114
  %9447 = vmatpush.bf16.msra.mxu0 %v6107
  %9448 = vmatpush.bf16.msra.mxu0 %v6100
  %9449 = vmatpush.bf16.msra.mxu0 %v6093
  %9450 = vmatmul.bf16.gmra.mxu0 %v54
  %v9451 = vpop.f32.mrf.mxu0
  %v9452 = vadd.f32 %v9439, %v9451
  %v9453 = vpop.f32.mrf.mxu0
  %9454 = vdwg.mxu0
  %9455 = vmatpush.bf16.msra.mxu0 %v6198
  %9456 = vmatpush.bf16.msra.mxu0 %v6191
  %9457 = vmatpush.bf16.msra.mxu0 %v6184
  %9458 = vmatpush.bf16.msra.mxu0 %v6177
  %9459 = vmatpush.bf16.msra.mxu0 %v6170
  %9460 = vmatpush.bf16.msra.mxu0 %v6163
  %9461 = vmatpush.bf16.msra.mxu0 %v6156
  %9462 = vmatpush.bf16.msra.mxu0 %v6149
  %9463 = vmatmul.bf16.gmra.mxu0 %v55
  %v9464 = vpop.f32.mrf.mxu0
  %v9465 = vadd.f32 %v9452, %v9464
  %v9466 = vpop.f32.mrf.mxu0
  %9467 = vdwg.mxu0
  %9468 = vmatpush.bf16.msra.mxu0 %v6254
  %9469 = vmatpush.bf16.msra.mxu0 %v6247
  %9470 = vmatpush.bf16.msra.mxu0 %v6240
  %9471 = vmatpush.bf16.msra.mxu0 %v6233
  %9472 = vmatpush.bf16.msra.mxu0 %v6226
  %9473 = vmatpush.bf16.msra.mxu0 %v6219
  %9474 = vmatpush.bf16.msra.mxu0 %v6212
  %9475 = vmatpush.bf16.msra.mxu0 %v6205
  %9476 = vmatmul.bf16.gmra.mxu0 %v56
  %v9477 = vpop.f32.mrf.mxu0
  %v9478 = vadd.f32 %v9465, %v9477
  %v9479 = vpop.f32.mrf.mxu0
  %9480 = vdwg.mxu0
  %9481 = vmatpush.bf16.msra.mxu0 %v6310
  %9482 = vmatpush.bf16.msra.mxu0 %v6303
  %9483 = vmatpush.bf16.msra.mxu0 %v6296
  %9484 = vmatpush.bf16.msra.mxu0 %v6289
  %9485 = vmatpush.bf16.msra.mxu0 %v6282
  %9486 = vmatpush.bf16.msra.mxu0 %v6275
  %9487 = vmatpush.bf16.msra.mxu0 %v6268
  %9488 = vmatpush.bf16.msra.mxu0 %v6261
  %9489 = vmatmul.bf16.gmra.mxu0 %v57
  %v9490 = vpop.f32.mrf.mxu0
  %v9491 = vadd.f32 %v9478, %v9490
  %v9492 = vpop.f32.mrf.mxu0
  %9493 = vdwg.mxu0
  %9494 = vmatpush.bf16.msra.mxu0 0
  %9495 = vmatpush.bf16.msra.mxu0 0
  %9496 = vmatpush.bf16.msra.mxu0 0
  %9497 = vmatpush.bf16.msra.mxu0 0
  %9498 = vmatpush.bf16.msra.mxu0 0
  %9499 = vmatpush.bf16.msra.mxu0 0
  %9500 = vmatpush.bf16.msra.mxu0 0
  %9501 = vmatpush.bf16.msra.mxu0 %v6317
  %9502 = vmatmul.bf16.gmra.mxu0 %v7503
  %v9503 = vpop.f32.mrf.mxu0
  %v9504 = vadd.f32 %v9491, %v9503
  %v9505 = vpop.f32.mrf.mxu0
  %9506 = vdwg.mxu0
  %v9507 = vtanh.pop %v7788
  %v9508 = vtanh.pop %v8074
  %v9509 = vtanh.pop %v8360
  %v9510 = vtanh.pop %v8646
  %v9511 = vtanh.pop %v8932
  %v9512 = vtanh.pop %v9218
  %v9513 = vtanh.pop %v9504
  %9514 = vst [vmem:[%s3] sm:$0x3f] %v9507
  %9515 = vst [vmem:[%s3 + $0x8] sm:$0x3f] %v9508
  %9516 = vst [vmem:[%s3 + $0x10] sm:$0x3f] %v9509
  %9517 = vst [vmem:[%s3 + $0x18] sm:$0x3f] %v9510
  %9518 = vst [vmem:[%s3 + $0x20] sm:$0x3f] %v9511
  %9519 = vst [vmem:[%s3 + $0x28] sm:$0x3f] %v9512
  %vm9520 = vcmask 128000
  %9521 = vst.msk [vmem:[%s3 + $0x30] sm:$0x3f] %vm9520, %v9513
  // Predicated region
  $region14: #{generator_forward.13} parent=0 // pred_check
    _
  $region15: #{generator_forward.13} parent=0 // pred_check_branch
    %9523 = sbr.rel (0) target = $region17
  $region16: #{generator_forward.13} parent=0 // pred_region
    _
  $region17: #{generator_forward.13} parent=0 // pred_fallthru
    _
  // Predicated region
  $region18: #{generator_forward.13} parent=0 // pred_check
    _
  $region19: #{generator_forward.13} parent=0 // pred_check_branch
    %9525 = sbr.rel (0) target = $region21
  $region20: #{generator_forward.13} parent=0 // pred_region
    _
  $region21: #{generator_forward.13} parent=0 // pred_fallthru
    _

</llo_original>
